<compile_context>
chip_gen: v6e
topology: v6e:2x2x1
jax: 0.10.0
libtpu: 0.0.40
codegen_flags: <defaults>
</compile_context>

<pallas_src>
import functools

import jax
import jax.numpy as jnp
from jax.experimental import pallas as pl
from jax.experimental.pallas import tpu as pltpu

NUM_CLASSES = 10


# ----------------------------------------------------------------------------
# Tiling helper (always returns a divisor of M)
# ----------------------------------------------------------------------------
def _pick_tile(M, cap):
    """Largest tile <= cap that divides M and is a multiple of 8, else M."""
    if M <= cap:
        return M
    t = cap
    while t >= 8:
        if M % t == 0 and t % 8 == 0:
            return t
        t //= 2
    return M


# ----------------------------------------------------------------------------
# Conv matmul: bf16 operands, f32 accumulate, fused bias + ReLU, bf16 output
# ----------------------------------------------------------------------------
def _matmul_bias_act_kernel(a_ref, b_ref, bias_ref, o_ref, *, apply_relu):
    acc = jnp.dot(a_ref[...], b_ref[...], preferred_element_type=jnp.float32)
    acc = acc + bias_ref[...]
    if apply_relu:
        acc = jnp.maximum(acc, 0.0)
    o_ref[...] = acc.astype(o_ref.dtype)


def matmul_bias_act(a, b, bias, *, apply_relu, out_dtype=jnp.bfloat16, tm_cap=1024):
    """out = (optionally ReLU)(a @ b + bias). a:(M,K) bf16, b:(K,N) bf16, bias:(N,) f32."""
    M, K = a.shape
    K2, N = b.shape
    assert K == K2
    tm = _pick_tile(M, tm_cap)
    grid = (M // tm,)
    flops = 2 * M * K * N
    bytes_accessed = M * K * 2 + K * N * 2 + M * N * 2 + N * 4
    return pl.pallas_call(
        functools.partial(_matmul_bias_act_kernel, apply_relu=apply_relu),
        out_shape=jax.ShapeDtypeStruct((M, N), out_dtype),
        grid=grid,
        in_specs=[
            pl.BlockSpec((tm, K), lambda i: (i, 0)),   # A tile, full K (bf16)
            pl.BlockSpec((K, N), lambda i: (0, 0)),    # weight resident (bf16)
            pl.BlockSpec((1, N), lambda i: (0, 0)),    # bias row (f32)
        ],
        out_specs=pl.BlockSpec((tm, N), lambda i: (i, 0)),
        compiler_params=pltpu.CompilerParams(
            dimension_semantics=("parallel",)),
        cost_estimate=pl.CostEstimate(
            flops=flops, transcendentals=0, bytes_accessed=bytes_accessed),
    )(a, b, bias.reshape(1, N))


# ----------------------------------------------------------------------------
# 2x2 max pool: single-input, lane-dense kernel (no strided views in HBM)
# ----------------------------------------------------------------------------
def _maxpool_kernel(x_ref, o_ref, *, wc, c, wo):
    x = x_ref[...]
    # H-pair max: the two halves are W*C-lane (multiple of 128) aligned slices.
    hm = jnp.maximum(x[:, :wc], x[:, wc:])
    # W-pair max: static C-wide lane slices, compacted with a single concat.
    parts = []
    for i in range(wo):
        lo = 2 * i * c
        parts.append(jnp.maximum(hm[:, lo:lo + c], hm[:, lo + c:lo + 2 * c]))
    o_ref[...] = jnp.concatenate(parts, axis=1)


def maxpool2x2(x):
    """2x2 stride-2 max pool on NHWC (H, W even).  Input reshaped (free) so each
    kernel row holds one H-pair; output rows are lane-dense (Wo*C >= 512)."""
    N, H, W, C = x.shape
    Ho, Wo = H // 2, W // 2
    M = N * Ho
    xin = x.reshape(M, 2 * W * C)                     # contiguous, no copy
    tm = _pick_tile(M, 512)
    grid = (M // tm,)
    itemsize = jnp.dtype(x.dtype).itemsize
    out = pl.pallas_call(
        functools.partial(_maxpool_kernel, wc=W * C, c=C, wo=Wo),
        out_shape=jax.ShapeDtypeStruct((M, Wo * C), x.dtype),
        grid=grid,
        in_specs=[pl.BlockSpec((tm, 2 * W * C), lambda i: (i, 0))],
        out_specs=pl.BlockSpec((tm, Wo * C), lambda i: (i, 0)),
        compiler_params=pltpu.CompilerParams(dimension_semantics=("parallel",)),
        cost_estimate=pl.CostEstimate(
            flops=3 * M * W * C, transcendentals=0,
            bytes_accessed=(M * 2 * W * C + M * Wo * C) * itemsize),
    )(xin)
    return out.reshape(N, Ho, Wo, C)


# ----------------------------------------------------------------------------
# Fused fc1(ReLU) -> fc2(ReLU) -> fc3 in a single pallas_call
# ----------------------------------------------------------------------------
def _fused_fc_kernel(x_ref, w1_ref, b1_ref, w2_ref, b2_ref, w3_ref, b3_ref,
                     o_ref, acc_ref):
    k = pl.program_id(1)

    @pl.when(k == 0)
    def _():
        acc_ref[...] = jnp.zeros_like(acc_ref)

    # Stream fc1: accumulate one K-tile of x @ w1 (bf16 operands, f32 accumulate).
    acc_ref[...] += jnp.dot(x_ref[...], w1_ref[...],
                            preferred_element_type=jnp.float32)

    @pl.when(k == pl.num_programs(1) - 1)
    def _():
        h1 = jnp.maximum(acc_ref[...] + b1_ref[...], 0.0)
        # TODO(synk): training-mode Dropout(0.3) mask not implemented (inference = identity).
        h2 = jnp.dot(h1.astype(jnp.bfloat16), w2_ref[...],
                     preferred_element_type=jnp.float32) + b2_ref[...]
        h2 = jnp.maximum(h2, 0.0)
        out = jnp.dot(h2.astype(jnp.bfloat16), w3_ref[...],
                      preferred_element_type=jnp.float32) + b3_ref[...]
        o_ref[...] = out.astype(o_ref.dtype)


def fused_fc(x, w1, b1, w2, b2, w3, b3, *, k_tile=1024, tb_cap=256):
    """Fused FC stack.  Grid = (batch tiles ["parallel"], fc1-K tiles ["arbitrary"]).

    fc1's 4096-deep K axis is streamed into an f32 VMEM accumulator; fc2/fc3 run
    at the final K step on VMEM-resident intermediates (no HBM round trips).
    Batch tiling bounds VMEM at large B and enables megacore sharding on v7x.
    """
    B, K1 = x.shape
    N1, N2, N3 = w1.shape[1], w2.shape[1], w3.shape[1]
    assert K1 % k_tile == 0
    tb = _pick_tile(B, tb_cap)
    grid = (B // tb, K1 // k_tile)
    flops = 2 * B * (K1 * N1 + N1 * N2 + N2 * N3)
    bytes_accessed = (B * K1 * 2 + K1 * N1 * 2 + N1 * N2 * 2 + N2 * N3 * 2
                      + (N1 + N2 + N3) * 4 + B * N3 * 4)
    return pl.pallas_call(
        _fused_fc_kernel,
        out_shape=jax.ShapeDtypeStruct((B, N3), jnp.float32),
        grid=grid,
        in_specs=[
            pl.BlockSpec((tb, k_tile), lambda b, k: (b, k)),   # activation tile (bf16)
            pl.BlockSpec((k_tile, N1), lambda b, k: (k, 0)),   # fc1 weight K-tile (bf16)
            pl.BlockSpec((1, N1), lambda b, k: (0, 0)),
            pl.BlockSpec((N1, N2), lambda b, k: (0, 0)),       # fc2 weight resident (bf16)
            pl.BlockSpec((1, N2), lambda b, k: (0, 0)),
            pl.BlockSpec((N2, N3), lambda b, k: (0, 0)),       # fc3 weight resident (padded)
            pl.BlockSpec((1, N3), lambda b, k: (0, 0)),
        ],
        out_specs=pl.BlockSpec((tb, N3), lambda b, k: (b, 0)),
        scratch_shapes=[pltpu.VMEM((tb, N1), jnp.float32)],
        compiler_params=pltpu.CompilerParams(
            dimension_semantics=("parallel", "arbitrary")),
        cost_estimate=pl.CostEstimate(
            flops=flops, transcendentals=0, bytes_accessed=bytes_accessed),
    )(x, w1, b1.reshape(1, N1), w2, b2.reshape(1, N2), w3, b3.reshape(1, N3))


# ----------------------------------------------------------------------------
# Conv (3x3, stride 1, pad 1) via bf16 im2col + Pallas matmul
# ----------------------------------------------------------------------------
def im2col_3x3(x):
    """x: (N,H,W,C) bf16 -> (N*H*W, 9*C) bf16, patch order (kh, kw, cin)."""
    N, H, W, C = x.shape
    xp = jnp.pad(x, ((0, 0), (1, 1), (1, 1), (0, 0)))
    cols = []
    for dh in range(3):
        for dw in range(3):
            cols.append(xp[:, dh:dh + H, dw:dw + W, :])
    patches = jnp.concatenate(cols, axis=-1)          # (N, H, W, 9*C) bf16
    return patches.reshape(N * H * W, 9 * C)


def conv3x3_relu(x_nhwc, w_mat, bias):
    """Conv3x3 (weight pre-reshaped to (9*Cin, Cout) bf16) + bias + ReLU."""
    N, H, W, Cin = x_nhwc.shape
    Cout = w_mat.shape[1]
    a = im2col_3x3(x_nhwc)                                    # (N*H*W, 9*Cin) bf16
    out = matmul_bias_act(a, w_mat, bias, apply_relu=True)    # (N*H*W, Cout) bf16
    return out.reshape(N, H, W, Cout)


# ----------------------------------------------------------------------------
# Parameters: PyTorch-layout init + one-time kernel-ready preparation
# ----------------------------------------------------------------------------
def init_params(key):
    """Deterministic synthetic params in PyTorch layout (conv (Cout,Cin,3,3),
    linear weights stored (in_features, out_features), NCHW flatten order)."""
    ks = jax.random.split(key, 12)
    s = 0.05
    return {
        "conv1_w": jax.random.normal(ks[0], (32, 3, 3, 3), jnp.float32) * s,
        "conv1_b": jax.random.normal(ks[1], (32,), jnp.float32) * s,
        "conv2_w": jax.random.normal(ks[2], (64, 32, 3, 3), jnp.float32) * s,
        "conv2_b": jax.random.normal(ks[3], (64,), jnp.float32) * s,
        "conv3_w": jax.random.normal(ks[4], (256, 64, 3, 3), jnp.float32) * s,
        "conv3_b": jax.random.normal(ks[5], (256,), jnp.float32) * s,
        "fc1_w": jax.random.normal(ks[6], (4 * 4 * 256, 512), jnp.float32) * s,
        "fc1_b": jax.random.normal(ks[7], (512,), jnp.float32) * s,
        "fc2_w": jax.random.normal(ks[8], (512, 256), jnp.float32) * s,
        "fc2_b": jax.random.normal(ks[9], (256,), jnp.float32) * s,
        "fc3_w": jax.random.normal(ks[10], (256, NUM_CLASSES), jnp.float32) * s,
        "fc3_b": jax.random.normal(ks[11], (NUM_CLASSES,), jnp.float32) * s,
    }


def prepare_params(p):
    """One-time conversion of PyTorch-layout params to kernel-ready params:
      * conv weights -> (9*Cin, Cout) matmul layout (row order (kh, kw, cin)), bf16
      * fc1 rows permuted from NCHW-flatten (c,h,w) to NHWC-flatten (h,w,c) order
      * FC weights bf16 (f32 accumulation in-kernel); fc3 padded to 128 cols
      * all biases stay f32
    """
    C, H, W = 256, 4, 4  # conv stack output: (N, 4, 4, 256) NHWC == 4*4*256 features
    out = {}
    for i in (1, 2, 3):
        w = p[f"conv{i}_w"]                       # (Cout, Cin, 3, 3)
        cin, cout = w.shape[1], w.shape[0]
        out[f"conv{i}_w"] = (jnp.transpose(w, (2, 3, 1, 0))
                             .reshape(9 * cin, cout).astype(jnp.bfloat16))
        out[f"conv{i}_b"] = p[f"conv{i}_b"]

    # fc1: rows are indexed c*H*W + h*W + w (PyTorch NCHW flatten). Re-order to
    # h*W*C + w*C + c so it consumes the NHWC flatten directly.
    w1 = p["fc1_w"].reshape(C, H, W, -1).transpose(1, 2, 0, 3).reshape(H * W * C, -1)
    out["fc1_w"] = w1.astype(jnp.bfloat16)
    out["fc1_b"] = p["fc1_b"]
    out["fc2_w"] = p["fc2_w"].astype(jnp.bfloat16)
    out["fc2_b"] = p["fc2_b"]

    n3 = p["fc3_w"].shape[1]
    pad = (-n3) % 128                             # 10 -> 128: unmasked stores
    out["fc3_w"] = jnp.pad(p["fc3_w"], ((0, 0), (0, pad))).astype(jnp.bfloat16)
    out["fc3_b"] = jnp.pad(p["fc3_b"], (0, pad))
    return out


# ----------------------------------------------------------------------------
# Forward pass (mirrors CNNWithFullyConnected.forward)
# ----------------------------------------------------------------------------
def forward(params, x):
    # x.view(-1, 3, 32, 32) -- input arrives NCHW
    x = x.reshape(-1, 3, 32, 32)
    x = jnp.transpose(x, (0, 2, 3, 1)).astype(jnp.bfloat16)      # NCHW -> NHWC, bf16

    x = conv3x3_relu(x, params["conv1_w"], params["conv1_b"])    # (N,32,32,32)
    x = maxpool2x2(x)                                            # (N,16,16,32)
    x = conv3x3_relu(x, params["conv2_w"], params["conv2_b"])    # (N,16,16,64)
    x = maxpool2x2(x)                                            # (N,8,8,64)
    x = conv3x3_relu(x, params["conv3_w"], params["conv3_b"])    # (N,8,8,256)
    x = maxpool2x2(x)                                            # (N,4,4,256)

    # NHWC flatten; fc1_w rows were permuted at prep time to match PyTorch's
    # NCHW flatten semantics, so no runtime transpose is needed here.
    n = x.shape[0]
    x = x.reshape(n, -1)                                         # (N, 4096) bf16

    out = fused_fc(x, params["fc1_w"], params["fc1_b"],
                   params["fc2_w"], params["fc2_b"],
                   params["fc3_w"], params["fc3_b"])             # (N, 128) f32
    return out[:, :NUM_CLASSES]                                  # (N, num_classes)


if __name__ == "__main__":
    key = jax.random.PRNGKey(0)
    pkey, xkey = jax.random.split(key)
    params = prepare_params(init_params(pkey))
    x = jax.random.normal(xkey, (2, 3, 32, 32), jnp.float32)

    fwd = jax.jit(forward)
    out = jax.block_until_ready(fwd(params, x))
    assert out.shape == (2, NUM_CLASSES), out.shape
    assert out.dtype == jnp.float32
    print("KERNEL_OK")
</pallas_src>

<mosaic_0001>
module attributes {stable_mosaic.version = 11 : i64} {
  func.func @_matmul_bias_act_kernel(%arg0: i32, %arg1: memref<1024x27xbf16, #tpu.memory_space<vmem>>, %arg2: memref<27x32xbf16, #tpu.memory_space<vmem>>, %arg3: memref<1x32xf32, #tpu.memory_space<vmem>>, %arg4: memref<1024x32xbf16, #tpu.memory_space<vmem>>) attributes {dimension_semantics = [#tpu.dimension_semantics<parallel>], iteration_bounds = array<i64: 2>, scalar_prefetch = 0 : i64, scratch_operands = 0 : i64, tpu.core_type = #tpu.core_type<tc>, window_params = [{transform_indices = @transform_0, window_bounds = array<i64: 1024, 27>}, {pipeline_mode = #tpu.pipeline_mode<synchronous>, transform_indices = @transform_1, window_bounds = array<i64: 27, 32>}, {pipeline_mode = #tpu.pipeline_mode<synchronous>, transform_indices = @transform_2, window_bounds = array<i64: 1, 32>}, {transform_indices = @transform_3, window_bounds = array<i64: 1024, 32>}]} {
    %c0 = arith.constant 0 : index
    %c0_0 = arith.constant 0 : index
    %0 = vector.load %arg1[%c0, %c0_0] : memref<1024x27xbf16, #tpu.memory_space<vmem>>, vector<1024x27xbf16>
    %c0_1 = arith.constant 0 : index
    %c0_2 = arith.constant 0 : index
    %1 = vector.load %arg2[%c0_1, %c0_2] : memref<27x32xbf16, #tpu.memory_space<vmem>>, vector<27x32xbf16>
    %cst = arith.constant dense<0.000000e+00> : vector<1024x32xf32>
    %2 = tpu.matmul %0, %1, %cst {dimension_numbers = #tpu.dot_dimension_numbers<[1], [0], [0], [1], [0, 0, 1, 1], [], []>} : vector<1024x27xbf16>, vector<27x32xbf16>, vector<1024x32xf32> -> vector<1024x32xf32>
    %c0_3 = arith.constant 0 : index
    %c0_4 = arith.constant 0 : index
    %3 = vector.load %arg3[%c0_3, %c0_4] : memref<1x32xf32, #tpu.memory_space<vmem>>, vector<1x32xf32>
    %4 = vector.broadcast %3 : vector<1x32xf32> to vector<1024x32xf32>
    %5 = arith.addf %2, %4 : vector<1024x32xf32>
    %cst_5 = arith.constant 0.000000e+00 : f32
    %6 = vector.broadcast %cst_5 : f32 to vector<1024x32xf32>
    %7 = arith.maximumf %5, %6 : vector<1024x32xf32>
    %8 = arith.truncf %7 : vector<1024x32xf32> to vector<1024x32xbf16>
    %c0_6 = arith.constant 0 : index
    %c0_7 = arith.constant 0 : index
    %9 = vector.load %arg4[%c0_6, %c0_7] : memref<1024x32xbf16, #tpu.memory_space<vmem>>, vector<1024x32xbf16>
    tpu.vector_store %arg4[%c0_6, %c0_7], %8 {strides = array<i32>} : memref<1024x32xbf16, #tpu.memory_space<vmem>>, vector<1024x32xbf16>,
    return
  }
  func.func @transform_0(%arg0: i32) -> (i32, i32) {
    %c0_i32 = arith.constant 0 : i32
    %c0_i32_0 = arith.constant 0 : i32
    return %arg0, %c0_i32 : i32, i32
  }
  func.func @transform_1(%arg0: i32) -> (i32, i32) {
    %c0_i32 = arith.constant 0 : i32
    %c0_i32_0 = arith.constant 0 : i32
    %c0_i32_1 = arith.constant 0 : i32
    return %c0_i32, %c0_i32_0 : i32, i32
  }
  func.func @transform_2(%arg0: i32) -> (i32, i32) {
    %c0_i32 = arith.constant 0 : i32
    %c0_i32_0 = arith.constant 0 : i32
    %c0_i32_1 = arith.constant 0 : i32
    return %c0_i32, %c0_i32_0 : i32, i32
  }
  func.func @transform_3(%arg0: i32) -> (i32, i32) {
    %c0_i32 = arith.constant 0 : i32
    %c0_i32_0 = arith.constant 0 : i32
    return %arg0, %c0_i32 : i32, i32
  }
}

module attributes {stable_mosaic.version = 11 : i64} {
  func.func @_maxpool_kernel(%arg0: i32, %arg1: memref<32x2048xbf16, #tpu.memory_space<vmem>>, %arg2: memref<32x512xbf16, #tpu.memory_space<vmem>>) attributes {dimension_semantics = [#tpu.dimension_semantics<parallel>], iteration_bounds = array<i64: 1>, scalar_prefetch = 0 : i64, scratch_operands = 0 : i64, tpu.core_type = #tpu.core_type<tc>, window_params = [{transform_indices = @transform_0, window_bounds = array<i64: 32, 2048>}, {transform_indices = @transform_1, window_bounds = array<i64: 32, 512>}]} {
    %c0 = arith.constant 0 : index
    %c0_0 = arith.constant 0 : index
    %0 = vector.load %arg1[%c0, %c0_0] : memref<32x2048xbf16, #tpu.memory_space<vmem>>, vector<32x2048xbf16>
    %1 = vector.extract_strided_slice %0 {offsets = [0, 0], sizes = [32, 1024], strides = [1, 1]} : vector<32x2048xbf16> to vector<32x1024xbf16>
    %2 = vector.extract_strided_slice %0 {offsets = [0, 1024], sizes = [32, 1024], strides = [1, 1]} : vector<32x2048xbf16> to vector<32x1024xbf16>
    %3 = arith.maximumf %1, %2 : vector<32x1024xbf16>
    %4 = vector.extract_strided_slice %3 {offsets = [0, 0], sizes = [32, 32], strides = [1, 1]} : vector<32x1024xbf16> to vector<32x32xbf16>
    %5 = vector.extract_strided_slice %3 {offsets = [0, 32], sizes = [32, 32], strides = [1, 1]} : vector<32x1024xbf16> to vector<32x32xbf16>
    %6 = arith.maximumf %4, %5 : vector<32x32xbf16>
    %7 = vector.extract_strided_slice %3 {offsets = [0, 64], sizes = [32, 32], strides = [1, 1]} : vector<32x1024xbf16> to vector<32x32xbf16>
    %8 = vector.extract_strided_slice %3 {offsets = [0, 96], sizes = [32, 32], strides = [1, 1]} : vector<32x1024xbf16> to vector<32x32xbf16>
    %9 = arith.maximumf %7, %8 : vector<32x32xbf16>
    %10 = vector.extract_strided_slice %3 {offsets = [0, 128], sizes = [32, 32], strides = [1, 1]} : vector<32x1024xbf16> to vector<32x32xbf16>
    %11 = vector.extract_strided_slice %3 {offsets = [0, 160], sizes = [32, 32], strides = [1, 1]} : vector<32x1024xbf16> to vector<32x32xbf16>
    %12 = arith.maximumf %10, %11 : vector<32x32xbf16>
    %13 = vector.extract_strided_slice %3 {offsets = [0, 192], sizes = [32, 32], strides = [1, 1]} : vector<32x1024xbf16> to vector<32x32xbf16>
    %14 = vector.extract_strided_slice %3 {offsets = [0, 224], sizes = [32, 32], strides = [1, 1]} : vector<32x1024xbf16> to vector<32x32xbf16>
    %15 = arith.maximumf %13, %14 : vector<32x32xbf16>
    %16 = vector.extract_strided_slice %3 {offsets = [0, 256], sizes = [32, 32], strides = [1, 1]} : vector<32x1024xbf16> to vector<32x32xbf16>
    %17 = vector.extract_strided_slice %3 {offsets = [0, 288], sizes = [32, 32], strides = [1, 1]} : vector<32x1024xbf16> to vector<32x32xbf16>
    %18 = arith.maximumf %16, %17 : vector<32x32xbf16>
    %19 = vector.extract_strided_slice %3 {offsets = [0, 320], sizes = [32, 32], strides = [1, 1]} : vector<32x1024xbf16> to vector<32x32xbf16>
    %20 = vector.extract_strided_slice %3 {offsets = [0, 352], sizes = [32, 32], strides = [1, 1]} : vector<32x1024xbf16> to vector<32x32xbf16>
    %21 = arith.maximumf %19, %20 : vector<32x32xbf16>
    %22 = vector.extract_strided_slice %3 {offsets = [0, 384], sizes = [32, 32], strides = [1, 1]} : vector<32x1024xbf16> to vector<32x32xbf16>
    %23 = vector.extract_strided_slice %3 {offsets = [0, 416], sizes = [32, 32], strides = [1, 1]} : vector<32x1024xbf16> to vector<32x32xbf16>
    %24 = arith.maximumf %22, %23 : vector<32x32xbf16>
    %25 = vector.extract_strided_slice %3 {offsets = [0, 448], sizes = [32, 32], strides = [1, 1]} : vector<32x1024xbf16> to vector<32x32xbf16>
    %26 = vector.extract_strided_slice %3 {offsets = [0, 480], sizes = [32, 32], strides = [1, 1]} : vector<32x1024xbf16> to vector<32x32xbf16>
    %27 = arith.maximumf %25, %26 : vector<32x32xbf16>
    %28 = vector.extract_strided_slice %3 {offsets = [0, 512], sizes = [32, 32], strides = [1, 1]} : vector<32x1024xbf16> to vector<32x32xbf16>
    %29 = vector.extract_strided_slice %3 {offsets = [0, 544], sizes = [32, 32], strides = [1, 1]} : vector<32x1024xbf16> to vector<32x32xbf16>
    %30 = arith.maximumf %28, %29 : vector<32x32xbf16>
    %31 = vector.extract_strided_slice %3 {offsets = [0, 576], sizes = [32, 32], strides = [1, 1]} : vector<32x1024xbf16> to vector<32x32xbf16>
    %32 = vector.extract_strided_slice %3 {offsets = [0, 608], sizes = [32, 32], strides = [1, 1]} : vector<32x1024xbf16> to vector<32x32xbf16>
    %33 = arith.maximumf %31, %32 : vector<32x32xbf16>
    %34 = vector.extract_strided_slice %3 {offsets = [0, 640], sizes = [32, 32], strides = [1, 1]} : vector<32x1024xbf16> to vector<32x32xbf16>
    %35 = vector.extract_strided_slice %3 {offsets = [0, 672], sizes = [32, 32], strides = [1, 1]} : vector<32x1024xbf16> to vector<32x32xbf16>
    %36 = arith.maximumf %34, %35 : vector<32x32xbf16>
    %37 = vector.extract_strided_slice %3 {offsets = [0, 704], sizes = [32, 32], strides = [1, 1]} : vector<32x1024xbf16> to vector<32x32xbf16>
    %38 = vector.extract_strided_slice %3 {offsets = [0, 736], sizes = [32, 32], strides = [1, 1]} : vector<32x1024xbf16> to vector<32x32xbf16>
    %39 = arith.maximumf %37, %38 : vector<32x32xbf16>
    %40 = vector.extract_strided_slice %3 {offsets = [0, 768], sizes = [32, 32], strides = [1, 1]} : vector<32x1024xbf16> to vector<32x32xbf16>
    %41 = vector.extract_strided_slice %3 {offsets = [0, 800], sizes = [32, 32], strides = [1, 1]} : vector<32x1024xbf16> to vector<32x32xbf16>
    %42 = arith.maximumf %40, %41 : vector<32x32xbf16>
    %43 = vector.extract_strided_slice %3 {offsets = [0, 832], sizes = [32, 32], strides = [1, 1]} : vector<32x1024xbf16> to vector<32x32xbf16>
    %44 = vector.extract_strided_slice %3 {offsets = [0, 864], sizes = [32, 32], strides = [1, 1]} : vector<32x1024xbf16> to vector<32x32xbf16>
    %45 = arith.maximumf %43, %44 : vector<32x32xbf16>
    %46 = vector.extract_strided_slice %3 {offsets = [0, 896], sizes = [32, 32], strides = [1, 1]} : vector<32x1024xbf16> to vector<32x32xbf16>
    %47 = vector.extract_strided_slice %3 {offsets = [0, 928], sizes = [32, 32], strides = [1, 1]} : vector<32x1024xbf16> to vector<32x32xbf16>
    %48 = arith.maximumf %46, %47 : vector<32x32xbf16>
    %49 = vector.extract_strided_slice %3 {offsets = [0, 960], sizes = [32, 32], strides = [1, 1]} : vector<32x1024xbf16> to vector<32x32xbf16>
    %50 = vector.extract_strided_slice %3 {offsets = [0, 992], sizes = [32, 32], strides = [1, 1]} : vector<32x1024xbf16> to vector<32x32xbf16>
    %51 = arith.maximumf %49, %50 : vector<32x32xbf16>
    %52 = tpu.concatenate %6, %9, %12, %15, %18, %21, %24, %27, %30, %33, %36, %39, %42, %45, %48, %51 in 1 : vector<32x32xbf16>, vector<32x32xbf16>, vector<32x32xbf16>, vector<32x32xbf16>, vector<32x32xbf16>, vector<32x32xbf16>, vector<32x32xbf16>, vector<32x32xbf16>, vector<32x32xbf16>, vector<32x32xbf16>, vector<32x32xbf16>, vector<32x32xbf16>, vector<32x32xbf16>, vector<32x32xbf16>, vector<32x32xbf16>, vector<32x32xbf16> -> vector<32x512xbf16>
    %c0_1 = arith.constant 0 : index
    %c0_2 = arith.constant 0 : index
    %53 = vector.load %arg2[%c0_1, %c0_2] : memref<32x512xbf16, #tpu.memory_space<vmem>>, vector<32x512xbf16>
    tpu.vector_store %arg2[%c0_1, %c0_2], %52 {strides = array<i32>} : memref<32x512xbf16, #tpu.memory_space<vmem>>, vector<32x512xbf16>,
    return
  }
  func.func @transform_0(%arg0: i32) -> (i32, i32) {
    %c0_i32 = arith.constant 0 : i32
    %c0_i32_0 = arith.constant 0 : i32
    return %arg0, %c0_i32 : i32, i32
  }
  func.func @transform_1(%arg0: i32) -> (i32, i32) {
    %c0_i32 = arith.constant 0 : i32
    %c0_i32_0 = arith.constant 0 : i32
    return %arg0, %c0_i32 : i32, i32
  }
}

module attributes {stable_mosaic.version = 11 : i64} {
  func.func @_matmul_bias_act_kernel(%arg0: i32, %arg1: memref<512x288xbf16, #tpu.memory_space<vmem>>, %arg2: memref<288x64xbf16, #tpu.memory_space<vmem>>, %arg3: memref<1x64xf32, #tpu.memory_space<vmem>>, %arg4: memref<512x64xbf16, #tpu.memory_space<vmem>>) attributes {dimension_semantics = [#tpu.dimension_semantics<parallel>], iteration_bounds = array<i64: 1>, scalar_prefetch = 0 : i64, scratch_operands = 0 : i64, tpu.core_type = #tpu.core_type<tc>, window_params = [{transform_indices = @transform_0, window_bounds = array<i64: 512, 288>}, {pipeline_mode = #tpu.pipeline_mode<synchronous>, transform_indices = @transform_1, window_bounds = array<i64: 288, 64>}, {pipeline_mode = #tpu.pipeline_mode<synchronous>, transform_indices = @transform_2, window_bounds = array<i64: 1, 64>}, {transform_indices = @transform_3, window_bounds = array<i64: 512, 64>}]} {
    %c0 = arith.constant 0 : index
    %c0_0 = arith.constant 0 : index
    %0 = vector.load %arg1[%c0, %c0_0] : memref<512x288xbf16, #tpu.memory_space<vmem>>, vector<512x288xbf16>
    %c0_1 = arith.constant 0 : index
    %c0_2 = arith.constant 0 : index
    %1 = vector.load %arg2[%c0_1, %c0_2] : memref<288x64xbf16, #tpu.memory_space<vmem>>, vector<288x64xbf16>
    %cst = arith.constant dense<0.000000e+00> : vector<512x64xf32>
    %2 = tpu.matmul %0, %1, %cst {dimension_numbers = #tpu.dot_dimension_numbers<[1], [0], [0], [1], [0, 0, 1, 1], [], []>} : vector<512x288xbf16>, vector<288x64xbf16>, vector<512x64xf32> -> vector<512x64xf32>
    %c0_3 = arith.constant 0 : index
    %c0_4 = arith.constant 0 : index
    %3 = vector.load %arg3[%c0_3, %c0_4] : memref<1x64xf32, #tpu.memory_space<vmem>>, vector<1x64xf32>
    %4 = vector.broadcast %3 : vector<1x64xf32> to vector<512x64xf32>
    %5 = arith.addf %2, %4 : vector<512x64xf32>
    %cst_5 = arith.constant 0.000000e+00 : f32
    %6 = vector.broadcast %cst_5 : f32 to vector<512x64xf32>
    %7 = arith.maximumf %5, %6 : vector<512x64xf32>
    %8 = arith.truncf %7 : vector<512x64xf32> to vector<512x64xbf16>
    %c0_6 = arith.constant 0 : index
    %c0_7 = arith.constant 0 : index
    %9 = vector.load %arg4[%c0_6, %c0_7] : memref<512x64xbf16, #tpu.memory_space<vmem>>, vector<512x64xbf16>
    tpu.vector_store %arg4[%c0_6, %c0_7], %8 {strides = array<i32>} : memref<512x64xbf16, #tpu.memory_space<vmem>>, vector<512x64xbf16>,
    return
  }
  func.func @transform_0(%arg0: i32) -> (i32, i32) {
    %c0_i32 = arith.constant 0 : i32
    %c0_i32_0 = arith.constant 0 : i32
    return %arg0, %c0_i32 : i32, i32
  }
  func.func @transform_1(%arg0: i32) -> (i32, i32) {
    %c0_i32 = arith.constant 0 : i32
    %c0_i32_0 = arith.constant 0 : i32
    %c0_i32_1 = arith.constant 0 : i32
    return %c0_i32, %c0_i32_0 : i32, i32
  }
  func.func @transform_2(%arg0: i32) -> (i32, i32) {
    %c0_i32 = arith.constant 0 : i32
    %c0_i32_0 = arith.constant 0 : i32
    %c0_i32_1 = arith.constant 0 : i32
    return %c0_i32, %c0_i32_0 : i32, i32
  }
  func.func @transform_3(%arg0: i32) -> (i32, i32) {
    %c0_i32 = arith.constant 0 : i32
    %c0_i32_0 = arith.constant 0 : i32
    return %arg0, %c0_i32 : i32, i32
  }
}

module attributes {stable_mosaic.version = 11 : i64} {
  func.func @_maxpool_kernel(%arg0: i32, %arg1: memref<16x2048xbf16, #tpu.memory_space<vmem>>, %arg2: memref<16x512xbf16, #tpu.memory_space<vmem>>) attributes {dimension_semantics = [#tpu.dimension_semantics<parallel>], iteration_bounds = array<i64: 1>, scalar_prefetch = 0 : i64, scratch_operands = 0 : i64, tpu.core_type = #tpu.core_type<tc>, window_params = [{transform_indices = @transform_0, window_bounds = array<i64: 16, 2048>}, {transform_indices = @transform_1, window_bounds = array<i64: 16, 512>}]} {
    %c0 = arith.constant 0 : index
    %c0_0 = arith.constant 0 : index
    %0 = vector.load %arg1[%c0, %c0_0] : memref<16x2048xbf16, #tpu.memory_space<vmem>>, vector<16x2048xbf16>
    %1 = vector.extract_strided_slice %0 {offsets = [0, 0], sizes = [16, 1024], strides = [1, 1]} : vector<16x2048xbf16> to vector<16x1024xbf16>
    %2 = vector.extract_strided_slice %0 {offsets = [0, 1024], sizes = [16, 1024], strides = [1, 1]} : vector<16x2048xbf16> to vector<16x1024xbf16>
    %3 = arith.maximumf %1, %2 : vector<16x1024xbf16>
    %4 = vector.extract_strided_slice %3 {offsets = [0, 0], sizes = [16, 64], strides = [1, 1]} : vector<16x1024xbf16> to vector<16x64xbf16>
    %5 = vector.extract_strided_slice %3 {offsets = [0, 64], sizes = [16, 64], strides = [1, 1]} : vector<16x1024xbf16> to vector<16x64xbf16>
    %6 = arith.maximumf %4, %5 : vector<16x64xbf16>
    %7 = vector.extract_strided_slice %3 {offsets = [0, 128], sizes = [16, 64], strides = [1, 1]} : vector<16x1024xbf16> to vector<16x64xbf16>
    %8 = vector.extract_strided_slice %3 {offsets = [0, 192], sizes = [16, 64], strides = [1, 1]} : vector<16x1024xbf16> to vector<16x64xbf16>
    %9 = arith.maximumf %7, %8 : vector<16x64xbf16>
    %10 = vector.extract_strided_slice %3 {offsets = [0, 256], sizes = [16, 64], strides = [1, 1]} : vector<16x1024xbf16> to vector<16x64xbf16>
    %11 = vector.extract_strided_slice %3 {offsets = [0, 320], sizes = [16, 64], strides = [1, 1]} : vector<16x1024xbf16> to vector<16x64xbf16>
    %12 = arith.maximumf %10, %11 : vector<16x64xbf16>
    %13 = vector.extract_strided_slice %3 {offsets = [0, 384], sizes = [16, 64], strides = [1, 1]} : vector<16x1024xbf16> to vector<16x64xbf16>
    %14 = vector.extract_strided_slice %3 {offsets = [0, 448], sizes = [16, 64], strides = [1, 1]} : vector<16x1024xbf16> to vector<16x64xbf16>
    %15 = arith.maximumf %13, %14 : vector<16x64xbf16>
    %16 = vector.extract_strided_slice %3 {offsets = [0, 512], sizes = [16, 64], strides = [1, 1]} : vector<16x1024xbf16> to vector<16x64xbf16>
    %17 = vector.extract_strided_slice %3 {offsets = [0, 576], sizes = [16, 64], strides = [1, 1]} : vector<16x1024xbf16> to vector<16x64xbf16>
    %18 = arith.maximumf %16, %17 : vector<16x64xbf16>
    %19 = vector.extract_strided_slice %3 {offsets = [0, 640], sizes = [16, 64], strides = [1, 1]} : vector<16x1024xbf16> to vector<16x64xbf16>
    %20 = vector.extract_strided_slice %3 {offsets = [0, 704], sizes = [16, 64], strides = [1, 1]} : vector<16x1024xbf16> to vector<16x64xbf16>
    %21 = arith.maximumf %19, %20 : vector<16x64xbf16>
    %22 = vector.extract_strided_slice %3 {offsets = [0, 768], sizes = [16, 64], strides = [1, 1]} : vector<16x1024xbf16> to vector<16x64xbf16>
    %23 = vector.extract_strided_slice %3 {offsets = [0, 832], sizes = [16, 64], strides = [1, 1]} : vector<16x1024xbf16> to vector<16x64xbf16>
    %24 = arith.maximumf %22, %23 : vector<16x64xbf16>
    %25 = vector.extract_strided_slice %3 {offsets = [0, 896], sizes = [16, 64], strides = [1, 1]} : vector<16x1024xbf16> to vector<16x64xbf16>
    %26 = vector.extract_strided_slice %3 {offsets = [0, 960], sizes = [16, 64], strides = [1, 1]} : vector<16x1024xbf16> to vector<16x64xbf16>
    %27 = arith.maximumf %25, %26 : vector<16x64xbf16>
    %28 = tpu.concatenate %6, %9, %12, %15, %18, %21, %24, %27 in 1 : vector<16x64xbf16>, vector<16x64xbf16>, vector<16x64xbf16>, vector<16x64xbf16>, vector<16x64xbf16>, vector<16x64xbf16>, vector<16x64xbf16>, vector<16x64xbf16> -> vector<16x512xbf16>
    %c0_1 = arith.constant 0 : index
    %c0_2 = arith.constant 0 : index
    %29 = vector.load %arg2[%c0_1, %c0_2] : memref<16x512xbf16, #tpu.memory_space<vmem>>, vector<16x512xbf16>
    tpu.vector_store %arg2[%c0_1, %c0_2], %28 {strides = array<i32>} : memref<16x512xbf16, #tpu.memory_space<vmem>>, vector<16x512xbf16>,
    return
  }
  func.func @transform_0(%arg0: i32) -> (i32, i32) {
    %c0_i32 = arith.constant 0 : i32
    %c0_i32_0 = arith.constant 0 : i32
    return %arg0, %c0_i32 : i32, i32
  }
  func.func @transform_1(%arg0: i32) -> (i32, i32) {
    %c0_i32 = arith.constant 0 : i32
    %c0_i32_0 = arith.constant 0 : i32
    return %arg0, %c0_i32 : i32, i32
  }
}

module attributes {stable_mosaic.version = 11 : i64} {
  func.func @_matmul_bias_act_kernel(%arg0: i32, %arg1: memref<128x576xbf16, #tpu.memory_space<vmem>>, %arg2: memref<576x256xbf16, #tpu.memory_space<vmem>>, %arg3: memref<1x256xf32, #tpu.memory_space<vmem>>, %arg4: memref<128x256xbf16, #tpu.memory_space<vmem>>) attributes {dimension_semantics = [#tpu.dimension_semantics<parallel>], iteration_bounds = array<i64: 1>, scalar_prefetch = 0 : i64, scratch_operands = 0 : i64, tpu.core_type = #tpu.core_type<tc>, window_params = [{transform_indices = @transform_0, window_bounds = array<i64: 128, 576>}, {pipeline_mode = #tpu.pipeline_mode<synchronous>, transform_indices = @transform_1, window_bounds = array<i64: 576, 256>}, {pipeline_mode = #tpu.pipeline_mode<synchronous>, transform_indices = @transform_2, window_bounds = array<i64: 1, 256>}, {transform_indices = @transform_3, window_bounds = array<i64: 128, 256>}]} {
    %c0 = arith.constant 0 : index
    %c0_0 = arith.constant 0 : index
    %0 = vector.load %arg1[%c0, %c0_0] : memref<128x576xbf16, #tpu.memory_space<vmem>>, vector<128x576xbf16>
    %c0_1 = arith.constant 0 : index
    %c0_2 = arith.constant 0 : index
    %1 = vector.load %arg2[%c0_1, %c0_2] : memref<576x256xbf16, #tpu.memory_space<vmem>>, vector<576x256xbf16>
    %cst = arith.constant dense<0.000000e+00> : vector<128x256xf32>
    %2 = tpu.matmul %0, %1, %cst {dimension_numbers = #tpu.dot_dimension_numbers<[1], [0], [0], [1], [0, 0, 1, 1], [], []>} : vector<128x576xbf16>, vector<576x256xbf16>, vector<128x256xf32> -> vector<128x256xf32>
    %c0_3 = arith.constant 0 : index
    %c0_4 = arith.constant 0 : index
    %3 = vector.load %arg3[%c0_3, %c0_4] : memref<1x256xf32, #tpu.memory_space<vmem>>, vector<1x256xf32>
    %4 = vector.broadcast %3 : vector<1x256xf32> to vector<128x256xf32>
    %5 = arith.addf %2, %4 : vector<128x256xf32>
    %cst_5 = arith.constant 0.000000e+00 : f32
    %6 = vector.broadcast %cst_5 : f32 to vector<128x256xf32>
    %7 = arith.maximumf %5, %6 : vector<128x256xf32>
    %8 = arith.truncf %7 : vector<128x256xf32> to vector<128x256xbf16>
    %c0_6 = arith.constant 0 : index
    %c0_7 = arith.constant 0 : index
    %9 = vector.load %arg4[%c0_6, %c0_7] : memref<128x256xbf16, #tpu.memory_space<vmem>>, vector<128x256xbf16>
    tpu.vector_store %arg4[%c0_6, %c0_7], %8 {strides = array<i32>} : memref<128x256xbf16, #tpu.memory_space<vmem>>, vector<128x256xbf16>,
    return
  }
  func.func @transform_0(%arg0: i32) -> (i32, i32) {
    %c0_i32 = arith.constant 0 : i32
    %c0_i32_0 = arith.constant 0 : i32
    return %arg0, %c0_i32 : i32, i32
  }
  func.func @transform_1(%arg0: i32) -> (i32, i32) {
    %c0_i32 = arith.constant 0 : i32
    %c0_i32_0 = arith.constant 0 : i32
    %c0_i32_1 = arith.constant 0 : i32
    return %c0_i32, %c0_i32_0 : i32, i32
  }
  func.func @transform_2(%arg0: i32) -> (i32, i32) {
    %c0_i32 = arith.constant 0 : i32
    %c0_i32_0 = arith.constant 0 : i32
    %c0_i32_1 = arith.constant 0 : i32
    return %c0_i32, %c0_i32_0 : i32, i32
  }
  func.func @transform_3(%arg0: i32) -> (i32, i32) {
    %c0_i32 = arith.constant 0 : i32
    %c0_i32_0 = arith.constant 0 : i32
    return %arg0, %c0_i32 : i32, i32
  }
}

module attributes {stable_mosaic.version = 11 : i64} {
  func.func @_maxpool_kernel(%arg0: i32, %arg1: memref<8x4096xbf16, #tpu.memory_space<vmem>>, %arg2: memref<8x1024xbf16, #tpu.memory_space<vmem>>) attributes {dimension_semantics = [#tpu.dimension_semantics<parallel>], iteration_bounds = array<i64: 1>, scalar_prefetch = 0 : i64, scratch_operands = 0 : i64, tpu.core_type = #tpu.core_type<tc>, window_params = [{transform_indices = @transform_0, window_bounds = array<i64: 8, 4096>}, {transform_indices = @transform_1, window_bounds = array<i64: 8, 1024>}]} {
    %c0 = arith.constant 0 : index
    %c0_0 = arith.constant 0 : index
    %0 = vector.load %arg1[%c0, %c0_0] : memref<8x4096xbf16, #tpu.memory_space<vmem>>, vector<8x4096xbf16>
    %1 = vector.extract_strided_slice %0 {offsets = [0, 0], sizes = [8, 2048], strides = [1, 1]} : vector<8x4096xbf16> to vector<8x2048xbf16>
    %2 = vector.extract_strided_slice %0 {offsets = [0, 2048], sizes = [8, 2048], strides = [1, 1]} : vector<8x4096xbf16> to vector<8x2048xbf16>
    %3 = arith.maximumf %1, %2 : vector<8x2048xbf16>
    %4 = vector.extract_strided_slice %3 {offsets = [0, 0], sizes = [8, 256], strides = [1, 1]} : vector<8x2048xbf16> to vector<8x256xbf16>
    %5 = vector.extract_strided_slice %3 {offsets = [0, 256], sizes = [8, 256], strides = [1, 1]} : vector<8x2048xbf16> to vector<8x256xbf16>
    %6 = arith.maximumf %4, %5 : vector<8x256xbf16>
    %7 = vector.extract_strided_slice %3 {offsets = [0, 512], sizes = [8, 256], strides = [1, 1]} : vector<8x2048xbf16> to vector<8x256xbf16>
    %8 = vector.extract_strided_slice %3 {offsets = [0, 768], sizes = [8, 256], strides = [1, 1]} : vector<8x2048xbf16> to vector<8x256xbf16>
    %9 = arith.maximumf %7, %8 : vector<8x256xbf16>
    %10 = vector.extract_strided_slice %3 {offsets = [0, 1024], sizes = [8, 256], strides = [1, 1]} : vector<8x2048xbf16> to vector<8x256xbf16>
    %11 = vector.extract_strided_slice %3 {offsets = [0, 1280], sizes = [8, 256], strides = [1, 1]} : vector<8x2048xbf16> to vector<8x256xbf16>
    %12 = arith.maximumf %10, %11 : vector<8x256xbf16>
    %13 = vector.extract_strided_slice %3 {offsets = [0, 1536], sizes = [8, 256], strides = [1, 1]} : vector<8x2048xbf16> to vector<8x256xbf16>
    %14 = vector.extract_strided_slice %3 {offsets = [0, 1792], sizes = [8, 256], strides = [1, 1]} : vector<8x2048xbf16> to vector<8x256xbf16>
    %15 = arith.maximumf %13, %14 : vector<8x256xbf16>
    %16 = tpu.concatenate %6, %9, %12, %15 in 1 : vector<8x256xbf16>, vector<8x256xbf16>, vector<8x256xbf16>, vector<8x256xbf16> -> vector<8x1024xbf16>
    %c0_1 = arith.constant 0 : index
    %c0_2 = arith.constant 0 : index
    %17 = vector.load %arg2[%c0_1, %c0_2] : memref<8x1024xbf16, #tpu.memory_space<vmem>>, vector<8x1024xbf16>
    tpu.vector_store %arg2[%c0_1, %c0_2], %16 {strides = array<i32>} : memref<8x1024xbf16, #tpu.memory_space<vmem>>, vector<8x1024xbf16>,
    return
  }
  func.func @transform_0(%arg0: i32) -> (i32, i32) {
    %c0_i32 = arith.constant 0 : i32
    %c0_i32_0 = arith.constant 0 : i32
    return %arg0, %c0_i32 : i32, i32
  }
  func.func @transform_1(%arg0: i32) -> (i32, i32) {
    %c0_i32 = arith.constant 0 : i32
    %c0_i32_0 = arith.constant 0 : i32
    return %arg0, %c0_i32 : i32, i32
  }
}

module attributes {stable_mosaic.version = 11 : i64} {
  func.func @_fused_fc_kernel(%arg0: i32, %arg1: i32, %arg2: memref<2x1024xbf16, #tpu.memory_space<vmem>>, %arg3: memref<1024x512xbf16, #tpu.memory_space<vmem>>, %arg4: memref<1x512xf32, #tpu.memory_space<vmem>>, %arg5: memref<512x256xbf16, #tpu.memory_space<vmem>>, %arg6: memref<1x256xf32, #tpu.memory_space<vmem>>, %arg7: memref<256x128xbf16, #tpu.memory_space<vmem>>, %arg8: memref<1x128xf32, #tpu.memory_space<vmem>>, %arg9: memref<2x128xf32, #tpu.memory_space<vmem>>, %arg10: memref<2x512xf32, #tpu.memory_space<vmem>>) attributes {dimension_semantics = [#tpu.dimension_semantics<parallel>, #tpu.dimension_semantics<arbitrary>], iteration_bounds = array<i64: 1, 4>, scalar_prefetch = 0 : i64, scratch_operands = 1 : i64, tpu.core_type = #tpu.core_type<tc>, window_params = [{transform_indices = @transform_0, window_bounds = array<i64: 2, 1024>}, {transform_indices = @transform_1, window_bounds = array<i64: 1024, 512>}, {pipeline_mode = #tpu.pipeline_mode<synchronous>, transform_indices = @transform_2, window_bounds = array<i64: 1, 512>}, {pipeline_mode = #tpu.pipeline_mode<synchronous>, transform_indices = @transform_3, window_bounds = array<i64: 512, 256>}, {pipeline_mode = #tpu.pipeline_mode<synchronous>, transform_indices = @transform_4, window_bounds = array<i64: 1, 256>}, {pipeline_mode = #tpu.pipeline_mode<synchronous>, transform_indices = @transform_5, window_bounds = array<i64: 256, 128>}, {pipeline_mode = #tpu.pipeline_mode<synchronous>, transform_indices = @transform_6, window_bounds = array<i64: 1, 128>}, {transform_indices = @transform_7, window_bounds = array<i64: 2, 128>}]} {
    %c0_i32 = arith.constant 0 : i32
    %0 = arith.cmpi eq, %arg1, %c0_i32 : i32
    %1 = arith.extui %0 : i1 to i32
    %c0_i32_0 = arith.constant 0 : i32
    %2 = arith.cmpi ne, %1, %c0_i32_0 : i32
    scf.if %2 {
      %cst_9 = arith.constant 0.000000e+00 : f32
      %12 = vector.broadcast %cst_9 : f32 to vector<2x512xf32>
      %c0_10 = arith.constant 0 : index
      %c0_11 = arith.constant 0 : index
      %13 = vector.load %arg10[%c0_10, %c0_11] : memref<2x512xf32, #tpu.memory_space<vmem>>, vector<2x512xf32>
      tpu.vector_store %arg10[%c0_10, %c0_11], %12 {strides = array<i32>} : memref<2x512xf32, #tpu.memory_space<vmem>>, vector<2x512xf32>,
    } else {
    }
    %c0 = arith.constant 0 : index
    %c0_1 = arith.constant 0 : index
    %3 = vector.load %arg10[%c0, %c0_1] : memref<2x512xf32, #tpu.memory_space<vmem>>, vector<2x512xf32>
    %c0_2 = arith.constant 0 : index
    %c0_3 = arith.constant 0 : index
    %4 = vector.load %arg2[%c0_2, %c0_3] : memref<2x1024xbf16, #tpu.memory_space<vmem>>, vector<2x1024xbf16>
    %c0_4 = arith.constant 0 : index
    %c0_5 = arith.constant 0 : index
    %5 = vector.load %arg3[%c0_4, %c0_5] : memref<1024x512xbf16, #tpu.memory_space<vmem>>, vector<1024x512xbf16>
    %cst = arith.constant dense<0.000000e+00> : vector<2x512xf32>
    %6 = tpu.matmul %4, %5, %cst {dimension_numbers = #tpu.dot_dimension_numbers<[1], [0], [0], [1], [0, 0, 1, 1], [], []>} : vector<2x1024xbf16>, vector<1024x512xbf16>, vector<2x512xf32> -> vector<2x512xf32>
    %7 = arith.addf %3, %6 : vector<2x512xf32>
    %c0_6 = arith.constant 0 : index
    %c0_7 = arith.constant 0 : index
    %8 = vector.load %arg10[%c0_6, %c0_7] : memref<2x512xf32, #tpu.memory_space<vmem>>, vector<2x512xf32>
    tpu.vector_store %arg10[%c0_6, %c0_7], %7 {strides = array<i32>} : memref<2x512xf32, #tpu.memory_space<vmem>>, vector<2x512xf32>,
    %c3_i32 = arith.constant 3 : i32
    %9 = arith.cmpi eq, %arg1, %c3_i32 : i32
    %10 = arith.extui %9 : i1 to i32
    %c0_i32_8 = arith.constant 0 : i32
    %11 = arith.cmpi ne, %10, %c0_i32_8 : i32
    scf.if %11 {
      %c0_9 = arith.constant 0 : index
      %c0_10 = arith.constant 0 : index
      %12 = vector.load %arg10[%c0_9, %c0_10] : memref<2x512xf32, #tpu.memory_space<vmem>>, vector<2x512xf32>
      %c0_11 = arith.constant 0 : index
      %c0_12 = arith.constant 0 : index
      %13 = vector.load %arg4[%c0_11, %c0_12] : memref<1x512xf32, #tpu.memory_space<vmem>>, vector<1x512xf32>
      %14 = vector.broadcast %13 : vector<1x512xf32> to vector<2x512xf32>
      %15 = arith.addf %12, %14 : vector<2x512xf32>
      %cst_13 = arith.constant 0.000000e+00 : f32
      %16 = vector.broadcast %cst_13 : f32 to vector<2x512xf32>
      %17 = arith.maximumf %15, %16 : vector<2x512xf32>
      %18 = arith.truncf %17 : vector<2x512xf32> to vector<2x512xbf16>
      %c0_14 = arith.constant 0 : index
      %c0_15 = arith.constant 0 : index
      %19 = vector.load %arg5[%c0_14, %c0_15] : memref<512x256xbf16, #tpu.memory_space<vmem>>, vector<512x256xbf16>
      %cst_16 = arith.constant dense<0.000000e+00> : vector<2x256xf32>
      %20 = tpu.matmul %18, %19, %cst_16 {dimension_numbers = #tpu.dot_dimension_numbers<[1], [0], [0], [1], [0, 0, 1, 1], [], []>} : vector<2x512xbf16>, vector<512x256xbf16>, vector<2x256xf32> -> vector<2x256xf32>
      %c0_17 = arith.constant 0 : index
      %c0_18 = arith.constant 0 : index
      %21 = vector.load %arg6[%c0_17, %c0_18] : memref<1x256xf32, #tpu.memory_space<vmem>>, vector<1x256xf32>
      %22 = vector.broadcast %21 : vector<1x256xf32> to vector<2x256xf32>
      %23 = arith.addf %20, %22 : vector<2x256xf32>
      %cst_19 = arith.constant 0.000000e+00 : f32
      %24 = vector.broadcast %cst_19 : f32 to vector<2x256xf32>
      %25 = arith.maximumf %23, %24 : vector<2x256xf32>
      %26 = arith.truncf %25 : vector<2x256xf32> to vector<2x256xbf16>
      %c0_20 = arith.constant 0 : index
      %c0_21 = arith.constant 0 : index
      %27 = vector.load %arg7[%c0_20, %c0_21] : memref<256x128xbf16, #tpu.memory_space<vmem>>, vector<256x128xbf16>
      %cst_22 = arith.constant dense<0.000000e+00> : vector<2x128xf32>
      %28 = tpu.matmul %26, %27, %cst_22 {dimension_numbers = #tpu.dot_dimension_numbers<[1], [0], [0], [1], [0, 0, 1, 1], [], []>} : vector<2x256xbf16>, vector<256x128xbf16>, vector<2x128xf32> -> vector<2x128xf32>
      %c0_23 = arith.constant 0 : index
      %c0_24 = arith.constant 0 : index
      %29 = vector.load %arg8[%c0_23, %c0_24] : memref<1x128xf32, #tpu.memory_space<vmem>>, vector<1x128xf32>
      %30 = vector.broadcast %29 : vector<1x128xf32> to vector<2x128xf32>
      %31 = arith.addf %28, %30 : vector<2x128xf32>
      %c0_25 = arith.constant 0 : index
      %c0_26 = arith.constant 0 : index
      %32 = vector.load %arg9[%c0_25, %c0_26] : memref<2x128xf32, #tpu.memory_space<vmem>>, vector<2x128xf32>
      tpu.vector_store %arg9[%c0_25, %c0_26], %31 {strides = array<i32>} : memref<2x128xf32, #tpu.memory_space<vmem>>, vector<2x128xf32>,
    } else {
    }
    return
  }
  func.func @transform_0(%arg0: i32, %arg1: i32) -> (i32, i32) {
    %c0_i32 = arith.constant 0 : i32
    return %arg0, %arg1 : i32, i32
  }
  func.func @transform_1(%arg0: i32, %arg1: i32) -> (i32, i32) {
    %c0_i32 = arith.constant 0 : i32
    %c0_i32_0 = arith.constant 0 : i32
    return %arg1, %c0_i32 : i32, i32
  }
  func.func @transform_2(%arg0: i32, %arg1: i32) -> (i32, i32) {
    %c0_i32 = arith.constant 0 : i32
    %c0_i32_0 = arith.constant 0 : i32
    %c0_i32_1 = arith.constant 0 : i32
    return %c0_i32, %c0_i32_0 : i32, i32
  }
  func.func @transform_3(%arg0: i32, %arg1: i32) -> (i32, i32) {
    %c0_i32 = arith.constant 0 : i32
    %c0_i32_0 = arith.constant 0 : i32
    %c0_i32_1 = arith.constant 0 : i32
    return %c0_i32, %c0_i32_0 : i32, i32
  }
  func.func @transform_4(%arg0: i32, %arg1: i32) -> (i32, i32) {
    %c0_i32 = arith.constant 0 : i32
    %c0_i32_0 = arith.constant 0 : i32
    %c0_i32_1 = arith.constant 0 : i32
    return %c0_i32, %c0_i32_0 : i32, i32
  }
  func.func @transform_5(%arg0: i32, %arg1: i32) -> (i32, i32) {
    %c0_i32 = arith.constant 0 : i32
    %c0_i32_0 = arith.constant 0 : i32
    %c0_i32_1 = arith.constant 0 : i32
    return %c0_i32, %c0_i32_0 : i32, i32
  }
  func.func @transform_6(%arg0: i32, %arg1: i32) -> (i32, i32) {
    %c0_i32 = arith.constant 0 : i32
    %c0_i32_0 = arith.constant 0 : i32
    %c0_i32_1 = arith.constant 0 : i32
    return %c0_i32, %c0_i32_0 : i32, i32
  }
  func.func @transform_7(%arg0: i32, %arg1: i32) -> (i32, i32) {
    %c0_i32 = arith.constant 0 : i32
    %c0_i32_0 = arith.constant 0 : i32
    return %arg0, %c0_i32 : i32, i32
  }
}

</mosaic_0001>

<llo_original>
// kernel: forward.8
$region0: #{forward.8}
  #allocation0 [shape = 'u32[]', space=smem, size = 0x4, offset = 0x4, fixed_abs, tag = 'smem constant byte address 0x4 - core index']
  #allocation1 [shape = 'u32[144,128]{1,0:T(1,128)}', space=vmem, size = 0x12000, scoped, tag = 'internal scratch']
  %s0 = inlined_call_operand.vmem [shape: bf16[32,2048], index: 0, kind: input, shape index: {}]
  %s1 = inlined_call_operand.vmem [shape: bf16[32,512], index: 1, kind: output, shape index: {}]
  %s2 = sld [smem:[#allocation0]]
  $region14: #{forward.8} parent=0
    _
  %s4 = ssub.s32 1, %s2
  %s5 = scalar_select 0, %s4, %s2
  // Predicated region
  $region2: #{forward.8} parent=0 // pred_check
    _
  $region3: #{forward.8} parent=0 // pred_check_branch
    %7 = sbr.rel (0) target = $region5
  $region4: #{forward.8} parent=0 // pred_region
    _
  $region5: #{forward.8} parent=0 // pred_fallthru
    _
  %v8 = vld [vmem:[%s0] sm:$0xff]
  %v9 = vld [vmem:[%s0 + $0x8] sm:$0xff]
  %v10 = vld [vmem:[%s0 + $0x10] sm:$0xff]
  %v11 = vld [vmem:[%s0 + $0x18] sm:$0xff]
  %v12 = vld [vmem:[%s0 + $0x20] sm:$0xff]
  %v13 = vld [vmem:[%s0 + $0x28] sm:$0xff]
  %v14 = vld [vmem:[%s0 + $0x30] sm:$0xff]
  %v15 = vld [vmem:[%s0 + $0x38] sm:$0xff]
  %v16 = vld [vmem:[%s0 + $0x40] sm:$0xff]
  %v17 = vld [vmem:[%s0 + $0x48] sm:$0xff]
  %v18 = vld [vmem:[%s0 + $0x50] sm:$0xff]
  %v19 = vld [vmem:[%s0 + $0x58] sm:$0xff]
  %v20 = vld [vmem:[%s0 + $0x60] sm:$0xff]
  %v21 = vld [vmem:[%s0 + $0x68] sm:$0xff]
  %v22 = vld [vmem:[%s0 + $0x70] sm:$0xff]
  %v23 = vld [vmem:[%s0 + $0x78] sm:$0xff]
  %v24 = vld [vmem:[%s0 + $0x80] sm:$0xff]
  %v25 = vld [vmem:[%s0 + $0x88] sm:$0xff]
  %v26 = vld [vmem:[%s0 + $0x90] sm:$0xff]
  %v27 = vld [vmem:[%s0 + $0x98] sm:$0xff]
  %v28 = vld [vmem:[%s0 + $0xa0] sm:$0xff]
  %v29 = vld [vmem:[%s0 + $0xa8] sm:$0xff]
  %v30 = vld [vmem:[%s0 + $0xb0] sm:$0xff]
  %v31 = vld [vmem:[%s0 + $0xb8] sm:$0xff]
  %v32 = vld [vmem:[%s0 + $0xc0] sm:$0xff]
  %v33 = vld [vmem:[%s0 + $0xc8] sm:$0xff]
  %v34 = vld [vmem:[%s0 + $0xd0] sm:$0xff]
  %v35 = vld [vmem:[%s0 + $0xd8] sm:$0xff]
  %v36 = vld [vmem:[%s0 + $0xe0] sm:$0xff]
  %v37 = vld [vmem:[%s0 + $0xe8] sm:$0xff]
  %v38 = vld [vmem:[%s0 + $0xf0] sm:$0xff]
  %v39 = vld [vmem:[%s0 + $0xf8] sm:$0xff]
  %v40 = vmax.bf16 %v8, %v12
  %v41 = vmax.bf16 %v9, %v13
  %v42 = vmax.bf16 %v10, %v14
  %v43 = vmax.bf16 %v11, %v15
  %v44 = vmax.bf16 %v16, %v20
  %v45 = vmax.bf16 %v17, %v21
  %v46 = vmax.bf16 %v18, %v22
  %v47 = vmax.bf16 %v19, %v23
  %v48 = vmax.bf16 %v24, %v28
  %v49 = vmax.bf16 %v25, %v29
  %v50 = vmax.bf16 %v26, %v30
  %v51 = vmax.bf16 %v27, %v31
  %v52 = vmax.bf16 %v32, %v36
  %v53 = vmax.bf16 %v33, %v37
  %v54 = vmax.bf16 %v34, %v38
  %v55 = vmax.bf16 %v35, %v39
  %60 = vrot.lane.b32.xlu0 %v40, 96
  %v61 = vpop.permute.xlu0 %60
  %62 = vrot.lane.b32.xlu0 %v44, 96
  %v63 = vpop.permute.xlu0 %62
  %64 = vrot.lane.b32.xlu0 %v48, 96
  %v65 = vpop.permute.xlu0 %64
  %66 = vrot.lane.b32.xlu0 %v52, 96
  %v67 = vpop.permute.xlu0 %66
  %v72 = vmax.bf16 %v40, %v61
  %v73 = vmax.bf16 %v44, %v63
  %v74 = vmax.bf16 %v48, %v65
  %v75 = vmax.bf16 %v52, %v67
  %v76 = vrot.slane %v40, 4
  %v77 = vrot.slane %v44, 4
  %v78 = vrot.slane %v48, 4
  %v79 = vrot.slane %v52, 4
  %v84 = vrot.slane %v61, 4
  %v85 = vrot.slane %v63, 4
  %v86 = vrot.slane %v65, 4
  %v87 = vrot.slane %v67, 4
  %v92 = vmax.bf16 %v76, %v84
  %v93 = vmax.bf16 %v77, %v85
  %v94 = vmax.bf16 %v78, %v86
  %v95 = vmax.bf16 %v79, %v87
  %96 = vrot.lane.b32.xlu0 %v40, 64
  %v97 = vpop.permute.xlu0 %96
  %98 = vrot.lane.b32.xlu0 %v44, 64
  %v99 = vpop.permute.xlu0 %98
  %100 = vrot.lane.b32.xlu0 %v48, 64
  %v101 = vpop.permute.xlu0 %100
  %102 = vrot.lane.b32.xlu0 %v52, 64
  %v103 = vpop.permute.xlu0 %102
  %v104 = vrot.slane %v97, 4
  %v105 = vrot.slane %v99, 4
  %v106 = vrot.slane %v101, 4
  %v107 = vrot.slane %v103, 4
  %112 = vrot.lane.b32.xlu0 %v40, 32
  %v113 = vpop.permute.xlu0 %112
  %114 = vrot.lane.b32.xlu0 %v44, 32
  %v115 = vpop.permute.xlu0 %114
  %116 = vrot.lane.b32.xlu0 %v48, 32
  %v117 = vpop.permute.xlu0 %116
  %118 = vrot.lane.b32.xlu0 %v52, 32
  %v119 = vpop.permute.xlu0 %118
  %v120 = vrot.slane %v113, 4
  %v121 = vrot.slane %v115, 4
  %v122 = vrot.slane %v117, 4
  %v123 = vrot.slane %v119, 4
  %v128 = vmax.bf16 %v104, %v120
  %v129 = vmax.bf16 %v105, %v121
  %v130 = vmax.bf16 %v106, %v122
  %v131 = vmax.bf16 %v107, %v123
  %136 = vrot.lane.b32.xlu0 %v41, 96
  %v137 = vpop.permute.xlu0 %136
  %138 = vrot.lane.b32.xlu0 %v45, 96
  %v139 = vpop.permute.xlu0 %138
  %140 = vrot.lane.b32.xlu0 %v49, 96
  %v141 = vpop.permute.xlu0 %140
  %142 = vrot.lane.b32.xlu0 %v53, 96
  %v143 = vpop.permute.xlu0 %142
  %v148 = vmax.bf16 %v41, %v137
  %v149 = vmax.bf16 %v45, %v139
  %v150 = vmax.bf16 %v49, %v141
  %v151 = vmax.bf16 %v53, %v143
  %v152 = vrot.slane %v41, 4
  %v153 = vrot.slane %v45, 4
  %v154 = vrot.slane %v49, 4
  %v155 = vrot.slane %v53, 4
  %v160 = vrot.slane %v137, 4
  %v161 = vrot.slane %v139, 4
  %v162 = vrot.slane %v141, 4
  %v163 = vrot.slane %v143, 4
  %v168 = vmax.bf16 %v152, %v160
  %v169 = vmax.bf16 %v153, %v161
  %v170 = vmax.bf16 %v154, %v162
  %v171 = vmax.bf16 %v155, %v163
  %172 = vrot.lane.b32.xlu0 %v41, 64
  %v173 = vpop.permute.xlu0 %172
  %174 = vrot.lane.b32.xlu0 %v45, 64
  %v175 = vpop.permute.xlu0 %174
  %176 = vrot.lane.b32.xlu0 %v49, 64
  %v177 = vpop.permute.xlu0 %176
  %178 = vrot.lane.b32.xlu0 %v53, 64
  %v179 = vpop.permute.xlu0 %178
  %v180 = vrot.slane %v173, 4
  %v181 = vrot.slane %v175, 4
  %v182 = vrot.slane %v177, 4
  %v183 = vrot.slane %v179, 4
  %188 = vrot.lane.b32.xlu0 %v41, 32
  %v189 = vpop.permute.xlu0 %188
  %190 = vrot.lane.b32.xlu0 %v45, 32
  %v191 = vpop.permute.xlu0 %190
  %192 = vrot.lane.b32.xlu0 %v49, 32
  %v193 = vpop.permute.xlu0 %192
  %194 = vrot.lane.b32.xlu0 %v53, 32
  %v195 = vpop.permute.xlu0 %194
  %v196 = vrot.slane %v189, 4
  %v197 = vrot.slane %v191, 4
  %v198 = vrot.slane %v193, 4
  %v199 = vrot.slane %v195, 4
  %v204 = vmax.bf16 %v180, %v196
  %v205 = vmax.bf16 %v181, %v197
  %v206 = vmax.bf16 %v182, %v198
  %v207 = vmax.bf16 %v183, %v199
  %212 = vrot.lane.b32.xlu0 %v42, 96
  %v213 = vpop.permute.xlu0 %212
  %214 = vrot.lane.b32.xlu0 %v46, 96
  %v215 = vpop.permute.xlu0 %214
  %216 = vrot.lane.b32.xlu0 %v50, 96
  %v217 = vpop.permute.xlu0 %216
  %218 = vrot.lane.b32.xlu0 %v54, 96
  %v219 = vpop.permute.xlu0 %218
  %v224 = vmax.bf16 %v42, %v213
  %v225 = vmax.bf16 %v46, %v215
  %v226 = vmax.bf16 %v50, %v217
  %v227 = vmax.bf16 %v54, %v219
  %v228 = vrot.slane %v42, 4
  %v229 = vrot.slane %v46, 4
  %v230 = vrot.slane %v50, 4
  %v231 = vrot.slane %v54, 4
  %v236 = vrot.slane %v213, 4
  %v237 = vrot.slane %v215, 4
  %v238 = vrot.slane %v217, 4
  %v239 = vrot.slane %v219, 4
  %v244 = vmax.bf16 %v228, %v236
  %v245 = vmax.bf16 %v229, %v237
  %v246 = vmax.bf16 %v230, %v238
  %v247 = vmax.bf16 %v231, %v239
  %248 = vrot.lane.b32.xlu0 %v42, 64
  %v249 = vpop.permute.xlu0 %248
  %250 = vrot.lane.b32.xlu0 %v46, 64
  %v251 = vpop.permute.xlu0 %250
  %252 = vrot.lane.b32.xlu0 %v50, 64
  %v253 = vpop.permute.xlu0 %252
  %254 = vrot.lane.b32.xlu0 %v54, 64
  %v255 = vpop.permute.xlu0 %254
  %v256 = vrot.slane %v249, 4
  %v257 = vrot.slane %v251, 4
  %v258 = vrot.slane %v253, 4
  %v259 = vrot.slane %v255, 4
  %264 = vrot.lane.b32.xlu0 %v42, 32
  %v265 = vpop.permute.xlu0 %264
  %266 = vrot.lane.b32.xlu0 %v46, 32
  %v267 = vpop.permute.xlu0 %266
  %268 = vrot.lane.b32.xlu0 %v50, 32
  %v269 = vpop.permute.xlu0 %268
  %270 = vrot.lane.b32.xlu0 %v54, 32
  %v271 = vpop.permute.xlu0 %270
  %v272 = vrot.slane %v265, 4
  %v273 = vrot.slane %v267, 4
  %v274 = vrot.slane %v269, 4
  %v275 = vrot.slane %v271, 4
  %v280 = vmax.bf16 %v256, %v272
  %v281 = vmax.bf16 %v257, %v273
  %v282 = vmax.bf16 %v258, %v274
  %v283 = vmax.bf16 %v259, %v275
  %288 = vrot.lane.b32.xlu0 %v43, 96
  %v289 = vpop.permute.xlu0 %288
  %290 = vrot.lane.b32.xlu0 %v47, 96
  %v291 = vpop.permute.xlu0 %290
  %292 = vrot.lane.b32.xlu0 %v51, 96
  %v293 = vpop.permute.xlu0 %292
  %294 = vrot.lane.b32.xlu0 %v55, 96
  %v295 = vpop.permute.xlu0 %294
  %v300 = vmax.bf16 %v43, %v289
  %v301 = vmax.bf16 %v47, %v291
  %v302 = vmax.bf16 %v51, %v293
  %v303 = vmax.bf16 %v55, %v295
  %v304 = vrot.slane %v43, 4
  %v305 = vrot.slane %v47, 4
  %v306 = vrot.slane %v51, 4
  %v307 = vrot.slane %v55, 4
  %v312 = vrot.slane %v289, 4
  %v313 = vrot.slane %v291, 4
  %v314 = vrot.slane %v293, 4
  %v315 = vrot.slane %v295, 4
  %v320 = vmax.bf16 %v304, %v312
  %v321 = vmax.bf16 %v305, %v313
  %v322 = vmax.bf16 %v306, %v314
  %v323 = vmax.bf16 %v307, %v315
  %324 = vrot.lane.b32.xlu0 %v43, 64
  %v325 = vpop.permute.xlu0 %324
  %326 = vrot.lane.b32.xlu0 %v47, 64
  %v327 = vpop.permute.xlu0 %326
  %328 = vrot.lane.b32.xlu0 %v51, 64
  %v329 = vpop.permute.xlu0 %328
  %330 = vrot.lane.b32.xlu0 %v55, 64
  %v331 = vpop.permute.xlu0 %330
  %v332 = vrot.slane %v325, 4
  %v333 = vrot.slane %v327, 4
  %v334 = vrot.slane %v329, 4
  %v335 = vrot.slane %v331, 4
  %340 = vrot.lane.b32.xlu0 %v43, 32
  %v341 = vpop.permute.xlu0 %340
  %342 = vrot.lane.b32.xlu0 %v47, 32
  %v343 = vpop.permute.xlu0 %342
  %344 = vrot.lane.b32.xlu0 %v51, 32
  %v345 = vpop.permute.xlu0 %344
  %346 = vrot.lane.b32.xlu0 %v55, 32
  %v347 = vpop.permute.xlu0 %346
  %v348 = vrot.slane %v341, 4
  %v349 = vrot.slane %v343, 4
  %v350 = vrot.slane %v345, 4
  %v351 = vrot.slane %v347, 4
  %v356 = vmax.bf16 %v332, %v348
  %v357 = vmax.bf16 %v333, %v349
  %v358 = vmax.bf16 %v334, %v350
  %v359 = vmax.bf16 %v335, %v351
  %v364 = vunpack.c.l.b16 %v72
  %v365 = vunpack.c.l.b16 %v73
  %v366 = vunpack.c.l.b16 %v74
  %v367 = vunpack.c.l.b16 %v75
  %v368 = vpack.c.b16 %v365, %v364
  %v369 = vpack.c.b16 %v367, %v366
  %370 = vrot.lane.b32.xlu0 %v368, 96
  %v371 = vpop.permute.xlu0 %370
  %372 = vrot.lane.b32.xlu0 %v369, 96
  %v373 = vpop.permute.xlu0 %372
  %v378 = vunpack.c.l.b16 %v92
  %v379 = vunpack.c.l.b16 %v93
  %v380 = vunpack.c.l.b16 %v94
  %v381 = vunpack.c.l.b16 %v95
  %v382 = vpack.c.b16 %v379, %v378
  %v383 = vpack.c.b16 %v381, %v380
  %384 = vrot.lane.b32.xlu0 %v382, 64
  %v385 = vpop.permute.xlu0 %384
  %386 = vrot.lane.b32.xlu0 %v383, 64
  %v387 = vpop.permute.xlu0 %386
  %v392 = vunpack.c.l.b16 %v128
  %v393 = vunpack.c.l.b16 %v129
  %v394 = vunpack.c.l.b16 %v130
  %v395 = vunpack.c.l.b16 %v131
  %v396 = vpack.c.b16 %v393, %v392
  %v397 = vpack.c.b16 %v395, %v394
  %398 = vrot.lane.b32.xlu0 %v396, 96
  %v399 = vpop.permute.xlu0 %398
  %400 = vrot.lane.b32.xlu0 %v397, 96
  %v401 = vpop.permute.xlu0 %400
  %v406 = vunpack.c.l.b16 %v148
  %v407 = vunpack.c.l.b16 %v149
  %v408 = vunpack.c.l.b16 %v150
  %v409 = vunpack.c.l.b16 %v151
  %v410 = vpack.c.b16 %v407, %v406
  %v411 = vpack.c.b16 %v409, %v408
  %412 = vrot.lane.b32.xlu0 %v410, 96
  %v413 = vpop.permute.xlu0 %412
  %414 = vrot.lane.b32.xlu0 %v411, 96
  %v415 = vpop.permute.xlu0 %414
  %v420 = vunpack.c.l.b16 %v168
  %v421 = vunpack.c.l.b16 %v169
  %v422 = vunpack.c.l.b16 %v170
  %v423 = vunpack.c.l.b16 %v171
  %v424 = vpack.c.b16 %v421, %v420
  %v425 = vpack.c.b16 %v423, %v422
  %426 = vrot.lane.b32.xlu0 %v424, 64
  %v427 = vpop.permute.xlu0 %426
  %428 = vrot.lane.b32.xlu0 %v425, 64
  %v429 = vpop.permute.xlu0 %428
  %v434 = vunpack.c.l.b16 %v204
  %v435 = vunpack.c.l.b16 %v205
  %v436 = vunpack.c.l.b16 %v206
  %v437 = vunpack.c.l.b16 %v207
  %v438 = vpack.c.b16 %v435, %v434
  %v439 = vpack.c.b16 %v437, %v436
  %440 = vrot.lane.b32.xlu0 %v438, 96
  %v441 = vpop.permute.xlu0 %440
  %442 = vrot.lane.b32.xlu0 %v439, 96
  %v443 = vpop.permute.xlu0 %442
  %v448 = vunpack.c.l.b16 %v224
  %v449 = vunpack.c.l.b16 %v225
  %v450 = vunpack.c.l.b16 %v226
  %v451 = vunpack.c.l.b16 %v227
  %v452 = vpack.c.b16 %v449, %v448
  %v453 = vpack.c.b16 %v451, %v450
  %454 = vrot.lane.b32.xlu0 %v452, 96
  %v455 = vpop.permute.xlu0 %454
  %456 = vrot.lane.b32.xlu0 %v453, 96
  %v457 = vpop.permute.xlu0 %456
  %v462 = vunpack.c.l.b16 %v244
  %v463 = vunpack.c.l.b16 %v245
  %v464 = vunpack.c.l.b16 %v246
  %v465 = vunpack.c.l.b16 %v247
  %v466 = vpack.c.b16 %v463, %v462
  %v467 = vpack.c.b16 %v465, %v464
  %468 = vrot.lane.b32.xlu0 %v466, 64
  %v469 = vpop.permute.xlu0 %468
  %470 = vrot.lane.b32.xlu0 %v467, 64
  %v471 = vpop.permute.xlu0 %470
  %v476 = vunpack.c.l.b16 %v280
  %v477 = vunpack.c.l.b16 %v281
  %v478 = vunpack.c.l.b16 %v282
  %v479 = vunpack.c.l.b16 %v283
  %v480 = vpack.c.b16 %v477, %v476
  %v481 = vpack.c.b16 %v479, %v478
  %482 = vrot.lane.b32.xlu0 %v480, 96
  %v483 = vpop.permute.xlu0 %482
  %484 = vrot.lane.b32.xlu0 %v481, 96
  %v485 = vpop.permute.xlu0 %484
  %v490 = vunpack.c.l.b16 %v300
  %v491 = vunpack.c.l.b16 %v301
  %v492 = vunpack.c.l.b16 %v302
  %v493 = vunpack.c.l.b16 %v303
  %v494 = vpack.c.b16 %v491, %v490
  %v495 = vpack.c.b16 %v493, %v492
  %496 = vrot.lane.b32.xlu0 %v494, 96
  %v497 = vpop.permute.xlu0 %496
  %498 = vrot.lane.b32.xlu0 %v495, 96
  %v499 = vpop.permute.xlu0 %498
  %v504 = vunpack.c.l.b16 %v320
  %v505 = vunpack.c.l.b16 %v321
  %v506 = vunpack.c.l.b16 %v322
  %v507 = vunpack.c.l.b16 %v323
  %v508 = vpack.c.b16 %v505, %v504
  %v509 = vpack.c.b16 %v507, %v506
  %510 = vrot.lane.b32.xlu0 %v508, 64
  %v511 = vpop.permute.xlu0 %510
  %512 = vrot.lane.b32.xlu0 %v509, 64
  %v513 = vpop.permute.xlu0 %512
  %v518 = vunpack.c.l.b16 %v356
  %v519 = vunpack.c.l.b16 %v357
  %v520 = vunpack.c.l.b16 %v358
  %v521 = vunpack.c.l.b16 %v359
  %v522 = vpack.c.b16 %v519, %v518
  %v523 = vpack.c.b16 %v521, %v520
  %524 = vrot.lane.b32.xlu0 %v522, 96
  %v525 = vpop.permute.xlu0 %524
  %526 = vrot.lane.b32.xlu0 %v523, 96
  %v527 = vpop.permute.xlu0 %526
  %vm528 = vcmask 261120
  %v531 = vsel %vm528, %v368, %v371
  %v534 = vsel %vm528, %v369, %v373
  %vm535 = vcmask 523264
  %v537 = vsel %vm535, %v531, %v385
  %v539 = vsel %vm535, %v534, %v387
  %vm540 = vcmask 785408
  %v542 = vsel %vm540, %v537, %v399
  %v544 = vsel %vm540, %v539, %v401
  %v547 = vsel %vm528, %v410, %v413
  %v550 = vsel %vm528, %v411, %v415
  %v552 = vsel %vm535, %v547, %v427
  %v554 = vsel %vm535, %v550, %v429
  %v556 = vsel %vm540, %v552, %v441
  %v558 = vsel %vm540, %v554, %v443
  %v561 = vsel %vm528, %v452, %v455
  %v564 = vsel %vm528, %v453, %v457
  %v566 = vsel %vm535, %v561, %v469
  %v568 = vsel %vm535, %v564, %v471
  %v570 = vsel %vm540, %v566, %v483
  %v572 = vsel %vm540, %v568, %v485
  %v575 = vsel %vm528, %v494, %v497
  %v578 = vsel %vm528, %v495, %v499
  %v580 = vsel %vm535, %v575, %v511
  %v582 = vsel %vm535, %v578, %v513
  %v584 = vsel %vm540, %v580, %v525
  %v586 = vsel %vm540, %v582, %v527
  %v595 = vunpack.c.l.b16 %v542
  %v596 = vunpack.c.l.b16 %v556
  %v597 = vunpack.c.l.b16 %v570
  %v598 = vunpack.c.l.b16 %v584
  %v599 = vunpack.c.h.b16 %v542
  %v600 = vunpack.c.h.b16 %v556
  %v601 = vunpack.c.h.b16 %v570
  %v602 = vunpack.c.h.b16 %v584
  %v603 = vunpack.c.l.b16 %v544
  %v604 = vunpack.c.l.b16 %v558
  %v605 = vunpack.c.l.b16 %v572
  %v606 = vunpack.c.l.b16 %v586
  %v607 = vunpack.c.h.b16 %v544
  %v608 = vunpack.c.h.b16 %v558
  %v609 = vunpack.c.h.b16 %v572
  %v610 = vunpack.c.h.b16 %v586
  %v611 = vpack.c.b16 %v596, %v595
  %v612 = vpack.c.b16 %v598, %v597
  %v613 = vpack.c.b16 %v600, %v599
  %v614 = vpack.c.b16 %v602, %v601
  %v615 = vpack.c.b16 %v604, %v603
  %v616 = vpack.c.b16 %v606, %v605
  %v617 = vpack.c.b16 %v608, %v607
  %v618 = vpack.c.b16 %v610, %v609
  %627 = vst [vmem:[%s1] sm:$0xff] %v611
  %628 = vst [vmem:[%s1 + $0x8] sm:$0xff] %v612
  %629 = vst [vmem:[%s1 + $0x10] sm:$0xff] %v613
  %630 = vst [vmem:[%s1 + $0x18] sm:$0xff] %v614
  %631 = vst [vmem:[%s1 + $0x20] sm:$0xff] %v615
  %632 = vst [vmem:[%s1 + $0x28] sm:$0xff] %v616
  %633 = vst [vmem:[%s1 + $0x30] sm:$0xff] %v617
  %634 = vst [vmem:[%s1 + $0x38] sm:$0xff] %v618
  // Predicated region
  $region6: #{forward.8} parent=0 // pred_check
    _
  $region7: #{forward.8} parent=0 // pred_check_branch
    %636 = sbr.rel (0) target = $region9
  $region8: #{forward.8} parent=0 // pred_region
    _
  $region9: #{forward.8} parent=0 // pred_fallthru
    _
  // Predicated region
  $region10: #{forward.8} parent=0 // pred_check
    _
  $region11: #{forward.8} parent=0 // pred_check_branch
    %638 = sbr.rel (0) target = $region13
  $region12: #{forward.8} parent=0 // pred_region
    _
  $region13: #{forward.8} parent=0 // pred_fallthru
    _

// kernel: forward.7
$region0: #{forward.7}
  #allocation0 [shape = 'u32[]', space=smem, size = 0x4, offset = 0x4, fixed_abs, tag = 'smem constant byte address 0x4 - core index']
  #allocation1 [shape = 'u32[144,128]{1,0:T(1,128)}', space=vmem, size = 0x12000, scoped, tag = 'internal scratch']
  %s0 = inlined_call_operand.vmem [shape: bf16[2048,27], index: 0, kind: input, shape index: {}]
  %s1 = inlined_call_operand.hbm [shape: bf16[27,32], index: 1, kind: input, shape index: {}]
  %s2 = inlined_call_operand.hbm [shape: f32[1,32], index: 2, kind: input, shape index: {}]
  %s3 = inlined_call_operand.vmem [shape: bf16[2048,32], index: 3, kind: output, shape index: {}]
  %s4 = sld [smem:[#allocation0]]
  $region53: #{forward.7} parent=0
    _
  %s6 = ssub.s32 1, %s4
  %s7 = scalar_select 0, %s6, %s4
  $region1: #{forward.7} parent=0
    #allocation2 [shape = 'u8[8192]{0}', space=vmem, size = 0x2000, scoped, tag = 'input window, operand 1, single buffered']
    #allocation3 [shape = 's32[2]{0}', space=sflag, size = 0x8, scoped, tag = 'scoped memory for forward.7']
    #allocation4 [shape = 'u8[512]{0}', space=vmem, size = 0x400, scoped, tag = 'input window, operand 2, single buffered']
    #allocation5 [shape = 's32[1]{0}', space=sflag, size = 0x4, scoped, tag = 'scoped memory for forward.7']
    %8 = vsyncpa [#allocation3], 0
    %9 = vsyncpa [#allocation5], 0
    loop: start=0, step=1, limit=4
    $region2: #{forward.7} parent=1 // loop_pre_header
      _
    $region3: #{forward.7} parent=1 // loop_header
      %s11 = sphi 0, %s15
      %p12 = scmp.ge.s32.totalorder %s11, 4
      %s21 = sphi 0, %s23
      %s24 = sphi 0, %s21
      %s25 = sphi 0, %s24
      %s41 = sphi 0, %s25
      %s45 = sphi 0, %s45
      %s47 = sphi 0, %s45
      %s48 = sphi 0, %s47
      %s62 = sphi 0, %s48
      %s66 = sphi 0, %s66
      %s68 = sphi 0, %s66
      %s69 = sphi 0, %s68
      %s83 = sphi 0, %s69
      %s89 = sphi 0, %s91
      %s92 = sphi 0, %s89
      %s93 = sphi 0, %s92
      %s109 = sphi 0, %s93
    $region4: #{forward.7} parent=1 // loop_header_branch
      %14 = sbr.rel (%p12) target = $region8
    $region5: #{forward.7} parent=1 // loop_body
      %s16 = ssub.s32 %s11, 1
      %s17 = ssub.s32 %s11, 2
      %s18 = sadd.s32 %s11, 1
      %s19 = ssub.s32 %s11, %s18
      %p20 = scmp.eq.s32.totalorder %s19, 0
      %s22 = sadd.s32 %s21, 1
      %s23 = scalar_select %p20, %s21, %s22
      %p26 = pneg %p20
      %p27 = scmp.eq.s32.totalorder %s11, 1
      %p28 = por %p26, %p27
      %p29 = scmp.ne.s32.totalorder %s21, %s24
      %p30 = scmp.eq.s32.totalorder %s11, 0
      %p31 = por %p29, %p30
      %p32 = scmp.ne.s32.totalorder %s21, %s24
      %p33 = scmp.eq.s32.totalorder %s16, 1
      %p34 = por %p32, %p33
      %p35 = scmp.ne.s32.totalorder %s24, %s25
      %p36 = scmp.eq.s32.totalorder %s16, 0
      %p37 = por %p35, %p36
      %p38 = scmp.ne.s32.totalorder %s24, %s25
      %p39 = scmp.eq.s32.totalorder %s17, 1
      %p40 = por %p38, %p39
      %p42 = scmp.ne.s32.totalorder %s25, %s41
      %p43 = scmp.eq.s32.totalorder %s17, 0
      %p44 = por %p42, %p43
      %s46 = sadd.s32 %s45, 1
      %p49 = scmp.eq.s32.totalorder %s11, 1
      %p50 = scmp.ne.s32.totalorder %s45, %s47
      %p51 = scmp.eq.s32.totalorder %s11, 0
      %p52 = por %p50, %p51
      %p53 = scmp.ne.s32.totalorder %s45, %s47
      %p54 = scmp.eq.s32.totalorder %s16, 1
      %p55 = por %p53, %p54
      %p56 = scmp.ne.s32.totalorder %s47, %s48
      %p57 = scmp.eq.s32.totalorder %s16, 0
      %p58 = por %p56, %p57
      %p59 = scmp.ne.s32.totalorder %s47, %s48
      %p60 = scmp.eq.s32.totalorder %s17, 1
      %p61 = por %p59, %p60
      %p63 = scmp.ne.s32.totalorder %s48, %s62
      %p64 = scmp.eq.s32.totalorder %s17, 0
      %p65 = por %p63, %p64
      %s67 = sadd.s32 %s66, 1
      %p70 = scmp.eq.s32.totalorder %s11, 1
      %p71 = scmp.ne.s32.totalorder %s66, %s68
      %p72 = scmp.eq.s32.totalorder %s11, 0
      %p73 = por %p71, %p72
      %p74 = scmp.ne.s32.totalorder %s66, %s68
      %p75 = scmp.eq.s32.totalorder %s16, 1
      %p76 = por %p74, %p75
      %p77 = scmp.ne.s32.totalorder %s68, %s69
      %p78 = scmp.eq.s32.totalorder %s16, 0
      %p79 = por %p77, %p78
      %p80 = scmp.ne.s32.totalorder %s68, %s69
      %p81 = scmp.eq.s32.totalorder %s17, 1
      %p82 = por %p80, %p81
      %p84 = scmp.ne.s32.totalorder %s69, %s83
      %p85 = scmp.eq.s32.totalorder %s17, 0
      %p86 = por %p84, %p85
      %s87 = ssub.s32 %s11, %s18
      %p88 = scmp.eq.s32.totalorder %s87, 0
      %s90 = sadd.s32 %s89, 1
      %s91 = scalar_select %p88, %s89, %s90
      %p94 = pneg %p88
      %p95 = scmp.eq.s32.totalorder %s11, 1
      %p96 = por %p94, %p95
      %p97 = scmp.ne.s32.totalorder %s89, %s92
      %p98 = scmp.eq.s32.totalorder %s11, 0
      %p99 = por %p97, %p98
      %p100 = scmp.ne.s32.totalorder %s89, %s92
      %p101 = scmp.eq.s32.totalorder %s16, 1
      %p102 = por %p100, %p101
      %p103 = scmp.ne.s32.totalorder %s92, %s93
      %p104 = scmp.eq.s32.totalorder %s16, 0
      %p105 = por %p103, %p104
      %p106 = scmp.ne.s32.totalorder %s92, %s93
      %p107 = scmp.eq.s32.totalorder %s17, 1
      %p108 = por %p106, %p107
      %p110 = scmp.ne.s32.totalorder %s93, %s109
      %p111 = scmp.eq.s32.totalorder %s17, 0
      %p112 = por %p110, %p111
      %p113 = scmp.le.s32.totalorder 1, %s11
      %p114 = scmp.lt.s32.totalorder %s11, 3
      %p115 = pnand %p113, %p114
      %p116 = pneg %p115
      // Predicated region
      $region9: #{forward.7} parent=5 // pred_check
        _
      $region10: #{forward.7} parent=5 // pred_check_branch
        %118 = sbr.rel (%p115) target = $region12
      $region11: #{forward.7} parent=5 // pred_region
        %s119 = ssub.s32 %s11, 1
        // Predicated region
        $region13: #{forward.7} parent=11 // pred_check
          %p120 = pneg %p58
        $region14: #{forward.7} parent=11 // pred_check_branch
          %122 = sbr.rel (%p120) target = $region16
        $region15: #{forward.7} parent=11 // pred_region
          %s124 = ssub.s32 256, 256
          %125 = vsyncadd [#allocation3], %s124
          %s126 = sshll.u32 [#allocation2], 4
          %s127 = int_to_ptr.vmem [resolvable:$true] %s126
          %132 = dma.hbm_to_vmem [thread:$0]  %s1, 256, %s127, [#allocation3], 64, 64, 4
        $region16: #{forward.7} parent=11 // pred_fallthru
          _
        // Predicated region
        $region17: #{forward.7} parent=11 // pred_check
          %p133 = pneg %p79
        $region18: #{forward.7} parent=11 // pred_check_branch
          %135 = sbr.rel (%p133) target = $region20
        $region19: #{forward.7} parent=11 // pred_region
          %s137 = ssub.s32 16, 16
          %138 = vsyncadd [#allocation5], %s137
          %s140 = sshll.u32 [#allocation4], 4
          %s141 = int_to_ptr.vmem [resolvable:$true] %s140
          %143 = dma.hbm_to_vmem [thread:$0]  %s2, 16, %s141, [#allocation5]
        $region20: #{forward.7} parent=11 // pred_fallthru
          _
      $region12: #{forward.7} parent=5 // pred_fallthru
        _
      %p144 = scmp.lt.s32.totalorder %s11, 2
      // Predicated region
      $region21: #{forward.7} parent=5 // pred_check
        %p145 = pneg %p144
      $region22: #{forward.7} parent=5 // pred_check_branch
        %147 = sbr.rel (%p145) target = $region24
      $region23: #{forward.7} parent=5 // pred_region
        // Predicated region
        $region25: #{forward.7} parent=23 // pred_check
          %p148 = pneg %p31
        $region26: #{forward.7} parent=23 // pred_check_branch
          %150 = sbr.rel (%p148) target = $region28
        $region27: #{forward.7} parent=23 // pred_region
          %s151 = smul.u32 128, %s11
          %p152 = scmp.lt.s32.totalorder %s151, 255
          %s153 = scalar_select %p152, %s151, 255
          %s154 = smul.addr %s153, 4
          %s155 = scalar_lea.vmem %s0, %s154
          %s156 = smul.u32 128, %s11
        $region28: #{forward.7} parent=23 // pred_fallthru
          _
      $region24: #{forward.7} parent=5 // pred_fallthru
        _
      %p157 = scmp.le.s32.totalorder 1, %s11
      %p158 = scmp.lt.s32.totalorder %s11, 3
      %p159 = pnand %p157, %p158
      %p160 = pneg %p159
      // Predicated region
      $region29: #{forward.7} parent=5 // pred_check
        _
      $region30: #{forward.7} parent=5 // pred_check_branch
        %162 = sbr.rel (%p159) target = $region32
      $region31: #{forward.7} parent=5 // pred_region
        %s163 = ssub.s32 %s11, 1
        // Predicated region
        $region33: #{forward.7} parent=31 // pred_check
          %p164 = pneg %p58
        $region34: #{forward.7} parent=31 // pred_check_branch
          %166 = sbr.rel (%p164) target = $region36
        $region35: #{forward.7} parent=31 // pred_region
          %167 = dma.done [#allocation3], 256
        $region36: #{forward.7} parent=31 // pred_fallthru
          _
        // Predicated region
        $region37: #{forward.7} parent=31 // pred_check
          %p168 = pneg %p79
        $region38: #{forward.7} parent=31 // pred_check_branch
          %170 = sbr.rel (%p168) target = $region40
        $region39: #{forward.7} parent=31 // pred_region
          %171 = dma.done [#allocation5], 16
        $region40: #{forward.7} parent=31 // pred_fallthru
          _
        %s172 = smul.u32 128, %s16
        %p173 = scmp.lt.s32.totalorder %s172, 255
        %s174 = scalar_select %p173, %s172, 255
        %s175 = smul.addr %s174, 4
        %s176 = scalar_lea.vmem %s0, %s175
        %p177 = pneg %p37
        %p178 = pneg %p34
        %p179 = pneg %p58
        %p180 = pneg %p55
        %p181 = pneg %p79
        %p182 = pneg %p76
        %p183 = pneg %p105
        %p184 = pneg %p102
        %s185 = smul.u32 128, %s16
        %p186 = scmp.lt.s32.totalorder %s185, 255
        %s187 = scalar_select %p186, %s185, 255
        %s188 = smul.addr %s187, 4
        %s189 = scalar_lea.vmem %s3, %s188
        %s190 = smul.u32 128, %s16
        %p191 = scmp.lt.s32.totalorder %s190, 255
        %s192 = scalar_select %p191, %s190, 255
        %s193 = smul.addr %s192, 4
        %s194 = scalar_lea.vmem %s0, %s193
        %s195 = smul.u32 128, %s16
        %s196 = smul.u32 128, %s16
        %p197 = scmp.lt.s32.totalorder %s196, 255
        %s198 = scalar_select %p197, %s196, 255
        %s199 = smul.addr %s198, 4
        %s200 = scalar_lea.vmem %s3, %s199
        %s201 = smul.u32 128, %s16
        %v203 = vld [vmem:[%s194] sm:$0xf]
        %v204 = vld [vmem:[%s194 + $0x4] sm:$0xf]
        %v205 = vld [vmem:[%s194 + $0x8] sm:$0xf]
        %v206 = vld [vmem:[%s194 + $0xc] sm:$0xf]
        %v207 = vld [vmem:[%s194 + $0x10] sm:$0xf]
        %v208 = vld [vmem:[%s194 + $0x14] sm:$0xf]
        %v209 = vld [vmem:[%s194 + $0x18] sm:$0xf]
        %v210 = vld [vmem:[%s194 + $0x1c] sm:$0xf]
        %v211 = vld [vmem:[%s194 + $0x20] sm:$0xf]
        %v212 = vld [vmem:[%s194 + $0x24] sm:$0xf]
        %v213 = vld [vmem:[%s194 + $0x28] sm:$0xf]
        %v214 = vld [vmem:[%s194 + $0x2c] sm:$0xf]
        %v215 = vld [vmem:[%s194 + $0x30] sm:$0xf]
        %v216 = vld [vmem:[%s194 + $0x34] sm:$0xf]
        %v217 = vld [vmem:[%s194 + $0x38] sm:$0xf]
        %v218 = vld [vmem:[%s194 + $0x3c] sm:$0xf]
        %v219 = vld [vmem:[%s194 + $0x40] sm:$0xf]
        %v220 = vld [vmem:[%s194 + $0x44] sm:$0xf]
        %v221 = vld [vmem:[%s194 + $0x48] sm:$0xf]
        %v222 = vld [vmem:[%s194 + $0x4c] sm:$0xf]
        %v223 = vld [vmem:[%s194 + $0x50] sm:$0xf]
        %v224 = vld [vmem:[%s194 + $0x54] sm:$0xf]
        %v225 = vld [vmem:[%s194 + $0x58] sm:$0xf]
        %v226 = vld [vmem:[%s194 + $0x5c] sm:$0xf]
        %v227 = vld [vmem:[%s194 + $0x60] sm:$0xf]
        %v228 = vld [vmem:[%s194 + $0x64] sm:$0xf]
        %v229 = vld [vmem:[%s194 + $0x68] sm:$0xf]
        %v230 = vld [vmem:[%s194 + $0x6c] sm:$0xf]
        %v231 = vld [vmem:[%s194 + $0x70] sm:$0xf]
        %v232 = vld [vmem:[%s194 + $0x74] sm:$0xf]
        %v233 = vld [vmem:[%s194 + $0x78] sm:$0xf]
        %v234 = vld [vmem:[%s194 + $0x7c] sm:$0xf]
        %v235 = vld [vmem:[%s194 + $0x80] sm:$0xf]
        %v236 = vld [vmem:[%s194 + $0x84] sm:$0xf]
        %v237 = vld [vmem:[%s194 + $0x88] sm:$0xf]
        %v238 = vld [vmem:[%s194 + $0x8c] sm:$0xf]
        %v239 = vld [vmem:[%s194 + $0x90] sm:$0xf]
        %v240 = vld [vmem:[%s194 + $0x94] sm:$0xf]
        %v241 = vld [vmem:[%s194 + $0x98] sm:$0xf]
        %v242 = vld [vmem:[%s194 + $0x9c] sm:$0xf]
        %v243 = vld [vmem:[%s194 + $0xa0] sm:$0xf]
        %v244 = vld [vmem:[%s194 + $0xa4] sm:$0xf]
        %v245 = vld [vmem:[%s194 + $0xa8] sm:$0xf]
        %v246 = vld [vmem:[%s194 + $0xac] sm:$0xf]
        %v247 = vld [vmem:[%s194 + $0xb0] sm:$0xf]
        %v248 = vld [vmem:[%s194 + $0xb4] sm:$0xf]
        %v249 = vld [vmem:[%s194 + $0xb8] sm:$0xf]
        %v250 = vld [vmem:[%s194 + $0xbc] sm:$0xf]
        %v251 = vld [vmem:[%s194 + $0xc0] sm:$0xf]
        %v252 = vld [vmem:[%s194 + $0xc4] sm:$0xf]
        %v253 = vld [vmem:[%s194 + $0xc8] sm:$0xf]
        %v254 = vld [vmem:[%s194 + $0xcc] sm:$0xf]
        %v255 = vld [vmem:[%s194 + $0xd0] sm:$0xf]
        %v256 = vld [vmem:[%s194 + $0xd4] sm:$0xf]
        %v257 = vld [vmem:[%s194 + $0xd8] sm:$0xf]
        %v258 = vld [vmem:[%s194 + $0xdc] sm:$0xf]
        %v259 = vld [vmem:[%s194 + $0xe0] sm:$0xf]
        %v260 = vld [vmem:[%s194 + $0xe4] sm:$0xf]
        %v261 = vld [vmem:[%s194 + $0xe8] sm:$0xf]
        %v262 = vld [vmem:[%s194 + $0xec] sm:$0xf]
        %v263 = vld [vmem:[%s194 + $0xf0] sm:$0xf]
        %v264 = vld [vmem:[%s194 + $0xf4] sm:$0xf]
        %v265 = vld [vmem:[%s194 + $0xf8] sm:$0xf]
        %v266 = vld [vmem:[%s194 + $0xfc] sm:$0xf]
        %v267 = vld [vmem:[%s194 + $0x100] sm:$0xf]
        %v268 = vld [vmem:[%s194 + $0x104] sm:$0xf]
        %v269 = vld [vmem:[%s194 + $0x108] sm:$0xf]
        %v270 = vld [vmem:[%s194 + $0x10c] sm:$0xf]
        %v271 = vld [vmem:[%s194 + $0x110] sm:$0xf]
        %v272 = vld [vmem:[%s194 + $0x114] sm:$0xf]
        %v273 = vld [vmem:[%s194 + $0x118] sm:$0xf]
        %v274 = vld [vmem:[%s194 + $0x11c] sm:$0xf]
        %v275 = vld [vmem:[%s194 + $0x120] sm:$0xf]
        %v276 = vld [vmem:[%s194 + $0x124] sm:$0xf]
        %v277 = vld [vmem:[%s194 + $0x128] sm:$0xf]
        %v278 = vld [vmem:[%s194 + $0x12c] sm:$0xf]
        %v279 = vld [vmem:[%s194 + $0x130] sm:$0xf]
        %v280 = vld [vmem:[%s194 + $0x134] sm:$0xf]
        %v281 = vld [vmem:[%s194 + $0x138] sm:$0xf]
        %v282 = vld [vmem:[%s194 + $0x13c] sm:$0xf]
        %v283 = vld [vmem:[%s194 + $0x140] sm:$0xf]
        %v284 = vld [vmem:[%s194 + $0x144] sm:$0xf]
        %v285 = vld [vmem:[%s194 + $0x148] sm:$0xf]
        %v286 = vld [vmem:[%s194 + $0x14c] sm:$0xf]
        %v287 = vld [vmem:[%s194 + $0x150] sm:$0xf]
        %v288 = vld [vmem:[%s194 + $0x154] sm:$0xf]
        %v289 = vld [vmem:[%s194 + $0x158] sm:$0xf]
        %v290 = vld [vmem:[%s194 + $0x15c] sm:$0xf]
        %v291 = vld [vmem:[%s194 + $0x160] sm:$0xf]
        %v292 = vld [vmem:[%s194 + $0x164] sm:$0xf]
        %v293 = vld [vmem:[%s194 + $0x168] sm:$0xf]
        %v294 = vld [vmem:[%s194 + $0x16c] sm:$0xf]
        %v295 = vld [vmem:[%s194 + $0x170] sm:$0xf]
        %v296 = vld [vmem:[%s194 + $0x174] sm:$0xf]
        %v297 = vld [vmem:[%s194 + $0x178] sm:$0xf]
        %v298 = vld [vmem:[%s194 + $0x17c] sm:$0xf]
        %v299 = vld [vmem:[%s194 + $0x180] sm:$0xf]
        %v300 = vld [vmem:[%s194 + $0x184] sm:$0xf]
        %v301 = vld [vmem:[%s194 + $0x188] sm:$0xf]
        %v302 = vld [vmem:[%s194 + $0x18c] sm:$0xf]
        %v303 = vld [vmem:[%s194 + $0x190] sm:$0xf]
        %v304 = vld [vmem:[%s194 + $0x194] sm:$0xf]
        %v305 = vld [vmem:[%s194 + $0x198] sm:$0xf]
        %v306 = vld [vmem:[%s194 + $0x19c] sm:$0xf]
        %v307 = vld [vmem:[%s194 + $0x1a0] sm:$0xf]
        %v308 = vld [vmem:[%s194 + $0x1a4] sm:$0xf]
        %v309 = vld [vmem:[%s194 + $0x1a8] sm:$0xf]
        %v310 = vld [vmem:[%s194 + $0x1ac] sm:$0xf]
        %v311 = vld [vmem:[%s194 + $0x1b0] sm:$0xf]
        %v312 = vld [vmem:[%s194 + $0x1b4] sm:$0xf]
        %v313 = vld [vmem:[%s194 + $0x1b8] sm:$0xf]
        %v314 = vld [vmem:[%s194 + $0x1bc] sm:$0xf]
        %v315 = vld [vmem:[%s194 + $0x1c0] sm:$0xf]
        %v316 = vld [vmem:[%s194 + $0x1c4] sm:$0xf]
        %v317 = vld [vmem:[%s194 + $0x1c8] sm:$0xf]
        %v318 = vld [vmem:[%s194 + $0x1cc] sm:$0xf]
        %v319 = vld [vmem:[%s194 + $0x1d0] sm:$0xf]
        %v320 = vld [vmem:[%s194 + $0x1d4] sm:$0xf]
        %v321 = vld [vmem:[%s194 + $0x1d8] sm:$0xf]
        %v322 = vld [vmem:[%s194 + $0x1dc] sm:$0xf]
        %v323 = vld [vmem:[%s194 + $0x1e0] sm:$0xf]
        %v324 = vld [vmem:[%s194 + $0x1e4] sm:$0xf]
        %v325 = vld [vmem:[%s194 + $0x1e8] sm:$0xf]
        %v326 = vld [vmem:[%s194 + $0x1ec] sm:$0xf]
        %v327 = vld [vmem:[%s194 + $0x1f0] sm:$0xf]
        %v328 = vld [vmem:[%s194 + $0x1f4] sm:$0xf]
        %v329 = vld [vmem:[%s194 + $0x1f8] sm:$0xf]
        %v330 = vld [vmem:[%s194 + $0x1fc] sm:$0xf]
        %v331 = vld [vmem:[#allocation2] sm:$0xf]
        %v332 = vld [vmem:[#allocation2 + $0x4] sm:$0xf]
        %v333 = vld [vmem:[#allocation2 + $0x8] sm:$0xf]
        %v334 = vld [vmem:[#allocation2 + $0xc] sm:$0x3]
        %v335 = vld [vmem:[#allocation4] sm:$0x1]
        %v337 = vlaneseq
        %v338 = vshrl.u32 %v337, 7
        %v339 = vsub.s32 0, %v338
        %v340 = vrot.slane %v335, %v339
        %v470 = vunpack.c.l.b16 %v203
        %v471 = vunpack.c.l.b16 %v204
        %v472 = vunpack.c.l.b16 %v205
        %v473 = vunpack.c.l.b16 %v206
        %v474 = vunpack.c.l.b16 %v207
        %v475 = vunpack.c.l.b16 %v208
        %v476 = vunpack.c.l.b16 %v209
        %v477 = vunpack.c.l.b16 %v210
        %v478 = vunpack.c.l.b16 %v211
        %v479 = vunpack.c.l.b16 %v212
        %v480 = vunpack.c.l.b16 %v213
        %v481 = vunpack.c.l.b16 %v214
        %v482 = vunpack.c.l.b16 %v215
        %v483 = vunpack.c.l.b16 %v216
        %v484 = vunpack.c.l.b16 %v217
        %v485 = vunpack.c.l.b16 %v218
        %v486 = vunpack.c.l.b16 %v219
        %v487 = vunpack.c.l.b16 %v220
        %v488 = vunpack.c.l.b16 %v221
        %v489 = vunpack.c.l.b16 %v222
        %v490 = vunpack.c.l.b16 %v223
        %v491 = vunpack.c.l.b16 %v224
        %v492 = vunpack.c.l.b16 %v225
        %v493 = vunpack.c.l.b16 %v226
        %v494 = vunpack.c.l.b16 %v227
        %v495 = vunpack.c.l.b16 %v228
        %v496 = vunpack.c.l.b16 %v229
        %v497 = vunpack.c.l.b16 %v230
        %v498 = vunpack.c.l.b16 %v231
        %v499 = vunpack.c.l.b16 %v232
        %v500 = vunpack.c.l.b16 %v233
        %v501 = vunpack.c.l.b16 %v234
        %v502 = vunpack.c.l.b16 %v235
        %v503 = vunpack.c.l.b16 %v236
        %v504 = vunpack.c.l.b16 %v237
        %v505 = vunpack.c.l.b16 %v238
        %v506 = vunpack.c.l.b16 %v239
        %v507 = vunpack.c.l.b16 %v240
        %v508 = vunpack.c.l.b16 %v241
        %v509 = vunpack.c.l.b16 %v242
        %v510 = vunpack.c.l.b16 %v243
        %v511 = vunpack.c.l.b16 %v244
        %v512 = vunpack.c.l.b16 %v245
        %v513 = vunpack.c.l.b16 %v246
        %v514 = vunpack.c.l.b16 %v247
        %v515 = vunpack.c.l.b16 %v248
        %v516 = vunpack.c.l.b16 %v249
        %v517 = vunpack.c.l.b16 %v250
        %v518 = vunpack.c.l.b16 %v251
        %v519 = vunpack.c.l.b16 %v252
        %v520 = vunpack.c.l.b16 %v253
        %v521 = vunpack.c.l.b16 %v254
        %v522 = vunpack.c.l.b16 %v255
        %v523 = vunpack.c.l.b16 %v256
        %v524 = vunpack.c.l.b16 %v257
        %v525 = vunpack.c.l.b16 %v258
        %v526 = vunpack.c.l.b16 %v259
        %v527 = vunpack.c.l.b16 %v260
        %v528 = vunpack.c.l.b16 %v261
        %v529 = vunpack.c.l.b16 %v262
        %v530 = vunpack.c.l.b16 %v263
        %v531 = vunpack.c.l.b16 %v264
        %v532 = vunpack.c.l.b16 %v265
        %v533 = vunpack.c.l.b16 %v266
        %v534 = vunpack.c.l.b16 %v267
        %v535 = vunpack.c.l.b16 %v268
        %v536 = vunpack.c.l.b16 %v269
        %v537 = vunpack.c.l.b16 %v270
        %v538 = vunpack.c.l.b16 %v271
        %v539 = vunpack.c.l.b16 %v272
        %v540 = vunpack.c.l.b16 %v273
        %v541 = vunpack.c.l.b16 %v274
        %v542 = vunpack.c.l.b16 %v275
        %v543 = vunpack.c.l.b16 %v276
        %v544 = vunpack.c.l.b16 %v277
        %v545 = vunpack.c.l.b16 %v278
        %v546 = vunpack.c.l.b16 %v279
        %v547 = vunpack.c.l.b16 %v280
        %v548 = vunpack.c.l.b16 %v281
        %v549 = vunpack.c.l.b16 %v282
        %v550 = vunpack.c.l.b16 %v283
        %v551 = vunpack.c.l.b16 %v284
        %v552 = vunpack.c.l.b16 %v285
        %v553 = vunpack.c.l.b16 %v286
        %v554 = vunpack.c.l.b16 %v287
        %v555 = vunpack.c.l.b16 %v288
        %v556 = vunpack.c.l.b16 %v289
        %v557 = vunpack.c.l.b16 %v290
        %v558 = vunpack.c.l.b16 %v291
        %v559 = vunpack.c.l.b16 %v292
        %v560 = vunpack.c.l.b16 %v293
        %v561 = vunpack.c.l.b16 %v294
        %v562 = vunpack.c.l.b16 %v295
        %v563 = vunpack.c.l.b16 %v296
        %v564 = vunpack.c.l.b16 %v297
        %v565 = vunpack.c.l.b16 %v298
        %v566 = vunpack.c.l.b16 %v299
        %v567 = vunpack.c.l.b16 %v300
        %v568 = vunpack.c.l.b16 %v301
        %v569 = vunpack.c.l.b16 %v302
        %v570 = vunpack.c.l.b16 %v303
        %v571 = vunpack.c.l.b16 %v304
        %v572 = vunpack.c.l.b16 %v305
        %v573 = vunpack.c.l.b16 %v306
        %v574 = vunpack.c.l.b16 %v307
        %v575 = vunpack.c.l.b16 %v308
        %v576 = vunpack.c.l.b16 %v309
        %v577 = vunpack.c.l.b16 %v310
        %v578 = vunpack.c.l.b16 %v311
        %v579 = vunpack.c.l.b16 %v312
        %v580 = vunpack.c.l.b16 %v313
        %v581 = vunpack.c.l.b16 %v314
        %v582 = vunpack.c.l.b16 %v315
        %v583 = vunpack.c.l.b16 %v316
        %v584 = vunpack.c.l.b16 %v317
        %v585 = vunpack.c.l.b16 %v318
        %v586 = vunpack.c.l.b16 %v319
        %v587 = vunpack.c.l.b16 %v320
        %v588 = vunpack.c.l.b16 %v321
        %v589 = vunpack.c.l.b16 %v322
        %v590 = vunpack.c.l.b16 %v323
        %v591 = vunpack.c.l.b16 %v324
        %v592 = vunpack.c.l.b16 %v325
        %v593 = vunpack.c.l.b16 %v326
        %v594 = vunpack.c.l.b16 %v327
        %v595 = vunpack.c.l.b16 %v328
        %v596 = vunpack.c.l.b16 %v329
        %v597 = vunpack.c.l.b16 %v330
        %v598 = vpack.c.b16 %v471, %v470
        %v599 = vpack.c.b16 %v473, %v472
        %v600 = vpack.c.b16 %v475, %v474
        %v601 = vpack.c.b16 %v477, %v476
        %v602 = vpack.c.b16 %v479, %v478
        %v603 = vpack.c.b16 %v481, %v480
        %v604 = vpack.c.b16 %v483, %v482
        %v605 = vpack.c.b16 %v485, %v484
        %v606 = vpack.c.b16 %v487, %v486
        %v607 = vpack.c.b16 %v489, %v488
        %v608 = vpack.c.b16 %v491, %v490
        %v609 = vpack.c.b16 %v493, %v492
        %v610 = vpack.c.b16 %v495, %v494
        %v611 = vpack.c.b16 %v497, %v496
        %v612 = vpack.c.b16 %v499, %v498
        %v613 = vpack.c.b16 %v501, %v500
        %v614 = vpack.c.b16 %v503, %v502
        %v615 = vpack.c.b16 %v505, %v504
        %v616 = vpack.c.b16 %v507, %v506
        %v617 = vpack.c.b16 %v509, %v508
        %v618 = vpack.c.b16 %v511, %v510
        %v619 = vpack.c.b16 %v513, %v512
        %v620 = vpack.c.b16 %v515, %v514
        %v621 = vpack.c.b16 %v517, %v516
        %v622 = vpack.c.b16 %v519, %v518
        %v623 = vpack.c.b16 %v521, %v520
        %v624 = vpack.c.b16 %v523, %v522
        %v625 = vpack.c.b16 %v525, %v524
        %v626 = vpack.c.b16 %v527, %v526
        %v627 = vpack.c.b16 %v529, %v528
        %v628 = vpack.c.b16 %v531, %v530
        %v629 = vpack.c.b16 %v533, %v532
        %v630 = vpack.c.b16 %v535, %v534
        %v631 = vpack.c.b16 %v537, %v536
        %v632 = vpack.c.b16 %v539, %v538
        %v633 = vpack.c.b16 %v541, %v540
        %v634 = vpack.c.b16 %v543, %v542
        %v635 = vpack.c.b16 %v545, %v544
        %v636 = vpack.c.b16 %v547, %v546
        %v637 = vpack.c.b16 %v549, %v548
        %v638 = vpack.c.b16 %v551, %v550
        %v639 = vpack.c.b16 %v553, %v552
        %v640 = vpack.c.b16 %v555, %v554
        %v641 = vpack.c.b16 %v557, %v556
        %v642 = vpack.c.b16 %v559, %v558
        %v643 = vpack.c.b16 %v561, %v560
        %v644 = vpack.c.b16 %v563, %v562
        %v645 = vpack.c.b16 %v565, %v564
        %v646 = vpack.c.b16 %v567, %v566
        %v647 = vpack.c.b16 %v569, %v568
        %v648 = vpack.c.b16 %v571, %v570
        %v649 = vpack.c.b16 %v573, %v572
        %v650 = vpack.c.b16 %v575, %v574
        %v651 = vpack.c.b16 %v577, %v576
        %v652 = vpack.c.b16 %v579, %v578
        %v653 = vpack.c.b16 %v581, %v580
        %v654 = vpack.c.b16 %v583, %v582
        %v655 = vpack.c.b16 %v585, %v584
        %v656 = vpack.c.b16 %v587, %v586
        %v657 = vpack.c.b16 %v589, %v588
        %v658 = vpack.c.b16 %v591, %v590
        %v659 = vpack.c.b16 %v593, %v592
        %v660 = vpack.c.b16 %v595, %v594
        %v661 = vpack.c.b16 %v597, %v596
        %v666 = vunpack.c.l.b16 %v331
        %v667 = vunpack.c.l.b16 %v332
        %v668 = vunpack.c.l.b16 %v333
        %v669 = vunpack.c.l.b16 %v334
        %v670 = vpack.c.b16 %v667, %v666
        %v671 = vpack.c.b16 %v669, %v668
        %vm673 = vcmask 220160
        %v675 = vsel %vm673, %v598, 0
        %v678 = vsel %vm673, %v599, 0
        %v681 = vsel %vm673, %v600, 0
        %v684 = vsel %vm673, %v601, 0
        %v687 = vsel %vm673, %v602, 0
        %v690 = vsel %vm673, %v603, 0
        %v693 = vsel %vm673, %v604, 0
        %v696 = vsel %vm673, %v605, 0
        %v699 = vsel %vm673, %v606, 0
        %v702 = vsel %vm673, %v607, 0
        %v705 = vsel %vm673, %v608, 0
        %v708 = vsel %vm673, %v609, 0
        %v711 = vsel %vm673, %v610, 0
        %v714 = vsel %vm673, %v611, 0
        %v717 = vsel %vm673, %v612, 0
        %v720 = vsel %vm673, %v613, 0
        %v723 = vsel %vm673, %v614, 0
        %v726 = vsel %vm673, %v615, 0
        %v729 = vsel %vm673, %v616, 0
        %v732 = vsel %vm673, %v617, 0
        %v735 = vsel %vm673, %v618, 0
        %v738 = vsel %vm673, %v619, 0
        %v741 = vsel %vm673, %v620, 0
        %v744 = vsel %vm673, %v621, 0
        %v747 = vsel %vm673, %v622, 0
        %v750 = vsel %vm673, %v623, 0
        %v753 = vsel %vm673, %v624, 0
        %v756 = vsel %vm673, %v625, 0
        %v759 = vsel %vm673, %v626, 0
        %v762 = vsel %vm673, %v627, 0
        %v765 = vsel %vm673, %v628, 0
        %v768 = vsel %vm673, %v629, 0
        %v771 = vsel %vm673, %v630, 0
        %v774 = vsel %vm673, %v631, 0
        %v777 = vsel %vm673, %v632, 0
        %v780 = vsel %vm673, %v633, 0
        %v783 = vsel %vm673, %v634, 0
        %v786 = vsel %vm673, %v635, 0
        %v789 = vsel %vm673, %v636, 0
        %v792 = vsel %vm673, %v637, 0
        %v795 = vsel %vm673, %v638, 0
        %v798 = vsel %vm673, %v639, 0
        %v801 = vsel %vm673, %v640, 0
        %v804 = vsel %vm673, %v641, 0
        %v807 = vsel %vm673, %v642, 0
        %v810 = vsel %vm673, %v643, 0
        %v813 = vsel %vm673, %v644, 0
        %v816 = vsel %vm673, %v645, 0
        %v819 = vsel %vm673, %v646, 0
        %v822 = vsel %vm673, %v647, 0
        %v825 = vsel %vm673, %v648, 0
        %v828 = vsel %vm673, %v649, 0
        %v831 = vsel %vm673, %v650, 0
        %v834 = vsel %vm673, %v651, 0
        %v837 = vsel %vm673, %v652, 0
        %v840 = vsel %vm673, %v653, 0
        %v843 = vsel %vm673, %v654, 0
        %v846 = vsel %vm673, %v655, 0
        %v849 = vsel %vm673, %v656, 0
        %v852 = vsel %vm673, %v657, 0
        %v855 = vsel %vm673, %v658, 0
        %v858 = vsel %vm673, %v659, 0
        %v861 = vsel %vm673, %v660, 0
        %v864 = vsel %vm673, %v661, 0
        %vm866 = vcmask 1044480
        %vm867 = vcmask 1045504
        %v868 = vsel %vm866, 4294967295, 65535
        %v869 = vsel %vm867, %v868, 0
        %v871 = vand.u32 %v671, %v869
        %873 = vmatprep.subr.bf16.mxu0 0
        %874 = vmatpush1.bf16.msra.mxu0 0
        %875 = vmatprep.subr.bf16.mxu0 0
        %876 = vmatpush1.bf16.msra.mxu0 0
        %877 = vmatprep.subr.bf16.mxu0 0
        %878 = vmatpush1.bf16.msra.mxu0 0
        %879 = vmatprep.subr.bf16.mxu0 0
        %880 = vmatpush1.bf16.msra.mxu0 0
        %881 = vmatprep.subr.bf16.mxu0 0
        %882 = vmatpush1.bf16.msra.mxu0 0
        %883 = vmatprep.subr.bf16.mxu0 0
        %884 = vmatpush1.bf16.msra.mxu0 0
        %885 = vmatprep.subr.bf16.mxu0 0
        %886 = vmatpush1.bf16.msra.mxu0 %v871
        %887 = vmatprep.subr.bf16.mxu0 0
        %888 = vmatpush1.bf16.msra.mxu0 %v670
        %889 = vmatprep.subr.bf16.mxu0 0
        %890 = vmatpush2.bf16.msra.mxu0 0
        %891 = vmatprep.subr.bf16.mxu0 0
        %892 = vmatpush2.bf16.msra.mxu0 0
        %893 = vmatprep.subr.bf16.mxu0 0
        %894 = vmatpush2.bf16.msra.mxu0 0
        %895 = vmatprep.subr.bf16.mxu0 0
        %896 = vmatpush2.bf16.msra.mxu0 0
        %897 = vmatprep.subr.bf16.mxu0 0
        %898 = vmatpush2.bf16.msra.mxu0 0
        %899 = vmatprep.subr.bf16.mxu0 0
        %900 = vmatpush2.bf16.msra.mxu0 0
        %901 = vmatprep.subr.bf16.mxu0 0
        %902 = vmatpush2.bf16.msra.mxu0 0
        %903 = vmatprep.subr.bf16.mxu0 0
        %904 = vmatpush2.bf16.msra.mxu0 0
        %905 = vmatprep.mubr.bf16.mxu0 0
        %906 = vmatmul.mubr.bf16.gmra.mxu0 %v675
        %v907 = vpop.f32.mrf.mxu0
        %v908 = vadd.f32 %v340, %v907
        %v909 = vpop.f32.mrf.mxu0
        %v910 = vpop.f32.mrf.mxu0
        %v911 = vadd.f32 %v340, %v910
        %v912 = vpop.f32.mrf.mxu0
        %913 = vmatprep.mubr.bf16.mxu0 0
        %914 = vmatmul.mubr.bf16.gmra.mxu0 %v678
        %v915 = vpop.f32.mrf.mxu0
        %v916 = vadd.f32 %v340, %v915
        %v917 = vpop.f32.mrf.mxu0
        %v918 = vpop.f32.mrf.mxu0
        %v919 = vadd.f32 %v340, %v918
        %v920 = vpop.f32.mrf.mxu0
        %921 = vmatprep.mubr.bf16.mxu0 0
        %922 = vmatmul.mubr.bf16.gmra.mxu0 %v681
        %v923 = vpop.f32.mrf.mxu0
        %v924 = vadd.f32 %v340, %v923
        %v925 = vpop.f32.mrf.mxu0
        %v926 = vpop.f32.mrf.mxu0
        %v927 = vadd.f32 %v340, %v926
        %v928 = vpop.f32.mrf.mxu0
        %929 = vmatprep.mubr.bf16.mxu0 0
        %930 = vmatmul.mubr.bf16.gmra.mxu0 %v684
        %v931 = vpop.f32.mrf.mxu0
        %v932 = vadd.f32 %v340, %v931
        %v933 = vpop.f32.mrf.mxu0
        %v934 = vpop.f32.mrf.mxu0
        %v935 = vadd.f32 %v340, %v934
        %v936 = vpop.f32.mrf.mxu0
        %937 = vmatprep.mubr.bf16.mxu0 0
        %938 = vmatmul.mubr.bf16.gmra.mxu0 %v687
        %v939 = vpop.f32.mrf.mxu0
        %v940 = vadd.f32 %v340, %v939
        %v941 = vpop.f32.mrf.mxu0
        %v942 = vpop.f32.mrf.mxu0
        %v943 = vadd.f32 %v340, %v942
        %v944 = vpop.f32.mrf.mxu0
        %945 = vmatprep.mubr.bf16.mxu0 0
        %946 = vmatmul.mubr.bf16.gmra.mxu0 %v690
        %v947 = vpop.f32.mrf.mxu0
        %v948 = vadd.f32 %v340, %v947
        %v949 = vpop.f32.mrf.mxu0
        %v950 = vpop.f32.mrf.mxu0
        %v951 = vadd.f32 %v340, %v950
        %v952 = vpop.f32.mrf.mxu0
        %953 = vmatprep.mubr.bf16.mxu0 0
        %954 = vmatmul.mubr.bf16.gmra.mxu0 %v693
        %v955 = vpop.f32.mrf.mxu0
        %v956 = vadd.f32 %v340, %v955
        %v957 = vpop.f32.mrf.mxu0
        %v958 = vpop.f32.mrf.mxu0
        %v959 = vadd.f32 %v340, %v958
        %v960 = vpop.f32.mrf.mxu0
        %961 = vmatprep.mubr.bf16.mxu0 0
        %962 = vmatmul.mubr.bf16.gmra.mxu0 %v696
        %v963 = vpop.f32.mrf.mxu0
        %v964 = vadd.f32 %v340, %v963
        %v965 = vpop.f32.mrf.mxu0
        %v966 = vpop.f32.mrf.mxu0
        %v967 = vadd.f32 %v340, %v966
        %v968 = vpop.f32.mrf.mxu0
        %969 = vmatprep.mubr.bf16.mxu0 0
        %970 = vmatmul.mubr.bf16.gmra.mxu0 %v699
        %v971 = vpop.f32.mrf.mxu0
        %v972 = vadd.f32 %v340, %v971
        %v973 = vpop.f32.mrf.mxu0
        %v974 = vpop.f32.mrf.mxu0
        %v975 = vadd.f32 %v340, %v974
        %v976 = vpop.f32.mrf.mxu0
        %977 = vmatprep.mubr.bf16.mxu0 0
        %978 = vmatmul.mubr.bf16.gmra.mxu0 %v702
        %v979 = vpop.f32.mrf.mxu0
        %v980 = vadd.f32 %v340, %v979
        %v981 = vpop.f32.mrf.mxu0
        %v982 = vpop.f32.mrf.mxu0
        %v983 = vadd.f32 %v340, %v982
        %v984 = vpop.f32.mrf.mxu0
        %985 = vmatprep.mubr.bf16.mxu0 0
        %986 = vmatmul.mubr.bf16.gmra.mxu0 %v705
        %v987 = vpop.f32.mrf.mxu0
        %v988 = vadd.f32 %v340, %v987
        %v989 = vpop.f32.mrf.mxu0
        %v990 = vpop.f32.mrf.mxu0
        %v991 = vadd.f32 %v340, %v990
        %v992 = vpop.f32.mrf.mxu0
        %993 = vmatprep.mubr.bf16.mxu0 0
        %994 = vmatmul.mubr.bf16.gmra.mxu0 %v708
        %v995 = vpop.f32.mrf.mxu0
        %v996 = vadd.f32 %v340, %v995
        %v997 = vpop.f32.mrf.mxu0
        %v998 = vpop.f32.mrf.mxu0
        %v999 = vadd.f32 %v340, %v998
        %v1000 = vpop.f32.mrf.mxu0
        %1001 = vmatprep.mubr.bf16.mxu0 0
        %1002 = vmatmul.mubr.bf16.gmra.mxu0 %v711
        %v1003 = vpop.f32.mrf.mxu0
        %v1004 = vadd.f32 %v340, %v1003
        %v1005 = vpop.f32.mrf.mxu0
        %v1006 = vpop.f32.mrf.mxu0
        %v1007 = vadd.f32 %v340, %v1006
        %v1008 = vpop.f32.mrf.mxu0
        %1009 = vmatprep.mubr.bf16.mxu0 0
        %1010 = vmatmul.mubr.bf16.gmra.mxu0 %v714
        %v1011 = vpop.f32.mrf.mxu0
        %v1012 = vadd.f32 %v340, %v1011
        %v1013 = vpop.f32.mrf.mxu0
        %v1014 = vpop.f32.mrf.mxu0
        %v1015 = vadd.f32 %v340, %v1014
        %v1016 = vpop.f32.mrf.mxu0
        %1017 = vmatprep.mubr.bf16.mxu0 0
        %1018 = vmatmul.mubr.bf16.gmra.mxu0 %v717
        %v1019 = vpop.f32.mrf.mxu0
        %v1020 = vadd.f32 %v340, %v1019
        %v1021 = vpop.f32.mrf.mxu0
        %v1022 = vpop.f32.mrf.mxu0
        %v1023 = vadd.f32 %v340, %v1022
        %v1024 = vpop.f32.mrf.mxu0
        %1025 = vmatprep.mubr.bf16.mxu0 0
        %1026 = vmatmul.mubr.bf16.gmra.mxu0 %v720
        %v1027 = vpop.f32.mrf.mxu0
        %v1028 = vadd.f32 %v340, %v1027
        %v1029 = vpop.f32.mrf.mxu0
        %v1030 = vpop.f32.mrf.mxu0
        %v1031 = vadd.f32 %v340, %v1030
        %v1032 = vpop.f32.mrf.mxu0
        %1033 = vmatprep.mubr.bf16.mxu0 0
        %1034 = vmatmul.mubr.bf16.gmra.mxu0 %v723
        %v1035 = vpop.f32.mrf.mxu0
        %v1036 = vadd.f32 %v340, %v1035
        %v1037 = vpop.f32.mrf.mxu0
        %v1038 = vpop.f32.mrf.mxu0
        %v1039 = vadd.f32 %v340, %v1038
        %v1040 = vpop.f32.mrf.mxu0
        %1041 = vmatprep.mubr.bf16.mxu0 0
        %1042 = vmatmul.mubr.bf16.gmra.mxu0 %v726
        %v1043 = vpop.f32.mrf.mxu0
        %v1044 = vadd.f32 %v340, %v1043
        %v1045 = vpop.f32.mrf.mxu0
        %v1046 = vpop.f32.mrf.mxu0
        %v1047 = vadd.f32 %v340, %v1046
        %v1048 = vpop.f32.mrf.mxu0
        %1049 = vmatprep.mubr.bf16.mxu0 0
        %1050 = vmatmul.mubr.bf16.gmra.mxu0 %v729
        %v1051 = vpop.f32.mrf.mxu0
        %v1052 = vadd.f32 %v340, %v1051
        %v1053 = vpop.f32.mrf.mxu0
        %v1054 = vpop.f32.mrf.mxu0
        %v1055 = vadd.f32 %v340, %v1054
        %v1056 = vpop.f32.mrf.mxu0
        %1057 = vmatprep.mubr.bf16.mxu0 0
        %1058 = vmatmul.mubr.bf16.gmra.mxu0 %v732
        %v1059 = vpop.f32.mrf.mxu0
        %v1060 = vadd.f32 %v340, %v1059
        %v1061 = vpop.f32.mrf.mxu0
        %v1062 = vpop.f32.mrf.mxu0
        %v1063 = vadd.f32 %v340, %v1062
        %v1064 = vpop.f32.mrf.mxu0
        %1065 = vmatprep.mubr.bf16.mxu0 0
        %1066 = vmatmul.mubr.bf16.gmra.mxu0 %v735
        %v1067 = vpop.f32.mrf.mxu0
        %v1068 = vadd.f32 %v340, %v1067
        %v1069 = vpop.f32.mrf.mxu0
        %v1070 = vpop.f32.mrf.mxu0
        %v1071 = vadd.f32 %v340, %v1070
        %v1072 = vpop.f32.mrf.mxu0
        %1073 = vmatprep.mubr.bf16.mxu0 0
        %1074 = vmatmul.mubr.bf16.gmra.mxu0 %v738
        %v1075 = vpop.f32.mrf.mxu0
        %v1076 = vadd.f32 %v340, %v1075
        %v1077 = vpop.f32.mrf.mxu0
        %v1078 = vpop.f32.mrf.mxu0
        %v1079 = vadd.f32 %v340, %v1078
        %v1080 = vpop.f32.mrf.mxu0
        %1081 = vmatprep.mubr.bf16.mxu0 0
        %1082 = vmatmul.mubr.bf16.gmra.mxu0 %v741
        %v1083 = vpop.f32.mrf.mxu0
        %v1084 = vadd.f32 %v340, %v1083
        %v1085 = vpop.f32.mrf.mxu0
        %v1086 = vpop.f32.mrf.mxu0
        %v1087 = vadd.f32 %v340, %v1086
        %v1088 = vpop.f32.mrf.mxu0
        %1089 = vmatprep.mubr.bf16.mxu0 0
        %1090 = vmatmul.mubr.bf16.gmra.mxu0 %v744
        %v1091 = vpop.f32.mrf.mxu0
        %v1092 = vadd.f32 %v340, %v1091
        %v1093 = vpop.f32.mrf.mxu0
        %v1094 = vpop.f32.mrf.mxu0
        %v1095 = vadd.f32 %v340, %v1094
        %v1096 = vpop.f32.mrf.mxu0
        %1097 = vmatprep.mubr.bf16.mxu0 0
        %1098 = vmatmul.mubr.bf16.gmra.mxu0 %v747
        %v1099 = vpop.f32.mrf.mxu0
        %v1100 = vadd.f32 %v340, %v1099
        %v1101 = vpop.f32.mrf.mxu0
        %v1102 = vpop.f32.mrf.mxu0
        %v1103 = vadd.f32 %v340, %v1102
        %v1104 = vpop.f32.mrf.mxu0
        %1105 = vmatprep.mubr.bf16.mxu0 0
        %1106 = vmatmul.mubr.bf16.gmra.mxu0 %v750
        %v1107 = vpop.f32.mrf.mxu0
        %v1108 = vadd.f32 %v340, %v1107
        %v1109 = vpop.f32.mrf.mxu0
        %v1110 = vpop.f32.mrf.mxu0
        %v1111 = vadd.f32 %v340, %v1110
        %v1112 = vpop.f32.mrf.mxu0
        %1113 = vmatprep.mubr.bf16.mxu0 0
        %1114 = vmatmul.mubr.bf16.gmra.mxu0 %v753
        %v1115 = vpop.f32.mrf.mxu0
        %v1116 = vadd.f32 %v340, %v1115
        %v1117 = vpop.f32.mrf.mxu0
        %v1118 = vpop.f32.mrf.mxu0
        %v1119 = vadd.f32 %v340, %v1118
        %v1120 = vpop.f32.mrf.mxu0
        %1121 = vmatprep.mubr.bf16.mxu0 0
        %1122 = vmatmul.mubr.bf16.gmra.mxu0 %v756
        %v1123 = vpop.f32.mrf.mxu0
        %v1124 = vadd.f32 %v340, %v1123
        %v1125 = vpop.f32.mrf.mxu0
        %v1126 = vpop.f32.mrf.mxu0
        %v1127 = vadd.f32 %v340, %v1126
        %v1128 = vpop.f32.mrf.mxu0
        %1129 = vmatprep.mubr.bf16.mxu0 0
        %1130 = vmatmul.mubr.bf16.gmra.mxu0 %v759
        %v1131 = vpop.f32.mrf.mxu0
        %v1132 = vadd.f32 %v340, %v1131
        %v1133 = vpop.f32.mrf.mxu0
        %v1134 = vpop.f32.mrf.mxu0
        %v1135 = vadd.f32 %v340, %v1134
        %v1136 = vpop.f32.mrf.mxu0
        %1137 = vmatprep.mubr.bf16.mxu0 0
        %1138 = vmatmul.mubr.bf16.gmra.mxu0 %v762
        %v1139 = vpop.f32.mrf.mxu0
        %v1140 = vadd.f32 %v340, %v1139
        %v1141 = vpop.f32.mrf.mxu0
        %v1142 = vpop.f32.mrf.mxu0
        %v1143 = vadd.f32 %v340, %v1142
        %v1144 = vpop.f32.mrf.mxu0
        %1145 = vmatprep.mubr.bf16.mxu0 0
        %1146 = vmatmul.mubr.bf16.gmra.mxu0 %v765
        %v1147 = vpop.f32.mrf.mxu0
        %v1148 = vadd.f32 %v340, %v1147
        %v1149 = vpop.f32.mrf.mxu0
        %v1150 = vpop.f32.mrf.mxu0
        %v1151 = vadd.f32 %v340, %v1150
        %v1152 = vpop.f32.mrf.mxu0
        %1153 = vmatprep.mubr.bf16.mxu0 0
        %1154 = vmatmul.mubr.bf16.gmra.mxu0 %v768
        %v1155 = vpop.f32.mrf.mxu0
        %v1156 = vadd.f32 %v340, %v1155
        %v1157 = vpop.f32.mrf.mxu0
        %v1158 = vpop.f32.mrf.mxu0
        %v1159 = vadd.f32 %v340, %v1158
        %v1160 = vpop.f32.mrf.mxu0
        %1161 = vmatprep.mubr.bf16.mxu0 0
        %1162 = vmatmul.mubr.bf16.gmra.mxu0 %v771
        %v1163 = vpop.f32.mrf.mxu0
        %v1164 = vadd.f32 %v340, %v1163
        %v1165 = vpop.f32.mrf.mxu0
        %v1166 = vpop.f32.mrf.mxu0
        %v1167 = vadd.f32 %v340, %v1166
        %v1168 = vpop.f32.mrf.mxu0
        %1169 = vmatprep.mubr.bf16.mxu0 0
        %1170 = vmatmul.mubr.bf16.gmra.mxu0 %v774
        %v1171 = vpop.f32.mrf.mxu0
        %v1172 = vadd.f32 %v340, %v1171
        %v1173 = vpop.f32.mrf.mxu0
        %v1174 = vpop.f32.mrf.mxu0
        %v1175 = vadd.f32 %v340, %v1174
        %v1176 = vpop.f32.mrf.mxu0
        %1177 = vmatprep.mubr.bf16.mxu0 0
        %1178 = vmatmul.mubr.bf16.gmra.mxu0 %v777
        %v1179 = vpop.f32.mrf.mxu0
        %v1180 = vadd.f32 %v340, %v1179
        %v1181 = vpop.f32.mrf.mxu0
        %v1182 = vpop.f32.mrf.mxu0
        %v1183 = vadd.f32 %v340, %v1182
        %v1184 = vpop.f32.mrf.mxu0
        %1185 = vmatprep.mubr.bf16.mxu0 0
        %1186 = vmatmul.mubr.bf16.gmra.mxu0 %v780
        %v1187 = vpop.f32.mrf.mxu0
        %v1188 = vadd.f32 %v340, %v1187
        %v1189 = vpop.f32.mrf.mxu0
        %v1190 = vpop.f32.mrf.mxu0
        %v1191 = vadd.f32 %v340, %v1190
        %v1192 = vpop.f32.mrf.mxu0
        %1193 = vmatprep.mubr.bf16.mxu0 0
        %1194 = vmatmul.mubr.bf16.gmra.mxu0 %v783
        %v1195 = vpop.f32.mrf.mxu0
        %v1196 = vadd.f32 %v340, %v1195
        %v1197 = vpop.f32.mrf.mxu0
        %v1198 = vpop.f32.mrf.mxu0
        %v1199 = vadd.f32 %v340, %v1198
        %v1200 = vpop.f32.mrf.mxu0
        %1201 = vmatprep.mubr.bf16.mxu0 0
        %1202 = vmatmul.mubr.bf16.gmra.mxu0 %v786
        %v1203 = vpop.f32.mrf.mxu0
        %v1204 = vadd.f32 %v340, %v1203
        %v1205 = vpop.f32.mrf.mxu0
        %v1206 = vpop.f32.mrf.mxu0
        %v1207 = vadd.f32 %v340, %v1206
        %v1208 = vpop.f32.mrf.mxu0
        %1209 = vmatprep.mubr.bf16.mxu0 0
        %1210 = vmatmul.mubr.bf16.gmra.mxu0 %v789
        %v1211 = vpop.f32.mrf.mxu0
        %v1212 = vadd.f32 %v340, %v1211
        %v1213 = vpop.f32.mrf.mxu0
        %v1214 = vpop.f32.mrf.mxu0
        %v1215 = vadd.f32 %v340, %v1214
        %v1216 = vpop.f32.mrf.mxu0
        %1217 = vmatprep.mubr.bf16.mxu0 0
        %1218 = vmatmul.mubr.bf16.gmra.mxu0 %v792
        %v1219 = vpop.f32.mrf.mxu0
        %v1220 = vadd.f32 %v340, %v1219
        %v1221 = vpop.f32.mrf.mxu0
        %v1222 = vpop.f32.mrf.mxu0
        %v1223 = vadd.f32 %v340, %v1222
        %v1224 = vpop.f32.mrf.mxu0
        %1225 = vmatprep.mubr.bf16.mxu0 0
        %1226 = vmatmul.mubr.bf16.gmra.mxu0 %v795
        %v1227 = vpop.f32.mrf.mxu0
        %v1228 = vadd.f32 %v340, %v1227
        %v1229 = vpop.f32.mrf.mxu0
        %v1230 = vpop.f32.mrf.mxu0
        %v1231 = vadd.f32 %v340, %v1230
        %v1232 = vpop.f32.mrf.mxu0
        %1233 = vmatprep.mubr.bf16.mxu0 0
        %1234 = vmatmul.mubr.bf16.gmra.mxu0 %v798
        %v1235 = vpop.f32.mrf.mxu0
        %v1236 = vadd.f32 %v340, %v1235
        %v1237 = vpop.f32.mrf.mxu0
        %v1238 = vpop.f32.mrf.mxu0
        %v1239 = vadd.f32 %v340, %v1238
        %v1240 = vpop.f32.mrf.mxu0
        %1241 = vmatprep.mubr.bf16.mxu0 0
        %1242 = vmatmul.mubr.bf16.gmra.mxu0 %v801
        %v1243 = vpop.f32.mrf.mxu0
        %v1244 = vadd.f32 %v340, %v1243
        %v1245 = vpop.f32.mrf.mxu0
        %v1246 = vpop.f32.mrf.mxu0
        %v1247 = vadd.f32 %v340, %v1246
        %v1248 = vpop.f32.mrf.mxu0
        %1249 = vmatprep.mubr.bf16.mxu0 0
        %1250 = vmatmul.mubr.bf16.gmra.mxu0 %v804
        %v1251 = vpop.f32.mrf.mxu0
        %v1252 = vadd.f32 %v340, %v1251
        %v1253 = vpop.f32.mrf.mxu0
        %v1254 = vpop.f32.mrf.mxu0
        %v1255 = vadd.f32 %v340, %v1254
        %v1256 = vpop.f32.mrf.mxu0
        %1257 = vmatprep.mubr.bf16.mxu0 0
        %1258 = vmatmul.mubr.bf16.gmra.mxu0 %v807
        %v1259 = vpop.f32.mrf.mxu0
        %v1260 = vadd.f32 %v340, %v1259
        %v1261 = vpop.f32.mrf.mxu0
        %v1262 = vpop.f32.mrf.mxu0
        %v1263 = vadd.f32 %v340, %v1262
        %v1264 = vpop.f32.mrf.mxu0
        %1265 = vmatprep.mubr.bf16.mxu0 0
        %1266 = vmatmul.mubr.bf16.gmra.mxu0 %v810
        %v1267 = vpop.f32.mrf.mxu0
        %v1268 = vadd.f32 %v340, %v1267
        %v1269 = vpop.f32.mrf.mxu0
        %v1270 = vpop.f32.mrf.mxu0
        %v1271 = vadd.f32 %v340, %v1270
        %v1272 = vpop.f32.mrf.mxu0
        %1273 = vmatprep.mubr.bf16.mxu0 0
        %1274 = vmatmul.mubr.bf16.gmra.mxu0 %v813
        %v1275 = vpop.f32.mrf.mxu0
        %v1276 = vadd.f32 %v340, %v1275
        %v1277 = vpop.f32.mrf.mxu0
        %v1278 = vpop.f32.mrf.mxu0
        %v1279 = vadd.f32 %v340, %v1278
        %v1280 = vpop.f32.mrf.mxu0
        %1281 = vmatprep.mubr.bf16.mxu0 0
        %1282 = vmatmul.mubr.bf16.gmra.mxu0 %v816
        %v1283 = vpop.f32.mrf.mxu0
        %v1284 = vadd.f32 %v340, %v1283
        %v1285 = vpop.f32.mrf.mxu0
        %v1286 = vpop.f32.mrf.mxu0
        %v1287 = vadd.f32 %v340, %v1286
        %v1288 = vpop.f32.mrf.mxu0
        %1289 = vmatprep.mubr.bf16.mxu0 0
        %1290 = vmatmul.mubr.bf16.gmra.mxu0 %v819
        %v1291 = vpop.f32.mrf.mxu0
        %v1292 = vadd.f32 %v340, %v1291
        %v1293 = vpop.f32.mrf.mxu0
        %v1294 = vpop.f32.mrf.mxu0
        %v1295 = vadd.f32 %v340, %v1294
        %v1296 = vpop.f32.mrf.mxu0
        %1297 = vmatprep.mubr.bf16.mxu0 0
        %1298 = vmatmul.mubr.bf16.gmra.mxu0 %v822
        %v1299 = vpop.f32.mrf.mxu0
        %v1300 = vadd.f32 %v340, %v1299
        %v1301 = vpop.f32.mrf.mxu0
        %v1302 = vpop.f32.mrf.mxu0
        %v1303 = vadd.f32 %v340, %v1302
        %v1304 = vpop.f32.mrf.mxu0
        %1305 = vmatprep.mubr.bf16.mxu0 0
        %1306 = vmatmul.mubr.bf16.gmra.mxu0 %v825
        %v1307 = vpop.f32.mrf.mxu0
        %v1308 = vadd.f32 %v340, %v1307
        %v1309 = vpop.f32.mrf.mxu0
        %v1310 = vpop.f32.mrf.mxu0
        %v1311 = vadd.f32 %v340, %v1310
        %v1312 = vpop.f32.mrf.mxu0
        %1313 = vmatprep.mubr.bf16.mxu0 0
        %1314 = vmatmul.mubr.bf16.gmra.mxu0 %v828
        %v1315 = vpop.f32.mrf.mxu0
        %v1316 = vadd.f32 %v340, %v1315
        %v1317 = vpop.f32.mrf.mxu0
        %v1318 = vpop.f32.mrf.mxu0
        %v1319 = vadd.f32 %v340, %v1318
        %v1320 = vpop.f32.mrf.mxu0
        %1321 = vmatprep.mubr.bf16.mxu0 0
        %1322 = vmatmul.mubr.bf16.gmra.mxu0 %v831
        %v1323 = vpop.f32.mrf.mxu0
        %v1324 = vadd.f32 %v340, %v1323
        %v1325 = vpop.f32.mrf.mxu0
        %v1326 = vpop.f32.mrf.mxu0
        %v1327 = vadd.f32 %v340, %v1326
        %v1328 = vpop.f32.mrf.mxu0
        %1329 = vmatprep.mubr.bf16.mxu0 0
        %1330 = vmatmul.mubr.bf16.gmra.mxu0 %v834
        %v1331 = vpop.f32.mrf.mxu0
        %v1332 = vadd.f32 %v340, %v1331
        %v1333 = vpop.f32.mrf.mxu0
        %v1334 = vpop.f32.mrf.mxu0
        %v1335 = vadd.f32 %v340, %v1334
        %v1336 = vpop.f32.mrf.mxu0
        %1337 = vmatprep.mubr.bf16.mxu0 0
        %1338 = vmatmul.mubr.bf16.gmra.mxu0 %v837
        %v1339 = vpop.f32.mrf.mxu0
        %v1340 = vadd.f32 %v340, %v1339
        %v1341 = vpop.f32.mrf.mxu0
        %v1342 = vpop.f32.mrf.mxu0
        %v1343 = vadd.f32 %v340, %v1342
        %v1344 = vpop.f32.mrf.mxu0
        %1345 = vmatprep.mubr.bf16.mxu0 0
        %1346 = vmatmul.mubr.bf16.gmra.mxu0 %v840
        %v1347 = vpop.f32.mrf.mxu0
        %v1348 = vadd.f32 %v340, %v1347
        %v1349 = vpop.f32.mrf.mxu0
        %v1350 = vpop.f32.mrf.mxu0
        %v1351 = vadd.f32 %v340, %v1350
        %v1352 = vpop.f32.mrf.mxu0
        %1353 = vmatprep.mubr.bf16.mxu0 0
        %1354 = vmatmul.mubr.bf16.gmra.mxu0 %v843
        %v1355 = vpop.f32.mrf.mxu0
        %v1356 = vadd.f32 %v340, %v1355
        %v1357 = vpop.f32.mrf.mxu0
        %v1358 = vpop.f32.mrf.mxu0
        %v1359 = vadd.f32 %v340, %v1358
        %v1360 = vpop.f32.mrf.mxu0
        %1361 = vmatprep.mubr.bf16.mxu0 0
        %1362 = vmatmul.mubr.bf16.gmra.mxu0 %v846
        %v1363 = vpop.f32.mrf.mxu0
        %v1364 = vadd.f32 %v340, %v1363
        %v1365 = vpop.f32.mrf.mxu0
        %v1366 = vpop.f32.mrf.mxu0
        %v1367 = vadd.f32 %v340, %v1366
        %v1368 = vpop.f32.mrf.mxu0
        %1369 = vmatprep.mubr.bf16.mxu0 0
        %1370 = vmatmul.mubr.bf16.gmra.mxu0 %v849
        %v1371 = vpop.f32.mrf.mxu0
        %v1372 = vadd.f32 %v340, %v1371
        %v1373 = vpop.f32.mrf.mxu0
        %v1374 = vpop.f32.mrf.mxu0
        %v1375 = vadd.f32 %v340, %v1374
        %v1376 = vpop.f32.mrf.mxu0
        %1377 = vmatprep.mubr.bf16.mxu0 0
        %1378 = vmatmul.mubr.bf16.gmra.mxu0 %v852
        %v1379 = vpop.f32.mrf.mxu0
        %v1380 = vadd.f32 %v340, %v1379
        %v1381 = vpop.f32.mrf.mxu0
        %v1382 = vpop.f32.mrf.mxu0
        %v1383 = vadd.f32 %v340, %v1382
        %v1384 = vpop.f32.mrf.mxu0
        %1385 = vmatprep.mubr.bf16.mxu0 0
        %1386 = vmatmul.mubr.bf16.gmra.mxu0 %v855
        %v1387 = vpop.f32.mrf.mxu0
        %v1388 = vadd.f32 %v340, %v1387
        %v1389 = vpop.f32.mrf.mxu0
        %v1390 = vpop.f32.mrf.mxu0
        %v1391 = vadd.f32 %v340, %v1390
        %v1392 = vpop.f32.mrf.mxu0
        %1393 = vmatprep.mubr.bf16.mxu0 0
        %1394 = vmatmul.mubr.bf16.gmra.mxu0 %v858
        %v1395 = vpop.f32.mrf.mxu0
        %v1396 = vadd.f32 %v340, %v1395
        %v1397 = vpop.f32.mrf.mxu0
        %v1398 = vpop.f32.mrf.mxu0
        %v1399 = vadd.f32 %v340, %v1398
        %v1400 = vpop.f32.mrf.mxu0
        %1401 = vmatprep.mubr.bf16.mxu0 0
        %1402 = vmatmul.mubr.bf16.gmra.mxu0 %v861
        %v1403 = vpop.f32.mrf.mxu0
        %v1404 = vadd.f32 %v340, %v1403
        %v1405 = vpop.f32.mrf.mxu0
        %v1406 = vpop.f32.mrf.mxu0
        %v1407 = vadd.f32 %v340, %v1406
        %v1408 = vpop.f32.mrf.mxu0
        %1409 = vmatprep.mubr.bf16.mxu0 0
        %1410 = vmatmul.mubr.bf16.gmra.mxu0 %v864
        %v1411 = vpop.f32.mrf.mxu0
        %v1412 = vadd.f32 %v340, %v1411
        %v1413 = vpop.f32.mrf.mxu0
        %v1414 = vpop.f32.mrf.mxu0
        %v1415 = vadd.f32 %v340, %v1414
        %v1416 = vpop.f32.mrf.mxu0
        %1417 = vdwg.mxu0
        %v1418 = vmax.f32 %v908, 0.0
        %v1419 = vmax.f32 %v911, 0.0
        %v1420 = vmax.f32 %v916, 0.0
        %v1421 = vmax.f32 %v919, 0.0
        %v1422 = vmax.f32 %v924, 0.0
        %v1423 = vmax.f32 %v927, 0.0
        %v1424 = vmax.f32 %v932, 0.0
        %v1425 = vmax.f32 %v935, 0.0
        %v1426 = vmax.f32 %v940, 0.0
        %v1427 = vmax.f32 %v943, 0.0
        %v1428 = vmax.f32 %v948, 0.0
        %v1429 = vmax.f32 %v951, 0.0
        %v1430 = vmax.f32 %v956, 0.0
        %v1431 = vmax.f32 %v959, 0.0
        %v1432 = vmax.f32 %v964, 0.0
        %v1433 = vmax.f32 %v967, 0.0
        %v1434 = vmax.f32 %v972, 0.0
        %v1435 = vmax.f32 %v975, 0.0
        %v1436 = vmax.f32 %v980, 0.0
        %v1437 = vmax.f32 %v983, 0.0
        %v1438 = vmax.f32 %v988, 0.0
        %v1439 = vmax.f32 %v991, 0.0
        %v1440 = vmax.f32 %v996, 0.0
        %v1441 = vmax.f32 %v999, 0.0
        %v1442 = vmax.f32 %v1004, 0.0
        %v1443 = vmax.f32 %v1007, 0.0
        %v1444 = vmax.f32 %v1012, 0.0
        %v1445 = vmax.f32 %v1015, 0.0
        %v1446 = vmax.f32 %v1020, 0.0
        %v1447 = vmax.f32 %v1023, 0.0
        %v1448 = vmax.f32 %v1028, 0.0
        %v1449 = vmax.f32 %v1031, 0.0
        %v1450 = vmax.f32 %v1036, 0.0
        %v1451 = vmax.f32 %v1039, 0.0
        %v1452 = vmax.f32 %v1044, 0.0
        %v1453 = vmax.f32 %v1047, 0.0
        %v1454 = vmax.f32 %v1052, 0.0
        %v1455 = vmax.f32 %v1055, 0.0
        %v1456 = vmax.f32 %v1060, 0.0
        %v1457 = vmax.f32 %v1063, 0.0
        %v1458 = vmax.f32 %v1068, 0.0
        %v1459 = vmax.f32 %v1071, 0.0
        %v1460 = vmax.f32 %v1076, 0.0
        %v1461 = vmax.f32 %v1079, 0.0
        %v1462 = vmax.f32 %v1084, 0.0
        %v1463 = vmax.f32 %v1087, 0.0
        %v1464 = vmax.f32 %v1092, 0.0
        %v1465 = vmax.f32 %v1095, 0.0
        %v1466 = vmax.f32 %v1100, 0.0
        %v1467 = vmax.f32 %v1103, 0.0
        %v1468 = vmax.f32 %v1108, 0.0
        %v1469 = vmax.f32 %v1111, 0.0
        %v1470 = vmax.f32 %v1116, 0.0
        %v1471 = vmax.f32 %v1119, 0.0
        %v1472 = vmax.f32 %v1124, 0.0
        %v1473 = vmax.f32 %v1127, 0.0
        %v1474 = vmax.f32 %v1132, 0.0
        %v1475 = vmax.f32 %v1135, 0.0
        %v1476 = vmax.f32 %v1140, 0.0
        %v1477 = vmax.f32 %v1143, 0.0
        %v1478 = vmax.f32 %v1148, 0.0
        %v1479 = vmax.f32 %v1151, 0.0
        %v1480 = vmax.f32 %v1156, 0.0
        %v1481 = vmax.f32 %v1159, 0.0
        %v1482 = vmax.f32 %v1164, 0.0
        %v1483 = vmax.f32 %v1167, 0.0
        %v1484 = vmax.f32 %v1172, 0.0
        %v1485 = vmax.f32 %v1175, 0.0
        %v1486 = vmax.f32 %v1180, 0.0
        %v1487 = vmax.f32 %v1183, 0.0
        %v1488 = vmax.f32 %v1188, 0.0
        %v1489 = vmax.f32 %v1191, 0.0
        %v1490 = vmax.f32 %v1196, 0.0
        %v1491 = vmax.f32 %v1199, 0.0
        %v1492 = vmax.f32 %v1204, 0.0
        %v1493 = vmax.f32 %v1207, 0.0
        %v1494 = vmax.f32 %v1212, 0.0
        %v1495 = vmax.f32 %v1215, 0.0
        %v1496 = vmax.f32 %v1220, 0.0
        %v1497 = vmax.f32 %v1223, 0.0
        %v1498 = vmax.f32 %v1228, 0.0
        %v1499 = vmax.f32 %v1231, 0.0
        %v1500 = vmax.f32 %v1236, 0.0
        %v1501 = vmax.f32 %v1239, 0.0
        %v1502 = vmax.f32 %v1244, 0.0
        %v1503 = vmax.f32 %v1247, 0.0
        %v1504 = vmax.f32 %v1252, 0.0
        %v1505 = vmax.f32 %v1255, 0.0
        %v1506 = vmax.f32 %v1260, 0.0
        %v1507 = vmax.f32 %v1263, 0.0
        %v1508 = vmax.f32 %v1268, 0.0
        %v1509 = vmax.f32 %v1271, 0.0
        %v1510 = vmax.f32 %v1276, 0.0
        %v1511 = vmax.f32 %v1279, 0.0
        %v1512 = vmax.f32 %v1284, 0.0
        %v1513 = vmax.f32 %v1287, 0.0
        %v1514 = vmax.f32 %v1292, 0.0
        %v1515 = vmax.f32 %v1295, 0.0
        %v1516 = vmax.f32 %v1300, 0.0
        %v1517 = vmax.f32 %v1303, 0.0
        %v1518 = vmax.f32 %v1308, 0.0
        %v1519 = vmax.f32 %v1311, 0.0
        %v1520 = vmax.f32 %v1316, 0.0
        %v1521 = vmax.f32 %v1319, 0.0
        %v1522 = vmax.f32 %v1324, 0.0
        %v1523 = vmax.f32 %v1327, 0.0
        %v1524 = vmax.f32 %v1332, 0.0
        %v1525 = vmax.f32 %v1335, 0.0
        %v1526 = vmax.f32 %v1340, 0.0
        %v1527 = vmax.f32 %v1343, 0.0
        %v1528 = vmax.f32 %v1348, 0.0
        %v1529 = vmax.f32 %v1351, 0.0
        %v1530 = vmax.f32 %v1356, 0.0
        %v1531 = vmax.f32 %v1359, 0.0
        %v1532 = vmax.f32 %v1364, 0.0
        %v1533 = vmax.f32 %v1367, 0.0
        %v1534 = vmax.f32 %v1372, 0.0
        %v1535 = vmax.f32 %v1375, 0.0
        %v1536 = vmax.f32 %v1380, 0.0
        %v1537 = vmax.f32 %v1383, 0.0
        %v1538 = vmax.f32 %v1388, 0.0
        %v1539 = vmax.f32 %v1391, 0.0
        %v1540 = vmax.f32 %v1396, 0.0
        %v1541 = vmax.f32 %v1399, 0.0
        %v1542 = vmax.f32 %v1404, 0.0
        %v1543 = vmax.f32 %v1407, 0.0
        %v1544 = vmax.f32 %v1412, 0.0
        %v1545 = vmax.f32 %v1415, 0.0
        %v1546 = vpack.c.bf16 %v1419, %v1418
        %v1547 = vpack.c.bf16 %v1421, %v1420
        %v1548 = vpack.c.bf16 %v1423, %v1422
        %v1549 = vpack.c.bf16 %v1425, %v1424
        %v1550 = vpack.c.bf16 %v1427, %v1426
        %v1551 = vpack.c.bf16 %v1429, %v1428
        %v1552 = vpack.c.bf16 %v1431, %v1430
        %v1553 = vpack.c.bf16 %v1433, %v1432
        %v1554 = vpack.c.bf16 %v1435, %v1434
        %v1555 = vpack.c.bf16 %v1437, %v1436
        %v1556 = vpack.c.bf16 %v1439, %v1438
        %v1557 = vpack.c.bf16 %v1441, %v1440
        %v1558 = vpack.c.bf16 %v1443, %v1442
        %v1559 = vpack.c.bf16 %v1445, %v1444
        %v1560 = vpack.c.bf16 %v1447, %v1446
        %v1561 = vpack.c.bf16 %v1449, %v1448
        %v1562 = vpack.c.bf16 %v1451, %v1450
        %v1563 = vpack.c.bf16 %v1453, %v1452
        %v1564 = vpack.c.bf16 %v1455, %v1454
        %v1565 = vpack.c.bf16 %v1457, %v1456
        %v1566 = vpack.c.bf16 %v1459, %v1458
        %v1567 = vpack.c.bf16 %v1461, %v1460
        %v1568 = vpack.c.bf16 %v1463, %v1462
        %v1569 = vpack.c.bf16 %v1465, %v1464
        %v1570 = vpack.c.bf16 %v1467, %v1466
        %v1571 = vpack.c.bf16 %v1469, %v1468
        %v1572 = vpack.c.bf16 %v1471, %v1470
        %v1573 = vpack.c.bf16 %v1473, %v1472
        %v1574 = vpack.c.bf16 %v1475, %v1474
        %v1575 = vpack.c.bf16 %v1477, %v1476
        %v1576 = vpack.c.bf16 %v1479, %v1478
        %v1577 = vpack.c.bf16 %v1481, %v1480
        %v1578 = vpack.c.bf16 %v1483, %v1482
        %v1579 = vpack.c.bf16 %v1485, %v1484
        %v1580 = vpack.c.bf16 %v1487, %v1486
        %v1581 = vpack.c.bf16 %v1489, %v1488
        %v1582 = vpack.c.bf16 %v1491, %v1490
        %v1583 = vpack.c.bf16 %v1493, %v1492
        %v1584 = vpack.c.bf16 %v1495, %v1494
        %v1585 = vpack.c.bf16 %v1497, %v1496
        %v1586 = vpack.c.bf16 %v1499, %v1498
        %v1587 = vpack.c.bf16 %v1501, %v1500
        %v1588 = vpack.c.bf16 %v1503, %v1502
        %v1589 = vpack.c.bf16 %v1505, %v1504
        %v1590 = vpack.c.bf16 %v1507, %v1506
        %v1591 = vpack.c.bf16 %v1509, %v1508
        %v1592 = vpack.c.bf16 %v1511, %v1510
        %v1593 = vpack.c.bf16 %v1513, %v1512
        %v1594 = vpack.c.bf16 %v1515, %v1514
        %v1595 = vpack.c.bf16 %v1517, %v1516
        %v1596 = vpack.c.bf16 %v1519, %v1518
        %v1597 = vpack.c.bf16 %v1521, %v1520
        %v1598 = vpack.c.bf16 %v1523, %v1522
        %v1599 = vpack.c.bf16 %v1525, %v1524
        %v1600 = vpack.c.bf16 %v1527, %v1526
        %v1601 = vpack.c.bf16 %v1529, %v1528
        %v1602 = vpack.c.bf16 %v1531, %v1530
        %v1603 = vpack.c.bf16 %v1533, %v1532
        %v1604 = vpack.c.bf16 %v1535, %v1534
        %v1605 = vpack.c.bf16 %v1537, %v1536
        %v1606 = vpack.c.bf16 %v1539, %v1538
        %v1607 = vpack.c.bf16 %v1541, %v1540
        %v1608 = vpack.c.bf16 %v1543, %v1542
        %v1609 = vpack.c.bf16 %v1545, %v1544
        %v1674 = vunpack.c.l.b16 %v1546
        %v1675 = vunpack.c.h.b16 %v1546
        %v1676 = vunpack.c.l.b16 %v1547
        %v1677 = vunpack.c.h.b16 %v1547
        %v1678 = vunpack.c.l.b16 %v1548
        %v1679 = vunpack.c.h.b16 %v1548
        %v1680 = vunpack.c.l.b16 %v1549
        %v1681 = vunpack.c.h.b16 %v1549
        %v1682 = vunpack.c.l.b16 %v1550
        %v1683 = vunpack.c.h.b16 %v1550
        %v1684 = vunpack.c.l.b16 %v1551
        %v1685 = vunpack.c.h.b16 %v1551
        %v1686 = vunpack.c.l.b16 %v1552
        %v1687 = vunpack.c.h.b16 %v1552
        %v1688 = vunpack.c.l.b16 %v1553
        %v1689 = vunpack.c.h.b16 %v1553
        %v1690 = vunpack.c.l.b16 %v1554
        %v1691 = vunpack.c.h.b16 %v1554
        %v1692 = vunpack.c.l.b16 %v1555
        %v1693 = vunpack.c.h.b16 %v1555
        %v1694 = vunpack.c.l.b16 %v1556
        %v1695 = vunpack.c.h.b16 %v1556
        %v1696 = vunpack.c.l.b16 %v1557
        %v1697 = vunpack.c.h.b16 %v1557
        %v1698 = vunpack.c.l.b16 %v1558
        %v1699 = vunpack.c.h.b16 %v1558
        %v1700 = vunpack.c.l.b16 %v1559
        %v1701 = vunpack.c.h.b16 %v1559
        %v1702 = vunpack.c.l.b16 %v1560
        %v1703 = vunpack.c.h.b16 %v1560
        %v1704 = vunpack.c.l.b16 %v1561
        %v1705 = vunpack.c.h.b16 %v1561
        %v1706 = vunpack.c.l.b16 %v1562
        %v1707 = vunpack.c.h.b16 %v1562
        %v1708 = vunpack.c.l.b16 %v1563
        %v1709 = vunpack.c.h.b16 %v1563
        %v1710 = vunpack.c.l.b16 %v1564
        %v1711 = vunpack.c.h.b16 %v1564
        %v1712 = vunpack.c.l.b16 %v1565
        %v1713 = vunpack.c.h.b16 %v1565
        %v1714 = vunpack.c.l.b16 %v1566
        %v1715 = vunpack.c.h.b16 %v1566
        %v1716 = vunpack.c.l.b16 %v1567
        %v1717 = vunpack.c.h.b16 %v1567
        %v1718 = vunpack.c.l.b16 %v1568
        %v1719 = vunpack.c.h.b16 %v1568
        %v1720 = vunpack.c.l.b16 %v1569
        %v1721 = vunpack.c.h.b16 %v1569
        %v1722 = vunpack.c.l.b16 %v1570
        %v1723 = vunpack.c.h.b16 %v1570
        %v1724 = vunpack.c.l.b16 %v1571
        %v1725 = vunpack.c.h.b16 %v1571
        %v1726 = vunpack.c.l.b16 %v1572
        %v1727 = vunpack.c.h.b16 %v1572
        %v1728 = vunpack.c.l.b16 %v1573
        %v1729 = vunpack.c.h.b16 %v1573
        %v1730 = vunpack.c.l.b16 %v1574
        %v1731 = vunpack.c.h.b16 %v1574
        %v1732 = vunpack.c.l.b16 %v1575
        %v1733 = vunpack.c.h.b16 %v1575
        %v1734 = vunpack.c.l.b16 %v1576
        %v1735 = vunpack.c.h.b16 %v1576
        %v1736 = vunpack.c.l.b16 %v1577
        %v1737 = vunpack.c.h.b16 %v1577
        %v1738 = vunpack.c.l.b16 %v1578
        %v1739 = vunpack.c.h.b16 %v1578
        %v1740 = vunpack.c.l.b16 %v1579
        %v1741 = vunpack.c.h.b16 %v1579
        %v1742 = vunpack.c.l.b16 %v1580
        %v1743 = vunpack.c.h.b16 %v1580
        %v1744 = vunpack.c.l.b16 %v1581
        %v1745 = vunpack.c.h.b16 %v1581
        %v1746 = vunpack.c.l.b16 %v1582
        %v1747 = vunpack.c.h.b16 %v1582
        %v1748 = vunpack.c.l.b16 %v1583
        %v1749 = vunpack.c.h.b16 %v1583
        %v1750 = vunpack.c.l.b16 %v1584
        %v1751 = vunpack.c.h.b16 %v1584
        %v1752 = vunpack.c.l.b16 %v1585
        %v1753 = vunpack.c.h.b16 %v1585
        %v1754 = vunpack.c.l.b16 %v1586
        %v1755 = vunpack.c.h.b16 %v1586
        %v1756 = vunpack.c.l.b16 %v1587
        %v1757 = vunpack.c.h.b16 %v1587
        %v1758 = vunpack.c.l.b16 %v1588
        %v1759 = vunpack.c.h.b16 %v1588
        %v1760 = vunpack.c.l.b16 %v1589
        %v1761 = vunpack.c.h.b16 %v1589
        %v1762 = vunpack.c.l.b16 %v1590
        %v1763 = vunpack.c.h.b16 %v1590
        %v1764 = vunpack.c.l.b16 %v1591
        %v1765 = vunpack.c.h.b16 %v1591
        %v1766 = vunpack.c.l.b16 %v1592
        %v1767 = vunpack.c.h.b16 %v1592
        %v1768 = vunpack.c.l.b16 %v1593
        %v1769 = vunpack.c.h.b16 %v1593
        %v1770 = vunpack.c.l.b16 %v1594
        %v1771 = vunpack.c.h.b16 %v1594
        %v1772 = vunpack.c.l.b16 %v1595
        %v1773 = vunpack.c.h.b16 %v1595
        %v1774 = vunpack.c.l.b16 %v1596
        %v1775 = vunpack.c.h.b16 %v1596
        %v1776 = vunpack.c.l.b16 %v1597
        %v1777 = vunpack.c.h.b16 %v1597
        %v1778 = vunpack.c.l.b16 %v1598
        %v1779 = vunpack.c.h.b16 %v1598
        %v1780 = vunpack.c.l.b16 %v1599
        %v1781 = vunpack.c.h.b16 %v1599
        %v1782 = vunpack.c.l.b16 %v1600
        %v1783 = vunpack.c.h.b16 %v1600
        %v1784 = vunpack.c.l.b16 %v1601
        %v1785 = vunpack.c.h.b16 %v1601
        %v1786 = vunpack.c.l.b16 %v1602
        %v1787 = vunpack.c.h.b16 %v1602
        %v1788 = vunpack.c.l.b16 %v1603
        %v1789 = vunpack.c.h.b16 %v1603
        %v1790 = vunpack.c.l.b16 %v1604
        %v1791 = vunpack.c.h.b16 %v1604
        %v1792 = vunpack.c.l.b16 %v1605
        %v1793 = vunpack.c.h.b16 %v1605
        %v1794 = vunpack.c.l.b16 %v1606
        %v1795 = vunpack.c.h.b16 %v1606
        %v1796 = vunpack.c.l.b16 %v1607
        %v1797 = vunpack.c.h.b16 %v1607
        %v1798 = vunpack.c.l.b16 %v1608
        %v1799 = vunpack.c.h.b16 %v1608
        %v1800 = vunpack.c.l.b16 %v1609
        %v1801 = vunpack.c.h.b16 %v1609
        %v1802 = vpack.c.b16 %v1674, %v1674
        %v1803 = vpack.c.b16 %v1675, %v1675
        %v1804 = vpack.c.b16 %v1676, %v1676
        %v1805 = vpack.c.b16 %v1677, %v1677
        %v1806 = vpack.c.b16 %v1678, %v1678
        %v1807 = vpack.c.b16 %v1679, %v1679
        %v1808 = vpack.c.b16 %v1680, %v1680
        %v1809 = vpack.c.b16 %v1681, %v1681
        %v1810 = vpack.c.b16 %v1682, %v1682
        %v1811 = vpack.c.b16 %v1683, %v1683
        %v1812 = vpack.c.b16 %v1684, %v1684
        %v1813 = vpack.c.b16 %v1685, %v1685
        %v1814 = vpack.c.b16 %v1686, %v1686
        %v1815 = vpack.c.b16 %v1687, %v1687
        %v1816 = vpack.c.b16 %v1688, %v1688
        %v1817 = vpack.c.b16 %v1689, %v1689
        %v1818 = vpack.c.b16 %v1690, %v1690
        %v1819 = vpack.c.b16 %v1691, %v1691
        %v1820 = vpack.c.b16 %v1692, %v1692
        %v1821 = vpack.c.b16 %v1693, %v1693
        %v1822 = vpack.c.b16 %v1694, %v1694
        %v1823 = vpack.c.b16 %v1695, %v1695
        %v1824 = vpack.c.b16 %v1696, %v1696
        %v1825 = vpack.c.b16 %v1697, %v1697
        %v1826 = vpack.c.b16 %v1698, %v1698
        %v1827 = vpack.c.b16 %v1699, %v1699
        %v1828 = vpack.c.b16 %v1700, %v1700
        %v1829 = vpack.c.b16 %v1701, %v1701
        %v1830 = vpack.c.b16 %v1702, %v1702
        %v1831 = vpack.c.b16 %v1703, %v1703
        %v1832 = vpack.c.b16 %v1704, %v1704
        %v1833 = vpack.c.b16 %v1705, %v1705
        %v1834 = vpack.c.b16 %v1706, %v1706
        %v1835 = vpack.c.b16 %v1707, %v1707
        %v1836 = vpack.c.b16 %v1708, %v1708
        %v1837 = vpack.c.b16 %v1709, %v1709
        %v1838 = vpack.c.b16 %v1710, %v1710
        %v1839 = vpack.c.b16 %v1711, %v1711
        %v1840 = vpack.c.b16 %v1712, %v1712
        %v1841 = vpack.c.b16 %v1713, %v1713
        %v1842 = vpack.c.b16 %v1714, %v1714
        %v1843 = vpack.c.b16 %v1715, %v1715
        %v1844 = vpack.c.b16 %v1716, %v1716
        %v1845 = vpack.c.b16 %v1717, %v1717
        %v1846 = vpack.c.b16 %v1718, %v1718
        %v1847 = vpack.c.b16 %v1719, %v1719
        %v1848 = vpack.c.b16 %v1720, %v1720
        %v1849 = vpack.c.b16 %v1721, %v1721
        %v1850 = vpack.c.b16 %v1722, %v1722
        %v1851 = vpack.c.b16 %v1723, %v1723
        %v1852 = vpack.c.b16 %v1724, %v1724
        %v1853 = vpack.c.b16 %v1725, %v1725
        %v1854 = vpack.c.b16 %v1726, %v1726
        %v1855 = vpack.c.b16 %v1727, %v1727
        %v1856 = vpack.c.b16 %v1728, %v1728
        %v1857 = vpack.c.b16 %v1729, %v1729
        %v1858 = vpack.c.b16 %v1730, %v1730
        %v1859 = vpack.c.b16 %v1731, %v1731
        %v1860 = vpack.c.b16 %v1732, %v1732
        %v1861 = vpack.c.b16 %v1733, %v1733
        %v1862 = vpack.c.b16 %v1734, %v1734
        %v1863 = vpack.c.b16 %v1735, %v1735
        %v1864 = vpack.c.b16 %v1736, %v1736
        %v1865 = vpack.c.b16 %v1737, %v1737
        %v1866 = vpack.c.b16 %v1738, %v1738
        %v1867 = vpack.c.b16 %v1739, %v1739
        %v1868 = vpack.c.b16 %v1740, %v1740
        %v1869 = vpack.c.b16 %v1741, %v1741
        %v1870 = vpack.c.b16 %v1742, %v1742
        %v1871 = vpack.c.b16 %v1743, %v1743
        %v1872 = vpack.c.b16 %v1744, %v1744
        %v1873 = vpack.c.b16 %v1745, %v1745
        %v1874 = vpack.c.b16 %v1746, %v1746
        %v1875 = vpack.c.b16 %v1747, %v1747
        %v1876 = vpack.c.b16 %v1748, %v1748
        %v1877 = vpack.c.b16 %v1749, %v1749
        %v1878 = vpack.c.b16 %v1750, %v1750
        %v1879 = vpack.c.b16 %v1751, %v1751
        %v1880 = vpack.c.b16 %v1752, %v1752
        %v1881 = vpack.c.b16 %v1753, %v1753
        %v1882 = vpack.c.b16 %v1754, %v1754
        %v1883 = vpack.c.b16 %v1755, %v1755
        %v1884 = vpack.c.b16 %v1756, %v1756
        %v1885 = vpack.c.b16 %v1757, %v1757
        %v1886 = vpack.c.b16 %v1758, %v1758
        %v1887 = vpack.c.b16 %v1759, %v1759
        %v1888 = vpack.c.b16 %v1760, %v1760
        %v1889 = vpack.c.b16 %v1761, %v1761
        %v1890 = vpack.c.b16 %v1762, %v1762
        %v1891 = vpack.c.b16 %v1763, %v1763
        %v1892 = vpack.c.b16 %v1764, %v1764
        %v1893 = vpack.c.b16 %v1765, %v1765
        %v1894 = vpack.c.b16 %v1766, %v1766
        %v1895 = vpack.c.b16 %v1767, %v1767
        %v1896 = vpack.c.b16 %v1768, %v1768
        %v1897 = vpack.c.b16 %v1769, %v1769
        %v1898 = vpack.c.b16 %v1770, %v1770
        %v1899 = vpack.c.b16 %v1771, %v1771
        %v1900 = vpack.c.b16 %v1772, %v1772
        %v1901 = vpack.c.b16 %v1773, %v1773
        %v1902 = vpack.c.b16 %v1774, %v1774
        %v1903 = vpack.c.b16 %v1775, %v1775
        %v1904 = vpack.c.b16 %v1776, %v1776
        %v1905 = vpack.c.b16 %v1777, %v1777
        %v1906 = vpack.c.b16 %v1778, %v1778
        %v1907 = vpack.c.b16 %v1779, %v1779
        %v1908 = vpack.c.b16 %v1780, %v1780
        %v1909 = vpack.c.b16 %v1781, %v1781
        %v1910 = vpack.c.b16 %v1782, %v1782
        %v1911 = vpack.c.b16 %v1783, %v1783
        %v1912 = vpack.c.b16 %v1784, %v1784
        %v1913 = vpack.c.b16 %v1785, %v1785
        %v1914 = vpack.c.b16 %v1786, %v1786
        %v1915 = vpack.c.b16 %v1787, %v1787
        %v1916 = vpack.c.b16 %v1788, %v1788
        %v1917 = vpack.c.b16 %v1789, %v1789
        %v1918 = vpack.c.b16 %v1790, %v1790
        %v1919 = vpack.c.b16 %v1791, %v1791
        %v1920 = vpack.c.b16 %v1792, %v1792
        %v1921 = vpack.c.b16 %v1793, %v1793
        %v1922 = vpack.c.b16 %v1794, %v1794
        %v1923 = vpack.c.b16 %v1795, %v1795
        %v1924 = vpack.c.b16 %v1796, %v1796
        %v1925 = vpack.c.b16 %v1797, %v1797
        %v1926 = vpack.c.b16 %v1798, %v1798
        %v1927 = vpack.c.b16 %v1799, %v1799
        %v1928 = vpack.c.b16 %v1800, %v1800
        %v1929 = vpack.c.b16 %v1801, %v1801
        %vm2058 = vcmask 257024
        %2059 = vst.msk [vmem:[%s200] sm:$0xf] %vm2058, %v1802
        %2060 = vst.msk [vmem:[%s200 + $0x4] sm:$0xf] %vm2058, %v1803
        %2061 = vst.msk [vmem:[%s200 + $0x8] sm:$0xf] %vm2058, %v1804
        %2062 = vst.msk [vmem:[%s200 + $0xc] sm:$0xf] %vm2058, %v1805
        %2063 = vst.msk [vmem:[%s200 + $0x10] sm:$0xf] %vm2058, %v1806
        %2064 = vst.msk [vmem:[%s200 + $0x14] sm:$0xf] %vm2058, %v1807
        %2065 = vst.msk [vmem:[%s200 + $0x18] sm:$0xf] %vm2058, %v1808
        %2066 = vst.msk [vmem:[%s200 + $0x1c] sm:$0xf] %vm2058, %v1809
        %2067 = vst.msk [vmem:[%s200 + $0x20] sm:$0xf] %vm2058, %v1810
        %2068 = vst.msk [vmem:[%s200 + $0x24] sm:$0xf] %vm2058, %v1811
        %2069 = vst.msk [vmem:[%s200 + $0x28] sm:$0xf] %vm2058, %v1812
        %2070 = vst.msk [vmem:[%s200 + $0x2c] sm:$0xf] %vm2058, %v1813
        %2071 = vst.msk [vmem:[%s200 + $0x30] sm:$0xf] %vm2058, %v1814
        %2072 = vst.msk [vmem:[%s200 + $0x34] sm:$0xf] %vm2058, %v1815
        %2073 = vst.msk [vmem:[%s200 + $0x38] sm:$0xf] %vm2058, %v1816
        %2074 = vst.msk [vmem:[%s200 + $0x3c] sm:$0xf] %vm2058, %v1817
        %2075 = vst.msk [vmem:[%s200 + $0x40] sm:$0xf] %vm2058, %v1818
        %2076 = vst.msk [vmem:[%s200 + $0x44] sm:$0xf] %vm2058, %v1819
        %2077 = vst.msk [vmem:[%s200 + $0x48] sm:$0xf] %vm2058, %v1820
        %2078 = vst.msk [vmem:[%s200 + $0x4c] sm:$0xf] %vm2058, %v1821
        %2079 = vst.msk [vmem:[%s200 + $0x50] sm:$0xf] %vm2058, %v1822
        %2080 = vst.msk [vmem:[%s200 + $0x54] sm:$0xf] %vm2058, %v1823
        %2081 = vst.msk [vmem:[%s200 + $0x58] sm:$0xf] %vm2058, %v1824
        %2082 = vst.msk [vmem:[%s200 + $0x5c] sm:$0xf] %vm2058, %v1825
        %2083 = vst.msk [vmem:[%s200 + $0x60] sm:$0xf] %vm2058, %v1826
        %2084 = vst.msk [vmem:[%s200 + $0x64] sm:$0xf] %vm2058, %v1827
        %2085 = vst.msk [vmem:[%s200 + $0x68] sm:$0xf] %vm2058, %v1828
        %2086 = vst.msk [vmem:[%s200 + $0x6c] sm:$0xf] %vm2058, %v1829
        %2087 = vst.msk [vmem:[%s200 + $0x70] sm:$0xf] %vm2058, %v1830
        %2088 = vst.msk [vmem:[%s200 + $0x74] sm:$0xf] %vm2058, %v1831
        %2089 = vst.msk [vmem:[%s200 + $0x78] sm:$0xf] %vm2058, %v1832
        %2090 = vst.msk [vmem:[%s200 + $0x7c] sm:$0xf] %vm2058, %v1833
        %2091 = vst.msk [vmem:[%s200 + $0x80] sm:$0xf] %vm2058, %v1834
        %2092 = vst.msk [vmem:[%s200 + $0x84] sm:$0xf] %vm2058, %v1835
        %2093 = vst.msk [vmem:[%s200 + $0x88] sm:$0xf] %vm2058, %v1836
        %2094 = vst.msk [vmem:[%s200 + $0x8c] sm:$0xf] %vm2058, %v1837
        %2095 = vst.msk [vmem:[%s200 + $0x90] sm:$0xf] %vm2058, %v1838
        %2096 = vst.msk [vmem:[%s200 + $0x94] sm:$0xf] %vm2058, %v1839
        %2097 = vst.msk [vmem:[%s200 + $0x98] sm:$0xf] %vm2058, %v1840
        %2098 = vst.msk [vmem:[%s200 + $0x9c] sm:$0xf] %vm2058, %v1841
        %2099 = vst.msk [vmem:[%s200 + $0xa0] sm:$0xf] %vm2058, %v1842
        %2100 = vst.msk [vmem:[%s200 + $0xa4] sm:$0xf] %vm2058, %v1843
        %2101 = vst.msk [vmem:[%s200 + $0xa8] sm:$0xf] %vm2058, %v1844
        %2102 = vst.msk [vmem:[%s200 + $0xac] sm:$0xf] %vm2058, %v1845
        %2103 = vst.msk [vmem:[%s200 + $0xb0] sm:$0xf] %vm2058, %v1846
        %2104 = vst.msk [vmem:[%s200 + $0xb4] sm:$0xf] %vm2058, %v1847
        %2105 = vst.msk [vmem:[%s200 + $0xb8] sm:$0xf] %vm2058, %v1848
        %2106 = vst.msk [vmem:[%s200 + $0xbc] sm:$0xf] %vm2058, %v1849
        %2107 = vst.msk [vmem:[%s200 + $0xc0] sm:$0xf] %vm2058, %v1850
        %2108 = vst.msk [vmem:[%s200 + $0xc4] sm:$0xf] %vm2058, %v1851
        %2109 = vst.msk [vmem:[%s200 + $0xc8] sm:$0xf] %vm2058, %v1852
        %2110 = vst.msk [vmem:[%s200 + $0xcc] sm:$0xf] %vm2058, %v1853
        %2111 = vst.msk [vmem:[%s200 + $0xd0] sm:$0xf] %vm2058, %v1854
        %2112 = vst.msk [vmem:[%s200 + $0xd4] sm:$0xf] %vm2058, %v1855
        %2113 = vst.msk [vmem:[%s200 + $0xd8] sm:$0xf] %vm2058, %v1856
        %2114 = vst.msk [vmem:[%s200 + $0xdc] sm:$0xf] %vm2058, %v1857
        %2115 = vst.msk [vmem:[%s200 + $0xe0] sm:$0xf] %vm2058, %v1858
        %2116 = vst.msk [vmem:[%s200 + $0xe4] sm:$0xf] %vm2058, %v1859
        %2117 = vst.msk [vmem:[%s200 + $0xe8] sm:$0xf] %vm2058, %v1860
        %2118 = vst.msk [vmem:[%s200 + $0xec] sm:$0xf] %vm2058, %v1861
        %2119 = vst.msk [vmem:[%s200 + $0xf0] sm:$0xf] %vm2058, %v1862
        %2120 = vst.msk [vmem:[%s200 + $0xf4] sm:$0xf] %vm2058, %v1863
        %2121 = vst.msk [vmem:[%s200 + $0xf8] sm:$0xf] %vm2058, %v1864
        %2122 = vst.msk [vmem:[%s200 + $0xfc] sm:$0xf] %vm2058, %v1865
        %2123 = vst.msk [vmem:[%s200 + $0x100] sm:$0xf] %vm2058, %v1866
        %2124 = vst.msk [vmem:[%s200 + $0x104] sm:$0xf] %vm2058, %v1867
        %2125 = vst.msk [vmem:[%s200 + $0x108] sm:$0xf] %vm2058, %v1868
        %2126 = vst.msk [vmem:[%s200 + $0x10c] sm:$0xf] %vm2058, %v1869
        %2127 = vst.msk [vmem:[%s200 + $0x110] sm:$0xf] %vm2058, %v1870
        %2128 = vst.msk [vmem:[%s200 + $0x114] sm:$0xf] %vm2058, %v1871
        %2129 = vst.msk [vmem:[%s200 + $0x118] sm:$0xf] %vm2058, %v1872
        %2130 = vst.msk [vmem:[%s200 + $0x11c] sm:$0xf] %vm2058, %v1873
        %2131 = vst.msk [vmem:[%s200 + $0x120] sm:$0xf] %vm2058, %v1874
        %2132 = vst.msk [vmem:[%s200 + $0x124] sm:$0xf] %vm2058, %v1875
        %2133 = vst.msk [vmem:[%s200 + $0x128] sm:$0xf] %vm2058, %v1876
        %2134 = vst.msk [vmem:[%s200 + $0x12c] sm:$0xf] %vm2058, %v1877
        %2135 = vst.msk [vmem:[%s200 + $0x130] sm:$0xf] %vm2058, %v1878
        %2136 = vst.msk [vmem:[%s200 + $0x134] sm:$0xf] %vm2058, %v1879
        %2137 = vst.msk [vmem:[%s200 + $0x138] sm:$0xf] %vm2058, %v1880
        %2138 = vst.msk [vmem:[%s200 + $0x13c] sm:$0xf] %vm2058, %v1881
        %2139 = vst.msk [vmem:[%s200 + $0x140] sm:$0xf] %vm2058, %v1882
        %2140 = vst.msk [vmem:[%s200 + $0x144] sm:$0xf] %vm2058, %v1883
        %2141 = vst.msk [vmem:[%s200 + $0x148] sm:$0xf] %vm2058, %v1884
        %2142 = vst.msk [vmem:[%s200 + $0x14c] sm:$0xf] %vm2058, %v1885
        %2143 = vst.msk [vmem:[%s200 + $0x150] sm:$0xf] %vm2058, %v1886
        %2144 = vst.msk [vmem:[%s200 + $0x154] sm:$0xf] %vm2058, %v1887
        %2145 = vst.msk [vmem:[%s200 + $0x158] sm:$0xf] %vm2058, %v1888
        %2146 = vst.msk [vmem:[%s200 + $0x15c] sm:$0xf] %vm2058, %v1889
        %2147 = vst.msk [vmem:[%s200 + $0x160] sm:$0xf] %vm2058, %v1890
        %2148 = vst.msk [vmem:[%s200 + $0x164] sm:$0xf] %vm2058, %v1891
        %2149 = vst.msk [vmem:[%s200 + $0x168] sm:$0xf] %vm2058, %v1892
        %2150 = vst.msk [vmem:[%s200 + $0x16c] sm:$0xf] %vm2058, %v1893
        %2151 = vst.msk [vmem:[%s200 + $0x170] sm:$0xf] %vm2058, %v1894
        %2152 = vst.msk [vmem:[%s200 + $0x174] sm:$0xf] %vm2058, %v1895
        %2153 = vst.msk [vmem:[%s200 + $0x178] sm:$0xf] %vm2058, %v1896
        %2154 = vst.msk [vmem:[%s200 + $0x17c] sm:$0xf] %vm2058, %v1897
        %2155 = vst.msk [vmem:[%s200 + $0x180] sm:$0xf] %vm2058, %v1898
        %2156 = vst.msk [vmem:[%s200 + $0x184] sm:$0xf] %vm2058, %v1899
        %2157 = vst.msk [vmem:[%s200 + $0x188] sm:$0xf] %vm2058, %v1900
        %2158 = vst.msk [vmem:[%s200 + $0x18c] sm:$0xf] %vm2058, %v1901
        %2159 = vst.msk [vmem:[%s200 + $0x190] sm:$0xf] %vm2058, %v1902
        %2160 = vst.msk [vmem:[%s200 + $0x194] sm:$0xf] %vm2058, %v1903
        %2161 = vst.msk [vmem:[%s200 + $0x198] sm:$0xf] %vm2058, %v1904
        %2162 = vst.msk [vmem:[%s200 + $0x19c] sm:$0xf] %vm2058, %v1905
        %2163 = vst.msk [vmem:[%s200 + $0x1a0] sm:$0xf] %vm2058, %v1906
        %2164 = vst.msk [vmem:[%s200 + $0x1a4] sm:$0xf] %vm2058, %v1907
        %2165 = vst.msk [vmem:[%s200 + $0x1a8] sm:$0xf] %vm2058, %v1908
        %2166 = vst.msk [vmem:[%s200 + $0x1ac] sm:$0xf] %vm2058, %v1909
        %2167 = vst.msk [vmem:[%s200 + $0x1b0] sm:$0xf] %vm2058, %v1910
        %2168 = vst.msk [vmem:[%s200 + $0x1b4] sm:$0xf] %vm2058, %v1911
        %2169 = vst.msk [vmem:[%s200 + $0x1b8] sm:$0xf] %vm2058, %v1912
        %2170 = vst.msk [vmem:[%s200 + $0x1bc] sm:$0xf] %vm2058, %v1913
        %2171 = vst.msk [vmem:[%s200 + $0x1c0] sm:$0xf] %vm2058, %v1914
        %2172 = vst.msk [vmem:[%s200 + $0x1c4] sm:$0xf] %vm2058, %v1915
        %2173 = vst.msk [vmem:[%s200 + $0x1c8] sm:$0xf] %vm2058, %v1916
        %2174 = vst.msk [vmem:[%s200 + $0x1cc] sm:$0xf] %vm2058, %v1917
        %2175 = vst.msk [vmem:[%s200 + $0x1d0] sm:$0xf] %vm2058, %v1918
        %2176 = vst.msk [vmem:[%s200 + $0x1d4] sm:$0xf] %vm2058, %v1919
        %2177 = vst.msk [vmem:[%s200 + $0x1d8] sm:$0xf] %vm2058, %v1920
        %2178 = vst.msk [vmem:[%s200 + $0x1dc] sm:$0xf] %vm2058, %v1921
        %2179 = vst.msk [vmem:[%s200 + $0x1e0] sm:$0xf] %vm2058, %v1922
        %2180 = vst.msk [vmem:[%s200 + $0x1e4] sm:$0xf] %vm2058, %v1923
        %2181 = vst.msk [vmem:[%s200 + $0x1e8] sm:$0xf] %vm2058, %v1924
        %2182 = vst.msk [vmem:[%s200 + $0x1ec] sm:$0xf] %vm2058, %v1925
        %2183 = vst.msk [vmem:[%s200 + $0x1f0] sm:$0xf] %vm2058, %v1926
        %2184 = vst.msk [vmem:[%s200 + $0x1f4] sm:$0xf] %vm2058, %v1927
        %2185 = vst.msk [vmem:[%s200 + $0x1f8] sm:$0xf] %vm2058, %v1928
        %2186 = vst.msk [vmem:[%s200 + $0x1fc] sm:$0xf] %vm2058, %v1929
        %s2187 = smul.u32 128, %s16
        %p2188 = scmp.lt.s32.totalorder %s2187, 255
        %s2189 = scalar_select %p2188, %s2187, 255
        %s2190 = smul.addr %s2189, 4
        %s2191 = scalar_lea.vmem %s3, %s2190
        // Predicated region
        $region41: #{forward.7} parent=31 // pred_check
          %p2192 = pneg %p102
        $region42: #{forward.7} parent=31 // pred_check_branch
          %2194 = sbr.rel (%p2192) target = $region44
        $region43: #{forward.7} parent=31 // pred_region
          %s2195 = smul.u32 128, %s16
        $region44: #{forward.7} parent=31 // pred_fallthru
          _
      $region32: #{forward.7} parent=5 // pred_fallthru
        _
      %p2196 = scmp.le.s32.totalorder 2, %s11
      // Predicated region
      $region45: #{forward.7} parent=5 // pred_check
        %p2197 = pneg %p2196
      $region46: #{forward.7} parent=5 // pred_check_branch
        %2199 = sbr.rel (%p2197) target = $region48
      $region47: #{forward.7} parent=5 // pred_region
        %s2200 = ssub.s32 %s11, 2
        // Predicated region
        $region49: #{forward.7} parent=47 // pred_check
          %p2201 = pneg %p108
        $region50: #{forward.7} parent=47 // pred_check_branch
          %2203 = sbr.rel (%p2201) target = $region52
        $region51: #{forward.7} parent=47 // pred_region
          %s2204 = smul.u32 128, %s17
          %p2205 = scmp.lt.s32.totalorder %s2204, 255
          %s2206 = scalar_select %p2205, %s2204, 255
          %s2207 = smul.addr %s2206, 4
          %s2208 = scalar_lea.vmem %s3, %s2207
        $region52: #{forward.7} parent=47 // pred_fallthru
          _
      $region48: #{forward.7} parent=5 // pred_fallthru
        _
    $region6: #{forward.7} parent=1 // loop_footer
      %s15 = sadd.s32 1, %s11
    $region7: #{forward.7} parent=1 // loop_footer_branch
      %10 = sbr.rel target = $region3
    $region8: #{forward.7} parent=1 // loop_exit
      _
    %2209 = vsyncpa [#allocation3], 1
    %s2210 = scalar_lea.sflag [#allocation3], 1
    %2211 = vsyncpa %s2210, 1
    %2212 = vsyncpa [#allocation5], 1

// kernel: forward.10
$region0: #{forward.10}
  #allocation0 [shape = 'u32[]', space=smem, size = 0x4, offset = 0x4, fixed_abs, tag = 'smem constant byte address 0x4 - core index']
  #allocation1 [shape = 'u32[144,128]{1,0:T(1,128)}', space=vmem, size = 0x12000, scoped, tag = 'internal scratch']
  %s0 = inlined_call_operand.vmem [shape: bf16[16,2048], index: 0, kind: input, shape index: {}]
  %s1 = inlined_call_operand.vmem [shape: bf16[16,512], index: 1, kind: output, shape index: {}]
  %s2 = sld [smem:[#allocation0]]
  $region14: #{forward.10} parent=0
    _
  %s4 = ssub.s32 1, %s2
  %s5 = scalar_select 0, %s4, %s2
  // Predicated region
  $region2: #{forward.10} parent=0 // pred_check
    _
  $region3: #{forward.10} parent=0 // pred_check_branch
    %7 = sbr.rel (0) target = $region5
  $region4: #{forward.10} parent=0 // pred_region
    _
  $region5: #{forward.10} parent=0 // pred_fallthru
    _
  %v8 = vld [vmem:[%s0] sm:$0xff]
  %v9 = vld [vmem:[%s0 + $0x8] sm:$0xff]
  %v10 = vld [vmem:[%s0 + $0x10] sm:$0xff]
  %v11 = vld [vmem:[%s0 + $0x18] sm:$0xff]
  %v12 = vld [vmem:[%s0 + $0x20] sm:$0xff]
  %v13 = vld [vmem:[%s0 + $0x28] sm:$0xff]
  %v14 = vld [vmem:[%s0 + $0x30] sm:$0xff]
  %v15 = vld [vmem:[%s0 + $0x38] sm:$0xff]
  %v16 = vld [vmem:[%s0 + $0x40] sm:$0xff]
  %v17 = vld [vmem:[%s0 + $0x48] sm:$0xff]
  %v18 = vld [vmem:[%s0 + $0x50] sm:$0xff]
  %v19 = vld [vmem:[%s0 + $0x58] sm:$0xff]
  %v20 = vld [vmem:[%s0 + $0x60] sm:$0xff]
  %v21 = vld [vmem:[%s0 + $0x68] sm:$0xff]
  %v22 = vld [vmem:[%s0 + $0x70] sm:$0xff]
  %v23 = vld [vmem:[%s0 + $0x78] sm:$0xff]
  %v24 = vmax.bf16 %v8, %v12
  %v25 = vmax.bf16 %v9, %v13
  %v26 = vmax.bf16 %v10, %v14
  %v27 = vmax.bf16 %v11, %v15
  %v28 = vmax.bf16 %v16, %v20
  %v29 = vmax.bf16 %v17, %v21
  %v30 = vmax.bf16 %v18, %v22
  %v31 = vmax.bf16 %v19, %v23
  %34 = vrot.lane.b32.xlu0 %v24, 64
  %v35 = vpop.permute.xlu0 %34
  %36 = vrot.lane.b32.xlu0 %v28, 64
  %v37 = vpop.permute.xlu0 %36
  %v40 = vmax.bf16 %v24, %v35
  %v41 = vmax.bf16 %v28, %v37
  %v42 = vrot.slane %v24, 4
  %v43 = vrot.slane %v28, 4
  %v46 = vrot.slane %v35, 4
  %v47 = vrot.slane %v37, 4
  %v50 = vmax.bf16 %v42, %v46
  %v51 = vmax.bf16 %v43, %v47
  %54 = vrot.lane.b32.xlu0 %v25, 64
  %v55 = vpop.permute.xlu0 %54
  %56 = vrot.lane.b32.xlu0 %v29, 64
  %v57 = vpop.permute.xlu0 %56
  %v60 = vmax.bf16 %v25, %v55
  %v61 = vmax.bf16 %v29, %v57
  %v62 = vrot.slane %v25, 4
  %v63 = vrot.slane %v29, 4
  %v66 = vrot.slane %v55, 4
  %v67 = vrot.slane %v57, 4
  %v70 = vmax.bf16 %v62, %v66
  %v71 = vmax.bf16 %v63, %v67
  %74 = vrot.lane.b32.xlu0 %v26, 64
  %v75 = vpop.permute.xlu0 %74
  %76 = vrot.lane.b32.xlu0 %v30, 64
  %v77 = vpop.permute.xlu0 %76
  %v80 = vmax.bf16 %v26, %v75
  %v81 = vmax.bf16 %v30, %v77
  %v82 = vrot.slane %v26, 4
  %v83 = vrot.slane %v30, 4
  %v86 = vrot.slane %v75, 4
  %v87 = vrot.slane %v77, 4
  %v90 = vmax.bf16 %v82, %v86
  %v91 = vmax.bf16 %v83, %v87
  %94 = vrot.lane.b32.xlu0 %v27, 64
  %v95 = vpop.permute.xlu0 %94
  %96 = vrot.lane.b32.xlu0 %v31, 64
  %v97 = vpop.permute.xlu0 %96
  %v100 = vmax.bf16 %v27, %v95
  %v101 = vmax.bf16 %v31, %v97
  %v102 = vrot.slane %v27, 4
  %v103 = vrot.slane %v31, 4
  %v106 = vrot.slane %v95, 4
  %v107 = vrot.slane %v97, 4
  %v110 = vmax.bf16 %v102, %v106
  %v111 = vmax.bf16 %v103, %v107
  %v114 = vunpack.c.l.b16 %v40
  %v115 = vunpack.c.l.b16 %v41
  %v116 = vpack.c.b16 %v115, %v114
  %v119 = vunpack.c.l.b16 %v50
  %v120 = vunpack.c.l.b16 %v51
  %v121 = vpack.c.b16 %v120, %v119
  %122 = vrot.lane.b32.xlu0 %v121, 64
  %v123 = vpop.permute.xlu0 %122
  %v126 = vunpack.c.l.b16 %v60
  %v127 = vunpack.c.l.b16 %v61
  %v128 = vpack.c.b16 %v127, %v126
  %v131 = vunpack.c.l.b16 %v70
  %v132 = vunpack.c.l.b16 %v71
  %v133 = vpack.c.b16 %v132, %v131
  %134 = vrot.lane.b32.xlu0 %v133, 64
  %v135 = vpop.permute.xlu0 %134
  %v138 = vunpack.c.l.b16 %v80
  %v139 = vunpack.c.l.b16 %v81
  %v140 = vpack.c.b16 %v139, %v138
  %v143 = vunpack.c.l.b16 %v90
  %v144 = vunpack.c.l.b16 %v91
  %v145 = vpack.c.b16 %v144, %v143
  %146 = vrot.lane.b32.xlu0 %v145, 64
  %v147 = vpop.permute.xlu0 %146
  %v150 = vunpack.c.l.b16 %v100
  %v151 = vunpack.c.l.b16 %v101
  %v152 = vpack.c.b16 %v151, %v150
  %v155 = vunpack.c.l.b16 %v110
  %v156 = vunpack.c.l.b16 %v111
  %v157 = vpack.c.b16 %v156, %v155
  %158 = vrot.lane.b32.xlu0 %v157, 64
  %v159 = vpop.permute.xlu0 %158
  %vm160 = vcmask 523264
  %v163 = vsel %vm160, %v116, %v123
  %v166 = vsel %vm160, %v128, %v135
  %v169 = vsel %vm160, %v140, %v147
  %v172 = vsel %vm160, %v152, %v159
  %v177 = vunpack.c.l.b16 %v163
  %v178 = vunpack.c.l.b16 %v166
  %v179 = vunpack.c.l.b16 %v169
  %v180 = vunpack.c.l.b16 %v172
  %v181 = vunpack.c.h.b16 %v163
  %v182 = vunpack.c.h.b16 %v166
  %v183 = vunpack.c.h.b16 %v169
  %v184 = vunpack.c.h.b16 %v172
  %v185 = vpack.c.b16 %v178, %v177
  %v186 = vpack.c.b16 %v180, %v179
  %v187 = vpack.c.b16 %v182, %v181
  %v188 = vpack.c.b16 %v184, %v183
  %193 = vst [vmem:[%s1] sm:$0xff] %v185
  %194 = vst [vmem:[%s1 + $0x8] sm:$0xff] %v186
  %195 = vst [vmem:[%s1 + $0x10] sm:$0xff] %v187
  %196 = vst [vmem:[%s1 + $0x18] sm:$0xff] %v188
  // Predicated region
  $region6: #{forward.10} parent=0 // pred_check
    _
  $region7: #{forward.10} parent=0 // pred_check_branch
    %198 = sbr.rel (0) target = $region9
  $region8: #{forward.10} parent=0 // pred_region
    _
  $region9: #{forward.10} parent=0 // pred_fallthru
    _
  // Predicated region
  $region10: #{forward.10} parent=0 // pred_check
    _
  $region11: #{forward.10} parent=0 // pred_check_branch
    %200 = sbr.rel (0) target = $region13
  $region12: #{forward.10} parent=0 // pred_region
    _
  $region13: #{forward.10} parent=0 // pred_fallthru
    _

// kernel: forward.9
$region0: #{forward.9}
  #allocation0 [shape = 'u32[]', space=smem, size = 0x4, offset = 0x4, fixed_abs, tag = 'smem constant byte address 0x4 - core index']
  #allocation1 [shape = 'u32[144,128]{1,0:T(1,128)}', space=vmem, size = 0x12000, scoped, tag = 'internal scratch']
  %s0 = inlined_call_operand.vmem [shape: bf16[512,288], index: 0, kind: input, shape index: {}]
  %s1 = inlined_call_operand.vmem [shape: bf16[288,64], index: 1, kind: input, shape index: {}]
  %s2 = inlined_call_operand.vmem [shape: f32[1,64], index: 2, kind: input, shape index: {}]
  %s3 = inlined_call_operand.vmem [shape: bf16[512,64], index: 3, kind: output, shape index: {}]
  %s4 = sld [smem:[#allocation0]]
  $region22: #{forward.9} parent=0
    _
  %s6 = ssub.s32 1, %s4
  %s7 = scalar_select 0, %s6, %s4
  // Predicated region
  $region2: #{forward.9} parent=0 // pred_check
    _
  $region3: #{forward.9} parent=0 // pred_check_branch
    %9 = sbr.rel (0) target = $region5
  $region4: #{forward.9} parent=0 // pred_region
    _
  $region5: #{forward.9} parent=0 // pred_fallthru
    _
  // Predicated region
  $region6: #{forward.9} parent=0 // pred_check
    _
  $region7: #{forward.9} parent=0 // pred_check_branch
    %11 = sbr.rel (0) target = $region9
  $region8: #{forward.9} parent=0 // pred_region
    _
  $region9: #{forward.9} parent=0 // pred_fallthru
    _
  // Predicated region
  $region10: #{forward.9} parent=0 // pred_check
    _
  $region11: #{forward.9} parent=0 // pred_check_branch
    %13 = sbr.rel (0) target = $region13
  $region12: #{forward.9} parent=0 // pred_region
    _
  $region13: #{forward.9} parent=0 // pred_fallthru
    _
  %v15 = vld [vmem:[%s0] sm:$0xff]
  %v16 = vld [vmem:[%s0 + $0x8] sm:$0xf]
  %v17 = vld [vmem:[%s0 + $0xc] sm:$0xff]
  %v18 = vld [vmem:[%s0 + $0x14] sm:$0xf]
  %v19 = vld [vmem:[%s0 + $0x18] sm:$0xff]
  %v20 = vld [vmem:[%s0 + $0x20] sm:$0xf]
  %v21 = vld [vmem:[%s0 + $0x24] sm:$0xff]
  %v22 = vld [vmem:[%s0 + $0x2c] sm:$0xf]
  %v23 = vld [vmem:[%s0 + $0x30] sm:$0xff]
  %v24 = vld [vmem:[%s0 + $0x38] sm:$0xf]
  %v25 = vld [vmem:[%s0 + $0x3c] sm:$0xff]
  %v26 = vld [vmem:[%s0 + $0x44] sm:$0xf]
  %v27 = vld [vmem:[%s0 + $0x48] sm:$0xff]
  %v28 = vld [vmem:[%s0 + $0x50] sm:$0xf]
  %v29 = vld [vmem:[%s0 + $0x54] sm:$0xff]
  %v30 = vld [vmem:[%s0 + $0x5c] sm:$0xf]
  %v31 = vld [vmem:[%s0 + $0x60] sm:$0xff]
  %v32 = vld [vmem:[%s0 + $0x68] sm:$0xf]
  %v33 = vld [vmem:[%s0 + $0x6c] sm:$0xff]
  %v34 = vld [vmem:[%s0 + $0x74] sm:$0xf]
  %v35 = vld [vmem:[%s0 + $0x78] sm:$0xff]
  %v36 = vld [vmem:[%s0 + $0x80] sm:$0xf]
  %v37 = vld [vmem:[%s0 + $0x84] sm:$0xff]
  %v38 = vld [vmem:[%s0 + $0x8c] sm:$0xf]
  %v39 = vld [vmem:[%s0 + $0x90] sm:$0xff]
  %v40 = vld [vmem:[%s0 + $0x98] sm:$0xf]
  %v41 = vld [vmem:[%s0 + $0x9c] sm:$0xff]
  %v42 = vld [vmem:[%s0 + $0xa4] sm:$0xf]
  %v43 = vld [vmem:[%s0 + $0xa8] sm:$0xff]
  %v44 = vld [vmem:[%s0 + $0xb0] sm:$0xf]
  %v45 = vld [vmem:[%s0 + $0xb4] sm:$0xff]
  %v46 = vld [vmem:[%s0 + $0xbc] sm:$0xf]
  %v47 = vld [vmem:[%s0 + $0xc0] sm:$0xff]
  %v48 = vld [vmem:[%s0 + $0xc8] sm:$0xf]
  %v49 = vld [vmem:[%s0 + $0xcc] sm:$0xff]
  %v50 = vld [vmem:[%s0 + $0xd4] sm:$0xf]
  %v51 = vld [vmem:[%s0 + $0xd8] sm:$0xff]
  %v52 = vld [vmem:[%s0 + $0xe0] sm:$0xf]
  %v53 = vld [vmem:[%s0 + $0xe4] sm:$0xff]
  %v54 = vld [vmem:[%s0 + $0xec] sm:$0xf]
  %v55 = vld [vmem:[%s0 + $0xf0] sm:$0xff]
  %v56 = vld [vmem:[%s0 + $0xf8] sm:$0xf]
  %v57 = vld [vmem:[%s0 + $0xfc] sm:$0xff]
  %v58 = vld [vmem:[%s0 + $0x104] sm:$0xf]
  %v59 = vld [vmem:[%s0 + $0x108] sm:$0xff]
  %v60 = vld [vmem:[%s0 + $0x110] sm:$0xf]
  %v61 = vld [vmem:[%s0 + $0x114] sm:$0xff]
  %v62 = vld [vmem:[%s0 + $0x11c] sm:$0xf]
  %v63 = vld [vmem:[%s0 + $0x120] sm:$0xff]
  %v64 = vld [vmem:[%s0 + $0x128] sm:$0xf]
  %v65 = vld [vmem:[%s0 + $0x12c] sm:$0xff]
  %v66 = vld [vmem:[%s0 + $0x134] sm:$0xf]
  %v67 = vld [vmem:[%s0 + $0x138] sm:$0xff]
  %v68 = vld [vmem:[%s0 + $0x140] sm:$0xf]
  %v69 = vld [vmem:[%s0 + $0x144] sm:$0xff]
  %v70 = vld [vmem:[%s0 + $0x14c] sm:$0xf]
  %v71 = vld [vmem:[%s0 + $0x150] sm:$0xff]
  %v72 = vld [vmem:[%s0 + $0x158] sm:$0xf]
  %v73 = vld [vmem:[%s0 + $0x15c] sm:$0xff]
  %v74 = vld [vmem:[%s0 + $0x164] sm:$0xf]
  %v75 = vld [vmem:[%s0 + $0x168] sm:$0xff]
  %v76 = vld [vmem:[%s0 + $0x170] sm:$0xf]
  %v77 = vld [vmem:[%s0 + $0x174] sm:$0xff]
  %v78 = vld [vmem:[%s0 + $0x17c] sm:$0xf]
  %v79 = vld [vmem:[%s0 + $0x180] sm:$0xff]
  %v80 = vld [vmem:[%s0 + $0x188] sm:$0xf]
  %v81 = vld [vmem:[%s0 + $0x18c] sm:$0xff]
  %v82 = vld [vmem:[%s0 + $0x194] sm:$0xf]
  %v83 = vld [vmem:[%s0 + $0x198] sm:$0xff]
  %v84 = vld [vmem:[%s0 + $0x1a0] sm:$0xf]
  %v85 = vld [vmem:[%s0 + $0x1a4] sm:$0xff]
  %v86 = vld [vmem:[%s0 + $0x1ac] sm:$0xf]
  %v87 = vld [vmem:[%s0 + $0x1b0] sm:$0xff]
  %v88 = vld [vmem:[%s0 + $0x1b8] sm:$0xf]
  %v89 = vld [vmem:[%s0 + $0x1bc] sm:$0xff]
  %v90 = vld [vmem:[%s0 + $0x1c4] sm:$0xf]
  %v91 = vld [vmem:[%s0 + $0x1c8] sm:$0xff]
  %v92 = vld [vmem:[%s0 + $0x1d0] sm:$0xf]
  %v93 = vld [vmem:[%s0 + $0x1d4] sm:$0xff]
  %v94 = vld [vmem:[%s0 + $0x1dc] sm:$0xf]
  %v95 = vld [vmem:[%s0 + $0x1e0] sm:$0xff]
  %v96 = vld [vmem:[%s0 + $0x1e8] sm:$0xf]
  %v97 = vld [vmem:[%s0 + $0x1ec] sm:$0xff]
  %v98 = vld [vmem:[%s0 + $0x1f4] sm:$0xf]
  %v99 = vld [vmem:[%s0 + $0x1f8] sm:$0xff]
  %v100 = vld [vmem:[%s0 + $0x200] sm:$0xf]
  %v101 = vld [vmem:[%s0 + $0x204] sm:$0xff]
  %v102 = vld [vmem:[%s0 + $0x20c] sm:$0xf]
  %v103 = vld [vmem:[%s0 + $0x210] sm:$0xff]
  %v104 = vld [vmem:[%s0 + $0x218] sm:$0xf]
  %v105 = vld [vmem:[%s0 + $0x21c] sm:$0xff]
  %v106 = vld [vmem:[%s0 + $0x224] sm:$0xf]
  %v107 = vld [vmem:[%s0 + $0x228] sm:$0xff]
  %v108 = vld [vmem:[%s0 + $0x230] sm:$0xf]
  %v109 = vld [vmem:[%s0 + $0x234] sm:$0xff]
  %v110 = vld [vmem:[%s0 + $0x23c] sm:$0xf]
  %v111 = vld [vmem:[%s0 + $0x240] sm:$0xff]
  %v112 = vld [vmem:[%s0 + $0x248] sm:$0xf]
  %v113 = vld [vmem:[%s0 + $0x24c] sm:$0xff]
  %v114 = vld [vmem:[%s0 + $0x254] sm:$0xf]
  %v115 = vld [vmem:[%s0 + $0x258] sm:$0xff]
  %v116 = vld [vmem:[%s0 + $0x260] sm:$0xf]
  %v117 = vld [vmem:[%s0 + $0x264] sm:$0xff]
  %v118 = vld [vmem:[%s0 + $0x26c] sm:$0xf]
  %v119 = vld [vmem:[%s0 + $0x270] sm:$0xff]
  %v120 = vld [vmem:[%s0 + $0x278] sm:$0xf]
  %v121 = vld [vmem:[%s0 + $0x27c] sm:$0xff]
  %v122 = vld [vmem:[%s0 + $0x284] sm:$0xf]
  %v123 = vld [vmem:[%s0 + $0x288] sm:$0xff]
  %v124 = vld [vmem:[%s0 + $0x290] sm:$0xf]
  %v125 = vld [vmem:[%s0 + $0x294] sm:$0xff]
  %v126 = vld [vmem:[%s0 + $0x29c] sm:$0xf]
  %v127 = vld [vmem:[%s0 + $0x2a0] sm:$0xff]
  %v128 = vld [vmem:[%s0 + $0x2a8] sm:$0xf]
  %v129 = vld [vmem:[%s0 + $0x2ac] sm:$0xff]
  %v130 = vld [vmem:[%s0 + $0x2b4] sm:$0xf]
  %v131 = vld [vmem:[%s0 + $0x2b8] sm:$0xff]
  %v132 = vld [vmem:[%s0 + $0x2c0] sm:$0xf]
  %v133 = vld [vmem:[%s0 + $0x2c4] sm:$0xff]
  %v134 = vld [vmem:[%s0 + $0x2cc] sm:$0xf]
  %v135 = vld [vmem:[%s0 + $0x2d0] sm:$0xff]
  %v136 = vld [vmem:[%s0 + $0x2d8] sm:$0xf]
  %v137 = vld [vmem:[%s0 + $0x2dc] sm:$0xff]
  %v138 = vld [vmem:[%s0 + $0x2e4] sm:$0xf]
  %v139 = vld [vmem:[%s0 + $0x2e8] sm:$0xff]
  %v140 = vld [vmem:[%s0 + $0x2f0] sm:$0xf]
  %v141 = vld [vmem:[%s0 + $0x2f4] sm:$0xff]
  %v142 = vld [vmem:[%s0 + $0x2fc] sm:$0xf]
  %v143 = vld [vmem:[%s1] sm:$0xf]
  %v144 = vld [vmem:[%s1 + $0x4] sm:$0xf]
  %v145 = vld [vmem:[%s1 + $0x8] sm:$0xf]
  %v146 = vld [vmem:[%s1 + $0xc] sm:$0xf]
  %v147 = vld [vmem:[%s1 + $0x10] sm:$0xf]
  %v148 = vld [vmem:[%s1 + $0x14] sm:$0xf]
  %v149 = vld [vmem:[%s1 + $0x18] sm:$0xf]
  %v150 = vld [vmem:[%s1 + $0x1c] sm:$0xf]
  %v151 = vld [vmem:[%s1 + $0x20] sm:$0xf]
  %v152 = vld [vmem:[%s1 + $0x24] sm:$0xf]
  %v153 = vld [vmem:[%s1 + $0x28] sm:$0xf]
  %v154 = vld [vmem:[%s1 + $0x2c] sm:$0xf]
  %v155 = vld [vmem:[%s1 + $0x30] sm:$0xf]
  %v156 = vld [vmem:[%s1 + $0x34] sm:$0xf]
  %v157 = vld [vmem:[%s1 + $0x38] sm:$0xf]
  %v158 = vld [vmem:[%s1 + $0x3c] sm:$0xf]
  %v159 = vld [vmem:[%s1 + $0x40] sm:$0xf]
  %v160 = vld [vmem:[%s1 + $0x44] sm:$0xf]
  %v161 = vld [vmem:[%s1 + $0x48] sm:$0xf]
  %v162 = vld [vmem:[%s1 + $0x4c] sm:$0xf]
  %v163 = vld [vmem:[%s1 + $0x50] sm:$0xf]
  %v164 = vld [vmem:[%s1 + $0x54] sm:$0xf]
  %v165 = vld [vmem:[%s1 + $0x58] sm:$0xf]
  %v166 = vld [vmem:[%s1 + $0x5c] sm:$0xf]
  %v167 = vld [vmem:[%s1 + $0x60] sm:$0xf]
  %v168 = vld [vmem:[%s1 + $0x64] sm:$0xf]
  %v169 = vld [vmem:[%s1 + $0x68] sm:$0xf]
  %v170 = vld [vmem:[%s1 + $0x6c] sm:$0xf]
  %v171 = vld [vmem:[%s1 + $0x70] sm:$0xf]
  %v172 = vld [vmem:[%s1 + $0x74] sm:$0xf]
  %v173 = vld [vmem:[%s1 + $0x78] sm:$0xf]
  %v174 = vld [vmem:[%s1 + $0x7c] sm:$0xf]
  %v175 = vld [vmem:[%s1 + $0x80] sm:$0xf]
  %v176 = vld [vmem:[%s1 + $0x84] sm:$0xf]
  %v177 = vld [vmem:[%s1 + $0x88] sm:$0xf]
  %v178 = vld [vmem:[%s1 + $0x8c] sm:$0xf]
  %v179 = vld [vmem:[%s2] sm:$0x1]
  %v181 = vlaneseq
  %v182 = vshrl.u32 %v181, 7
  %v183 = vsub.s32 0, %v182
  %v184 = vrot.slane %v179, %v183
  %v314 = vunpack.c.l.b16 %v15
  %v315 = vunpack.c.h.b16 %v15
  %v316 = vunpack.c.l.b16 %v16
  %v317 = vunpack.c.l.b16 %v17
  %v318 = vunpack.c.h.b16 %v17
  %v319 = vunpack.c.l.b16 %v18
  %v320 = vunpack.c.l.b16 %v19
  %v321 = vunpack.c.h.b16 %v19
  %v322 = vunpack.c.l.b16 %v20
  %v323 = vunpack.c.l.b16 %v21
  %v324 = vunpack.c.h.b16 %v21
  %v325 = vunpack.c.l.b16 %v22
  %v326 = vunpack.c.l.b16 %v23
  %v327 = vunpack.c.h.b16 %v23
  %v328 = vunpack.c.l.b16 %v24
  %v329 = vunpack.c.l.b16 %v25
  %v330 = vunpack.c.h.b16 %v25
  %v331 = vunpack.c.l.b16 %v26
  %v332 = vunpack.c.l.b16 %v27
  %v333 = vunpack.c.h.b16 %v27
  %v334 = vunpack.c.l.b16 %v28
  %v335 = vunpack.c.l.b16 %v29
  %v336 = vunpack.c.h.b16 %v29
  %v337 = vunpack.c.l.b16 %v30
  %v338 = vunpack.c.l.b16 %v31
  %v339 = vunpack.c.h.b16 %v31
  %v340 = vunpack.c.l.b16 %v32
  %v341 = vunpack.c.l.b16 %v33
  %v342 = vunpack.c.h.b16 %v33
  %v343 = vunpack.c.l.b16 %v34
  %v344 = vunpack.c.l.b16 %v35
  %v345 = vunpack.c.h.b16 %v35
  %v346 = vunpack.c.l.b16 %v36
  %v347 = vunpack.c.l.b16 %v37
  %v348 = vunpack.c.h.b16 %v37
  %v349 = vunpack.c.l.b16 %v38
  %v350 = vunpack.c.l.b16 %v39
  %v351 = vunpack.c.h.b16 %v39
  %v352 = vunpack.c.l.b16 %v40
  %v353 = vunpack.c.l.b16 %v41
  %v354 = vunpack.c.h.b16 %v41
  %v355 = vunpack.c.l.b16 %v42
  %v356 = vunpack.c.l.b16 %v43
  %v357 = vunpack.c.h.b16 %v43
  %v358 = vunpack.c.l.b16 %v44
  %v359 = vunpack.c.l.b16 %v45
  %v360 = vunpack.c.h.b16 %v45
  %v361 = vunpack.c.l.b16 %v46
  %v362 = vunpack.c.l.b16 %v47
  %v363 = vunpack.c.h.b16 %v47
  %v364 = vunpack.c.l.b16 %v48
  %v365 = vunpack.c.l.b16 %v49
  %v366 = vunpack.c.h.b16 %v49
  %v367 = vunpack.c.l.b16 %v50
  %v368 = vunpack.c.l.b16 %v51
  %v369 = vunpack.c.h.b16 %v51
  %v370 = vunpack.c.l.b16 %v52
  %v371 = vunpack.c.l.b16 %v53
  %v372 = vunpack.c.h.b16 %v53
  %v373 = vunpack.c.l.b16 %v54
  %v374 = vunpack.c.l.b16 %v55
  %v375 = vunpack.c.h.b16 %v55
  %v376 = vunpack.c.l.b16 %v56
  %v377 = vunpack.c.l.b16 %v57
  %v378 = vunpack.c.h.b16 %v57
  %v379 = vunpack.c.l.b16 %v58
  %v380 = vunpack.c.l.b16 %v59
  %v381 = vunpack.c.h.b16 %v59
  %v382 = vunpack.c.l.b16 %v60
  %v383 = vunpack.c.l.b16 %v61
  %v384 = vunpack.c.h.b16 %v61
  %v385 = vunpack.c.l.b16 %v62
  %v386 = vunpack.c.l.b16 %v63
  %v387 = vunpack.c.h.b16 %v63
  %v388 = vunpack.c.l.b16 %v64
  %v389 = vunpack.c.l.b16 %v65
  %v390 = vunpack.c.h.b16 %v65
  %v391 = vunpack.c.l.b16 %v66
  %v392 = vunpack.c.l.b16 %v67
  %v393 = vunpack.c.h.b16 %v67
  %v394 = vunpack.c.l.b16 %v68
  %v395 = vunpack.c.l.b16 %v69
  %v396 = vunpack.c.h.b16 %v69
  %v397 = vunpack.c.l.b16 %v70
  %v398 = vunpack.c.l.b16 %v71
  %v399 = vunpack.c.h.b16 %v71
  %v400 = vunpack.c.l.b16 %v72
  %v401 = vunpack.c.l.b16 %v73
  %v402 = vunpack.c.h.b16 %v73
  %v403 = vunpack.c.l.b16 %v74
  %v404 = vunpack.c.l.b16 %v75
  %v405 = vunpack.c.h.b16 %v75
  %v406 = vunpack.c.l.b16 %v76
  %v407 = vunpack.c.l.b16 %v77
  %v408 = vunpack.c.h.b16 %v77
  %v409 = vunpack.c.l.b16 %v78
  %v410 = vunpack.c.l.b16 %v79
  %v411 = vunpack.c.h.b16 %v79
  %v412 = vunpack.c.l.b16 %v80
  %v413 = vunpack.c.l.b16 %v81
  %v414 = vunpack.c.h.b16 %v81
  %v415 = vunpack.c.l.b16 %v82
  %v416 = vunpack.c.l.b16 %v83
  %v417 = vunpack.c.h.b16 %v83
  %v418 = vunpack.c.l.b16 %v84
  %v419 = vunpack.c.l.b16 %v85
  %v420 = vunpack.c.h.b16 %v85
  %v421 = vunpack.c.l.b16 %v86
  %v422 = vunpack.c.l.b16 %v87
  %v423 = vunpack.c.h.b16 %v87
  %v424 = vunpack.c.l.b16 %v88
  %v425 = vunpack.c.l.b16 %v89
  %v426 = vunpack.c.h.b16 %v89
  %v427 = vunpack.c.l.b16 %v90
  %v428 = vunpack.c.l.b16 %v91
  %v429 = vunpack.c.h.b16 %v91
  %v430 = vunpack.c.l.b16 %v92
  %v431 = vunpack.c.l.b16 %v93
  %v432 = vunpack.c.h.b16 %v93
  %v433 = vunpack.c.l.b16 %v94
  %v434 = vunpack.c.l.b16 %v95
  %v435 = vunpack.c.h.b16 %v95
  %v436 = vunpack.c.l.b16 %v96
  %v437 = vunpack.c.l.b16 %v97
  %v438 = vunpack.c.h.b16 %v97
  %v439 = vunpack.c.l.b16 %v98
  %v440 = vunpack.c.l.b16 %v99
  %v441 = vunpack.c.h.b16 %v99
  %v442 = vunpack.c.l.b16 %v100
  %v443 = vunpack.c.l.b16 %v101
  %v444 = vunpack.c.h.b16 %v101
  %v445 = vunpack.c.l.b16 %v102
  %v446 = vunpack.c.l.b16 %v103
  %v447 = vunpack.c.h.b16 %v103
  %v448 = vunpack.c.l.b16 %v104
  %v449 = vunpack.c.l.b16 %v105
  %v450 = vunpack.c.h.b16 %v105
  %v451 = vunpack.c.l.b16 %v106
  %v452 = vunpack.c.l.b16 %v107
  %v453 = vunpack.c.h.b16 %v107
  %v454 = vunpack.c.l.b16 %v108
  %v455 = vunpack.c.l.b16 %v109
  %v456 = vunpack.c.h.b16 %v109
  %v457 = vunpack.c.l.b16 %v110
  %v458 = vunpack.c.l.b16 %v111
  %v459 = vunpack.c.h.b16 %v111
  %v460 = vunpack.c.l.b16 %v112
  %v461 = vunpack.c.l.b16 %v113
  %v462 = vunpack.c.h.b16 %v113
  %v463 = vunpack.c.l.b16 %v114
  %v464 = vunpack.c.l.b16 %v115
  %v465 = vunpack.c.h.b16 %v115
  %v466 = vunpack.c.l.b16 %v116
  %v467 = vunpack.c.l.b16 %v117
  %v468 = vunpack.c.h.b16 %v117
  %v469 = vunpack.c.l.b16 %v118
  %v470 = vunpack.c.l.b16 %v119
  %v471 = vunpack.c.h.b16 %v119
  %v472 = vunpack.c.l.b16 %v120
  %v473 = vunpack.c.l.b16 %v121
  %v474 = vunpack.c.h.b16 %v121
  %v475 = vunpack.c.l.b16 %v122
  %v476 = vunpack.c.l.b16 %v123
  %v477 = vunpack.c.h.b16 %v123
  %v478 = vunpack.c.l.b16 %v124
  %v479 = vunpack.c.l.b16 %v125
  %v480 = vunpack.c.h.b16 %v125
  %v481 = vunpack.c.l.b16 %v126
  %v482 = vunpack.c.l.b16 %v127
  %v483 = vunpack.c.h.b16 %v127
  %v484 = vunpack.c.l.b16 %v128
  %v485 = vunpack.c.l.b16 %v129
  %v486 = vunpack.c.h.b16 %v129
  %v487 = vunpack.c.l.b16 %v130
  %v488 = vunpack.c.l.b16 %v131
  %v489 = vunpack.c.h.b16 %v131
  %v490 = vunpack.c.l.b16 %v132
  %v491 = vunpack.c.l.b16 %v133
  %v492 = vunpack.c.h.b16 %v133
  %v493 = vunpack.c.l.b16 %v134
  %v494 = vunpack.c.l.b16 %v135
  %v495 = vunpack.c.h.b16 %v135
  %v496 = vunpack.c.l.b16 %v136
  %v497 = vunpack.c.l.b16 %v137
  %v498 = vunpack.c.h.b16 %v137
  %v499 = vunpack.c.l.b16 %v138
  %v500 = vunpack.c.l.b16 %v139
  %v501 = vunpack.c.h.b16 %v139
  %v502 = vunpack.c.l.b16 %v140
  %v503 = vunpack.c.l.b16 %v141
  %v504 = vunpack.c.h.b16 %v141
  %v505 = vunpack.c.l.b16 %v142
  %v506 = vpack.c.b16 %v317, %v314
  %v507 = vpack.c.b16 %v318, %v315
  %v508 = vpack.c.b16 %v319, %v316
  %v509 = vpack.c.b16 %v323, %v320
  %v510 = vpack.c.b16 %v324, %v321
  %v511 = vpack.c.b16 %v325, %v322
  %v512 = vpack.c.b16 %v329, %v326
  %v513 = vpack.c.b16 %v330, %v327
  %v514 = vpack.c.b16 %v331, %v328
  %v515 = vpack.c.b16 %v335, %v332
  %v516 = vpack.c.b16 %v336, %v333
  %v517 = vpack.c.b16 %v337, %v334
  %v518 = vpack.c.b16 %v341, %v338
  %v519 = vpack.c.b16 %v342, %v339
  %v520 = vpack.c.b16 %v343, %v340
  %v521 = vpack.c.b16 %v347, %v344
  %v522 = vpack.c.b16 %v348, %v345
  %v523 = vpack.c.b16 %v349, %v346
  %v524 = vpack.c.b16 %v353, %v350
  %v525 = vpack.c.b16 %v354, %v351
  %v526 = vpack.c.b16 %v355, %v352
  %v527 = vpack.c.b16 %v359, %v356
  %v528 = vpack.c.b16 %v360, %v357
  %v529 = vpack.c.b16 %v361, %v358
  %v530 = vpack.c.b16 %v365, %v362
  %v531 = vpack.c.b16 %v366, %v363
  %v532 = vpack.c.b16 %v367, %v364
  %v533 = vpack.c.b16 %v371, %v368
  %v534 = vpack.c.b16 %v372, %v369
  %v535 = vpack.c.b16 %v373, %v370
  %v536 = vpack.c.b16 %v377, %v374
  %v537 = vpack.c.b16 %v378, %v375
  %v538 = vpack.c.b16 %v379, %v376
  %v539 = vpack.c.b16 %v383, %v380
  %v540 = vpack.c.b16 %v384, %v381
  %v541 = vpack.c.b16 %v385, %v382
  %v542 = vpack.c.b16 %v389, %v386
  %v543 = vpack.c.b16 %v390, %v387
  %v544 = vpack.c.b16 %v391, %v388
  %v545 = vpack.c.b16 %v395, %v392
  %v546 = vpack.c.b16 %v396, %v393
  %v547 = vpack.c.b16 %v397, %v394
  %v548 = vpack.c.b16 %v401, %v398
  %v549 = vpack.c.b16 %v402, %v399
  %v550 = vpack.c.b16 %v403, %v400
  %v551 = vpack.c.b16 %v407, %v404
  %v552 = vpack.c.b16 %v408, %v405
  %v553 = vpack.c.b16 %v409, %v406
  %v554 = vpack.c.b16 %v413, %v410
  %v555 = vpack.c.b16 %v414, %v411
  %v556 = vpack.c.b16 %v415, %v412
  %v557 = vpack.c.b16 %v419, %v416
  %v558 = vpack.c.b16 %v420, %v417
  %v559 = vpack.c.b16 %v421, %v418
  %v560 = vpack.c.b16 %v425, %v422
  %v561 = vpack.c.b16 %v426, %v423
  %v562 = vpack.c.b16 %v427, %v424
  %v563 = vpack.c.b16 %v431, %v428
  %v564 = vpack.c.b16 %v432, %v429
  %v565 = vpack.c.b16 %v433, %v430
  %v566 = vpack.c.b16 %v437, %v434
  %v567 = vpack.c.b16 %v438, %v435
  %v568 = vpack.c.b16 %v439, %v436
  %v569 = vpack.c.b16 %v443, %v440
  %v570 = vpack.c.b16 %v444, %v441
  %v571 = vpack.c.b16 %v445, %v442
  %v572 = vpack.c.b16 %v449, %v446
  %v573 = vpack.c.b16 %v450, %v447
  %v574 = vpack.c.b16 %v451, %v448
  %v575 = vpack.c.b16 %v455, %v452
  %v576 = vpack.c.b16 %v456, %v453
  %v577 = vpack.c.b16 %v457, %v454
  %v578 = vpack.c.b16 %v461, %v458
  %v579 = vpack.c.b16 %v462, %v459
  %v580 = vpack.c.b16 %v463, %v460
  %v581 = vpack.c.b16 %v467, %v464
  %v582 = vpack.c.b16 %v468, %v465
  %v583 = vpack.c.b16 %v469, %v466
  %v584 = vpack.c.b16 %v473, %v470
  %v585 = vpack.c.b16 %v474, %v471
  %v586 = vpack.c.b16 %v475, %v472
  %v587 = vpack.c.b16 %v479, %v476
  %v588 = vpack.c.b16 %v480, %v477
  %v589 = vpack.c.b16 %v481, %v478
  %v590 = vpack.c.b16 %v485, %v482
  %v591 = vpack.c.b16 %v486, %v483
  %v592 = vpack.c.b16 %v487, %v484
  %v593 = vpack.c.b16 %v491, %v488
  %v594 = vpack.c.b16 %v492, %v489
  %v595 = vpack.c.b16 %v493, %v490
  %v596 = vpack.c.b16 %v497, %v494
  %v597 = vpack.c.b16 %v498, %v495
  %v598 = vpack.c.b16 %v499, %v496
  %v599 = vpack.c.b16 %v503, %v500
  %v600 = vpack.c.b16 %v504, %v501
  %v601 = vpack.c.b16 %v505, %v502
  %v702 = vunpack.c.l.b16 %v143
  %v703 = vunpack.c.l.b16 %v144
  %v704 = vunpack.c.l.b16 %v145
  %v705 = vunpack.c.l.b16 %v146
  %v706 = vunpack.c.l.b16 %v147
  %v707 = vunpack.c.l.b16 %v148
  %v708 = vunpack.c.l.b16 %v149
  %v709 = vunpack.c.l.b16 %v150
  %v710 = vunpack.c.l.b16 %v151
  %v711 = vunpack.c.l.b16 %v152
  %v712 = vunpack.c.l.b16 %v153
  %v713 = vunpack.c.l.b16 %v154
  %v714 = vunpack.c.l.b16 %v155
  %v715 = vunpack.c.l.b16 %v156
  %v716 = vunpack.c.l.b16 %v157
  %v717 = vunpack.c.l.b16 %v158
  %v718 = vunpack.c.l.b16 %v159
  %v719 = vunpack.c.l.b16 %v160
  %v720 = vunpack.c.l.b16 %v161
  %v721 = vunpack.c.l.b16 %v162
  %v722 = vunpack.c.l.b16 %v163
  %v723 = vunpack.c.l.b16 %v164
  %v724 = vunpack.c.l.b16 %v165
  %v725 = vunpack.c.l.b16 %v166
  %v726 = vunpack.c.l.b16 %v167
  %v727 = vunpack.c.l.b16 %v168
  %v728 = vunpack.c.l.b16 %v169
  %v729 = vunpack.c.l.b16 %v170
  %v730 = vunpack.c.l.b16 %v171
  %v731 = vunpack.c.l.b16 %v172
  %v732 = vunpack.c.l.b16 %v173
  %v733 = vunpack.c.l.b16 %v174
  %v734 = vunpack.c.l.b16 %v175
  %v735 = vunpack.c.l.b16 %v176
  %v736 = vunpack.c.l.b16 %v177
  %v737 = vunpack.c.l.b16 %v178
  %v738 = vpack.c.b16 %v703, %v702
  %v739 = vpack.c.b16 %v705, %v704
  %v740 = vpack.c.b16 %v707, %v706
  %v741 = vpack.c.b16 %v709, %v708
  %v742 = vpack.c.b16 %v711, %v710
  %v743 = vpack.c.b16 %v713, %v712
  %v744 = vpack.c.b16 %v715, %v714
  %v745 = vpack.c.b16 %v717, %v716
  %v746 = vpack.c.b16 %v719, %v718
  %v747 = vpack.c.b16 %v721, %v720
  %v748 = vpack.c.b16 %v723, %v722
  %v749 = vpack.c.b16 %v725, %v724
  %v750 = vpack.c.b16 %v727, %v726
  %v751 = vpack.c.b16 %v729, %v728
  %v752 = vpack.c.b16 %v731, %v730
  %v753 = vpack.c.b16 %v733, %v732
  %v754 = vpack.c.b16 %v735, %v734
  %v755 = vpack.c.b16 %v737, %v736
  %vm774 = vcmask 261120
  %v776 = vsel %vm774, %v508, 0
  %v779 = vsel %vm774, %v511, 0
  %v782 = vsel %vm774, %v514, 0
  %v785 = vsel %vm774, %v517, 0
  %v788 = vsel %vm774, %v520, 0
  %v791 = vsel %vm774, %v523, 0
  %v794 = vsel %vm774, %v526, 0
  %v797 = vsel %vm774, %v529, 0
  %v800 = vsel %vm774, %v532, 0
  %v803 = vsel %vm774, %v535, 0
  %v806 = vsel %vm774, %v538, 0
  %v809 = vsel %vm774, %v541, 0
  %v812 = vsel %vm774, %v544, 0
  %v815 = vsel %vm774, %v547, 0
  %v818 = vsel %vm774, %v550, 0
  %v821 = vsel %vm774, %v553, 0
  %v824 = vsel %vm774, %v556, 0
  %v827 = vsel %vm774, %v559, 0
  %v830 = vsel %vm774, %v562, 0
  %v833 = vsel %vm774, %v565, 0
  %v836 = vsel %vm774, %v568, 0
  %v839 = vsel %vm774, %v571, 0
  %v842 = vsel %vm774, %v574, 0
  %v845 = vsel %vm774, %v577, 0
  %v848 = vsel %vm774, %v580, 0
  %v851 = vsel %vm774, %v583, 0
  %v854 = vsel %vm774, %v586, 0
  %v857 = vsel %vm774, %v589, 0
  %v860 = vsel %vm774, %v592, 0
  %v863 = vsel %vm774, %v595, 0
  %v866 = vsel %vm774, %v598, 0
  %v869 = vsel %vm774, %v601, 0
  %871 = vmatprep.subr.bf16.mxu0 0
  %872 = vmatpush1.bf16.msra.mxu0 %v745
  %873 = vmatprep.subr.bf16.mxu0 0
  %874 = vmatpush1.bf16.msra.mxu0 %v744
  %875 = vmatprep.subr.bf16.mxu0 0
  %876 = vmatpush1.bf16.msra.mxu0 %v743
  %877 = vmatprep.subr.bf16.mxu0 0
  %878 = vmatpush1.bf16.msra.mxu0 %v742
  %879 = vmatprep.subr.bf16.mxu0 0
  %880 = vmatpush1.bf16.msra.mxu0 %v741
  %881 = vmatprep.subr.bf16.mxu0 0
  %882 = vmatpush1.bf16.msra.mxu0 %v740
  %883 = vmatprep.subr.bf16.mxu0 0
  %884 = vmatpush1.bf16.msra.mxu0 %v739
  %885 = vmatprep.subr.bf16.mxu0 0
  %886 = vmatpush1.bf16.msra.mxu0 %v738
  %887 = vmatprep.subr.bf16.mxu0 0
  %888 = vmatpush2.bf16.msra.mxu0 %v753
  %889 = vmatprep.subr.bf16.mxu0 0
  %890 = vmatpush2.bf16.msra.mxu0 %v752
  %891 = vmatprep.subr.bf16.mxu0 0
  %892 = vmatpush2.bf16.msra.mxu0 %v751
  %893 = vmatprep.subr.bf16.mxu0 0
  %894 = vmatpush2.bf16.msra.mxu0 %v750
  %895 = vmatprep.subr.bf16.mxu0 0
  %896 = vmatpush2.bf16.msra.mxu0 %v749
  %897 = vmatprep.subr.bf16.mxu0 0
  %898 = vmatpush2.bf16.msra.mxu0 %v748
  %899 = vmatprep.subr.bf16.mxu0 0
  %900 = vmatpush2.bf16.msra.mxu0 %v747
  %901 = vmatprep.subr.bf16.mxu0 0
  %902 = vmatpush2.bf16.msra.mxu0 %v746
  %903 = vmatprep.mubr.bf16.mxu0 %v507
  %904 = vmatmul.mubr.bf16.gmra.mxu0 %v506
  %v905 = vpop.f32.mrf.mxu0
  %v906 = vadd.f32 %v184, %v905
  %v907 = vpop.f32.mrf.mxu0
  %v908 = vpop.f32.mrf.mxu0
  %v909 = vadd.f32 %v184, %v908
  %v910 = vpop.f32.mrf.mxu0
  %911 = vmatprep.mubr.bf16.mxu0 %v510
  %912 = vmatmul.mubr.bf16.gmra.mxu0 %v509
  %v913 = vpop.f32.mrf.mxu0
  %v914 = vadd.f32 %v184, %v913
  %v915 = vpop.f32.mrf.mxu0
  %v916 = vpop.f32.mrf.mxu0
  %v917 = vadd.f32 %v184, %v916
  %v918 = vpop.f32.mrf.mxu0
  %919 = vmatprep.mubr.bf16.mxu0 %v513
  %920 = vmatmul.mubr.bf16.gmra.mxu0 %v512
  %v921 = vpop.f32.mrf.mxu0
  %v922 = vadd.f32 %v184, %v921
  %v923 = vpop.f32.mrf.mxu0
  %v924 = vpop.f32.mrf.mxu0
  %v925 = vadd.f32 %v184, %v924
  %v926 = vpop.f32.mrf.mxu0
  %927 = vmatprep.mubr.bf16.mxu0 %v516
  %928 = vmatmul.mubr.bf16.gmra.mxu0 %v515
  %v929 = vpop.f32.mrf.mxu0
  %v930 = vadd.f32 %v184, %v929
  %v931 = vpop.f32.mrf.mxu0
  %v932 = vpop.f32.mrf.mxu0
  %v933 = vadd.f32 %v184, %v932
  %v934 = vpop.f32.mrf.mxu0
  %935 = vmatprep.mubr.bf16.mxu0 %v519
  %936 = vmatmul.mubr.bf16.gmra.mxu0 %v518
  %v937 = vpop.f32.mrf.mxu0
  %v938 = vadd.f32 %v184, %v937
  %v939 = vpop.f32.mrf.mxu0
  %v940 = vpop.f32.mrf.mxu0
  %v941 = vadd.f32 %v184, %v940
  %v942 = vpop.f32.mrf.mxu0
  %943 = vmatprep.mubr.bf16.mxu0 %v522
  %944 = vmatmul.mubr.bf16.gmra.mxu0 %v521
  %v945 = vpop.f32.mrf.mxu0
  %v946 = vadd.f32 %v184, %v945
  %v947 = vpop.f32.mrf.mxu0
  %v948 = vpop.f32.mrf.mxu0
  %v949 = vadd.f32 %v184, %v948
  %v950 = vpop.f32.mrf.mxu0
  %951 = vmatprep.mubr.bf16.mxu0 %v525
  %952 = vmatmul.mubr.bf16.gmra.mxu0 %v524
  %v953 = vpop.f32.mrf.mxu0
  %v954 = vadd.f32 %v184, %v953
  %v955 = vpop.f32.mrf.mxu0
  %v956 = vpop.f32.mrf.mxu0
  %v957 = vadd.f32 %v184, %v956
  %v958 = vpop.f32.mrf.mxu0
  %959 = vmatprep.mubr.bf16.mxu0 %v528
  %960 = vmatmul.mubr.bf16.gmra.mxu0 %v527
  %v961 = vpop.f32.mrf.mxu0
  %v962 = vadd.f32 %v184, %v961
  %v963 = vpop.f32.mrf.mxu0
  %v964 = vpop.f32.mrf.mxu0
  %v965 = vadd.f32 %v184, %v964
  %v966 = vpop.f32.mrf.mxu0
  %967 = vmatprep.mubr.bf16.mxu0 %v531
  %968 = vmatmul.mubr.bf16.gmra.mxu0 %v530
  %v969 = vpop.f32.mrf.mxu0
  %v970 = vadd.f32 %v184, %v969
  %v971 = vpop.f32.mrf.mxu0
  %v972 = vpop.f32.mrf.mxu0
  %v973 = vadd.f32 %v184, %v972
  %v974 = vpop.f32.mrf.mxu0
  %975 = vmatprep.mubr.bf16.mxu0 %v534
  %976 = vmatmul.mubr.bf16.gmra.mxu0 %v533
  %v977 = vpop.f32.mrf.mxu0
  %v978 = vadd.f32 %v184, %v977
  %v979 = vpop.f32.mrf.mxu0
  %v980 = vpop.f32.mrf.mxu0
  %v981 = vadd.f32 %v184, %v980
  %v982 = vpop.f32.mrf.mxu0
  %983 = vmatprep.mubr.bf16.mxu0 %v537
  %984 = vmatmul.mubr.bf16.gmra.mxu0 %v536
  %v985 = vpop.f32.mrf.mxu0
  %v986 = vadd.f32 %v184, %v985
  %v987 = vpop.f32.mrf.mxu0
  %v988 = vpop.f32.mrf.mxu0
  %v989 = vadd.f32 %v184, %v988
  %v990 = vpop.f32.mrf.mxu0
  %991 = vmatprep.mubr.bf16.mxu0 %v540
  %992 = vmatmul.mubr.bf16.gmra.mxu0 %v539
  %v993 = vpop.f32.mrf.mxu0
  %v994 = vadd.f32 %v184, %v993
  %v995 = vpop.f32.mrf.mxu0
  %v996 = vpop.f32.mrf.mxu0
  %v997 = vadd.f32 %v184, %v996
  %v998 = vpop.f32.mrf.mxu0
  %999 = vmatprep.mubr.bf16.mxu0 %v543
  %1000 = vmatmul.mubr.bf16.gmra.mxu0 %v542
  %v1001 = vpop.f32.mrf.mxu0
  %v1002 = vadd.f32 %v184, %v1001
  %v1003 = vpop.f32.mrf.mxu0
  %v1004 = vpop.f32.mrf.mxu0
  %v1005 = vadd.f32 %v184, %v1004
  %v1006 = vpop.f32.mrf.mxu0
  %1007 = vmatprep.mubr.bf16.mxu0 %v546
  %1008 = vmatmul.mubr.bf16.gmra.mxu0 %v545
  %v1009 = vpop.f32.mrf.mxu0
  %v1010 = vadd.f32 %v184, %v1009
  %v1011 = vpop.f32.mrf.mxu0
  %v1012 = vpop.f32.mrf.mxu0
  %v1013 = vadd.f32 %v184, %v1012
  %v1014 = vpop.f32.mrf.mxu0
  %1015 = vmatprep.mubr.bf16.mxu0 %v549
  %1016 = vmatmul.mubr.bf16.gmra.mxu0 %v548
  %v1017 = vpop.f32.mrf.mxu0
  %v1018 = vadd.f32 %v184, %v1017
  %v1019 = vpop.f32.mrf.mxu0
  %v1020 = vpop.f32.mrf.mxu0
  %v1021 = vadd.f32 %v184, %v1020
  %v1022 = vpop.f32.mrf.mxu0
  %1023 = vmatprep.mubr.bf16.mxu0 %v552
  %1024 = vmatmul.mubr.bf16.gmra.mxu0 %v551
  %v1025 = vpop.f32.mrf.mxu0
  %v1026 = vadd.f32 %v184, %v1025
  %v1027 = vpop.f32.mrf.mxu0
  %v1028 = vpop.f32.mrf.mxu0
  %v1029 = vadd.f32 %v184, %v1028
  %v1030 = vpop.f32.mrf.mxu0
  %1031 = vmatprep.mubr.bf16.mxu0 %v555
  %1032 = vmatmul.mubr.bf16.gmra.mxu0 %v554
  %v1033 = vpop.f32.mrf.mxu0
  %v1034 = vadd.f32 %v184, %v1033
  %v1035 = vpop.f32.mrf.mxu0
  %v1036 = vpop.f32.mrf.mxu0
  %v1037 = vadd.f32 %v184, %v1036
  %v1038 = vpop.f32.mrf.mxu0
  %1039 = vmatprep.mubr.bf16.mxu0 %v558
  %1040 = vmatmul.mubr.bf16.gmra.mxu0 %v557
  %v1041 = vpop.f32.mrf.mxu0
  %v1042 = vadd.f32 %v184, %v1041
  %v1043 = vpop.f32.mrf.mxu0
  %v1044 = vpop.f32.mrf.mxu0
  %v1045 = vadd.f32 %v184, %v1044
  %v1046 = vpop.f32.mrf.mxu0
  %1047 = vmatprep.mubr.bf16.mxu0 %v561
  %1048 = vmatmul.mubr.bf16.gmra.mxu0 %v560
  %v1049 = vpop.f32.mrf.mxu0
  %v1050 = vadd.f32 %v184, %v1049
  %v1051 = vpop.f32.mrf.mxu0
  %v1052 = vpop.f32.mrf.mxu0
  %v1053 = vadd.f32 %v184, %v1052
  %v1054 = vpop.f32.mrf.mxu0
  %1055 = vmatprep.mubr.bf16.mxu0 %v564
  %1056 = vmatmul.mubr.bf16.gmra.mxu0 %v563
  %v1057 = vpop.f32.mrf.mxu0
  %v1058 = vadd.f32 %v184, %v1057
  %v1059 = vpop.f32.mrf.mxu0
  %v1060 = vpop.f32.mrf.mxu0
  %v1061 = vadd.f32 %v184, %v1060
  %v1062 = vpop.f32.mrf.mxu0
  %1063 = vmatprep.mubr.bf16.mxu0 %v567
  %1064 = vmatmul.mubr.bf16.gmra.mxu0 %v566
  %v1065 = vpop.f32.mrf.mxu0
  %v1066 = vadd.f32 %v184, %v1065
  %v1067 = vpop.f32.mrf.mxu0
  %v1068 = vpop.f32.mrf.mxu0
  %v1069 = vadd.f32 %v184, %v1068
  %v1070 = vpop.f32.mrf.mxu0
  %1071 = vmatprep.mubr.bf16.mxu0 %v570
  %1072 = vmatmul.mubr.bf16.gmra.mxu0 %v569
  %v1073 = vpop.f32.mrf.mxu0
  %v1074 = vadd.f32 %v184, %v1073
  %v1075 = vpop.f32.mrf.mxu0
  %v1076 = vpop.f32.mrf.mxu0
  %v1077 = vadd.f32 %v184, %v1076
  %v1078 = vpop.f32.mrf.mxu0
  %1079 = vmatprep.mubr.bf16.mxu0 %v573
  %1080 = vmatmul.mubr.bf16.gmra.mxu0 %v572
  %v1081 = vpop.f32.mrf.mxu0
  %v1082 = vadd.f32 %v184, %v1081
  %v1083 = vpop.f32.mrf.mxu0
  %v1084 = vpop.f32.mrf.mxu0
  %v1085 = vadd.f32 %v184, %v1084
  %v1086 = vpop.f32.mrf.mxu0
  %1087 = vmatprep.mubr.bf16.mxu0 %v576
  %1088 = vmatmul.mubr.bf16.gmra.mxu0 %v575
  %v1089 = vpop.f32.mrf.mxu0
  %v1090 = vadd.f32 %v184, %v1089
  %v1091 = vpop.f32.mrf.mxu0
  %v1092 = vpop.f32.mrf.mxu0
  %v1093 = vadd.f32 %v184, %v1092
  %v1094 = vpop.f32.mrf.mxu0
  %1095 = vmatprep.mubr.bf16.mxu0 %v579
  %1096 = vmatmul.mubr.bf16.gmra.mxu0 %v578
  %v1097 = vpop.f32.mrf.mxu0
  %v1098 = vadd.f32 %v184, %v1097
  %v1099 = vpop.f32.mrf.mxu0
  %v1100 = vpop.f32.mrf.mxu0
  %v1101 = vadd.f32 %v184, %v1100
  %v1102 = vpop.f32.mrf.mxu0
  %1103 = vmatprep.mubr.bf16.mxu0 %v582
  %1104 = vmatmul.mubr.bf16.gmra.mxu0 %v581
  %v1105 = vpop.f32.mrf.mxu0
  %v1106 = vadd.f32 %v184, %v1105
  %v1107 = vpop.f32.mrf.mxu0
  %v1108 = vpop.f32.mrf.mxu0
  %v1109 = vadd.f32 %v184, %v1108
  %v1110 = vpop.f32.mrf.mxu0
  %1111 = vmatprep.mubr.bf16.mxu0 %v585
  %1112 = vmatmul.mubr.bf16.gmra.mxu0 %v584
  %v1113 = vpop.f32.mrf.mxu0
  %v1114 = vadd.f32 %v184, %v1113
  %v1115 = vpop.f32.mrf.mxu0
  %v1116 = vpop.f32.mrf.mxu0
  %v1117 = vadd.f32 %v184, %v1116
  %v1118 = vpop.f32.mrf.mxu0
  %1119 = vmatprep.mubr.bf16.mxu0 %v588
  %1120 = vmatmul.mubr.bf16.gmra.mxu0 %v587
  %v1121 = vpop.f32.mrf.mxu0
  %v1122 = vadd.f32 %v184, %v1121
  %v1123 = vpop.f32.mrf.mxu0
  %v1124 = vpop.f32.mrf.mxu0
  %v1125 = vadd.f32 %v184, %v1124
  %v1126 = vpop.f32.mrf.mxu0
  %1127 = vmatprep.mubr.bf16.mxu0 %v591
  %1128 = vmatmul.mubr.bf16.gmra.mxu0 %v590
  %v1129 = vpop.f32.mrf.mxu0
  %v1130 = vadd.f32 %v184, %v1129
  %v1131 = vpop.f32.mrf.mxu0
  %v1132 = vpop.f32.mrf.mxu0
  %v1133 = vadd.f32 %v184, %v1132
  %v1134 = vpop.f32.mrf.mxu0
  %1135 = vmatprep.mubr.bf16.mxu0 %v594
  %1136 = vmatmul.mubr.bf16.gmra.mxu0 %v593
  %v1137 = vpop.f32.mrf.mxu0
  %v1138 = vadd.f32 %v184, %v1137
  %v1139 = vpop.f32.mrf.mxu0
  %v1140 = vpop.f32.mrf.mxu0
  %v1141 = vadd.f32 %v184, %v1140
  %v1142 = vpop.f32.mrf.mxu0
  %1143 = vmatprep.mubr.bf16.mxu0 %v597
  %1144 = vmatmul.mubr.bf16.gmra.mxu0 %v596
  %v1145 = vpop.f32.mrf.mxu0
  %v1146 = vadd.f32 %v184, %v1145
  %v1147 = vpop.f32.mrf.mxu0
  %v1148 = vpop.f32.mrf.mxu0
  %v1149 = vadd.f32 %v184, %v1148
  %v1150 = vpop.f32.mrf.mxu0
  %1151 = vmatprep.mubr.bf16.mxu0 %v600
  %1152 = vmatmul.mubr.bf16.gmra.mxu0 %v599
  %v1153 = vpop.f32.mrf.mxu0
  %v1154 = vadd.f32 %v184, %v1153
  %v1155 = vpop.f32.mrf.mxu0
  %v1156 = vpop.f32.mrf.mxu0
  %v1157 = vadd.f32 %v184, %v1156
  %v1158 = vpop.f32.mrf.mxu0
  %1159 = vdwg.mxu0
  %1160 = vmatprep.subr.bf16.mxu0 0
  %1161 = vmatpush1.bf16.msra.mxu0 0
  %1162 = vmatprep.subr.bf16.mxu0 0
  %1163 = vmatpush1.bf16.msra.mxu0 0
  %1164 = vmatprep.subr.bf16.mxu0 0
  %1165 = vmatpush1.bf16.msra.mxu0 0
  %1166 = vmatprep.subr.bf16.mxu0 0
  %1167 = vmatpush1.bf16.msra.mxu0 0
  %1168 = vmatprep.subr.bf16.mxu0 0
  %1169 = vmatpush1.bf16.msra.mxu0 0
  %1170 = vmatprep.subr.bf16.mxu0 0
  %1171 = vmatpush1.bf16.msra.mxu0 0
  %1172 = vmatprep.subr.bf16.mxu0 0
  %1173 = vmatpush1.bf16.msra.mxu0 %v755
  %1174 = vmatprep.subr.bf16.mxu0 0
  %1175 = vmatpush1.bf16.msra.mxu0 %v754
  %1176 = vmatprep.subr.bf16.mxu0 0
  %1177 = vmatpush2.bf16.msra.mxu0 0
  %1178 = vmatprep.subr.bf16.mxu0 0
  %1179 = vmatpush2.bf16.msra.mxu0 0
  %1180 = vmatprep.subr.bf16.mxu0 0
  %1181 = vmatpush2.bf16.msra.mxu0 0
  %1182 = vmatprep.subr.bf16.mxu0 0
  %1183 = vmatpush2.bf16.msra.mxu0 0
  %1184 = vmatprep.subr.bf16.mxu0 0
  %1185 = vmatpush2.bf16.msra.mxu0 0
  %1186 = vmatprep.subr.bf16.mxu0 0
  %1187 = vmatpush2.bf16.msra.mxu0 0
  %1188 = vmatprep.subr.bf16.mxu0 0
  %1189 = vmatpush2.bf16.msra.mxu0 0
  %1190 = vmatprep.subr.bf16.mxu0 0
  %1191 = vmatpush2.bf16.msra.mxu0 0
  %1192 = vmatprep.mubr.bf16.mxu0 0
  %1193 = vmatmul.mubr.bf16.gmra.mxu0 %v776
  %v1194 = vpop.f32.mrf.mxu0
  %v1195 = vadd.f32 %v906, %v1194
  %v1196 = vpop.f32.mrf.mxu0
  %v1197 = vpop.f32.mrf.mxu0
  %v1198 = vadd.f32 %v909, %v1197
  %v1199 = vpop.f32.mrf.mxu0
  %1200 = vmatprep.mubr.bf16.mxu0 0
  %1201 = vmatmul.mubr.bf16.gmra.mxu0 %v779
  %v1202 = vpop.f32.mrf.mxu0
  %v1203 = vadd.f32 %v914, %v1202
  %v1204 = vpop.f32.mrf.mxu0
  %v1205 = vpop.f32.mrf.mxu0
  %v1206 = vadd.f32 %v917, %v1205
  %v1207 = vpop.f32.mrf.mxu0
  %1208 = vmatprep.mubr.bf16.mxu0 0
  %1209 = vmatmul.mubr.bf16.gmra.mxu0 %v782
  %v1210 = vpop.f32.mrf.mxu0
  %v1211 = vadd.f32 %v922, %v1210
  %v1212 = vpop.f32.mrf.mxu0
  %v1213 = vpop.f32.mrf.mxu0
  %v1214 = vadd.f32 %v925, %v1213
  %v1215 = vpop.f32.mrf.mxu0
  %1216 = vmatprep.mubr.bf16.mxu0 0
  %1217 = vmatmul.mubr.bf16.gmra.mxu0 %v785
  %v1218 = vpop.f32.mrf.mxu0
  %v1219 = vadd.f32 %v930, %v1218
  %v1220 = vpop.f32.mrf.mxu0
  %v1221 = vpop.f32.mrf.mxu0
  %v1222 = vadd.f32 %v933, %v1221
  %v1223 = vpop.f32.mrf.mxu0
  %1224 = vmatprep.mubr.bf16.mxu0 0
  %1225 = vmatmul.mubr.bf16.gmra.mxu0 %v788
  %v1226 = vpop.f32.mrf.mxu0
  %v1227 = vadd.f32 %v938, %v1226
  %v1228 = vpop.f32.mrf.mxu0
  %v1229 = vpop.f32.mrf.mxu0
  %v1230 = vadd.f32 %v941, %v1229
  %v1231 = vpop.f32.mrf.mxu0
  %1232 = vmatprep.mubr.bf16.mxu0 0
  %1233 = vmatmul.mubr.bf16.gmra.mxu0 %v791
  %v1234 = vpop.f32.mrf.mxu0
  %v1235 = vadd.f32 %v946, %v1234
  %v1236 = vpop.f32.mrf.mxu0
  %v1237 = vpop.f32.mrf.mxu0
  %v1238 = vadd.f32 %v949, %v1237
  %v1239 = vpop.f32.mrf.mxu0
  %1240 = vmatprep.mubr.bf16.mxu0 0
  %1241 = vmatmul.mubr.bf16.gmra.mxu0 %v794
  %v1242 = vpop.f32.mrf.mxu0
  %v1243 = vadd.f32 %v954, %v1242
  %v1244 = vpop.f32.mrf.mxu0
  %v1245 = vpop.f32.mrf.mxu0
  %v1246 = vadd.f32 %v957, %v1245
  %v1247 = vpop.f32.mrf.mxu0
  %1248 = vmatprep.mubr.bf16.mxu0 0
  %1249 = vmatmul.mubr.bf16.gmra.mxu0 %v797
  %v1250 = vpop.f32.mrf.mxu0
  %v1251 = vadd.f32 %v962, %v1250
  %v1252 = vpop.f32.mrf.mxu0
  %v1253 = vpop.f32.mrf.mxu0
  %v1254 = vadd.f32 %v965, %v1253
  %v1255 = vpop.f32.mrf.mxu0
  %1256 = vmatprep.mubr.bf16.mxu0 0
  %1257 = vmatmul.mubr.bf16.gmra.mxu0 %v800
  %v1258 = vpop.f32.mrf.mxu0
  %v1259 = vadd.f32 %v970, %v1258
  %v1260 = vpop.f32.mrf.mxu0
  %v1261 = vpop.f32.mrf.mxu0
  %v1262 = vadd.f32 %v973, %v1261
  %v1263 = vpop.f32.mrf.mxu0
  %1264 = vmatprep.mubr.bf16.mxu0 0
  %1265 = vmatmul.mubr.bf16.gmra.mxu0 %v803
  %v1266 = vpop.f32.mrf.mxu0
  %v1267 = vadd.f32 %v978, %v1266
  %v1268 = vpop.f32.mrf.mxu0
  %v1269 = vpop.f32.mrf.mxu0
  %v1270 = vadd.f32 %v981, %v1269
  %v1271 = vpop.f32.mrf.mxu0
  %1272 = vmatprep.mubr.bf16.mxu0 0
  %1273 = vmatmul.mubr.bf16.gmra.mxu0 %v806
  %v1274 = vpop.f32.mrf.mxu0
  %v1275 = vadd.f32 %v986, %v1274
  %v1276 = vpop.f32.mrf.mxu0
  %v1277 = vpop.f32.mrf.mxu0
  %v1278 = vadd.f32 %v989, %v1277
  %v1279 = vpop.f32.mrf.mxu0
  %1280 = vmatprep.mubr.bf16.mxu0 0
  %1281 = vmatmul.mubr.bf16.gmra.mxu0 %v809
  %v1282 = vpop.f32.mrf.mxu0
  %v1283 = vadd.f32 %v994, %v1282
  %v1284 = vpop.f32.mrf.mxu0
  %v1285 = vpop.f32.mrf.mxu0
  %v1286 = vadd.f32 %v997, %v1285
  %v1287 = vpop.f32.mrf.mxu0
  %1288 = vmatprep.mubr.bf16.mxu0 0
  %1289 = vmatmul.mubr.bf16.gmra.mxu0 %v812
  %v1290 = vpop.f32.mrf.mxu0
  %v1291 = vadd.f32 %v1002, %v1290
  %v1292 = vpop.f32.mrf.mxu0
  %v1293 = vpop.f32.mrf.mxu0
  %v1294 = vadd.f32 %v1005, %v1293
  %v1295 = vpop.f32.mrf.mxu0
  %1296 = vmatprep.mubr.bf16.mxu0 0
  %1297 = vmatmul.mubr.bf16.gmra.mxu0 %v815
  %v1298 = vpop.f32.mrf.mxu0
  %v1299 = vadd.f32 %v1010, %v1298
  %v1300 = vpop.f32.mrf.mxu0
  %v1301 = vpop.f32.mrf.mxu0
  %v1302 = vadd.f32 %v1013, %v1301
  %v1303 = vpop.f32.mrf.mxu0
  %1304 = vmatprep.mubr.bf16.mxu0 0
  %1305 = vmatmul.mubr.bf16.gmra.mxu0 %v818
  %v1306 = vpop.f32.mrf.mxu0
  %v1307 = vadd.f32 %v1018, %v1306
  %v1308 = vpop.f32.mrf.mxu0
  %v1309 = vpop.f32.mrf.mxu0
  %v1310 = vadd.f32 %v1021, %v1309
  %v1311 = vpop.f32.mrf.mxu0
  %1312 = vmatprep.mubr.bf16.mxu0 0
  %1313 = vmatmul.mubr.bf16.gmra.mxu0 %v821
  %v1314 = vpop.f32.mrf.mxu0
  %v1315 = vadd.f32 %v1026, %v1314
  %v1316 = vpop.f32.mrf.mxu0
  %v1317 = vpop.f32.mrf.mxu0
  %v1318 = vadd.f32 %v1029, %v1317
  %v1319 = vpop.f32.mrf.mxu0
  %1320 = vmatprep.mubr.bf16.mxu0 0
  %1321 = vmatmul.mubr.bf16.gmra.mxu0 %v824
  %v1322 = vpop.f32.mrf.mxu0
  %v1323 = vadd.f32 %v1034, %v1322
  %v1324 = vpop.f32.mrf.mxu0
  %v1325 = vpop.f32.mrf.mxu0
  %v1326 = vadd.f32 %v1037, %v1325
  %v1327 = vpop.f32.mrf.mxu0
  %1328 = vmatprep.mubr.bf16.mxu0 0
  %1329 = vmatmul.mubr.bf16.gmra.mxu0 %v827
  %v1330 = vpop.f32.mrf.mxu0
  %v1331 = vadd.f32 %v1042, %v1330
  %v1332 = vpop.f32.mrf.mxu0
  %v1333 = vpop.f32.mrf.mxu0
  %v1334 = vadd.f32 %v1045, %v1333
  %v1335 = vpop.f32.mrf.mxu0
  %1336 = vmatprep.mubr.bf16.mxu0 0
  %1337 = vmatmul.mubr.bf16.gmra.mxu0 %v830
  %v1338 = vpop.f32.mrf.mxu0
  %v1339 = vadd.f32 %v1050, %v1338
  %v1340 = vpop.f32.mrf.mxu0
  %v1341 = vpop.f32.mrf.mxu0
  %v1342 = vadd.f32 %v1053, %v1341
  %v1343 = vpop.f32.mrf.mxu0
  %1344 = vmatprep.mubr.bf16.mxu0 0
  %1345 = vmatmul.mubr.bf16.gmra.mxu0 %v833
  %v1346 = vpop.f32.mrf.mxu0
  %v1347 = vadd.f32 %v1058, %v1346
  %v1348 = vpop.f32.mrf.mxu0
  %v1349 = vpop.f32.mrf.mxu0
  %v1350 = vadd.f32 %v1061, %v1349
  %v1351 = vpop.f32.mrf.mxu0
  %1352 = vmatprep.mubr.bf16.mxu0 0
  %1353 = vmatmul.mubr.bf16.gmra.mxu0 %v836
  %v1354 = vpop.f32.mrf.mxu0
  %v1355 = vadd.f32 %v1066, %v1354
  %v1356 = vpop.f32.mrf.mxu0
  %v1357 = vpop.f32.mrf.mxu0
  %v1358 = vadd.f32 %v1069, %v1357
  %v1359 = vpop.f32.mrf.mxu0
  %1360 = vmatprep.mubr.bf16.mxu0 0
  %1361 = vmatmul.mubr.bf16.gmra.mxu0 %v839
  %v1362 = vpop.f32.mrf.mxu0
  %v1363 = vadd.f32 %v1074, %v1362
  %v1364 = vpop.f32.mrf.mxu0
  %v1365 = vpop.f32.mrf.mxu0
  %v1366 = vadd.f32 %v1077, %v1365
  %v1367 = vpop.f32.mrf.mxu0
  %1368 = vmatprep.mubr.bf16.mxu0 0
  %1369 = vmatmul.mubr.bf16.gmra.mxu0 %v842
  %v1370 = vpop.f32.mrf.mxu0
  %v1371 = vadd.f32 %v1082, %v1370
  %v1372 = vpop.f32.mrf.mxu0
  %v1373 = vpop.f32.mrf.mxu0
  %v1374 = vadd.f32 %v1085, %v1373
  %v1375 = vpop.f32.mrf.mxu0
  %1376 = vmatprep.mubr.bf16.mxu0 0
  %1377 = vmatmul.mubr.bf16.gmra.mxu0 %v845
  %v1378 = vpop.f32.mrf.mxu0
  %v1379 = vadd.f32 %v1090, %v1378
  %v1380 = vpop.f32.mrf.mxu0
  %v1381 = vpop.f32.mrf.mxu0
  %v1382 = vadd.f32 %v1093, %v1381
  %v1383 = vpop.f32.mrf.mxu0
  %1384 = vmatprep.mubr.bf16.mxu0 0
  %1385 = vmatmul.mubr.bf16.gmra.mxu0 %v848
  %v1386 = vpop.f32.mrf.mxu0
  %v1387 = vadd.f32 %v1098, %v1386
  %v1388 = vpop.f32.mrf.mxu0
  %v1389 = vpop.f32.mrf.mxu0
  %v1390 = vadd.f32 %v1101, %v1389
  %v1391 = vpop.f32.mrf.mxu0
  %1392 = vmatprep.mubr.bf16.mxu0 0
  %1393 = vmatmul.mubr.bf16.gmra.mxu0 %v851
  %v1394 = vpop.f32.mrf.mxu0
  %v1395 = vadd.f32 %v1106, %v1394
  %v1396 = vpop.f32.mrf.mxu0
  %v1397 = vpop.f32.mrf.mxu0
  %v1398 = vadd.f32 %v1109, %v1397
  %v1399 = vpop.f32.mrf.mxu0
  %1400 = vmatprep.mubr.bf16.mxu0 0
  %1401 = vmatmul.mubr.bf16.gmra.mxu0 %v854
  %v1402 = vpop.f32.mrf.mxu0
  %v1403 = vadd.f32 %v1114, %v1402
  %v1404 = vpop.f32.mrf.mxu0
  %v1405 = vpop.f32.mrf.mxu0
  %v1406 = vadd.f32 %v1117, %v1405
  %v1407 = vpop.f32.mrf.mxu0
  %1408 = vmatprep.mubr.bf16.mxu0 0
  %1409 = vmatmul.mubr.bf16.gmra.mxu0 %v857
  %v1410 = vpop.f32.mrf.mxu0
  %v1411 = vadd.f32 %v1122, %v1410
  %v1412 = vpop.f32.mrf.mxu0
  %v1413 = vpop.f32.mrf.mxu0
  %v1414 = vadd.f32 %v1125, %v1413
  %v1415 = vpop.f32.mrf.mxu0
  %1416 = vmatprep.mubr.bf16.mxu0 0
  %1417 = vmatmul.mubr.bf16.gmra.mxu0 %v860
  %v1418 = vpop.f32.mrf.mxu0
  %v1419 = vadd.f32 %v1130, %v1418
  %v1420 = vpop.f32.mrf.mxu0
  %v1421 = vpop.f32.mrf.mxu0
  %v1422 = vadd.f32 %v1133, %v1421
  %v1423 = vpop.f32.mrf.mxu0
  %1424 = vmatprep.mubr.bf16.mxu0 0
  %1425 = vmatmul.mubr.bf16.gmra.mxu0 %v863
  %v1426 = vpop.f32.mrf.mxu0
  %v1427 = vadd.f32 %v1138, %v1426
  %v1428 = vpop.f32.mrf.mxu0
  %v1429 = vpop.f32.mrf.mxu0
  %v1430 = vadd.f32 %v1141, %v1429
  %v1431 = vpop.f32.mrf.mxu0
  %1432 = vmatprep.mubr.bf16.mxu0 0
  %1433 = vmatmul.mubr.bf16.gmra.mxu0 %v866
  %v1434 = vpop.f32.mrf.mxu0
  %v1435 = vadd.f32 %v1146, %v1434
  %v1436 = vpop.f32.mrf.mxu0
  %v1437 = vpop.f32.mrf.mxu0
  %v1438 = vadd.f32 %v1149, %v1437
  %v1439 = vpop.f32.mrf.mxu0
  %1440 = vmatprep.mubr.bf16.mxu0 0
  %1441 = vmatmul.mubr.bf16.gmra.mxu0 %v869
  %v1442 = vpop.f32.mrf.mxu0
  %v1443 = vadd.f32 %v1154, %v1442
  %v1444 = vpop.f32.mrf.mxu0
  %v1445 = vpop.f32.mrf.mxu0
  %v1446 = vadd.f32 %v1157, %v1445
  %v1447 = vpop.f32.mrf.mxu0
  %1448 = vdwg.mxu0
  %v1449 = vmax.f32 %v1195, 0.0
  %v1450 = vmax.f32 %v1198, 0.0
  %v1451 = vmax.f32 %v1203, 0.0
  %v1452 = vmax.f32 %v1206, 0.0
  %v1453 = vmax.f32 %v1211, 0.0
  %v1454 = vmax.f32 %v1214, 0.0
  %v1455 = vmax.f32 %v1219, 0.0
  %v1456 = vmax.f32 %v1222, 0.0
  %v1457 = vmax.f32 %v1227, 0.0
  %v1458 = vmax.f32 %v1230, 0.0
  %v1459 = vmax.f32 %v1235, 0.0
  %v1460 = vmax.f32 %v1238, 0.0
  %v1461 = vmax.f32 %v1243, 0.0
  %v1462 = vmax.f32 %v1246, 0.0
  %v1463 = vmax.f32 %v1251, 0.0
  %v1464 = vmax.f32 %v1254, 0.0
  %v1465 = vmax.f32 %v1259, 0.0
  %v1466 = vmax.f32 %v1262, 0.0
  %v1467 = vmax.f32 %v1267, 0.0
  %v1468 = vmax.f32 %v1270, 0.0
  %v1469 = vmax.f32 %v1275, 0.0
  %v1470 = vmax.f32 %v1278, 0.0
  %v1471 = vmax.f32 %v1283, 0.0
  %v1472 = vmax.f32 %v1286, 0.0
  %v1473 = vmax.f32 %v1291, 0.0
  %v1474 = vmax.f32 %v1294, 0.0
  %v1475 = vmax.f32 %v1299, 0.0
  %v1476 = vmax.f32 %v1302, 0.0
  %v1477 = vmax.f32 %v1307, 0.0
  %v1478 = vmax.f32 %v1310, 0.0
  %v1479 = vmax.f32 %v1315, 0.0
  %v1480 = vmax.f32 %v1318, 0.0
  %v1481 = vmax.f32 %v1323, 0.0
  %v1482 = vmax.f32 %v1326, 0.0
  %v1483 = vmax.f32 %v1331, 0.0
  %v1484 = vmax.f32 %v1334, 0.0
  %v1485 = vmax.f32 %v1339, 0.0
  %v1486 = vmax.f32 %v1342, 0.0
  %v1487 = vmax.f32 %v1347, 0.0
  %v1488 = vmax.f32 %v1350, 0.0
  %v1489 = vmax.f32 %v1355, 0.0
  %v1490 = vmax.f32 %v1358, 0.0
  %v1491 = vmax.f32 %v1363, 0.0
  %v1492 = vmax.f32 %v1366, 0.0
  %v1493 = vmax.f32 %v1371, 0.0
  %v1494 = vmax.f32 %v1374, 0.0
  %v1495 = vmax.f32 %v1379, 0.0
  %v1496 = vmax.f32 %v1382, 0.0
  %v1497 = vmax.f32 %v1387, 0.0
  %v1498 = vmax.f32 %v1390, 0.0
  %v1499 = vmax.f32 %v1395, 0.0
  %v1500 = vmax.f32 %v1398, 0.0
  %v1501 = vmax.f32 %v1403, 0.0
  %v1502 = vmax.f32 %v1406, 0.0
  %v1503 = vmax.f32 %v1411, 0.0
  %v1504 = vmax.f32 %v1414, 0.0
  %v1505 = vmax.f32 %v1419, 0.0
  %v1506 = vmax.f32 %v1422, 0.0
  %v1507 = vmax.f32 %v1427, 0.0
  %v1508 = vmax.f32 %v1430, 0.0
  %v1509 = vmax.f32 %v1435, 0.0
  %v1510 = vmax.f32 %v1438, 0.0
  %v1511 = vmax.f32 %v1443, 0.0
  %v1512 = vmax.f32 %v1446, 0.0
  %v1513 = vpack.c.bf16 %v1450, %v1449
  %v1514 = vpack.c.bf16 %v1452, %v1451
  %v1515 = vpack.c.bf16 %v1454, %v1453
  %v1516 = vpack.c.bf16 %v1456, %v1455
  %v1517 = vpack.c.bf16 %v1458, %v1457
  %v1518 = vpack.c.bf16 %v1460, %v1459
  %v1519 = vpack.c.bf16 %v1462, %v1461
  %v1520 = vpack.c.bf16 %v1464, %v1463
  %v1521 = vpack.c.bf16 %v1466, %v1465
  %v1522 = vpack.c.bf16 %v1468, %v1467
  %v1523 = vpack.c.bf16 %v1470, %v1469
  %v1524 = vpack.c.bf16 %v1472, %v1471
  %v1525 = vpack.c.bf16 %v1474, %v1473
  %v1526 = vpack.c.bf16 %v1476, %v1475
  %v1527 = vpack.c.bf16 %v1478, %v1477
  %v1528 = vpack.c.bf16 %v1480, %v1479
  %v1529 = vpack.c.bf16 %v1482, %v1481
  %v1530 = vpack.c.bf16 %v1484, %v1483
  %v1531 = vpack.c.bf16 %v1486, %v1485
  %v1532 = vpack.c.bf16 %v1488, %v1487
  %v1533 = vpack.c.bf16 %v1490, %v1489
  %v1534 = vpack.c.bf16 %v1492, %v1491
  %v1535 = vpack.c.bf16 %v1494, %v1493
  %v1536 = vpack.c.bf16 %v1496, %v1495
  %v1537 = vpack.c.bf16 %v1498, %v1497
  %v1538 = vpack.c.bf16 %v1500, %v1499
  %v1539 = vpack.c.bf16 %v1502, %v1501
  %v1540 = vpack.c.bf16 %v1504, %v1503
  %v1541 = vpack.c.bf16 %v1506, %v1505
  %v1542 = vpack.c.bf16 %v1508, %v1507
  %v1543 = vpack.c.bf16 %v1510, %v1509
  %v1544 = vpack.c.bf16 %v1512, %v1511
  %v1577 = vunpack.c.l.b16 %v1513
  %v1578 = vunpack.c.h.b16 %v1513
  %v1579 = vunpack.c.l.b16 %v1514
  %v1580 = vunpack.c.h.b16 %v1514
  %v1581 = vunpack.c.l.b16 %v1515
  %v1582 = vunpack.c.h.b16 %v1515
  %v1583 = vunpack.c.l.b16 %v1516
  %v1584 = vunpack.c.h.b16 %v1516
  %v1585 = vunpack.c.l.b16 %v1517
  %v1586 = vunpack.c.h.b16 %v1517
  %v1587 = vunpack.c.l.b16 %v1518
  %v1588 = vunpack.c.h.b16 %v1518
  %v1589 = vunpack.c.l.b16 %v1519
  %v1590 = vunpack.c.h.b16 %v1519
  %v1591 = vunpack.c.l.b16 %v1520
  %v1592 = vunpack.c.h.b16 %v1520
  %v1593 = vunpack.c.l.b16 %v1521
  %v1594 = vunpack.c.h.b16 %v1521
  %v1595 = vunpack.c.l.b16 %v1522
  %v1596 = vunpack.c.h.b16 %v1522
  %v1597 = vunpack.c.l.b16 %v1523
  %v1598 = vunpack.c.h.b16 %v1523
  %v1599 = vunpack.c.l.b16 %v1524
  %v1600 = vunpack.c.h.b16 %v1524
  %v1601 = vunpack.c.l.b16 %v1525
  %v1602 = vunpack.c.h.b16 %v1525
  %v1603 = vunpack.c.l.b16 %v1526
  %v1604 = vunpack.c.h.b16 %v1526
  %v1605 = vunpack.c.l.b16 %v1527
  %v1606 = vunpack.c.h.b16 %v1527
  %v1607 = vunpack.c.l.b16 %v1528
  %v1608 = vunpack.c.h.b16 %v1528
  %v1609 = vunpack.c.l.b16 %v1529
  %v1610 = vunpack.c.h.b16 %v1529
  %v1611 = vunpack.c.l.b16 %v1530
  %v1612 = vunpack.c.h.b16 %v1530
  %v1613 = vunpack.c.l.b16 %v1531
  %v1614 = vunpack.c.h.b16 %v1531
  %v1615 = vunpack.c.l.b16 %v1532
  %v1616 = vunpack.c.h.b16 %v1532
  %v1617 = vunpack.c.l.b16 %v1533
  %v1618 = vunpack.c.h.b16 %v1533
  %v1619 = vunpack.c.l.b16 %v1534
  %v1620 = vunpack.c.h.b16 %v1534
  %v1621 = vunpack.c.l.b16 %v1535
  %v1622 = vunpack.c.h.b16 %v1535
  %v1623 = vunpack.c.l.b16 %v1536
  %v1624 = vunpack.c.h.b16 %v1536
  %v1625 = vunpack.c.l.b16 %v1537
  %v1626 = vunpack.c.h.b16 %v1537
  %v1627 = vunpack.c.l.b16 %v1538
  %v1628 = vunpack.c.h.b16 %v1538
  %v1629 = vunpack.c.l.b16 %v1539
  %v1630 = vunpack.c.h.b16 %v1539
  %v1631 = vunpack.c.l.b16 %v1540
  %v1632 = vunpack.c.h.b16 %v1540
  %v1633 = vunpack.c.l.b16 %v1541
  %v1634 = vunpack.c.h.b16 %v1541
  %v1635 = vunpack.c.l.b16 %v1542
  %v1636 = vunpack.c.h.b16 %v1542
  %v1637 = vunpack.c.l.b16 %v1543
  %v1638 = vunpack.c.h.b16 %v1543
  %v1639 = vunpack.c.l.b16 %v1544
  %v1640 = vunpack.c.h.b16 %v1544
  %v1641 = vpack.c.b16 %v1577, %v1577
  %v1642 = vpack.c.b16 %v1578, %v1578
  %v1643 = vpack.c.b16 %v1579, %v1579
  %v1644 = vpack.c.b16 %v1580, %v1580
  %v1645 = vpack.c.b16 %v1581, %v1581
  %v1646 = vpack.c.b16 %v1582, %v1582
  %v1647 = vpack.c.b16 %v1583, %v1583
  %v1648 = vpack.c.b16 %v1584, %v1584
  %v1649 = vpack.c.b16 %v1585, %v1585
  %v1650 = vpack.c.b16 %v1586, %v1586
  %v1651 = vpack.c.b16 %v1587, %v1587
  %v1652 = vpack.c.b16 %v1588, %v1588
  %v1653 = vpack.c.b16 %v1589, %v1589
  %v1654 = vpack.c.b16 %v1590, %v1590
  %v1655 = vpack.c.b16 %v1591, %v1591
  %v1656 = vpack.c.b16 %v1592, %v1592
  %v1657 = vpack.c.b16 %v1593, %v1593
  %v1658 = vpack.c.b16 %v1594, %v1594
  %v1659 = vpack.c.b16 %v1595, %v1595
  %v1660 = vpack.c.b16 %v1596, %v1596
  %v1661 = vpack.c.b16 %v1597, %v1597
  %v1662 = vpack.c.b16 %v1598, %v1598
  %v1663 = vpack.c.b16 %v1599, %v1599
  %v1664 = vpack.c.b16 %v1600, %v1600
  %v1665 = vpack.c.b16 %v1601, %v1601
  %v1666 = vpack.c.b16 %v1602, %v1602
  %v1667 = vpack.c.b16 %v1603, %v1603
  %v1668 = vpack.c.b16 %v1604, %v1604
  %v1669 = vpack.c.b16 %v1605, %v1605
  %v1670 = vpack.c.b16 %v1606, %v1606
  %v1671 = vpack.c.b16 %v1607, %v1607
  %v1672 = vpack.c.b16 %v1608, %v1608
  %v1673 = vpack.c.b16 %v1609, %v1609
  %v1674 = vpack.c.b16 %v1610, %v1610
  %v1675 = vpack.c.b16 %v1611, %v1611
  %v1676 = vpack.c.b16 %v1612, %v1612
  %v1677 = vpack.c.b16 %v1613, %v1613
  %v1678 = vpack.c.b16 %v1614, %v1614
  %v1679 = vpack.c.b16 %v1615, %v1615
  %v1680 = vpack.c.b16 %v1616, %v1616
  %v1681 = vpack.c.b16 %v1617, %v1617
  %v1682 = vpack.c.b16 %v1618, %v1618
  %v1683 = vpack.c.b16 %v1619, %v1619
  %v1684 = vpack.c.b16 %v1620, %v1620
  %v1685 = vpack.c.b16 %v1621, %v1621
  %v1686 = vpack.c.b16 %v1622, %v1622
  %v1687 = vpack.c.b16 %v1623, %v1623
  %v1688 = vpack.c.b16 %v1624, %v1624
  %v1689 = vpack.c.b16 %v1625, %v1625
  %v1690 = vpack.c.b16 %v1626, %v1626
  %v1691 = vpack.c.b16 %v1627, %v1627
  %v1692 = vpack.c.b16 %v1628, %v1628
  %v1693 = vpack.c.b16 %v1629, %v1629
  %v1694 = vpack.c.b16 %v1630, %v1630
  %v1695 = vpack.c.b16 %v1631, %v1631
  %v1696 = vpack.c.b16 %v1632, %v1632
  %v1697 = vpack.c.b16 %v1633, %v1633
  %v1698 = vpack.c.b16 %v1634, %v1634
  %v1699 = vpack.c.b16 %v1635, %v1635
  %v1700 = vpack.c.b16 %v1636, %v1636
  %v1701 = vpack.c.b16 %v1637, %v1637
  %v1702 = vpack.c.b16 %v1638, %v1638
  %v1703 = vpack.c.b16 %v1639, %v1639
  %v1704 = vpack.c.b16 %v1640, %v1640
  %vm1769 = vcmask 519168
  %1770 = vst.msk [vmem:[%s3] sm:$0xf] %vm1769, %v1641
  %1771 = vst.msk [vmem:[%s3 + $0x4] sm:$0xf] %vm1769, %v1642
  %1772 = vst.msk [vmem:[%s3 + $0x8] sm:$0xf] %vm1769, %v1643
  %1773 = vst.msk [vmem:[%s3 + $0xc] sm:$0xf] %vm1769, %v1644
  %1774 = vst.msk [vmem:[%s3 + $0x10] sm:$0xf] %vm1769, %v1645
  %1775 = vst.msk [vmem:[%s3 + $0x14] sm:$0xf] %vm1769, %v1646
  %1776 = vst.msk [vmem:[%s3 + $0x18] sm:$0xf] %vm1769, %v1647
  %1777 = vst.msk [vmem:[%s3 + $0x1c] sm:$0xf] %vm1769, %v1648
  %1778 = vst.msk [vmem:[%s3 + $0x20] sm:$0xf] %vm1769, %v1649
  %1779 = vst.msk [vmem:[%s3 + $0x24] sm:$0xf] %vm1769, %v1650
  %1780 = vst.msk [vmem:[%s3 + $0x28] sm:$0xf] %vm1769, %v1651
  %1781 = vst.msk [vmem:[%s3 + $0x2c] sm:$0xf] %vm1769, %v1652
  %1782 = vst.msk [vmem:[%s3 + $0x30] sm:$0xf] %vm1769, %v1653
  %1783 = vst.msk [vmem:[%s3 + $0x34] sm:$0xf] %vm1769, %v1654
  %1784 = vst.msk [vmem:[%s3 + $0x38] sm:$0xf] %vm1769, %v1655
  %1785 = vst.msk [vmem:[%s3 + $0x3c] sm:$0xf] %vm1769, %v1656
  %1786 = vst.msk [vmem:[%s3 + $0x40] sm:$0xf] %vm1769, %v1657
  %1787 = vst.msk [vmem:[%s3 + $0x44] sm:$0xf] %vm1769, %v1658
  %1788 = vst.msk [vmem:[%s3 + $0x48] sm:$0xf] %vm1769, %v1659
  %1789 = vst.msk [vmem:[%s3 + $0x4c] sm:$0xf] %vm1769, %v1660
  %1790 = vst.msk [vmem:[%s3 + $0x50] sm:$0xf] %vm1769, %v1661
  %1791 = vst.msk [vmem:[%s3 + $0x54] sm:$0xf] %vm1769, %v1662
  %1792 = vst.msk [vmem:[%s3 + $0x58] sm:$0xf] %vm1769, %v1663
  %1793 = vst.msk [vmem:[%s3 + $0x5c] sm:$0xf] %vm1769, %v1664
  %1794 = vst.msk [vmem:[%s3 + $0x60] sm:$0xf] %vm1769, %v1665
  %1795 = vst.msk [vmem:[%s3 + $0x64] sm:$0xf] %vm1769, %v1666
  %1796 = vst.msk [vmem:[%s3 + $0x68] sm:$0xf] %vm1769, %v1667
  %1797 = vst.msk [vmem:[%s3 + $0x6c] sm:$0xf] %vm1769, %v1668
  %1798 = vst.msk [vmem:[%s3 + $0x70] sm:$0xf] %vm1769, %v1669
  %1799 = vst.msk [vmem:[%s3 + $0x74] sm:$0xf] %vm1769, %v1670
  %1800 = vst.msk [vmem:[%s3 + $0x78] sm:$0xf] %vm1769, %v1671
  %1801 = vst.msk [vmem:[%s3 + $0x7c] sm:$0xf] %vm1769, %v1672
  %1802 = vst.msk [vmem:[%s3 + $0x80] sm:$0xf] %vm1769, %v1673
  %1803 = vst.msk [vmem:[%s3 + $0x84] sm:$0xf] %vm1769, %v1674
  %1804 = vst.msk [vmem:[%s3 + $0x88] sm:$0xf] %vm1769, %v1675
  %1805 = vst.msk [vmem:[%s3 + $0x8c] sm:$0xf] %vm1769, %v1676
  %1806 = vst.msk [vmem:[%s3 + $0x90] sm:$0xf] %vm1769, %v1677
  %1807 = vst.msk [vmem:[%s3 + $0x94] sm:$0xf] %vm1769, %v1678
  %1808 = vst.msk [vmem:[%s3 + $0x98] sm:$0xf] %vm1769, %v1679
  %1809 = vst.msk [vmem:[%s3 + $0x9c] sm:$0xf] %vm1769, %v1680
  %1810 = vst.msk [vmem:[%s3 + $0xa0] sm:$0xf] %vm1769, %v1681
  %1811 = vst.msk [vmem:[%s3 + $0xa4] sm:$0xf] %vm1769, %v1682
  %1812 = vst.msk [vmem:[%s3 + $0xa8] sm:$0xf] %vm1769, %v1683
  %1813 = vst.msk [vmem:[%s3 + $0xac] sm:$0xf] %vm1769, %v1684
  %1814 = vst.msk [vmem:[%s3 + $0xb0] sm:$0xf] %vm1769, %v1685
  %1815 = vst.msk [vmem:[%s3 + $0xb4] sm:$0xf] %vm1769, %v1686
  %1816 = vst.msk [vmem:[%s3 + $0xb8] sm:$0xf] %vm1769, %v1687
  %1817 = vst.msk [vmem:[%s3 + $0xbc] sm:$0xf] %vm1769, %v1688
  %1818 = vst.msk [vmem:[%s3 + $0xc0] sm:$0xf] %vm1769, %v1689
  %1819 = vst.msk [vmem:[%s3 + $0xc4] sm:$0xf] %vm1769, %v1690
  %1820 = vst.msk [vmem:[%s3 + $0xc8] sm:$0xf] %vm1769, %v1691
  %1821 = vst.msk [vmem:[%s3 + $0xcc] sm:$0xf] %vm1769, %v1692
  %1822 = vst.msk [vmem:[%s3 + $0xd0] sm:$0xf] %vm1769, %v1693
  %1823 = vst.msk [vmem:[%s3 + $0xd4] sm:$0xf] %vm1769, %v1694
  %1824 = vst.msk [vmem:[%s3 + $0xd8] sm:$0xf] %vm1769, %v1695
  %1825 = vst.msk [vmem:[%s3 + $0xdc] sm:$0xf] %vm1769, %v1696
  %1826 = vst.msk [vmem:[%s3 + $0xe0] sm:$0xf] %vm1769, %v1697
  %1827 = vst.msk [vmem:[%s3 + $0xe4] sm:$0xf] %vm1769, %v1698
  %1828 = vst.msk [vmem:[%s3 + $0xe8] sm:$0xf] %vm1769, %v1699
  %1829 = vst.msk [vmem:[%s3 + $0xec] sm:$0xf] %vm1769, %v1700
  %1830 = vst.msk [vmem:[%s3 + $0xf0] sm:$0xf] %vm1769, %v1701
  %1831 = vst.msk [vmem:[%s3 + $0xf4] sm:$0xf] %vm1769, %v1702
  %1832 = vst.msk [vmem:[%s3 + $0xf8] sm:$0xf] %vm1769, %v1703
  %1833 = vst.msk [vmem:[%s3 + $0xfc] sm:$0xf] %vm1769, %v1704
  // Predicated region
  $region14: #{forward.9} parent=0 // pred_check
    _
  $region15: #{forward.9} parent=0 // pred_check_branch
    %1835 = sbr.rel (0) target = $region17
  $region16: #{forward.9} parent=0 // pred_region
    _
  $region17: #{forward.9} parent=0 // pred_fallthru
    _
  // Predicated region
  $region18: #{forward.9} parent=0 // pred_check
    _
  $region19: #{forward.9} parent=0 // pred_check_branch
    %1837 = sbr.rel (0) target = $region21
  $region20: #{forward.9} parent=0 // pred_region
    _
  $region21: #{forward.9} parent=0 // pred_fallthru
    _

// kernel: forward.12
$region0: #{forward.12}
  #allocation0 [shape = 'u32[]', space=smem, size = 0x4, offset = 0x4, fixed_abs, tag = 'smem constant byte address 0x4 - core index']
  #allocation1 [shape = 'u32[144,128]{1,0:T(1,128)}', space=vmem, size = 0x12000, scoped, tag = 'internal scratch']
  %s0 = inlined_call_operand.vmem [shape: bf16[8,4096], index: 0, kind: input, shape index: {}]
  %s1 = inlined_call_operand.vmem [shape: bf16[8,1024], index: 1, kind: output, shape index: {}]
  %s2 = sld [smem:[#allocation0]]
  $region14: #{forward.12} parent=0
    _
  %s4 = ssub.s32 1, %s2
  %s5 = scalar_select 0, %s4, %s2
  // Predicated region
  $region2: #{forward.12} parent=0 // pred_check
    _
  $region3: #{forward.12} parent=0 // pred_check_branch
    %7 = sbr.rel (0) target = $region5
  $region4: #{forward.12} parent=0 // pred_region
    _
  $region5: #{forward.12} parent=0 // pred_fallthru
    _
  %v8 = vld [vmem:[%s0] sm:$0xff]
  %v9 = vld [vmem:[%s0 + $0x8] sm:$0xff]
  %v10 = vld [vmem:[%s0 + $0x10] sm:$0xff]
  %v11 = vld [vmem:[%s0 + $0x18] sm:$0xff]
  %v12 = vld [vmem:[%s0 + $0x20] sm:$0xff]
  %v13 = vld [vmem:[%s0 + $0x28] sm:$0xff]
  %v14 = vld [vmem:[%s0 + $0x30] sm:$0xff]
  %v15 = vld [vmem:[%s0 + $0x38] sm:$0xff]
  %v16 = vld [vmem:[%s0 + $0x40] sm:$0xff]
  %v17 = vld [vmem:[%s0 + $0x48] sm:$0xff]
  %v18 = vld [vmem:[%s0 + $0x50] sm:$0xff]
  %v19 = vld [vmem:[%s0 + $0x58] sm:$0xff]
  %v20 = vld [vmem:[%s0 + $0x60] sm:$0xff]
  %v21 = vld [vmem:[%s0 + $0x68] sm:$0xff]
  %v22 = vld [vmem:[%s0 + $0x70] sm:$0xff]
  %v23 = vld [vmem:[%s0 + $0x78] sm:$0xff]
  %v24 = vmax.bf16 %v8, %v16
  %v25 = vmax.bf16 %v9, %v17
  %v26 = vmax.bf16 %v10, %v18
  %v27 = vmax.bf16 %v11, %v19
  %v28 = vmax.bf16 %v12, %v20
  %v29 = vmax.bf16 %v13, %v21
  %v30 = vmax.bf16 %v14, %v22
  %v31 = vmax.bf16 %v15, %v23
  %v32 = vmax.bf16 %v24, %v25
  %v33 = vmax.bf16 %v26, %v27
  %v34 = vmax.bf16 %v28, %v29
  %v35 = vmax.bf16 %v30, %v31
  %v37 = vunpack.c.l.b16 %v32
  %v38 = vunpack.c.h.b16 %v32
  %v40 = vunpack.c.l.b16 %v33
  %v41 = vunpack.c.h.b16 %v33
  %v43 = vunpack.c.l.b16 %v34
  %v44 = vunpack.c.h.b16 %v34
  %v46 = vunpack.c.l.b16 %v35
  %v47 = vunpack.c.h.b16 %v35
  %v48 = vpack.c.b16 %v38, %v37
  %v49 = vpack.c.b16 %v41, %v40
  %v50 = vpack.c.b16 %v44, %v43
  %v51 = vpack.c.b16 %v47, %v46
  %56 = vst [vmem:[%s1] sm:$0xff] %v48
  %57 = vst [vmem:[%s1 + $0x8] sm:$0xff] %v49
  %58 = vst [vmem:[%s1 + $0x10] sm:$0xff] %v50
  %59 = vst [vmem:[%s1 + $0x18] sm:$0xff] %v51
  // Predicated region
  $region6: #{forward.12} parent=0 // pred_check
    _
  $region7: #{forward.12} parent=0 // pred_check_branch
    %61 = sbr.rel (0) target = $region9
  $region8: #{forward.12} parent=0 // pred_region
    _
  $region9: #{forward.12} parent=0 // pred_fallthru
    _
  // Predicated region
  $region10: #{forward.12} parent=0 // pred_check
    _
  $region11: #{forward.12} parent=0 // pred_check_branch
    %63 = sbr.rel (0) target = $region13
  $region12: #{forward.12} parent=0 // pred_region
    _
  $region13: #{forward.12} parent=0 // pred_fallthru
    _

// kernel: forward.11
$region0: #{forward.11}
  #allocation0 [shape = 'u32[]', space=smem, size = 0x4, offset = 0x4, fixed_abs, tag = 'smem constant byte address 0x4 - core index']
  #allocation1 [shape = 'u32[144,128]{1,0:T(1,128)}', space=vmem, size = 0x12000, scoped, tag = 'internal scratch']
  %s0 = inlined_call_operand.vmem [shape: bf16[128,576], index: 0, kind: input, shape index: {}]
  %s1 = inlined_call_operand.vmem [shape: bf16[576,256], index: 1, kind: input, shape index: {}]
  %s2 = inlined_call_operand.vmem [shape: f32[1,256], index: 2, kind: input, shape index: {}]
  %s3 = inlined_call_operand.vmem [shape: bf16[128,256], index: 3, kind: output, shape index: {}]
  %s4 = sld [smem:[#allocation0]]
  $region22: #{forward.11} parent=0
    _
  %s6 = ssub.s32 1, %s4
  %s7 = scalar_select 0, %s6, %s4
  // Predicated region
  $region2: #{forward.11} parent=0 // pred_check
    _
  $region3: #{forward.11} parent=0 // pred_check_branch
    %9 = sbr.rel (0) target = $region5
  $region4: #{forward.11} parent=0 // pred_region
    _
  $region5: #{forward.11} parent=0 // pred_fallthru
    _
  // Predicated region
  $region6: #{forward.11} parent=0 // pred_check
    _
  $region7: #{forward.11} parent=0 // pred_check_branch
    %11 = sbr.rel (0) target = $region9
  $region8: #{forward.11} parent=0 // pred_region
    _
  $region9: #{forward.11} parent=0 // pred_fallthru
    _
  // Predicated region
  $region10: #{forward.11} parent=0 // pred_check
    _
  $region11: #{forward.11} parent=0 // pred_check_branch
    %13 = sbr.rel (0) target = $region13
  $region12: #{forward.11} parent=0 // pred_region
    _
  $region13: #{forward.11} parent=0 // pred_fallthru
    _
  %v15 = vld [vmem:[%s0] sm:$0xff]
  %v16 = vld [vmem:[%s0 + $0x8] sm:$0xff]
  %v17 = vld [vmem:[%s0 + $0x10] sm:$0xf]
  %v18 = vld [vmem:[%s0 + $0x14] sm:$0xff]
  %v19 = vld [vmem:[%s0 + $0x1c] sm:$0xff]
  %v20 = vld [vmem:[%s0 + $0x24] sm:$0xf]
  %v21 = vld [vmem:[%s0 + $0x28] sm:$0xff]
  %v22 = vld [vmem:[%s0 + $0x30] sm:$0xff]
  %v23 = vld [vmem:[%s0 + $0x38] sm:$0xf]
  %v24 = vld [vmem:[%s0 + $0x3c] sm:$0xff]
  %v25 = vld [vmem:[%s0 + $0x44] sm:$0xff]
  %v26 = vld [vmem:[%s0 + $0x4c] sm:$0xf]
  %v27 = vld [vmem:[%s0 + $0x50] sm:$0xff]
  %v28 = vld [vmem:[%s0 + $0x58] sm:$0xff]
  %v29 = vld [vmem:[%s0 + $0x60] sm:$0xf]
  %v30 = vld [vmem:[%s0 + $0x64] sm:$0xff]
  %v31 = vld [vmem:[%s0 + $0x6c] sm:$0xff]
  %v32 = vld [vmem:[%s0 + $0x74] sm:$0xf]
  %v33 = vld [vmem:[%s0 + $0x78] sm:$0xff]
  %v34 = vld [vmem:[%s0 + $0x80] sm:$0xff]
  %v35 = vld [vmem:[%s0 + $0x88] sm:$0xf]
  %v36 = vld [vmem:[%s0 + $0x8c] sm:$0xff]
  %v37 = vld [vmem:[%s0 + $0x94] sm:$0xff]
  %v38 = vld [vmem:[%s0 + $0x9c] sm:$0xf]
  %v39 = vld [vmem:[%s0 + $0xa0] sm:$0xff]
  %v40 = vld [vmem:[%s0 + $0xa8] sm:$0xff]
  %v41 = vld [vmem:[%s0 + $0xb0] sm:$0xf]
  %v42 = vld [vmem:[%s0 + $0xb4] sm:$0xff]
  %v43 = vld [vmem:[%s0 + $0xbc] sm:$0xff]
  %v44 = vld [vmem:[%s0 + $0xc4] sm:$0xf]
  %v45 = vld [vmem:[%s0 + $0xc8] sm:$0xff]
  %v46 = vld [vmem:[%s0 + $0xd0] sm:$0xff]
  %v47 = vld [vmem:[%s0 + $0xd8] sm:$0xf]
  %v48 = vld [vmem:[%s0 + $0xdc] sm:$0xff]
  %v49 = vld [vmem:[%s0 + $0xe4] sm:$0xff]
  %v50 = vld [vmem:[%s0 + $0xec] sm:$0xf]
  %v51 = vld [vmem:[%s0 + $0xf0] sm:$0xff]
  %v52 = vld [vmem:[%s0 + $0xf8] sm:$0xff]
  %v53 = vld [vmem:[%s0 + $0x100] sm:$0xf]
  %v54 = vld [vmem:[%s0 + $0x104] sm:$0xff]
  %v55 = vld [vmem:[%s0 + $0x10c] sm:$0xff]
  %v56 = vld [vmem:[%s0 + $0x114] sm:$0xf]
  %v57 = vld [vmem:[%s0 + $0x118] sm:$0xff]
  %v58 = vld [vmem:[%s0 + $0x120] sm:$0xff]
  %v59 = vld [vmem:[%s0 + $0x128] sm:$0xf]
  %v60 = vld [vmem:[%s0 + $0x12c] sm:$0xff]
  %v61 = vld [vmem:[%s0 + $0x134] sm:$0xff]
  %v62 = vld [vmem:[%s0 + $0x13c] sm:$0xf]
  %v63 = vld [vmem:[%s1] sm:$0xff]
  %v64 = vld [vmem:[%s1 + $0x8] sm:$0xff]
  %v65 = vld [vmem:[%s1 + $0x10] sm:$0xff]
  %v66 = vld [vmem:[%s1 + $0x18] sm:$0xff]
  %v67 = vld [vmem:[%s1 + $0x20] sm:$0xff]
  %v68 = vld [vmem:[%s1 + $0x28] sm:$0xff]
  %v69 = vld [vmem:[%s1 + $0x30] sm:$0xff]
  %v70 = vld [vmem:[%s1 + $0x38] sm:$0xff]
  %v71 = vld [vmem:[%s1 + $0x40] sm:$0xff]
  %v72 = vld [vmem:[%s1 + $0x48] sm:$0xff]
  %v73 = vld [vmem:[%s1 + $0x50] sm:$0xff]
  %v74 = vld [vmem:[%s1 + $0x58] sm:$0xff]
  %v75 = vld [vmem:[%s1 + $0x60] sm:$0xff]
  %v76 = vld [vmem:[%s1 + $0x68] sm:$0xff]
  %v77 = vld [vmem:[%s1 + $0x70] sm:$0xff]
  %v78 = vld [vmem:[%s1 + $0x78] sm:$0xff]
  %v79 = vld [vmem:[%s1 + $0x80] sm:$0xff]
  %v80 = vld [vmem:[%s1 + $0x88] sm:$0xff]
  %v81 = vld [vmem:[%s1 + $0x90] sm:$0xff]
  %v82 = vld [vmem:[%s1 + $0x98] sm:$0xff]
  %v83 = vld [vmem:[%s1 + $0xa0] sm:$0xff]
  %v84 = vld [vmem:[%s1 + $0xa8] sm:$0xff]
  %v85 = vld [vmem:[%s1 + $0xb0] sm:$0xff]
  %v86 = vld [vmem:[%s1 + $0xb8] sm:$0xff]
  %v87 = vld [vmem:[%s1 + $0xc0] sm:$0xff]
  %v88 = vld [vmem:[%s1 + $0xc8] sm:$0xff]
  %v89 = vld [vmem:[%s1 + $0xd0] sm:$0xff]
  %v90 = vld [vmem:[%s1 + $0xd8] sm:$0xff]
  %v91 = vld [vmem:[%s1 + $0xe0] sm:$0xff]
  %v92 = vld [vmem:[%s1 + $0xe8] sm:$0xff]
  %v93 = vld [vmem:[%s1 + $0xf0] sm:$0xff]
  %v94 = vld [vmem:[%s1 + $0xf8] sm:$0xff]
  %v95 = vld [vmem:[%s1 + $0x100] sm:$0xff]
  %v96 = vld [vmem:[%s1 + $0x108] sm:$0xff]
  %v97 = vld [vmem:[%s1 + $0x110] sm:$0xff]
  %v98 = vld [vmem:[%s1 + $0x118] sm:$0xff]
  %v99 = vld [vmem:[%s1 + $0x120] sm:$0xff]
  %v100 = vld [vmem:[%s1 + $0x128] sm:$0xff]
  %v101 = vld [vmem:[%s1 + $0x130] sm:$0xff]
  %v102 = vld [vmem:[%s1 + $0x138] sm:$0xff]
  %v103 = vld [vmem:[%s1 + $0x140] sm:$0xff]
  %v104 = vld [vmem:[%s1 + $0x148] sm:$0xff]
  %v105 = vld [vmem:[%s1 + $0x150] sm:$0xff]
  %v106 = vld [vmem:[%s1 + $0x158] sm:$0xff]
  %v107 = vld [vmem:[%s1 + $0x160] sm:$0xff]
  %v108 = vld [vmem:[%s1 + $0x168] sm:$0xff]
  %v109 = vld [vmem:[%s1 + $0x170] sm:$0xff]
  %v110 = vld [vmem:[%s1 + $0x178] sm:$0xff]
  %v111 = vld [vmem:[%s1 + $0x180] sm:$0xff]
  %v112 = vld [vmem:[%s1 + $0x188] sm:$0xff]
  %v113 = vld [vmem:[%s1 + $0x190] sm:$0xff]
  %v114 = vld [vmem:[%s1 + $0x198] sm:$0xff]
  %v115 = vld [vmem:[%s1 + $0x1a0] sm:$0xff]
  %v116 = vld [vmem:[%s1 + $0x1a8] sm:$0xff]
  %v117 = vld [vmem:[%s1 + $0x1b0] sm:$0xff]
  %v118 = vld [vmem:[%s1 + $0x1b8] sm:$0xff]
  %v119 = vld [vmem:[%s1 + $0x1c0] sm:$0xff]
  %v120 = vld [vmem:[%s1 + $0x1c8] sm:$0xff]
  %v121 = vld [vmem:[%s1 + $0x1d0] sm:$0xff]
  %v122 = vld [vmem:[%s1 + $0x1d8] sm:$0xff]
  %v123 = vld [vmem:[%s1 + $0x1e0] sm:$0xff]
  %v124 = vld [vmem:[%s1 + $0x1e8] sm:$0xff]
  %v125 = vld [vmem:[%s1 + $0x1f0] sm:$0xff]
  %v126 = vld [vmem:[%s1 + $0x1f8] sm:$0xff]
  %v127 = vld [vmem:[%s1 + $0x200] sm:$0xff]
  %v128 = vld [vmem:[%s1 + $0x208] sm:$0xff]
  %v129 = vld [vmem:[%s1 + $0x210] sm:$0xff]
  %v130 = vld [vmem:[%s1 + $0x218] sm:$0xff]
  %v131 = vld [vmem:[%s1 + $0x220] sm:$0xff]
  %v132 = vld [vmem:[%s1 + $0x228] sm:$0xff]
  %v133 = vld [vmem:[%s1 + $0x230] sm:$0xff]
  %v134 = vld [vmem:[%s1 + $0x238] sm:$0xff]
  %v135 = vld [vmem:[%s2] sm:$0x3]
  %v137 = vlaneseq
  %v138 = vshrl.u32 %v137, 7
  %v139 = vsub.s32 0, %v138
  %v140 = vrot.slane %v135, %v139
  %v141 = vlaneseq
  %v142 = vshrl.u32 %v141, 7
  %v143 = vsub.s32 1, %v142
  %v144 = vrot.slane %v135, %v143
  %v195 = vunpack.c.l.b16 %v15
  %v196 = vunpack.c.h.b16 %v15
  %v197 = vunpack.c.l.b16 %v16
  %v198 = vunpack.c.h.b16 %v16
  %v199 = vunpack.c.l.b16 %v17
  %v200 = vunpack.c.l.b16 %v18
  %v201 = vunpack.c.h.b16 %v18
  %v202 = vunpack.c.l.b16 %v19
  %v203 = vunpack.c.h.b16 %v19
  %v204 = vunpack.c.l.b16 %v20
  %v205 = vunpack.c.l.b16 %v21
  %v206 = vunpack.c.h.b16 %v21
  %v207 = vunpack.c.l.b16 %v22
  %v208 = vunpack.c.h.b16 %v22
  %v209 = vunpack.c.l.b16 %v23
  %v210 = vunpack.c.l.b16 %v24
  %v211 = vunpack.c.h.b16 %v24
  %v212 = vunpack.c.l.b16 %v25
  %v213 = vunpack.c.h.b16 %v25
  %v214 = vunpack.c.l.b16 %v26
  %v215 = vunpack.c.l.b16 %v27
  %v216 = vunpack.c.h.b16 %v27
  %v217 = vunpack.c.l.b16 %v28
  %v218 = vunpack.c.h.b16 %v28
  %v219 = vunpack.c.l.b16 %v29
  %v220 = vunpack.c.l.b16 %v30
  %v221 = vunpack.c.h.b16 %v30
  %v222 = vunpack.c.l.b16 %v31
  %v223 = vunpack.c.h.b16 %v31
  %v224 = vunpack.c.l.b16 %v32
  %v225 = vunpack.c.l.b16 %v33
  %v226 = vunpack.c.h.b16 %v33
  %v227 = vunpack.c.l.b16 %v34
  %v228 = vunpack.c.h.b16 %v34
  %v229 = vunpack.c.l.b16 %v35
  %v230 = vunpack.c.l.b16 %v36
  %v231 = vunpack.c.h.b16 %v36
  %v232 = vunpack.c.l.b16 %v37
  %v233 = vunpack.c.h.b16 %v37
  %v234 = vunpack.c.l.b16 %v38
  %v235 = vunpack.c.l.b16 %v39
  %v236 = vunpack.c.h.b16 %v39
  %v237 = vunpack.c.l.b16 %v40
  %v238 = vunpack.c.h.b16 %v40
  %v239 = vunpack.c.l.b16 %v41
  %v240 = vunpack.c.l.b16 %v42
  %v241 = vunpack.c.h.b16 %v42
  %v242 = vunpack.c.l.b16 %v43
  %v243 = vunpack.c.h.b16 %v43
  %v244 = vunpack.c.l.b16 %v44
  %v245 = vunpack.c.l.b16 %v45
  %v246 = vunpack.c.h.b16 %v45
  %v247 = vunpack.c.l.b16 %v46
  %v248 = vunpack.c.h.b16 %v46
  %v249 = vunpack.c.l.b16 %v47
  %v250 = vunpack.c.l.b16 %v48
  %v251 = vunpack.c.h.b16 %v48
  %v252 = vunpack.c.l.b16 %v49
  %v253 = vunpack.c.h.b16 %v49
  %v254 = vunpack.c.l.b16 %v50
  %v255 = vunpack.c.l.b16 %v51
  %v256 = vunpack.c.h.b16 %v51
  %v257 = vunpack.c.l.b16 %v52
  %v258 = vunpack.c.h.b16 %v52
  %v259 = vunpack.c.l.b16 %v53
  %v260 = vunpack.c.l.b16 %v54
  %v261 = vunpack.c.h.b16 %v54
  %v262 = vunpack.c.l.b16 %v55
  %v263 = vunpack.c.h.b16 %v55
  %v264 = vunpack.c.l.b16 %v56
  %v265 = vunpack.c.l.b16 %v57
  %v266 = vunpack.c.h.b16 %v57
  %v267 = vunpack.c.l.b16 %v58
  %v268 = vunpack.c.h.b16 %v58
  %v269 = vunpack.c.l.b16 %v59
  %v270 = vunpack.c.l.b16 %v60
  %v271 = vunpack.c.h.b16 %v60
  %v272 = vunpack.c.l.b16 %v61
  %v273 = vunpack.c.h.b16 %v61
  %v274 = vunpack.c.l.b16 %v62
  %v275 = vpack.c.b16 %v200, %v195
  %v276 = vpack.c.b16 %v201, %v196
  %v277 = vpack.c.b16 %v202, %v197
  %v278 = vpack.c.b16 %v203, %v198
  %v279 = vpack.c.b16 %v204, %v199
  %v280 = vpack.c.b16 %v210, %v205
  %v281 = vpack.c.b16 %v211, %v206
  %v282 = vpack.c.b16 %v212, %v207
  %v283 = vpack.c.b16 %v213, %v208
  %v284 = vpack.c.b16 %v214, %v209
  %v285 = vpack.c.b16 %v220, %v215
  %v286 = vpack.c.b16 %v221, %v216
  %v287 = vpack.c.b16 %v222, %v217
  %v288 = vpack.c.b16 %v223, %v218
  %v289 = vpack.c.b16 %v224, %v219
  %v290 = vpack.c.b16 %v230, %v225
  %v291 = vpack.c.b16 %v231, %v226
  %v292 = vpack.c.b16 %v232, %v227
  %v293 = vpack.c.b16 %v233, %v228
  %v294 = vpack.c.b16 %v234, %v229
  %v295 = vpack.c.b16 %v240, %v235
  %v296 = vpack.c.b16 %v241, %v236
  %v297 = vpack.c.b16 %v242, %v237
  %v298 = vpack.c.b16 %v243, %v238
  %v299 = vpack.c.b16 %v244, %v239
  %v300 = vpack.c.b16 %v250, %v245
  %v301 = vpack.c.b16 %v251, %v246
  %v302 = vpack.c.b16 %v252, %v247
  %v303 = vpack.c.b16 %v253, %v248
  %v304 = vpack.c.b16 %v254, %v249
  %v305 = vpack.c.b16 %v260, %v255
  %v306 = vpack.c.b16 %v261, %v256
  %v307 = vpack.c.b16 %v262, %v257
  %v308 = vpack.c.b16 %v263, %v258
  %v309 = vpack.c.b16 %v264, %v259
  %v310 = vpack.c.b16 %v270, %v265
  %v311 = vpack.c.b16 %v271, %v266
  %v312 = vpack.c.b16 %v272, %v267
  %v313 = vpack.c.b16 %v273, %v268
  %v314 = vpack.c.b16 %v274, %v269
  %v419 = vunpack.c.l.b16 %v63
  %v420 = vunpack.c.h.b16 %v63
  %v421 = vunpack.c.l.b16 %v64
  %v422 = vunpack.c.h.b16 %v64
  %v423 = vunpack.c.l.b16 %v65
  %v424 = vunpack.c.h.b16 %v65
  %v425 = vunpack.c.l.b16 %v66
  %v426 = vunpack.c.h.b16 %v66
  %v427 = vunpack.c.l.b16 %v67
  %v428 = vunpack.c.h.b16 %v67
  %v429 = vunpack.c.l.b16 %v68
  %v430 = vunpack.c.h.b16 %v68
  %v431 = vunpack.c.l.b16 %v69
  %v432 = vunpack.c.h.b16 %v69
  %v433 = vunpack.c.l.b16 %v70
  %v434 = vunpack.c.h.b16 %v70
  %v435 = vunpack.c.l.b16 %v71
  %v436 = vunpack.c.h.b16 %v71
  %v437 = vunpack.c.l.b16 %v72
  %v438 = vunpack.c.h.b16 %v72
  %v439 = vunpack.c.l.b16 %v73
  %v440 = vunpack.c.h.b16 %v73
  %v441 = vunpack.c.l.b16 %v74
  %v442 = vunpack.c.h.b16 %v74
  %v443 = vunpack.c.l.b16 %v75
  %v444 = vunpack.c.h.b16 %v75
  %v445 = vunpack.c.l.b16 %v76
  %v446 = vunpack.c.h.b16 %v76
  %v447 = vunpack.c.l.b16 %v77
  %v448 = vunpack.c.h.b16 %v77
  %v449 = vunpack.c.l.b16 %v78
  %v450 = vunpack.c.h.b16 %v78
  %v451 = vunpack.c.l.b16 %v79
  %v452 = vunpack.c.h.b16 %v79
  %v453 = vunpack.c.l.b16 %v80
  %v454 = vunpack.c.h.b16 %v80
  %v455 = vunpack.c.l.b16 %v81
  %v456 = vunpack.c.h.b16 %v81
  %v457 = vunpack.c.l.b16 %v82
  %v458 = vunpack.c.h.b16 %v82
  %v459 = vunpack.c.l.b16 %v83
  %v460 = vunpack.c.h.b16 %v83
  %v461 = vunpack.c.l.b16 %v84
  %v462 = vunpack.c.h.b16 %v84
  %v463 = vunpack.c.l.b16 %v85
  %v464 = vunpack.c.h.b16 %v85
  %v465 = vunpack.c.l.b16 %v86
  %v466 = vunpack.c.h.b16 %v86
  %v467 = vunpack.c.l.b16 %v87
  %v468 = vunpack.c.h.b16 %v87
  %v469 = vunpack.c.l.b16 %v88
  %v470 = vunpack.c.h.b16 %v88
  %v471 = vunpack.c.l.b16 %v89
  %v472 = vunpack.c.h.b16 %v89
  %v473 = vunpack.c.l.b16 %v90
  %v474 = vunpack.c.h.b16 %v90
  %v475 = vunpack.c.l.b16 %v91
  %v476 = vunpack.c.h.b16 %v91
  %v477 = vunpack.c.l.b16 %v92
  %v478 = vunpack.c.h.b16 %v92
  %v479 = vunpack.c.l.b16 %v93
  %v480 = vunpack.c.h.b16 %v93
  %v481 = vunpack.c.l.b16 %v94
  %v482 = vunpack.c.h.b16 %v94
  %v483 = vunpack.c.l.b16 %v95
  %v484 = vunpack.c.h.b16 %v95
  %v485 = vunpack.c.l.b16 %v96
  %v486 = vunpack.c.h.b16 %v96
  %v487 = vunpack.c.l.b16 %v97
  %v488 = vunpack.c.h.b16 %v97
  %v489 = vunpack.c.l.b16 %v98
  %v490 = vunpack.c.h.b16 %v98
  %v491 = vunpack.c.l.b16 %v99
  %v492 = vunpack.c.h.b16 %v99
  %v493 = vunpack.c.l.b16 %v100
  %v494 = vunpack.c.h.b16 %v100
  %v495 = vunpack.c.l.b16 %v101
  %v496 = vunpack.c.h.b16 %v101
  %v497 = vunpack.c.l.b16 %v102
  %v498 = vunpack.c.h.b16 %v102
  %v499 = vunpack.c.l.b16 %v103
  %v500 = vunpack.c.h.b16 %v103
  %v501 = vunpack.c.l.b16 %v104
  %v502 = vunpack.c.h.b16 %v104
  %v503 = vunpack.c.l.b16 %v105
  %v504 = vunpack.c.h.b16 %v105
  %v505 = vunpack.c.l.b16 %v106
  %v506 = vunpack.c.h.b16 %v106
  %v507 = vunpack.c.l.b16 %v107
  %v508 = vunpack.c.h.b16 %v107
  %v509 = vunpack.c.l.b16 %v108
  %v510 = vunpack.c.h.b16 %v108
  %v511 = vunpack.c.l.b16 %v109
  %v512 = vunpack.c.h.b16 %v109
  %v513 = vunpack.c.l.b16 %v110
  %v514 = vunpack.c.h.b16 %v110
  %v515 = vunpack.c.l.b16 %v111
  %v516 = vunpack.c.h.b16 %v111
  %v517 = vunpack.c.l.b16 %v112
  %v518 = vunpack.c.h.b16 %v112
  %v519 = vunpack.c.l.b16 %v113
  %v520 = vunpack.c.h.b16 %v113
  %v521 = vunpack.c.l.b16 %v114
  %v522 = vunpack.c.h.b16 %v114
  %v523 = vunpack.c.l.b16 %v115
  %v524 = vunpack.c.h.b16 %v115
  %v525 = vunpack.c.l.b16 %v116
  %v526 = vunpack.c.h.b16 %v116
  %v527 = vunpack.c.l.b16 %v117
  %v528 = vunpack.c.h.b16 %v117
  %v529 = vunpack.c.l.b16 %v118
  %v530 = vunpack.c.h.b16 %v118
  %v531 = vunpack.c.l.b16 %v119
  %v532 = vunpack.c.h.b16 %v119
  %v533 = vunpack.c.l.b16 %v120
  %v534 = vunpack.c.h.b16 %v120
  %v535 = vunpack.c.l.b16 %v121
  %v536 = vunpack.c.h.b16 %v121
  %v537 = vunpack.c.l.b16 %v122
  %v538 = vunpack.c.h.b16 %v122
  %v539 = vunpack.c.l.b16 %v123
  %v540 = vunpack.c.h.b16 %v123
  %v541 = vunpack.c.l.b16 %v124
  %v542 = vunpack.c.h.b16 %v124
  %v543 = vunpack.c.l.b16 %v125
  %v544 = vunpack.c.h.b16 %v125
  %v545 = vunpack.c.l.b16 %v126
  %v546 = vunpack.c.h.b16 %v126
  %v547 = vunpack.c.l.b16 %v127
  %v548 = vunpack.c.h.b16 %v127
  %v549 = vunpack.c.l.b16 %v128
  %v550 = vunpack.c.h.b16 %v128
  %v551 = vunpack.c.l.b16 %v129
  %v552 = vunpack.c.h.b16 %v129
  %v553 = vunpack.c.l.b16 %v130
  %v554 = vunpack.c.h.b16 %v130
  %v555 = vunpack.c.l.b16 %v131
  %v556 = vunpack.c.h.b16 %v131
  %v557 = vunpack.c.l.b16 %v132
  %v558 = vunpack.c.h.b16 %v132
  %v559 = vunpack.c.l.b16 %v133
  %v560 = vunpack.c.h.b16 %v133
  %v561 = vunpack.c.l.b16 %v134
  %v562 = vunpack.c.h.b16 %v134
  %v563 = vpack.c.b16 %v421, %v419
  %v564 = vpack.c.b16 %v422, %v420
  %v565 = vpack.c.b16 %v425, %v423
  %v566 = vpack.c.b16 %v426, %v424
  %v567 = vpack.c.b16 %v429, %v427
  %v568 = vpack.c.b16 %v430, %v428
  %v569 = vpack.c.b16 %v433, %v431
  %v570 = vpack.c.b16 %v434, %v432
  %v571 = vpack.c.b16 %v437, %v435
  %v572 = vpack.c.b16 %v438, %v436
  %v573 = vpack.c.b16 %v441, %v439
  %v574 = vpack.c.b16 %v442, %v440
  %v575 = vpack.c.b16 %v445, %v443
  %v576 = vpack.c.b16 %v446, %v444
  %v577 = vpack.c.b16 %v449, %v447
  %v578 = vpack.c.b16 %v450, %v448
  %v579 = vpack.c.b16 %v453, %v451
  %v580 = vpack.c.b16 %v454, %v452
  %v581 = vpack.c.b16 %v457, %v455
  %v582 = vpack.c.b16 %v458, %v456
  %v583 = vpack.c.b16 %v461, %v459
  %v584 = vpack.c.b16 %v462, %v460
  %v585 = vpack.c.b16 %v465, %v463
  %v586 = vpack.c.b16 %v466, %v464
  %v587 = vpack.c.b16 %v469, %v467
  %v588 = vpack.c.b16 %v470, %v468
  %v589 = vpack.c.b16 %v473, %v471
  %v590 = vpack.c.b16 %v474, %v472
  %v591 = vpack.c.b16 %v477, %v475
  %v592 = vpack.c.b16 %v478, %v476
  %v593 = vpack.c.b16 %v481, %v479
  %v594 = vpack.c.b16 %v482, %v480
  %v595 = vpack.c.b16 %v485, %v483
  %v596 = vpack.c.b16 %v486, %v484
  %v597 = vpack.c.b16 %v489, %v487
  %v598 = vpack.c.b16 %v490, %v488
  %v599 = vpack.c.b16 %v493, %v491
  %v600 = vpack.c.b16 %v494, %v492
  %v601 = vpack.c.b16 %v497, %v495
  %v602 = vpack.c.b16 %v498, %v496
  %v603 = vpack.c.b16 %v501, %v499
  %v604 = vpack.c.b16 %v502, %v500
  %v605 = vpack.c.b16 %v505, %v503
  %v606 = vpack.c.b16 %v506, %v504
  %v607 = vpack.c.b16 %v509, %v507
  %v608 = vpack.c.b16 %v510, %v508
  %v609 = vpack.c.b16 %v513, %v511
  %v610 = vpack.c.b16 %v514, %v512
  %v611 = vpack.c.b16 %v517, %v515
  %v612 = vpack.c.b16 %v518, %v516
  %v613 = vpack.c.b16 %v521, %v519
  %v614 = vpack.c.b16 %v522, %v520
  %v615 = vpack.c.b16 %v525, %v523
  %v616 = vpack.c.b16 %v526, %v524
  %v617 = vpack.c.b16 %v529, %v527
  %v618 = vpack.c.b16 %v530, %v528
  %v619 = vpack.c.b16 %v533, %v531
  %v620 = vpack.c.b16 %v534, %v532
  %v621 = vpack.c.b16 %v537, %v535
  %v622 = vpack.c.b16 %v538, %v536
  %v623 = vpack.c.b16 %v541, %v539
  %v624 = vpack.c.b16 %v542, %v540
  %v625 = vpack.c.b16 %v545, %v543
  %v626 = vpack.c.b16 %v546, %v544
  %v627 = vpack.c.b16 %v549, %v547
  %v628 = vpack.c.b16 %v550, %v548
  %v629 = vpack.c.b16 %v553, %v551
  %v630 = vpack.c.b16 %v554, %v552
  %v631 = vpack.c.b16 %v557, %v555
  %v632 = vpack.c.b16 %v558, %v556
  %v633 = vpack.c.b16 %v561, %v559
  %v634 = vpack.c.b16 %v562, %v560
  %vm707 = vcmask 523264
  %v709 = vsel %vm707, %v279, 0
  %v712 = vsel %vm707, %v284, 0
  %v715 = vsel %vm707, %v289, 0
  %v718 = vsel %vm707, %v294, 0
  %v721 = vsel %vm707, %v299, 0
  %v724 = vsel %vm707, %v304, 0
  %v727 = vsel %vm707, %v309, 0
  %v730 = vsel %vm707, %v314, 0
  %732 = vmatprep.subr.bf16.mxu0 %v578
  %733 = vmatpush1.bf16.msra.mxu0 %v577
  %734 = vmatprep.subr.bf16.mxu0 %v576
  %735 = vmatpush1.bf16.msra.mxu0 %v575
  %736 = vmatprep.subr.bf16.mxu0 %v574
  %737 = vmatpush1.bf16.msra.mxu0 %v573
  %738 = vmatprep.subr.bf16.mxu0 %v572
  %739 = vmatpush1.bf16.msra.mxu0 %v571
  %740 = vmatprep.subr.bf16.mxu0 %v570
  %741 = vmatpush1.bf16.msra.mxu0 %v569
  %742 = vmatprep.subr.bf16.mxu0 %v568
  %743 = vmatpush1.bf16.msra.mxu0 %v567
  %744 = vmatprep.subr.bf16.mxu0 %v566
  %745 = vmatpush1.bf16.msra.mxu0 %v565
  %746 = vmatprep.subr.bf16.mxu0 %v564
  %747 = vmatpush1.bf16.msra.mxu0 %v563
  %748 = vmatprep.subr.bf16.mxu0 %v594
  %749 = vmatpush2.bf16.msra.mxu0 %v593
  %750 = vmatprep.subr.bf16.mxu0 %v592
  %751 = vmatpush2.bf16.msra.mxu0 %v591
  %752 = vmatprep.subr.bf16.mxu0 %v590
  %753 = vmatpush2.bf16.msra.mxu0 %v589
  %754 = vmatprep.subr.bf16.mxu0 %v588
  %755 = vmatpush2.bf16.msra.mxu0 %v587
  %756 = vmatprep.subr.bf16.mxu0 %v586
  %757 = vmatpush2.bf16.msra.mxu0 %v585
  %758 = vmatprep.subr.bf16.mxu0 %v584
  %759 = vmatpush2.bf16.msra.mxu0 %v583
  %760 = vmatprep.subr.bf16.mxu0 %v582
  %761 = vmatpush2.bf16.msra.mxu0 %v581
  %762 = vmatprep.subr.bf16.mxu0 %v580
  %763 = vmatpush2.bf16.msra.mxu0 %v579
  %764 = vmatprep.mubr.bf16.mxu0 %v276
  %765 = vmatmul.mubr.bf16.gmra.mxu0 %v275
  %v766 = vpop.f32.mrf.mxu0
  %v767 = vadd.f32 %v140, %v766
  %v768 = vpop.f32.mrf.mxu0
  %v769 = vadd.f32 %v144, %v768
  %v770 = vpop.f32.mrf.mxu0
  %v771 = vadd.f32 %v140, %v770
  %v772 = vpop.f32.mrf.mxu0
  %v773 = vadd.f32 %v144, %v772
  %774 = vmatprep.mubr.bf16.mxu0 %v281
  %775 = vmatmul.mubr.bf16.gmra.mxu0 %v280
  %v776 = vpop.f32.mrf.mxu0
  %v777 = vadd.f32 %v140, %v776
  %v778 = vpop.f32.mrf.mxu0
  %v779 = vadd.f32 %v144, %v778
  %v780 = vpop.f32.mrf.mxu0
  %v781 = vadd.f32 %v140, %v780
  %v782 = vpop.f32.mrf.mxu0
  %v783 = vadd.f32 %v144, %v782
  %784 = vmatprep.mubr.bf16.mxu0 %v286
  %785 = vmatmul.mubr.bf16.gmra.mxu0 %v285
  %v786 = vpop.f32.mrf.mxu0
  %v787 = vadd.f32 %v140, %v786
  %v788 = vpop.f32.mrf.mxu0
  %v789 = vadd.f32 %v144, %v788
  %v790 = vpop.f32.mrf.mxu0
  %v791 = vadd.f32 %v140, %v790
  %v792 = vpop.f32.mrf.mxu0
  %v793 = vadd.f32 %v144, %v792
  %794 = vmatprep.mubr.bf16.mxu0 %v291
  %795 = vmatmul.mubr.bf16.gmra.mxu0 %v290
  %v796 = vpop.f32.mrf.mxu0
  %v797 = vadd.f32 %v140, %v796
  %v798 = vpop.f32.mrf.mxu0
  %v799 = vadd.f32 %v144, %v798
  %v800 = vpop.f32.mrf.mxu0
  %v801 = vadd.f32 %v140, %v800
  %v802 = vpop.f32.mrf.mxu0
  %v803 = vadd.f32 %v144, %v802
  %804 = vmatprep.mubr.bf16.mxu0 %v296
  %805 = vmatmul.mubr.bf16.gmra.mxu0 %v295
  %v806 = vpop.f32.mrf.mxu0
  %v807 = vadd.f32 %v140, %v806
  %v808 = vpop.f32.mrf.mxu0
  %v809 = vadd.f32 %v144, %v808
  %v810 = vpop.f32.mrf.mxu0
  %v811 = vadd.f32 %v140, %v810
  %v812 = vpop.f32.mrf.mxu0
  %v813 = vadd.f32 %v144, %v812
  %814 = vmatprep.mubr.bf16.mxu0 %v301
  %815 = vmatmul.mubr.bf16.gmra.mxu0 %v300
  %v816 = vpop.f32.mrf.mxu0
  %v817 = vadd.f32 %v140, %v816
  %v818 = vpop.f32.mrf.mxu0
  %v819 = vadd.f32 %v144, %v818
  %v820 = vpop.f32.mrf.mxu0
  %v821 = vadd.f32 %v140, %v820
  %v822 = vpop.f32.mrf.mxu0
  %v823 = vadd.f32 %v144, %v822
  %824 = vmatprep.mubr.bf16.mxu0 %v306
  %825 = vmatmul.mubr.bf16.gmra.mxu0 %v305
  %v826 = vpop.f32.mrf.mxu0
  %v827 = vadd.f32 %v140, %v826
  %v828 = vpop.f32.mrf.mxu0
  %v829 = vadd.f32 %v144, %v828
  %v830 = vpop.f32.mrf.mxu0
  %v831 = vadd.f32 %v140, %v830
  %v832 = vpop.f32.mrf.mxu0
  %v833 = vadd.f32 %v144, %v832
  %834 = vmatprep.mubr.bf16.mxu0 %v311
  %835 = vmatmul.mubr.bf16.gmra.mxu0 %v310
  %v836 = vpop.f32.mrf.mxu0
  %v837 = vadd.f32 %v140, %v836
  %v838 = vpop.f32.mrf.mxu0
  %v839 = vadd.f32 %v144, %v838
  %v840 = vpop.f32.mrf.mxu0
  %v841 = vadd.f32 %v140, %v840
  %v842 = vpop.f32.mrf.mxu0
  %v843 = vadd.f32 %v144, %v842
  %844 = vdwg.mxu0
  %845 = vmatprep.subr.bf16.mxu0 %v610
  %846 = vmatpush1.bf16.msra.mxu0 %v609
  %847 = vmatprep.subr.bf16.mxu0 %v608
  %848 = vmatpush1.bf16.msra.mxu0 %v607
  %849 = vmatprep.subr.bf16.mxu0 %v606
  %850 = vmatpush1.bf16.msra.mxu0 %v605
  %851 = vmatprep.subr.bf16.mxu0 %v604
  %852 = vmatpush1.bf16.msra.mxu0 %v603
  %853 = vmatprep.subr.bf16.mxu0 %v602
  %854 = vmatpush1.bf16.msra.mxu0 %v601
  %855 = vmatprep.subr.bf16.mxu0 %v600
  %856 = vmatpush1.bf16.msra.mxu0 %v599
  %857 = vmatprep.subr.bf16.mxu0 %v598
  %858 = vmatpush1.bf16.msra.mxu0 %v597
  %859 = vmatprep.subr.bf16.mxu0 %v596
  %860 = vmatpush1.bf16.msra.mxu0 %v595
  %861 = vmatprep.subr.bf16.mxu0 %v626
  %862 = vmatpush2.bf16.msra.mxu0 %v625
  %863 = vmatprep.subr.bf16.mxu0 %v624
  %864 = vmatpush2.bf16.msra.mxu0 %v623
  %865 = vmatprep.subr.bf16.mxu0 %v622
  %866 = vmatpush2.bf16.msra.mxu0 %v621
  %867 = vmatprep.subr.bf16.mxu0 %v620
  %868 = vmatpush2.bf16.msra.mxu0 %v619
  %869 = vmatprep.subr.bf16.mxu0 %v618
  %870 = vmatpush2.bf16.msra.mxu0 %v617
  %871 = vmatprep.subr.bf16.mxu0 %v616
  %872 = vmatpush2.bf16.msra.mxu0 %v615
  %873 = vmatprep.subr.bf16.mxu0 %v614
  %874 = vmatpush2.bf16.msra.mxu0 %v613
  %875 = vmatprep.subr.bf16.mxu0 %v612
  %876 = vmatpush2.bf16.msra.mxu0 %v611
  %877 = vmatprep.mubr.bf16.mxu0 %v278
  %878 = vmatmul.mubr.bf16.gmra.mxu0 %v277
  %v879 = vpop.f32.mrf.mxu0
  %v880 = vadd.f32 %v767, %v879
  %v881 = vpop.f32.mrf.mxu0
  %v882 = vadd.f32 %v769, %v881
  %v883 = vpop.f32.mrf.mxu0
  %v884 = vadd.f32 %v771, %v883
  %v885 = vpop.f32.mrf.mxu0
  %v886 = vadd.f32 %v773, %v885
  %887 = vmatprep.mubr.bf16.mxu0 %v283
  %888 = vmatmul.mubr.bf16.gmra.mxu0 %v282
  %v889 = vpop.f32.mrf.mxu0
  %v890 = vadd.f32 %v777, %v889
  %v891 = vpop.f32.mrf.mxu0
  %v892 = vadd.f32 %v779, %v891
  %v893 = vpop.f32.mrf.mxu0
  %v894 = vadd.f32 %v781, %v893
  %v895 = vpop.f32.mrf.mxu0
  %v896 = vadd.f32 %v783, %v895
  %897 = vmatprep.mubr.bf16.mxu0 %v288
  %898 = vmatmul.mubr.bf16.gmra.mxu0 %v287
  %v899 = vpop.f32.mrf.mxu0
  %v900 = vadd.f32 %v787, %v899
  %v901 = vpop.f32.mrf.mxu0
  %v902 = vadd.f32 %v789, %v901
  %v903 = vpop.f32.mrf.mxu0
  %v904 = vadd.f32 %v791, %v903
  %v905 = vpop.f32.mrf.mxu0
  %v906 = vadd.f32 %v793, %v905
  %907 = vmatprep.mubr.bf16.mxu0 %v293
  %908 = vmatmul.mubr.bf16.gmra.mxu0 %v292
  %v909 = vpop.f32.mrf.mxu0
  %v910 = vadd.f32 %v797, %v909
  %v911 = vpop.f32.mrf.mxu0
  %v912 = vadd.f32 %v799, %v911
  %v913 = vpop.f32.mrf.mxu0
  %v914 = vadd.f32 %v801, %v913
  %v915 = vpop.f32.mrf.mxu0
  %v916 = vadd.f32 %v803, %v915
  %917 = vmatprep.mubr.bf16.mxu0 %v298
  %918 = vmatmul.mubr.bf16.gmra.mxu0 %v297
  %v919 = vpop.f32.mrf.mxu0
  %v920 = vadd.f32 %v807, %v919
  %v921 = vpop.f32.mrf.mxu0
  %v922 = vadd.f32 %v809, %v921
  %v923 = vpop.f32.mrf.mxu0
  %v924 = vadd.f32 %v811, %v923
  %v925 = vpop.f32.mrf.mxu0
  %v926 = vadd.f32 %v813, %v925
  %927 = vmatprep.mubr.bf16.mxu0 %v303
  %928 = vmatmul.mubr.bf16.gmra.mxu0 %v302
  %v929 = vpop.f32.mrf.mxu0
  %v930 = vadd.f32 %v817, %v929
  %v931 = vpop.f32.mrf.mxu0
  %v932 = vadd.f32 %v819, %v931
  %v933 = vpop.f32.mrf.mxu0
  %v934 = vadd.f32 %v821, %v933
  %v935 = vpop.f32.mrf.mxu0
  %v936 = vadd.f32 %v823, %v935
  %937 = vmatprep.mubr.bf16.mxu0 %v308
  %938 = vmatmul.mubr.bf16.gmra.mxu0 %v307
  %v939 = vpop.f32.mrf.mxu0
  %v940 = vadd.f32 %v827, %v939
  %v941 = vpop.f32.mrf.mxu0
  %v942 = vadd.f32 %v829, %v941
  %v943 = vpop.f32.mrf.mxu0
  %v944 = vadd.f32 %v831, %v943
  %v945 = vpop.f32.mrf.mxu0
  %v946 = vadd.f32 %v833, %v945
  %947 = vmatprep.mubr.bf16.mxu0 %v313
  %948 = vmatmul.mubr.bf16.gmra.mxu0 %v312
  %v949 = vpop.f32.mrf.mxu0
  %v950 = vadd.f32 %v837, %v949
  %v951 = vpop.f32.mrf.mxu0
  %v952 = vadd.f32 %v839, %v951
  %v953 = vpop.f32.mrf.mxu0
  %v954 = vadd.f32 %v841, %v953
  %v955 = vpop.f32.mrf.mxu0
  %v956 = vadd.f32 %v843, %v955
  %957 = vdwg.mxu0
  %958 = vmatprep.subr.bf16.mxu0 0
  %959 = vmatpush1.bf16.msra.mxu0 0
  %960 = vmatprep.subr.bf16.mxu0 0
  %961 = vmatpush1.bf16.msra.mxu0 0
  %962 = vmatprep.subr.bf16.mxu0 0
  %963 = vmatpush1.bf16.msra.mxu0 0
  %964 = vmatprep.subr.bf16.mxu0 0
  %965 = vmatpush1.bf16.msra.mxu0 0
  %966 = vmatprep.subr.bf16.mxu0 %v634
  %967 = vmatpush1.bf16.msra.mxu0 %v633
  %968 = vmatprep.subr.bf16.mxu0 %v632
  %969 = vmatpush1.bf16.msra.mxu0 %v631
  %970 = vmatprep.subr.bf16.mxu0 %v630
  %971 = vmatpush1.bf16.msra.mxu0 %v629
  %972 = vmatprep.subr.bf16.mxu0 %v628
  %973 = vmatpush1.bf16.msra.mxu0 %v627
  %974 = vmatprep.subr.bf16.mxu0 0
  %975 = vmatpush2.bf16.msra.mxu0 0
  %976 = vmatprep.subr.bf16.mxu0 0
  %977 = vmatpush2.bf16.msra.mxu0 0
  %978 = vmatprep.subr.bf16.mxu0 0
  %979 = vmatpush2.bf16.msra.mxu0 0
  %980 = vmatprep.subr.bf16.mxu0 0
  %981 = vmatpush2.bf16.msra.mxu0 0
  %982 = vmatprep.subr.bf16.mxu0 0
  %983 = vmatpush2.bf16.msra.mxu0 0
  %984 = vmatprep.subr.bf16.mxu0 0
  %985 = vmatpush2.bf16.msra.mxu0 0
  %986 = vmatprep.subr.bf16.mxu0 0
  %987 = vmatpush2.bf16.msra.mxu0 0
  %988 = vmatprep.subr.bf16.mxu0 0
  %989 = vmatpush2.bf16.msra.mxu0 0
  %990 = vmatprep.mubr.bf16.mxu0 0
  %991 = vmatmul.mubr.bf16.gmra.mxu0 %v709
  %v992 = vpop.f32.mrf.mxu0
  %v993 = vadd.f32 %v880, %v992
  %v994 = vpop.f32.mrf.mxu0
  %v995 = vadd.f32 %v882, %v994
  %v996 = vpop.f32.mrf.mxu0
  %v997 = vadd.f32 %v884, %v996
  %v998 = vpop.f32.mrf.mxu0
  %v999 = vadd.f32 %v886, %v998
  %1000 = vmatprep.mubr.bf16.mxu0 0
  %1001 = vmatmul.mubr.bf16.gmra.mxu0 %v712
  %v1002 = vpop.f32.mrf.mxu0
  %v1003 = vadd.f32 %v890, %v1002
  %v1004 = vpop.f32.mrf.mxu0
  %v1005 = vadd.f32 %v892, %v1004
  %v1006 = vpop.f32.mrf.mxu0
  %v1007 = vadd.f32 %v894, %v1006
  %v1008 = vpop.f32.mrf.mxu0
  %v1009 = vadd.f32 %v896, %v1008
  %1010 = vmatprep.mubr.bf16.mxu0 0
  %1011 = vmatmul.mubr.bf16.gmra.mxu0 %v715
  %v1012 = vpop.f32.mrf.mxu0
  %v1013 = vadd.f32 %v900, %v1012
  %v1014 = vpop.f32.mrf.mxu0
  %v1015 = vadd.f32 %v902, %v1014
  %v1016 = vpop.f32.mrf.mxu0
  %v1017 = vadd.f32 %v904, %v1016
  %v1018 = vpop.f32.mrf.mxu0
  %v1019 = vadd.f32 %v906, %v1018
  %1020 = vmatprep.mubr.bf16.mxu0 0
  %1021 = vmatmul.mubr.bf16.gmra.mxu0 %v718
  %v1022 = vpop.f32.mrf.mxu0
  %v1023 = vadd.f32 %v910, %v1022
  %v1024 = vpop.f32.mrf.mxu0
  %v1025 = vadd.f32 %v912, %v1024
  %v1026 = vpop.f32.mrf.mxu0
  %v1027 = vadd.f32 %v914, %v1026
  %v1028 = vpop.f32.mrf.mxu0
  %v1029 = vadd.f32 %v916, %v1028
  %1030 = vmatprep.mubr.bf16.mxu0 0
  %1031 = vmatmul.mubr.bf16.gmra.mxu0 %v721
  %v1032 = vpop.f32.mrf.mxu0
  %v1033 = vadd.f32 %v920, %v1032
  %v1034 = vpop.f32.mrf.mxu0
  %v1035 = vadd.f32 %v922, %v1034
  %v1036 = vpop.f32.mrf.mxu0
  %v1037 = vadd.f32 %v924, %v1036
  %v1038 = vpop.f32.mrf.mxu0
  %v1039 = vadd.f32 %v926, %v1038
  %1040 = vmatprep.mubr.bf16.mxu0 0
  %1041 = vmatmul.mubr.bf16.gmra.mxu0 %v724
  %v1042 = vpop.f32.mrf.mxu0
  %v1043 = vadd.f32 %v930, %v1042
  %v1044 = vpop.f32.mrf.mxu0
  %v1045 = vadd.f32 %v932, %v1044
  %v1046 = vpop.f32.mrf.mxu0
  %v1047 = vadd.f32 %v934, %v1046
  %v1048 = vpop.f32.mrf.mxu0
  %v1049 = vadd.f32 %v936, %v1048
  %1050 = vmatprep.mubr.bf16.mxu0 0
  %1051 = vmatmul.mubr.bf16.gmra.mxu0 %v727
  %v1052 = vpop.f32.mrf.mxu0
  %v1053 = vadd.f32 %v940, %v1052
  %v1054 = vpop.f32.mrf.mxu0
  %v1055 = vadd.f32 %v942, %v1054
  %v1056 = vpop.f32.mrf.mxu0
  %v1057 = vadd.f32 %v944, %v1056
  %v1058 = vpop.f32.mrf.mxu0
  %v1059 = vadd.f32 %v946, %v1058
  %1060 = vmatprep.mubr.bf16.mxu0 0
  %1061 = vmatmul.mubr.bf16.gmra.mxu0 %v730
  %v1062 = vpop.f32.mrf.mxu0
  %v1063 = vadd.f32 %v950, %v1062
  %v1064 = vpop.f32.mrf.mxu0
  %v1065 = vadd.f32 %v952, %v1064
  %v1066 = vpop.f32.mrf.mxu0
  %v1067 = vadd.f32 %v954, %v1066
  %v1068 = vpop.f32.mrf.mxu0
  %v1069 = vadd.f32 %v956, %v1068
  %1070 = vdwg.mxu0
  %v1071 = vmax.f32 %v993, 0.0
  %v1072 = vmax.f32 %v995, 0.0
  %v1073 = vmax.f32 %v997, 0.0
  %v1074 = vmax.f32 %v999, 0.0
  %v1075 = vmax.f32 %v1003, 0.0
  %v1076 = vmax.f32 %v1005, 0.0
  %v1077 = vmax.f32 %v1007, 0.0
  %v1078 = vmax.f32 %v1009, 0.0
  %v1079 = vmax.f32 %v1013, 0.0
  %v1080 = vmax.f32 %v1015, 0.0
  %v1081 = vmax.f32 %v1017, 0.0
  %v1082 = vmax.f32 %v1019, 0.0
  %v1083 = vmax.f32 %v1023, 0.0
  %v1084 = vmax.f32 %v1025, 0.0
  %v1085 = vmax.f32 %v1027, 0.0
  %v1086 = vmax.f32 %v1029, 0.0
  %v1087 = vmax.f32 %v1033, 0.0
  %v1088 = vmax.f32 %v1035, 0.0
  %v1089 = vmax.f32 %v1037, 0.0
  %v1090 = vmax.f32 %v1039, 0.0
  %v1091 = vmax.f32 %v1043, 0.0
  %v1092 = vmax.f32 %v1045, 0.0
  %v1093 = vmax.f32 %v1047, 0.0
  %v1094 = vmax.f32 %v1049, 0.0
  %v1095 = vmax.f32 %v1053, 0.0
  %v1096 = vmax.f32 %v1055, 0.0
  %v1097 = vmax.f32 %v1057, 0.0
  %v1098 = vmax.f32 %v1059, 0.0
  %v1099 = vmax.f32 %v1063, 0.0
  %v1100 = vmax.f32 %v1065, 0.0
  %v1101 = vmax.f32 %v1067, 0.0
  %v1102 = vmax.f32 %v1069, 0.0
  %v1103 = vpack.c.bf16 %v1073, %v1071
  %v1104 = vpack.c.bf16 %v1074, %v1072
  %v1105 = vpack.c.bf16 %v1077, %v1075
  %v1106 = vpack.c.bf16 %v1078, %v1076
  %v1107 = vpack.c.bf16 %v1081, %v1079
  %v1108 = vpack.c.bf16 %v1082, %v1080
  %v1109 = vpack.c.bf16 %v1085, %v1083
  %v1110 = vpack.c.bf16 %v1086, %v1084
  %v1111 = vpack.c.bf16 %v1089, %v1087
  %v1112 = vpack.c.bf16 %v1090, %v1088
  %v1113 = vpack.c.bf16 %v1093, %v1091
  %v1114 = vpack.c.bf16 %v1094, %v1092
  %v1115 = vpack.c.bf16 %v1097, %v1095
  %v1116 = vpack.c.bf16 %v1098, %v1096
  %v1117 = vpack.c.bf16 %v1101, %v1099
  %v1118 = vpack.c.bf16 %v1102, %v1100
  %v1135 = vunpack.c.l.b16 %v1103
  %v1136 = vunpack.c.l.b16 %v1104
  %v1137 = vunpack.c.h.b16 %v1103
  %v1138 = vunpack.c.h.b16 %v1104
  %v1139 = vunpack.c.l.b16 %v1105
  %v1140 = vunpack.c.l.b16 %v1106
  %v1141 = vunpack.c.h.b16 %v1105
  %v1142 = vunpack.c.h.b16 %v1106
  %v1143 = vunpack.c.l.b16 %v1107
  %v1144 = vunpack.c.l.b16 %v1108
  %v1145 = vunpack.c.h.b16 %v1107
  %v1146 = vunpack.c.h.b16 %v1108
  %v1147 = vunpack.c.l.b16 %v1109
  %v1148 = vunpack.c.l.b16 %v1110
  %v1149 = vunpack.c.h.b16 %v1109
  %v1150 = vunpack.c.h.b16 %v1110
  %v1151 = vunpack.c.l.b16 %v1111
  %v1152 = vunpack.c.l.b16 %v1112
  %v1153 = vunpack.c.h.b16 %v1111
  %v1154 = vunpack.c.h.b16 %v1112
  %v1155 = vunpack.c.l.b16 %v1113
  %v1156 = vunpack.c.l.b16 %v1114
  %v1157 = vunpack.c.h.b16 %v1113
  %v1158 = vunpack.c.h.b16 %v1114
  %v1159 = vunpack.c.l.b16 %v1115
  %v1160 = vunpack.c.l.b16 %v1116
  %v1161 = vunpack.c.h.b16 %v1115
  %v1162 = vunpack.c.h.b16 %v1116
  %v1163 = vunpack.c.l.b16 %v1117
  %v1164 = vunpack.c.l.b16 %v1118
  %v1165 = vunpack.c.h.b16 %v1117
  %v1166 = vunpack.c.h.b16 %v1118
  %v1167 = vpack.c.b16 %v1136, %v1135
  %v1168 = vpack.c.b16 %v1138, %v1137
  %v1169 = vpack.c.b16 %v1140, %v1139
  %v1170 = vpack.c.b16 %v1142, %v1141
  %v1171 = vpack.c.b16 %v1144, %v1143
  %v1172 = vpack.c.b16 %v1146, %v1145
  %v1173 = vpack.c.b16 %v1148, %v1147
  %v1174 = vpack.c.b16 %v1150, %v1149
  %v1175 = vpack.c.b16 %v1152, %v1151
  %v1176 = vpack.c.b16 %v1154, %v1153
  %v1177 = vpack.c.b16 %v1156, %v1155
  %v1178 = vpack.c.b16 %v1158, %v1157
  %v1179 = vpack.c.b16 %v1160, %v1159
  %v1180 = vpack.c.b16 %v1162, %v1161
  %v1181 = vpack.c.b16 %v1164, %v1163
  %v1182 = vpack.c.b16 %v1166, %v1165
  %1199 = vst [vmem:[%s3] sm:$0xff] %v1167
  %1200 = vst [vmem:[%s3 + $0x8] sm:$0xff] %v1168
  %1201 = vst [vmem:[%s3 + $0x10] sm:$0xff] %v1169
  %1202 = vst [vmem:[%s3 + $0x18] sm:$0xff] %v1170
  %1203 = vst [vmem:[%s3 + $0x20] sm:$0xff] %v1171
  %1204 = vst [vmem:[%s3 + $0x28] sm:$0xff] %v1172
  %1205 = vst [vmem:[%s3 + $0x30] sm:$0xff] %v1173
  %1206 = vst [vmem:[%s3 + $0x38] sm:$0xff] %v1174
  %1207 = vst [vmem:[%s3 + $0x40] sm:$0xff] %v1175
  %1208 = vst [vmem:[%s3 + $0x48] sm:$0xff] %v1176
  %1209 = vst [vmem:[%s3 + $0x50] sm:$0xff] %v1177
  %1210 = vst [vmem:[%s3 + $0x58] sm:$0xff] %v1178
  %1211 = vst [vmem:[%s3 + $0x60] sm:$0xff] %v1179
  %1212 = vst [vmem:[%s3 + $0x68] sm:$0xff] %v1180
  %1213 = vst [vmem:[%s3 + $0x70] sm:$0xff] %v1181
  %1214 = vst [vmem:[%s3 + $0x78] sm:$0xff] %v1182
  // Predicated region
  $region14: #{forward.11} parent=0 // pred_check
    _
  $region15: #{forward.11} parent=0 // pred_check_branch
    %1216 = sbr.rel (0) target = $region17
  $region16: #{forward.11} parent=0 // pred_region
    _
  $region17: #{forward.11} parent=0 // pred_fallthru
    _
  // Predicated region
  $region18: #{forward.11} parent=0 // pred_check
    _
  $region19: #{forward.11} parent=0 // pred_check_branch
    %1218 = sbr.rel (0) target = $region21
  $region20: #{forward.11} parent=0 // pred_region
    _
  $region21: #{forward.11} parent=0 // pred_fallthru
    _

// kernel: forward.13
$region0: #{forward.13}
  #allocation0 [shape = 'u32[]', space=smem, size = 0x4, offset = 0x4, fixed_abs, tag = 'smem constant byte address 0x4 - core index']
  #allocation1 [shape = 'u32[144,128]{1,0:T(1,128)}', space=vmem, size = 0x12000, scoped, tag = 'internal scratch']
  #allocation2 [shape = 'f32[2,512]{1,0:T(2,128)}', space=vmem, size = 0x1000, scoped, tag = 'scratch operand']
  %s0 = inlined_call_operand.vmem [shape: bf16[2,4096], index: 0, kind: input, shape index: {}]
  %s1 = inlined_call_operand.vmem [shape: bf16[4096,512], index: 1, kind: input, shape index: {}]
  %s2 = inlined_call_operand.vmem [shape: f32[1,512], index: 2, kind: input, shape index: {}]
  %s3 = inlined_call_operand.vmem [shape: bf16[512,256], index: 3, kind: input, shape index: {}]
  %s4 = inlined_call_operand.vmem [shape: f32[1,256], index: 4, kind: input, shape index: {}]
  %s5 = inlined_call_operand.vmem [shape: bf16[256,128], index: 5, kind: input, shape index: {}]
  %s6 = inlined_call_operand.vmem [shape: f32[1,128], index: 6, kind: input, shape index: {}]
  %s7 = inlined_call_operand.hbm [shape: f32[2,128], index: 7, kind: output, shape index: {}]
  %s8 = sld [smem:[#allocation0]]
  $region69: #{forward.13} parent=0
    _
  %s10 = ssub.s32 1, %s8
  %s11 = scalar_select 0, %s10, %s8
  $region1: #{forward.13} parent=0
    #allocation3 [shape = 'u8[1024]{0}', space=vmem, size = 0x400, scoped, tag = 'output window, operand 0, single buffered']
    #allocation4 [shape = 's32[2]{0}', space=sflag, size = 0x8, scoped, tag = 'scoped memory for forward.13']
    %12 = vsyncpa [#allocation4], 0
    loop: start=0, step=1, limit=6
    $region2: #{forward.13} parent=1 // loop_pre_header
      _
    $region3: #{forward.13} parent=1 // loop_header
      %s14 = sphi 0, %s18
      %p15 = scmp.ge.s32.totalorder %s14, 6
      %s21 = sphi 0, %s33
      %s22 = sphi 0, %s29
      %s23 = sphi 0, %s21
      %s24 = sphi 0, %s22
      %s25 = sphi 0, %s23
      %s26 = sphi 0, %s24
      %s38 = sphi 0, %s40
      %s41 = sphi 0, %s38
      %s42 = sphi 0, %s41
      %s58 = sphi 0, %s42
      %s64 = sphi 0, %s66
      %s67 = sphi 0, %s64
      %s68 = sphi 0, %s67
      %s84 = sphi 0, %s68
      %s88 = sphi 0, %s88
      %s90 = sphi 0, %s88
      %s91 = sphi 0, %s90
      %s105 = sphi 0, %s91
      %s109 = sphi 0, %s109
      %s111 = sphi 0, %s109
      %s112 = sphi 0, %s111
      %s126 = sphi 0, %s112
      %s130 = sphi 0, %s130
      %s132 = sphi 0, %s130
      %s133 = sphi 0, %s132
      %s147 = sphi 0, %s133
      %s151 = sphi 0, %s151
      %s153 = sphi 0, %s151
      %s154 = sphi 0, %s153
      %s168 = sphi 0, %s154
      %s172 = sphi 0, %s172
      %s174 = sphi 0, %s172
      %s175 = sphi 0, %s174
      %s189 = sphi 0, %s175
      %s195 = sphi 0, %s197
      %s198 = sphi 0, %s195
      %s199 = sphi 0, %s198
      %s215 = sphi 0, %s199
    $region4: #{forward.13} parent=1 // loop_header_branch
      %17 = sbr.rel (%p15) target = $region8
    $region5: #{forward.13} parent=1 // loop_body
      %s19 = ssub.s32 %s14, 1
      %s20 = ssub.s32 %s14, 2
      %s27 = sadd.s32 1, %s22
      %p28 = scmp.ge.s32.totalorder %s27, 4
      %s29 = scalar_select %p28, 0, %s27
      %s30 = sadd.s32 1, %s21
      %s31 = scalar_select %p28, %s30, %s21
      %p32 = scmp.ge.s32.totalorder %s31, 1
      %s33 = scalar_select %p32, 0, %s31
      %s34 = ssub.s32 %s21, %s33
      %s35 = ssub.s32 %s22, %s29
      %s36 = sor.u32 %s34, %s35
      %p37 = scmp.eq.s32.totalorder %s36, 0
      %s39 = sadd.s32 %s38, 1
      %s40 = scalar_select %p37, %s38, %s39
      %p43 = pneg %p37
      %p44 = scmp.eq.s32.totalorder %s14, 3
      %p45 = por %p43, %p44
      %p46 = scmp.ne.s32.totalorder %s38, %s41
      %p47 = scmp.eq.s32.totalorder %s14, 0
      %p48 = por %p46, %p47
      %p49 = scmp.ne.s32.totalorder %s38, %s41
      %p50 = scmp.eq.s32.totalorder %s19, 3
      %p51 = por %p49, %p50
      %p52 = scmp.ne.s32.totalorder %s41, %s42
      %p53 = scmp.eq.s32.totalorder %s19, 0
      %p54 = por %p52, %p53
      %p55 = scmp.ne.s32.totalorder %s41, %s42
      %p56 = scmp.eq.s32.totalorder %s20, 3
      %p57 = por %p55, %p56
      %p59 = scmp.ne.s32.totalorder %s42, %s58
      %p60 = scmp.eq.s32.totalorder %s20, 0
      %p61 = por %p59, %p60
      %s62 = ssub.s32 %s22, %s29
      %p63 = scmp.eq.s32.totalorder %s62, 0
      %s65 = sadd.s32 %s64, 1
      %s66 = scalar_select %p63, %s64, %s65
      %p69 = pneg %p63
      %p70 = scmp.eq.s32.totalorder %s14, 3
      %p71 = por %p69, %p70
      %p72 = scmp.ne.s32.totalorder %s64, %s67
      %p73 = scmp.eq.s32.totalorder %s14, 0
      %p74 = por %p72, %p73
      %p75 = scmp.ne.s32.totalorder %s64, %s67
      %p76 = scmp.eq.s32.totalorder %s19, 3
      %p77 = por %p75, %p76
      %p78 = scmp.ne.s32.totalorder %s67, %s68
      %p79 = scmp.eq.s32.totalorder %s19, 0
      %p80 = por %p78, %p79
      %p81 = scmp.ne.s32.totalorder %s67, %s68
      %p82 = scmp.eq.s32.totalorder %s20, 3
      %p83 = por %p81, %p82
      %p85 = scmp.ne.s32.totalorder %s68, %s84
      %p86 = scmp.eq.s32.totalorder %s20, 0
      %p87 = por %p85, %p86
      %s89 = sadd.s32 %s88, 1
      %p92 = scmp.eq.s32.totalorder %s14, 3
      %p93 = scmp.ne.s32.totalorder %s88, %s90
      %p94 = scmp.eq.s32.totalorder %s14, 0
      %p95 = por %p93, %p94
      %p96 = scmp.ne.s32.totalorder %s88, %s90
      %p97 = scmp.eq.s32.totalorder %s19, 3
      %p98 = por %p96, %p97
      %p99 = scmp.ne.s32.totalorder %s90, %s91
      %p100 = scmp.eq.s32.totalorder %s19, 0
      %p101 = por %p99, %p100
      %p102 = scmp.ne.s32.totalorder %s90, %s91
      %p103 = scmp.eq.s32.totalorder %s20, 3
      %p104 = por %p102, %p103
      %p106 = scmp.ne.s32.totalorder %s91, %s105
      %p107 = scmp.eq.s32.totalorder %s20, 0
      %p108 = por %p106, %p107
      %s110 = sadd.s32 %s109, 1
      %p113 = scmp.eq.s32.totalorder %s14, 3
      %p114 = scmp.ne.s32.totalorder %s109, %s111
      %p115 = scmp.eq.s32.totalorder %s14, 0
      %p116 = por %p114, %p115
      %p117 = scmp.ne.s32.totalorder %s109, %s111
      %p118 = scmp.eq.s32.totalorder %s19, 3
      %p119 = por %p117, %p118
      %p120 = scmp.ne.s32.totalorder %s111, %s112
      %p121 = scmp.eq.s32.totalorder %s19, 0
      %p122 = por %p120, %p121
      %p123 = scmp.ne.s32.totalorder %s111, %s112
      %p124 = scmp.eq.s32.totalorder %s20, 3
      %p125 = por %p123, %p124
      %p127 = scmp.ne.s32.totalorder %s112, %s126
      %p128 = scmp.eq.s32.totalorder %s20, 0
      %p129 = por %p127, %p128
      %s131 = sadd.s32 %s130, 1
      %p134 = scmp.eq.s32.totalorder %s14, 3
      %p135 = scmp.ne.s32.totalorder %s130, %s132
      %p136 = scmp.eq.s32.totalorder %s14, 0
      %p137 = por %p135, %p136
      %p138 = scmp.ne.s32.totalorder %s130, %s132
      %p139 = scmp.eq.s32.totalorder %s19, 3
      %p140 = por %p138, %p139
      %p141 = scmp.ne.s32.totalorder %s132, %s133
      %p142 = scmp.eq.s32.totalorder %s19, 0
      %p143 = por %p141, %p142
      %p144 = scmp.ne.s32.totalorder %s132, %s133
      %p145 = scmp.eq.s32.totalorder %s20, 3
      %p146 = por %p144, %p145
      %p148 = scmp.ne.s32.totalorder %s133, %s147
      %p149 = scmp.eq.s32.totalorder %s20, 0
      %p150 = por %p148, %p149
      %s152 = sadd.s32 %s151, 1
      %p155 = scmp.eq.s32.totalorder %s14, 3
      %p156 = scmp.ne.s32.totalorder %s151, %s153
      %p157 = scmp.eq.s32.totalorder %s14, 0
      %p158 = por %p156, %p157
      %p159 = scmp.ne.s32.totalorder %s151, %s153
      %p160 = scmp.eq.s32.totalorder %s19, 3
      %p161 = por %p159, %p160
      %p162 = scmp.ne.s32.totalorder %s153, %s154
      %p163 = scmp.eq.s32.totalorder %s19, 0
      %p164 = por %p162, %p163
      %p165 = scmp.ne.s32.totalorder %s153, %s154
      %p166 = scmp.eq.s32.totalorder %s20, 3
      %p167 = por %p165, %p166
      %p169 = scmp.ne.s32.totalorder %s154, %s168
      %p170 = scmp.eq.s32.totalorder %s20, 0
      %p171 = por %p169, %p170
      %s173 = sadd.s32 %s172, 1
      %p176 = scmp.eq.s32.totalorder %s14, 3
      %p177 = scmp.ne.s32.totalorder %s172, %s174
      %p178 = scmp.eq.s32.totalorder %s14, 0
      %p179 = por %p177, %p178
      %p180 = scmp.ne.s32.totalorder %s172, %s174
      %p181 = scmp.eq.s32.totalorder %s19, 3
      %p182 = por %p180, %p181
      %p183 = scmp.ne.s32.totalorder %s174, %s175
      %p184 = scmp.eq.s32.totalorder %s19, 0
      %p185 = por %p183, %p184
      %p186 = scmp.ne.s32.totalorder %s174, %s175
      %p187 = scmp.eq.s32.totalorder %s20, 3
      %p188 = por %p186, %p187
      %p190 = scmp.ne.s32.totalorder %s175, %s189
      %p191 = scmp.eq.s32.totalorder %s20, 0
      %p192 = por %p190, %p191
      %s193 = ssub.s32 %s21, %s33
      %p194 = scmp.eq.s32.totalorder %s193, 0
      %s196 = sadd.s32 %s195, 1
      %s197 = scalar_select %p194, %s195, %s196
      %p200 = pneg %p194
      %p201 = scmp.eq.s32.totalorder %s14, 3
      %p202 = por %p200, %p201
      %p203 = scmp.ne.s32.totalorder %s195, %s198
      %p204 = scmp.eq.s32.totalorder %s14, 0
      %p205 = por %p203, %p204
      %p206 = scmp.ne.s32.totalorder %s195, %s198
      %p207 = scmp.eq.s32.totalorder %s19, 3
      %p208 = por %p206, %p207
      %p209 = scmp.ne.s32.totalorder %s198, %s199
      %p210 = scmp.eq.s32.totalorder %s19, 0
      %p211 = por %p209, %p210
      %p212 = scmp.ne.s32.totalorder %s198, %s199
      %p213 = scmp.eq.s32.totalorder %s20, 3
      %p214 = por %p212, %p213
      %p216 = scmp.ne.s32.totalorder %s199, %s215
      %p217 = scmp.eq.s32.totalorder %s20, 0
      %p218 = por %p216, %p217
      %p219 = scmp.le.s32.totalorder 1, %s14
      %p220 = scmp.lt.s32.totalorder %s14, 5
      %p221 = pnand %p219, %p220
      %p222 = pneg %p221
      // Predicated region
      $region9: #{forward.13} parent=5 // pred_check
        _
      $region10: #{forward.13} parent=5 // pred_check_branch
        %224 = sbr.rel (%p221) target = $region12
      $region11: #{forward.13} parent=5 // pred_region
        %s225 = ssub.s32 %s14, 1
        // Predicated region
        $region13: #{forward.13} parent=11 // pred_check
          %p226 = pneg %p101
        $region14: #{forward.13} parent=11 // pred_check_branch
          %228 = sbr.rel (%p226) target = $region16
        $region15: #{forward.13} parent=11 // pred_region
          _
        $region16: #{forward.13} parent=11 // pred_fallthru
          _
        // Predicated region
        $region17: #{forward.13} parent=11 // pred_check
          %p229 = pneg %p122
        $region18: #{forward.13} parent=11 // pred_check_branch
          %231 = sbr.rel (%p229) target = $region20
        $region19: #{forward.13} parent=11 // pred_region
          _
        $region20: #{forward.13} parent=11 // pred_fallthru
          _
        // Predicated region
        $region21: #{forward.13} parent=11 // pred_check
          %p232 = pneg %p143
        $region22: #{forward.13} parent=11 // pred_check_branch
          %234 = sbr.rel (%p232) target = $region24
        $region23: #{forward.13} parent=11 // pred_region
          _
        $region24: #{forward.13} parent=11 // pred_fallthru
          _
        // Predicated region
        $region25: #{forward.13} parent=11 // pred_check
          %p235 = pneg %p164
        $region26: #{forward.13} parent=11 // pred_check_branch
          %237 = sbr.rel (%p235) target = $region28
        $region27: #{forward.13} parent=11 // pred_region
          _
        $region28: #{forward.13} parent=11 // pred_fallthru
          _
        // Predicated region
        $region29: #{forward.13} parent=11 // pred_check
          %p238 = pneg %p185
        $region30: #{forward.13} parent=11 // pred_check_branch
          %240 = sbr.rel (%p238) target = $region32
        $region31: #{forward.13} parent=11 // pred_region
          _
        $region32: #{forward.13} parent=11 // pred_fallthru
          _
      $region12: #{forward.13} parent=5 // pred_fallthru
        _
      %p241 = scmp.lt.s32.totalorder %s14, 4
      // Predicated region
      $region33: #{forward.13} parent=5 // pred_check
        %p242 = pneg %p241
      $region34: #{forward.13} parent=5 // pred_check_branch
        %244 = sbr.rel (%p242) target = $region36
      $region35: #{forward.13} parent=5 // pred_region
        // Predicated region
        $region37: #{forward.13} parent=35 // pred_check
          %p245 = pneg %p48
        $region38: #{forward.13} parent=35 // pred_check_branch
          %247 = sbr.rel (%p245) target = $region40
        $region39: #{forward.13} parent=35 // pred_region
          %s248 = smul.u32 8, %s22
          %p249 = scmp.lt.s32.totalorder %s21, 0
          %s250 = scalar_select %p249, %s21, 0
          %p251 = scmp.lt.s32.totalorder %s248, 31
          %s252 = scalar_select %p251, %s248, 31
          %s253 = smul.addr %s250, 32
          %s254 = sadd.s32 %s252, %s253
          %s255 = scalar_lea.vmem %s0, %s254
          %s256 = smul.u32 8, %s22
        $region40: #{forward.13} parent=35 // pred_fallthru
          _
        // Predicated region
        $region41: #{forward.13} parent=35 // pred_check
          %p257 = pneg %p74
        $region42: #{forward.13} parent=35 // pred_check_branch
          %259 = sbr.rel (%p257) target = $region44
        $region43: #{forward.13} parent=35 // pred_region
          %s260 = smul.u32 128, %s22
          %p261 = scmp.lt.s32.totalorder %s260, 511
          %s262 = scalar_select %p261, %s260, 511
          %s263 = smul.addr %s262, 4
          %s264 = smul.addr %s263, 4
          %s265 = scalar_lea.vmem %s1, %s264
          %s266 = smul.u32 128, %s22
        $region44: #{forward.13} parent=35 // pred_fallthru
          _
      $region36: #{forward.13} parent=5 // pred_fallthru
        _
      %p267 = scmp.le.s32.totalorder 1, %s14
      %p268 = scmp.lt.s32.totalorder %s14, 5
      %p269 = pnand %p267, %p268
      %p270 = pneg %p269
      // Predicated region
      $region45: #{forward.13} parent=5 // pred_check
        _
      $region46: #{forward.13} parent=5 // pred_check_branch
        %272 = sbr.rel (%p269) target = $region48
      $region47: #{forward.13} parent=5 // pred_region
        %s273 = ssub.s32 %s14, 1
        %s274 = smul.u32 8, %s24
        %p275 = scmp.lt.s32.totalorder %s23, 0
        %s276 = scalar_select %p275, %s23, 0
        %p277 = scmp.lt.s32.totalorder %s274, 31
        %s278 = scalar_select %p277, %s274, 31
        %s279 = smul.addr %s276, 32
        %s280 = sadd.s32 %s278, %s279
        %s281 = scalar_lea.vmem %s0, %s280
        %p282 = pneg %p54
        %p283 = pneg %p51
        %s284 = smul.u32 128, %s24
        %p285 = scmp.lt.s32.totalorder %s284, 511
        %s286 = scalar_select %p285, %s284, 511
        %s287 = smul.addr %s286, 4
        %s288 = smul.addr %s287, 4
        %s289 = scalar_lea.vmem %s1, %s288
        %p290 = pneg %p80
        %p291 = pneg %p77
        %p292 = pneg %p101
        %p293 = pneg %p98
        %p294 = pneg %p122
        %p295 = pneg %p119
        %p296 = pneg %p143
        %p297 = pneg %p140
        %p298 = pneg %p164
        %p299 = pneg %p161
        %p300 = pneg %p185
        %p301 = pneg %p182
        %p302 = pneg %p211
        %p303 = pneg %p208
        %s304 = smul.u32 8, %s24
        %p305 = scmp.lt.s32.totalorder %s23, 0
        %s306 = scalar_select %p305, %s23, 0
        %p307 = scmp.lt.s32.totalorder %s304, 31
        %s308 = scalar_select %p307, %s304, 31
        %s309 = smul.addr %s306, 32
        %s310 = sadd.s32 %s308, %s309
        %s311 = scalar_lea.vmem %s0, %s310
        %s312 = smul.u32 8, %s24
        %s313 = smul.u32 128, %s24
        %p314 = scmp.lt.s32.totalorder %s313, 511
        %s315 = scalar_select %p314, %s313, 511
        %s316 = smul.addr %s315, 4
        %s317 = smul.addr %s316, 4
        %s318 = scalar_lea.vmem %s1, %s317
        %s319 = smul.u32 128, %s24
        %p321 = scmp.eq.s32.totalorder %s24, 0
        // Predicated region
        $region49: #{forward.13} parent=47 // pred_check
          %p322 = pneg %p321
        $region50: #{forward.13} parent=47 // pred_check_branch
          %324 = sbr.rel (%p322) target = $region52
        $region51: #{forward.13} parent=47 // pred_region
          %325 = vst [vmem:[#allocation2] sm:$0xff] 0.0
        $region52: #{forward.13} parent=47 // pred_fallthru
          _
        %v326 = vld [vmem:[#allocation2] sm:$0xff]
        %v327 = vld [vmem:[%s311] sm:$0xff]
        %v328 = vld [vmem:[%s318] sm:$0xff]
        %v329 = vld [vmem:[%s318 + $0x8] sm:$0xff]
        %v330 = vld [vmem:[%s318 + $0x10] sm:$0xff]
        %v331 = vld [vmem:[%s318 + $0x18] sm:$0xff]
        %v332 = vld [vmem:[%s318 + $0x20] sm:$0xff]
        %v333 = vld [vmem:[%s318 + $0x28] sm:$0xff]
        %v334 = vld [vmem:[%s318 + $0x30] sm:$0xff]
        %v335 = vld [vmem:[%s318 + $0x38] sm:$0xff]
        %v336 = vld [vmem:[%s318 + $0x40] sm:$0xff]
        %v337 = vld [vmem:[%s318 + $0x48] sm:$0xff]
        %v338 = vld [vmem:[%s318 + $0x50] sm:$0xff]
        %v339 = vld [vmem:[%s318 + $0x58] sm:$0xff]
        %v340 = vld [vmem:[%s318 + $0x60] sm:$0xff]
        %v341 = vld [vmem:[%s318 + $0x68] sm:$0xff]
        %v342 = vld [vmem:[%s318 + $0x70] sm:$0xff]
        %v343 = vld [vmem:[%s318 + $0x78] sm:$0xff]
        %v344 = vld [vmem:[%s318 + $0x80] sm:$0xff]
        %v345 = vld [vmem:[%s318 + $0x88] sm:$0xff]
        %v346 = vld [vmem:[%s318 + $0x90] sm:$0xff]
        %v347 = vld [vmem:[%s318 + $0x98] sm:$0xff]
        %v348 = vld [vmem:[%s318 + $0xa0] sm:$0xff]
        %v349 = vld [vmem:[%s318 + $0xa8] sm:$0xff]
        %v350 = vld [vmem:[%s318 + $0xb0] sm:$0xff]
        %v351 = vld [vmem:[%s318 + $0xb8] sm:$0xff]
        %v352 = vld [vmem:[%s318 + $0xc0] sm:$0xff]
        %v353 = vld [vmem:[%s318 + $0xc8] sm:$0xff]
        %v354 = vld [vmem:[%s318 + $0xd0] sm:$0xff]
        %v355 = vld [vmem:[%s318 + $0xd8] sm:$0xff]
        %v356 = vld [vmem:[%s318 + $0xe0] sm:$0xff]
        %v357 = vld [vmem:[%s318 + $0xe8] sm:$0xff]
        %v358 = vld [vmem:[%s318 + $0xf0] sm:$0xff]
        %v359 = vld [vmem:[%s318 + $0xf8] sm:$0xff]
        %v360 = vld [vmem:[%s318 + $0x100] sm:$0xff]
        %v361 = vld [vmem:[%s318 + $0x108] sm:$0xff]
        %v362 = vld [vmem:[%s318 + $0x110] sm:$0xff]
        %v363 = vld [vmem:[%s318 + $0x118] sm:$0xff]
        %v364 = vld [vmem:[%s318 + $0x120] sm:$0xff]
        %v365 = vld [vmem:[%s318 + $0x128] sm:$0xff]
        %v366 = vld [vmem:[%s318 + $0x130] sm:$0xff]
        %v367 = vld [vmem:[%s318 + $0x138] sm:$0xff]
        %v368 = vld [vmem:[%s318 + $0x140] sm:$0xff]
        %v369 = vld [vmem:[%s318 + $0x148] sm:$0xff]
        %v370 = vld [vmem:[%s318 + $0x150] sm:$0xff]
        %v371 = vld [vmem:[%s318 + $0x158] sm:$0xff]
        %v372 = vld [vmem:[%s318 + $0x160] sm:$0xff]
        %v373 = vld [vmem:[%s318 + $0x168] sm:$0xff]
        %v374 = vld [vmem:[%s318 + $0x170] sm:$0xff]
        %v375 = vld [vmem:[%s318 + $0x178] sm:$0xff]
        %v376 = vld [vmem:[%s318 + $0x180] sm:$0xff]
        %v377 = vld [vmem:[%s318 + $0x188] sm:$0xff]
        %v378 = vld [vmem:[%s318 + $0x190] sm:$0xff]
        %v379 = vld [vmem:[%s318 + $0x198] sm:$0xff]
        %v380 = vld [vmem:[%s318 + $0x1a0] sm:$0xff]
        %v381 = vld [vmem:[%s318 + $0x1a8] sm:$0xff]
        %v382 = vld [vmem:[%s318 + $0x1b0] sm:$0xff]
        %v383 = vld [vmem:[%s318 + $0x1b8] sm:$0xff]
        %v384 = vld [vmem:[%s318 + $0x1c0] sm:$0xff]
        %v385 = vld [vmem:[%s318 + $0x1c8] sm:$0xff]
        %v386 = vld [vmem:[%s318 + $0x1d0] sm:$0xff]
        %v387 = vld [vmem:[%s318 + $0x1d8] sm:$0xff]
        %v388 = vld [vmem:[%s318 + $0x1e0] sm:$0xff]
        %v389 = vld [vmem:[%s318 + $0x1e8] sm:$0xff]
        %v390 = vld [vmem:[%s318 + $0x1f0] sm:$0xff]
        %v391 = vld [vmem:[%s318 + $0x1f8] sm:$0xff]
        %v392 = vld [vmem:[%s318 + $0x200] sm:$0xff]
        %v393 = vld [vmem:[%s318 + $0x208] sm:$0xff]
        %v394 = vld [vmem:[%s318 + $0x210] sm:$0xff]
        %v395 = vld [vmem:[%s318 + $0x218] sm:$0xff]
        %v396 = vld [vmem:[%s318 + $0x220] sm:$0xff]
        %v397 = vld [vmem:[%s318 + $0x228] sm:$0xff]
        %v398 = vld [vmem:[%s318 + $0x230] sm:$0xff]
        %v399 = vld [vmem:[%s318 + $0x238] sm:$0xff]
        %v400 = vld [vmem:[%s318 + $0x240] sm:$0xff]
        %v401 = vld [vmem:[%s318 + $0x248] sm:$0xff]
        %v402 = vld [vmem:[%s318 + $0x250] sm:$0xff]
        %v403 = vld [vmem:[%s318 + $0x258] sm:$0xff]
        %v404 = vld [vmem:[%s318 + $0x260] sm:$0xff]
        %v405 = vld [vmem:[%s318 + $0x268] sm:$0xff]
        %v406 = vld [vmem:[%s318 + $0x270] sm:$0xff]
        %v407 = vld [vmem:[%s318 + $0x278] sm:$0xff]
        %v408 = vld [vmem:[%s318 + $0x280] sm:$0xff]
        %v409 = vld [vmem:[%s318 + $0x288] sm:$0xff]
        %v410 = vld [vmem:[%s318 + $0x290] sm:$0xff]
        %v411 = vld [vmem:[%s318 + $0x298] sm:$0xff]
        %v412 = vld [vmem:[%s318 + $0x2a0] sm:$0xff]
        %v413 = vld [vmem:[%s318 + $0x2a8] sm:$0xff]
        %v414 = vld [vmem:[%s318 + $0x2b0] sm:$0xff]
        %v415 = vld [vmem:[%s318 + $0x2b8] sm:$0xff]
        %v416 = vld [vmem:[%s318 + $0x2c0] sm:$0xff]
        %v417 = vld [vmem:[%s318 + $0x2c8] sm:$0xff]
        %v418 = vld [vmem:[%s318 + $0x2d0] sm:$0xff]
        %v419 = vld [vmem:[%s318 + $0x2d8] sm:$0xff]
        %v420 = vld [vmem:[%s318 + $0x2e0] sm:$0xff]
        %v421 = vld [vmem:[%s318 + $0x2e8] sm:$0xff]
        %v422 = vld [vmem:[%s318 + $0x2f0] sm:$0xff]
        %v423 = vld [vmem:[%s318 + $0x2f8] sm:$0xff]
        %v424 = vld [vmem:[%s318 + $0x300] sm:$0xff]
        %v425 = vld [vmem:[%s318 + $0x308] sm:$0xff]
        %v426 = vld [vmem:[%s318 + $0x310] sm:$0xff]
        %v427 = vld [vmem:[%s318 + $0x318] sm:$0xff]
        %v428 = vld [vmem:[%s318 + $0x320] sm:$0xff]
        %v429 = vld [vmem:[%s318 + $0x328] sm:$0xff]
        %v430 = vld [vmem:[%s318 + $0x330] sm:$0xff]
        %v431 = vld [vmem:[%s318 + $0x338] sm:$0xff]
        %v432 = vld [vmem:[%s318 + $0x340] sm:$0xff]
        %v433 = vld [vmem:[%s318 + $0x348] sm:$0xff]
        %v434 = vld [vmem:[%s318 + $0x350] sm:$0xff]
        %v435 = vld [vmem:[%s318 + $0x358] sm:$0xff]
        %v436 = vld [vmem:[%s318 + $0x360] sm:$0xff]
        %v437 = vld [vmem:[%s318 + $0x368] sm:$0xff]
        %v438 = vld [vmem:[%s318 + $0x370] sm:$0xff]
        %v439 = vld [vmem:[%s318 + $0x378] sm:$0xff]
        %v440 = vld [vmem:[%s318 + $0x380] sm:$0xff]
        %v441 = vld [vmem:[%s318 + $0x388] sm:$0xff]
        %v442 = vld [vmem:[%s318 + $0x390] sm:$0xff]
        %v443 = vld [vmem:[%s318 + $0x398] sm:$0xff]
        %v444 = vld [vmem:[%s318 + $0x3a0] sm:$0xff]
        %v445 = vld [vmem:[%s318 + $0x3a8] sm:$0xff]
        %v446 = vld [vmem:[%s318 + $0x3b0] sm:$0xff]
        %v447 = vld [vmem:[%s318 + $0x3b8] sm:$0xff]
        %v448 = vld [vmem:[%s318 + $0x3c0] sm:$0xff]
        %v449 = vld [vmem:[%s318 + $0x3c8] sm:$0xff]
        %v450 = vld [vmem:[%s318 + $0x3d0] sm:$0xff]
        %v451 = vld [vmem:[%s318 + $0x3d8] sm:$0xff]
        %v452 = vld [vmem:[%s318 + $0x3e0] sm:$0xff]
        %v453 = vld [vmem:[%s318 + $0x3e8] sm:$0xff]
        %v454 = vld [vmem:[%s318 + $0x3f0] sm:$0xff]
        %v455 = vld [vmem:[%s318 + $0x3f8] sm:$0xff]
        %v456 = vld [vmem:[%s318 + $0x400] sm:$0xff]
        %v457 = vld [vmem:[%s318 + $0x408] sm:$0xff]
        %v458 = vld [vmem:[%s318 + $0x410] sm:$0xff]
        %v459 = vld [vmem:[%s318 + $0x418] sm:$0xff]
        %v460 = vld [vmem:[%s318 + $0x420] sm:$0xff]
        %v461 = vld [vmem:[%s318 + $0x428] sm:$0xff]
        %v462 = vld [vmem:[%s318 + $0x430] sm:$0xff]
        %v463 = vld [vmem:[%s318 + $0x438] sm:$0xff]
        %v464 = vld [vmem:[%s318 + $0x440] sm:$0xff]
        %v465 = vld [vmem:[%s318 + $0x448] sm:$0xff]
        %v466 = vld [vmem:[%s318 + $0x450] sm:$0xff]
        %v467 = vld [vmem:[%s318 + $0x458] sm:$0xff]
        %v468 = vld [vmem:[%s318 + $0x460] sm:$0xff]
        %v469 = vld [vmem:[%s318 + $0x468] sm:$0xff]
        %v470 = vld [vmem:[%s318 + $0x470] sm:$0xff]
        %v471 = vld [vmem:[%s318 + $0x478] sm:$0xff]
        %v472 = vld [vmem:[%s318 + $0x480] sm:$0xff]
        %v473 = vld [vmem:[%s318 + $0x488] sm:$0xff]
        %v474 = vld [vmem:[%s318 + $0x490] sm:$0xff]
        %v475 = vld [vmem:[%s318 + $0x498] sm:$0xff]
        %v476 = vld [vmem:[%s318 + $0x4a0] sm:$0xff]
        %v477 = vld [vmem:[%s318 + $0x4a8] sm:$0xff]
        %v478 = vld [vmem:[%s318 + $0x4b0] sm:$0xff]
        %v479 = vld [vmem:[%s318 + $0x4b8] sm:$0xff]
        %v480 = vld [vmem:[%s318 + $0x4c0] sm:$0xff]
        %v481 = vld [vmem:[%s318 + $0x4c8] sm:$0xff]
        %v482 = vld [vmem:[%s318 + $0x4d0] sm:$0xff]
        %v483 = vld [vmem:[%s318 + $0x4d8] sm:$0xff]
        %v484 = vld [vmem:[%s318 + $0x4e0] sm:$0xff]
        %v485 = vld [vmem:[%s318 + $0x4e8] sm:$0xff]
        %v486 = vld [vmem:[%s318 + $0x4f0] sm:$0xff]
        %v487 = vld [vmem:[%s318 + $0x4f8] sm:$0xff]
        %v488 = vld [vmem:[%s318 + $0x500] sm:$0xff]
        %v489 = vld [vmem:[%s318 + $0x508] sm:$0xff]
        %v490 = vld [vmem:[%s318 + $0x510] sm:$0xff]
        %v491 = vld [vmem:[%s318 + $0x518] sm:$0xff]
        %v492 = vld [vmem:[%s318 + $0x520] sm:$0xff]
        %v493 = vld [vmem:[%s318 + $0x528] sm:$0xff]
        %v494 = vld [vmem:[%s318 + $0x530] sm:$0xff]
        %v495 = vld [vmem:[%s318 + $0x538] sm:$0xff]
        %v496 = vld [vmem:[%s318 + $0x540] sm:$0xff]
        %v497 = vld [vmem:[%s318 + $0x548] sm:$0xff]
        %v498 = vld [vmem:[%s318 + $0x550] sm:$0xff]
        %v499 = vld [vmem:[%s318 + $0x558] sm:$0xff]
        %v500 = vld [vmem:[%s318 + $0x560] sm:$0xff]
        %v501 = vld [vmem:[%s318 + $0x568] sm:$0xff]
        %v502 = vld [vmem:[%s318 + $0x570] sm:$0xff]
        %v503 = vld [vmem:[%s318 + $0x578] sm:$0xff]
        %v504 = vld [vmem:[%s318 + $0x580] sm:$0xff]
        %v505 = vld [vmem:[%s318 + $0x588] sm:$0xff]
        %v506 = vld [vmem:[%s318 + $0x590] sm:$0xff]
        %v507 = vld [vmem:[%s318 + $0x598] sm:$0xff]
        %v508 = vld [vmem:[%s318 + $0x5a0] sm:$0xff]
        %v509 = vld [vmem:[%s318 + $0x5a8] sm:$0xff]
        %v510 = vld [vmem:[%s318 + $0x5b0] sm:$0xff]
        %v511 = vld [vmem:[%s318 + $0x5b8] sm:$0xff]
        %v512 = vld [vmem:[%s318 + $0x5c0] sm:$0xff]
        %v513 = vld [vmem:[%s318 + $0x5c8] sm:$0xff]
        %v514 = vld [vmem:[%s318 + $0x5d0] sm:$0xff]
        %v515 = vld [vmem:[%s318 + $0x5d8] sm:$0xff]
        %v516 = vld [vmem:[%s318 + $0x5e0] sm:$0xff]
        %v517 = vld [vmem:[%s318 + $0x5e8] sm:$0xff]
        %v518 = vld [vmem:[%s318 + $0x5f0] sm:$0xff]
        %v519 = vld [vmem:[%s318 + $0x5f8] sm:$0xff]
        %v520 = vld [vmem:[%s318 + $0x600] sm:$0xff]
        %v521 = vld [vmem:[%s318 + $0x608] sm:$0xff]
        %v522 = vld [vmem:[%s318 + $0x610] sm:$0xff]
        %v523 = vld [vmem:[%s318 + $0x618] sm:$0xff]
        %v524 = vld [vmem:[%s318 + $0x620] sm:$0xff]
        %v525 = vld [vmem:[%s318 + $0x628] sm:$0xff]
        %v526 = vld [vmem:[%s318 + $0x630] sm:$0xff]
        %v527 = vld [vmem:[%s318 + $0x638] sm:$0xff]
        %v528 = vld [vmem:[%s318 + $0x640] sm:$0xff]
        %v529 = vld [vmem:[%s318 + $0x648] sm:$0xff]
        %v530 = vld [vmem:[%s318 + $0x650] sm:$0xff]
        %v531 = vld [vmem:[%s318 + $0x658] sm:$0xff]
        %v532 = vld [vmem:[%s318 + $0x660] sm:$0xff]
        %v533 = vld [vmem:[%s318 + $0x668] sm:$0xff]
        %v534 = vld [vmem:[%s318 + $0x670] sm:$0xff]
        %v535 = vld [vmem:[%s318 + $0x678] sm:$0xff]
        %v536 = vld [vmem:[%s318 + $0x680] sm:$0xff]
        %v537 = vld [vmem:[%s318 + $0x688] sm:$0xff]
        %v538 = vld [vmem:[%s318 + $0x690] sm:$0xff]
        %v539 = vld [vmem:[%s318 + $0x698] sm:$0xff]
        %v540 = vld [vmem:[%s318 + $0x6a0] sm:$0xff]
        %v541 = vld [vmem:[%s318 + $0x6a8] sm:$0xff]
        %v542 = vld [vmem:[%s318 + $0x6b0] sm:$0xff]
        %v543 = vld [vmem:[%s318 + $0x6b8] sm:$0xff]
        %v544 = vld [vmem:[%s318 + $0x6c0] sm:$0xff]
        %v545 = vld [vmem:[%s318 + $0x6c8] sm:$0xff]
        %v546 = vld [vmem:[%s318 + $0x6d0] sm:$0xff]
        %v547 = vld [vmem:[%s318 + $0x6d8] sm:$0xff]
        %v548 = vld [vmem:[%s318 + $0x6e0] sm:$0xff]
        %v549 = vld [vmem:[%s318 + $0x6e8] sm:$0xff]
        %v550 = vld [vmem:[%s318 + $0x6f0] sm:$0xff]
        %v551 = vld [vmem:[%s318 + $0x6f8] sm:$0xff]
        %v552 = vld [vmem:[%s318 + $0x700] sm:$0xff]
        %v553 = vld [vmem:[%s318 + $0x708] sm:$0xff]
        %v554 = vld [vmem:[%s318 + $0x710] sm:$0xff]
        %v555 = vld [vmem:[%s318 + $0x718] sm:$0xff]
        %v556 = vld [vmem:[%s318 + $0x720] sm:$0xff]
        %v557 = vld [vmem:[%s318 + $0x728] sm:$0xff]
        %v558 = vld [vmem:[%s318 + $0x730] sm:$0xff]
        %v559 = vld [vmem:[%s318 + $0x738] sm:$0xff]
        %v560 = vld [vmem:[%s318 + $0x740] sm:$0xff]
        %v561 = vld [vmem:[%s318 + $0x748] sm:$0xff]
        %v562 = vld [vmem:[%s318 + $0x750] sm:$0xff]
        %v563 = vld [vmem:[%s318 + $0x758] sm:$0xff]
        %v564 = vld [vmem:[%s318 + $0x760] sm:$0xff]
        %v565 = vld [vmem:[%s318 + $0x768] sm:$0xff]
        %v566 = vld [vmem:[%s318 + $0x770] sm:$0xff]
        %v567 = vld [vmem:[%s318 + $0x778] sm:$0xff]
        %v568 = vld [vmem:[%s318 + $0x780] sm:$0xff]
        %v569 = vld [vmem:[%s318 + $0x788] sm:$0xff]
        %v570 = vld [vmem:[%s318 + $0x790] sm:$0xff]
        %v571 = vld [vmem:[%s318 + $0x798] sm:$0xff]
        %v572 = vld [vmem:[%s318 + $0x7a0] sm:$0xff]
        %v573 = vld [vmem:[%s318 + $0x7a8] sm:$0xff]
        %v574 = vld [vmem:[%s318 + $0x7b0] sm:$0xff]
        %v575 = vld [vmem:[%s318 + $0x7b8] sm:$0xff]
        %v576 = vld [vmem:[%s318 + $0x7c0] sm:$0xff]
        %v577 = vld [vmem:[%s318 + $0x7c8] sm:$0xff]
        %v578 = vld [vmem:[%s318 + $0x7d0] sm:$0xff]
        %v579 = vld [vmem:[%s318 + $0x7d8] sm:$0xff]
        %v580 = vld [vmem:[%s318 + $0x7e0] sm:$0xff]
        %v581 = vld [vmem:[%s318 + $0x7e8] sm:$0xff]
        %v582 = vld [vmem:[%s318 + $0x7f0] sm:$0xff]
        %v583 = vld [vmem:[%s318 + $0x7f8] sm:$0xff]
        %v585 = vcombine.high %v327, %v327
        %v587 = vunpack.c.l.s4 1966171168
        %v588 = vunpack.c.0.s8 %v587
        %v589 = vlaneseq
        %v590 = vshrl.u32 %v589, 7
        %v591 = vsub.s32 %v588, %v590
        %v592 = vrot.slane %v327, %v591
        %v594 = vunpack.c.l.s4 1966171168
        %v595 = vunpack.c.0.s8 %v594
        %v596 = vlaneseq
        %v597 = vshrl.u32 %v596, 7
        %v598 = vsub.s32 %v595, %v597
        %v599 = vrot.slane %v585, %v598
        %v600 = vcombine.high %v592, %v592
        %v601 = vcombine.high %v599, %v599
        %v603 = vunpack.c.l.s4 1966171168
        %v604 = vunpack.c.0.s8 %v603
        %v605 = vlaneseq
        %v606 = vshrl.u32 %v605, 7
        %v607 = vsub.s32 %v604, %v606
        %v608 = vrot.slane %v592, %v607
        %v610 = vunpack.c.l.s4 1966171168
        %v611 = vunpack.c.0.s8 %v610
        %v612 = vlaneseq
        %v613 = vshrl.u32 %v612, 7
        %v614 = vsub.s32 %v611, %v613
        %v615 = vrot.slane %v599, %v614
        %v617 = vunpack.c.l.s4 1966171168
        %v618 = vunpack.c.0.s8 %v617
        %v619 = vlaneseq
        %v620 = vshrl.u32 %v619, 7
        %v621 = vsub.s32 %v618, %v620
        %v622 = vrot.slane %v600, %v621
        %v624 = vunpack.c.l.s4 1966171168
        %v625 = vunpack.c.0.s8 %v624
        %v626 = vlaneseq
        %v627 = vshrl.u32 %v626, 7
        %v628 = vsub.s32 %v625, %v627
        %v629 = vrot.slane %v601, %v628
        %v630 = vcombine.high %v608, %v608
        %v631 = vcombine.high %v615, %v615
        %v632 = vcombine.high %v622, %v622
        %v633 = vcombine.high %v629, %v629
        %v898 = vunpack.c.l.b16 %v328
        %v899 = vunpack.c.h.b16 %v328
        %v900 = vunpack.c.l.b16 %v329
        %v901 = vunpack.c.h.b16 %v329
        %v902 = vunpack.c.l.b16 %v330
        %v903 = vunpack.c.h.b16 %v330
        %v904 = vunpack.c.l.b16 %v331
        %v905 = vunpack.c.h.b16 %v331
        %v906 = vunpack.c.l.b16 %v332
        %v907 = vunpack.c.h.b16 %v332
        %v908 = vunpack.c.l.b16 %v333
        %v909 = vunpack.c.h.b16 %v333
        %v910 = vunpack.c.l.b16 %v334
        %v911 = vunpack.c.h.b16 %v334
        %v912 = vunpack.c.l.b16 %v335
        %v913 = vunpack.c.h.b16 %v335
        %v914 = vunpack.c.l.b16 %v336
        %v915 = vunpack.c.h.b16 %v336
        %v916 = vunpack.c.l.b16 %v337
        %v917 = vunpack.c.h.b16 %v337
        %v918 = vunpack.c.l.b16 %v338
        %v919 = vunpack.c.h.b16 %v338
        %v920 = vunpack.c.l.b16 %v339
        %v921 = vunpack.c.h.b16 %v339
        %v922 = vunpack.c.l.b16 %v340
        %v923 = vunpack.c.h.b16 %v340
        %v924 = vunpack.c.l.b16 %v341
        %v925 = vunpack.c.h.b16 %v341
        %v926 = vunpack.c.l.b16 %v342
        %v927 = vunpack.c.h.b16 %v342
        %v928 = vunpack.c.l.b16 %v343
        %v929 = vunpack.c.h.b16 %v343
        %v930 = vunpack.c.l.b16 %v344
        %v931 = vunpack.c.h.b16 %v344
        %v932 = vunpack.c.l.b16 %v345
        %v933 = vunpack.c.h.b16 %v345
        %v934 = vunpack.c.l.b16 %v346
        %v935 = vunpack.c.h.b16 %v346
        %v936 = vunpack.c.l.b16 %v347
        %v937 = vunpack.c.h.b16 %v347
        %v938 = vunpack.c.l.b16 %v348
        %v939 = vunpack.c.h.b16 %v348
        %v940 = vunpack.c.l.b16 %v349
        %v941 = vunpack.c.h.b16 %v349
        %v942 = vunpack.c.l.b16 %v350
        %v943 = vunpack.c.h.b16 %v350
        %v944 = vunpack.c.l.b16 %v351
        %v945 = vunpack.c.h.b16 %v351
        %v946 = vunpack.c.l.b16 %v352
        %v947 = vunpack.c.h.b16 %v352
        %v948 = vunpack.c.l.b16 %v353
        %v949 = vunpack.c.h.b16 %v353
        %v950 = vunpack.c.l.b16 %v354
        %v951 = vunpack.c.h.b16 %v354
        %v952 = vunpack.c.l.b16 %v355
        %v953 = vunpack.c.h.b16 %v355
        %v954 = vunpack.c.l.b16 %v356
        %v955 = vunpack.c.h.b16 %v356
        %v956 = vunpack.c.l.b16 %v357
        %v957 = vunpack.c.h.b16 %v357
        %v958 = vunpack.c.l.b16 %v358
        %v959 = vunpack.c.h.b16 %v358
        %v960 = vunpack.c.l.b16 %v359
        %v961 = vunpack.c.h.b16 %v359
        %v962 = vunpack.c.l.b16 %v360
        %v963 = vunpack.c.h.b16 %v360
        %v964 = vunpack.c.l.b16 %v361
        %v965 = vunpack.c.h.b16 %v361
        %v966 = vunpack.c.l.b16 %v362
        %v967 = vunpack.c.h.b16 %v362
        %v968 = vunpack.c.l.b16 %v363
        %v969 = vunpack.c.h.b16 %v363
        %v970 = vunpack.c.l.b16 %v364
        %v971 = vunpack.c.h.b16 %v364
        %v972 = vunpack.c.l.b16 %v365
        %v973 = vunpack.c.h.b16 %v365
        %v974 = vunpack.c.l.b16 %v366
        %v975 = vunpack.c.h.b16 %v366
        %v976 = vunpack.c.l.b16 %v367
        %v977 = vunpack.c.h.b16 %v367
        %v978 = vunpack.c.l.b16 %v368
        %v979 = vunpack.c.h.b16 %v368
        %v980 = vunpack.c.l.b16 %v369
        %v981 = vunpack.c.h.b16 %v369
        %v982 = vunpack.c.l.b16 %v370
        %v983 = vunpack.c.h.b16 %v370
        %v984 = vunpack.c.l.b16 %v371
        %v985 = vunpack.c.h.b16 %v371
        %v986 = vunpack.c.l.b16 %v372
        %v987 = vunpack.c.h.b16 %v372
        %v988 = vunpack.c.l.b16 %v373
        %v989 = vunpack.c.h.b16 %v373
        %v990 = vunpack.c.l.b16 %v374
        %v991 = vunpack.c.h.b16 %v374
        %v992 = vunpack.c.l.b16 %v375
        %v993 = vunpack.c.h.b16 %v375
        %v994 = vunpack.c.l.b16 %v376
        %v995 = vunpack.c.h.b16 %v376
        %v996 = vunpack.c.l.b16 %v377
        %v997 = vunpack.c.h.b16 %v377
        %v998 = vunpack.c.l.b16 %v378
        %v999 = vunpack.c.h.b16 %v378
        %v1000 = vunpack.c.l.b16 %v379
        %v1001 = vunpack.c.h.b16 %v379
        %v1002 = vunpack.c.l.b16 %v380
        %v1003 = vunpack.c.h.b16 %v380
        %v1004 = vunpack.c.l.b16 %v381
        %v1005 = vunpack.c.h.b16 %v381
        %v1006 = vunpack.c.l.b16 %v382
        %v1007 = vunpack.c.h.b16 %v382
        %v1008 = vunpack.c.l.b16 %v383
        %v1009 = vunpack.c.h.b16 %v383
        %v1010 = vunpack.c.l.b16 %v384
        %v1011 = vunpack.c.h.b16 %v384
        %v1012 = vunpack.c.l.b16 %v385
        %v1013 = vunpack.c.h.b16 %v385
        %v1014 = vunpack.c.l.b16 %v386
        %v1015 = vunpack.c.h.b16 %v386
        %v1016 = vunpack.c.l.b16 %v387
        %v1017 = vunpack.c.h.b16 %v387
        %v1018 = vunpack.c.l.b16 %v388
        %v1019 = vunpack.c.h.b16 %v388
        %v1020 = vunpack.c.l.b16 %v389
        %v1021 = vunpack.c.h.b16 %v389
        %v1022 = vunpack.c.l.b16 %v390
        %v1023 = vunpack.c.h.b16 %v390
        %v1024 = vunpack.c.l.b16 %v391
        %v1025 = vunpack.c.h.b16 %v391
        %v1026 = vunpack.c.l.b16 %v392
        %v1027 = vunpack.c.h.b16 %v392
        %v1028 = vunpack.c.l.b16 %v393
        %v1029 = vunpack.c.h.b16 %v393
        %v1030 = vunpack.c.l.b16 %v394
        %v1031 = vunpack.c.h.b16 %v394
        %v1032 = vunpack.c.l.b16 %v395
        %v1033 = vunpack.c.h.b16 %v395
        %v1034 = vunpack.c.l.b16 %v396
        %v1035 = vunpack.c.h.b16 %v396
        %v1036 = vunpack.c.l.b16 %v397
        %v1037 = vunpack.c.h.b16 %v397
        %v1038 = vunpack.c.l.b16 %v398
        %v1039 = vunpack.c.h.b16 %v398
        %v1040 = vunpack.c.l.b16 %v399
        %v1041 = vunpack.c.h.b16 %v399
        %v1042 = vunpack.c.l.b16 %v400
        %v1043 = vunpack.c.h.b16 %v400
        %v1044 = vunpack.c.l.b16 %v401
        %v1045 = vunpack.c.h.b16 %v401
        %v1046 = vunpack.c.l.b16 %v402
        %v1047 = vunpack.c.h.b16 %v402
        %v1048 = vunpack.c.l.b16 %v403
        %v1049 = vunpack.c.h.b16 %v403
        %v1050 = vunpack.c.l.b16 %v404
        %v1051 = vunpack.c.h.b16 %v404
        %v1052 = vunpack.c.l.b16 %v405
        %v1053 = vunpack.c.h.b16 %v405
        %v1054 = vunpack.c.l.b16 %v406
        %v1055 = vunpack.c.h.b16 %v406
        %v1056 = vunpack.c.l.b16 %v407
        %v1057 = vunpack.c.h.b16 %v407
        %v1058 = vunpack.c.l.b16 %v408
        %v1059 = vunpack.c.h.b16 %v408
        %v1060 = vunpack.c.l.b16 %v409
        %v1061 = vunpack.c.h.b16 %v409
        %v1062 = vunpack.c.l.b16 %v410
        %v1063 = vunpack.c.h.b16 %v410
        %v1064 = vunpack.c.l.b16 %v411
        %v1065 = vunpack.c.h.b16 %v411
        %v1066 = vunpack.c.l.b16 %v412
        %v1067 = vunpack.c.h.b16 %v412
        %v1068 = vunpack.c.l.b16 %v413
        %v1069 = vunpack.c.h.b16 %v413
        %v1070 = vunpack.c.l.b16 %v414
        %v1071 = vunpack.c.h.b16 %v414
        %v1072 = vunpack.c.l.b16 %v415
        %v1073 = vunpack.c.h.b16 %v415
        %v1074 = vunpack.c.l.b16 %v416
        %v1075 = vunpack.c.h.b16 %v416
        %v1076 = vunpack.c.l.b16 %v417
        %v1077 = vunpack.c.h.b16 %v417
        %v1078 = vunpack.c.l.b16 %v418
        %v1079 = vunpack.c.h.b16 %v418
        %v1080 = vunpack.c.l.b16 %v419
        %v1081 = vunpack.c.h.b16 %v419
        %v1082 = vunpack.c.l.b16 %v420
        %v1083 = vunpack.c.h.b16 %v420
        %v1084 = vunpack.c.l.b16 %v421
        %v1085 = vunpack.c.h.b16 %v421
        %v1086 = vunpack.c.l.b16 %v422
        %v1087 = vunpack.c.h.b16 %v422
        %v1088 = vunpack.c.l.b16 %v423
        %v1089 = vunpack.c.h.b16 %v423
        %v1090 = vunpack.c.l.b16 %v424
        %v1091 = vunpack.c.h.b16 %v424
        %v1092 = vunpack.c.l.b16 %v425
        %v1093 = vunpack.c.h.b16 %v425
        %v1094 = vunpack.c.l.b16 %v426
        %v1095 = vunpack.c.h.b16 %v426
        %v1096 = vunpack.c.l.b16 %v427
        %v1097 = vunpack.c.h.b16 %v427
        %v1098 = vunpack.c.l.b16 %v428
        %v1099 = vunpack.c.h.b16 %v428
        %v1100 = vunpack.c.l.b16 %v429
        %v1101 = vunpack.c.h.b16 %v429
        %v1102 = vunpack.c.l.b16 %v430
        %v1103 = vunpack.c.h.b16 %v430
        %v1104 = vunpack.c.l.b16 %v431
        %v1105 = vunpack.c.h.b16 %v431
        %v1106 = vunpack.c.l.b16 %v432
        %v1107 = vunpack.c.h.b16 %v432
        %v1108 = vunpack.c.l.b16 %v433
        %v1109 = vunpack.c.h.b16 %v433
        %v1110 = vunpack.c.l.b16 %v434
        %v1111 = vunpack.c.h.b16 %v434
        %v1112 = vunpack.c.l.b16 %v435
        %v1113 = vunpack.c.h.b16 %v435
        %v1114 = vunpack.c.l.b16 %v436
        %v1115 = vunpack.c.h.b16 %v436
        %v1116 = vunpack.c.l.b16 %v437
        %v1117 = vunpack.c.h.b16 %v437
        %v1118 = vunpack.c.l.b16 %v438
        %v1119 = vunpack.c.h.b16 %v438
        %v1120 = vunpack.c.l.b16 %v439
        %v1121 = vunpack.c.h.b16 %v439
        %v1122 = vunpack.c.l.b16 %v440
        %v1123 = vunpack.c.h.b16 %v440
        %v1124 = vunpack.c.l.b16 %v441
        %v1125 = vunpack.c.h.b16 %v441
        %v1126 = vunpack.c.l.b16 %v442
        %v1127 = vunpack.c.h.b16 %v442
        %v1128 = vunpack.c.l.b16 %v443
        %v1129 = vunpack.c.h.b16 %v443
        %v1130 = vunpack.c.l.b16 %v444
        %v1131 = vunpack.c.h.b16 %v444
        %v1132 = vunpack.c.l.b16 %v445
        %v1133 = vunpack.c.h.b16 %v445
        %v1134 = vunpack.c.l.b16 %v446
        %v1135 = vunpack.c.h.b16 %v446
        %v1136 = vunpack.c.l.b16 %v447
        %v1137 = vunpack.c.h.b16 %v447
        %v1138 = vunpack.c.l.b16 %v448
        %v1139 = vunpack.c.h.b16 %v448
        %v1140 = vunpack.c.l.b16 %v449
        %v1141 = vunpack.c.h.b16 %v449
        %v1142 = vunpack.c.l.b16 %v450
        %v1143 = vunpack.c.h.b16 %v450
        %v1144 = vunpack.c.l.b16 %v451
        %v1145 = vunpack.c.h.b16 %v451
        %v1146 = vunpack.c.l.b16 %v452
        %v1147 = vunpack.c.h.b16 %v452
        %v1148 = vunpack.c.l.b16 %v453
        %v1149 = vunpack.c.h.b16 %v453
        %v1150 = vunpack.c.l.b16 %v454
        %v1151 = vunpack.c.h.b16 %v454
        %v1152 = vunpack.c.l.b16 %v455
        %v1153 = vunpack.c.h.b16 %v455
        %v1154 = vunpack.c.l.b16 %v456
        %v1155 = vunpack.c.h.b16 %v456
        %v1156 = vunpack.c.l.b16 %v457
        %v1157 = vunpack.c.h.b16 %v457
        %v1158 = vunpack.c.l.b16 %v458
        %v1159 = vunpack.c.h.b16 %v458
        %v1160 = vunpack.c.l.b16 %v459
        %v1161 = vunpack.c.h.b16 %v459
        %v1162 = vunpack.c.l.b16 %v460
        %v1163 = vunpack.c.h.b16 %v460
        %v1164 = vunpack.c.l.b16 %v461
        %v1165 = vunpack.c.h.b16 %v461
        %v1166 = vunpack.c.l.b16 %v462
        %v1167 = vunpack.c.h.b16 %v462
        %v1168 = vunpack.c.l.b16 %v463
        %v1169 = vunpack.c.h.b16 %v463
        %v1170 = vunpack.c.l.b16 %v464
        %v1171 = vunpack.c.h.b16 %v464
        %v1172 = vunpack.c.l.b16 %v465
        %v1173 = vunpack.c.h.b16 %v465
        %v1174 = vunpack.c.l.b16 %v466
        %v1175 = vunpack.c.h.b16 %v466
        %v1176 = vunpack.c.l.b16 %v467
        %v1177 = vunpack.c.h.b16 %v467
        %v1178 = vunpack.c.l.b16 %v468
        %v1179 = vunpack.c.h.b16 %v468
        %v1180 = vunpack.c.l.b16 %v469
        %v1181 = vunpack.c.h.b16 %v469
        %v1182 = vunpack.c.l.b16 %v470
        %v1183 = vunpack.c.h.b16 %v470
        %v1184 = vunpack.c.l.b16 %v471
        %v1185 = vunpack.c.h.b16 %v471
        %v1186 = vunpack.c.l.b16 %v472
        %v1187 = vunpack.c.h.b16 %v472
        %v1188 = vunpack.c.l.b16 %v473
        %v1189 = vunpack.c.h.b16 %v473
        %v1190 = vunpack.c.l.b16 %v474
        %v1191 = vunpack.c.h.b16 %v474
        %v1192 = vunpack.c.l.b16 %v475
        %v1193 = vunpack.c.h.b16 %v475
        %v1194 = vunpack.c.l.b16 %v476
        %v1195 = vunpack.c.h.b16 %v476
        %v1196 = vunpack.c.l.b16 %v477
        %v1197 = vunpack.c.h.b16 %v477
        %v1198 = vunpack.c.l.b16 %v478
        %v1199 = vunpack.c.h.b16 %v478
        %v1200 = vunpack.c.l.b16 %v479
        %v1201 = vunpack.c.h.b16 %v479
        %v1202 = vunpack.c.l.b16 %v480
        %v1203 = vunpack.c.h.b16 %v480
        %v1204 = vunpack.c.l.b16 %v481
        %v1205 = vunpack.c.h.b16 %v481
        %v1206 = vunpack.c.l.b16 %v482
        %v1207 = vunpack.c.h.b16 %v482
        %v1208 = vunpack.c.l.b16 %v483
        %v1209 = vunpack.c.h.b16 %v483
        %v1210 = vunpack.c.l.b16 %v484
        %v1211 = vunpack.c.h.b16 %v484
        %v1212 = vunpack.c.l.b16 %v485
        %v1213 = vunpack.c.h.b16 %v485
        %v1214 = vunpack.c.l.b16 %v486
        %v1215 = vunpack.c.h.b16 %v486
        %v1216 = vunpack.c.l.b16 %v487
        %v1217 = vunpack.c.h.b16 %v487
        %v1218 = vunpack.c.l.b16 %v488
        %v1219 = vunpack.c.h.b16 %v488
        %v1220 = vunpack.c.l.b16 %v489
        %v1221 = vunpack.c.h.b16 %v489
        %v1222 = vunpack.c.l.b16 %v490
        %v1223 = vunpack.c.h.b16 %v490
        %v1224 = vunpack.c.l.b16 %v491
        %v1225 = vunpack.c.h.b16 %v491
        %v1226 = vunpack.c.l.b16 %v492
        %v1227 = vunpack.c.h.b16 %v492
        %v1228 = vunpack.c.l.b16 %v493
        %v1229 = vunpack.c.h.b16 %v493
        %v1230 = vunpack.c.l.b16 %v494
        %v1231 = vunpack.c.h.b16 %v494
        %v1232 = vunpack.c.l.b16 %v495
        %v1233 = vunpack.c.h.b16 %v495
        %v1234 = vunpack.c.l.b16 %v496
        %v1235 = vunpack.c.h.b16 %v496
        %v1236 = vunpack.c.l.b16 %v497
        %v1237 = vunpack.c.h.b16 %v497
        %v1238 = vunpack.c.l.b16 %v498
        %v1239 = vunpack.c.h.b16 %v498
        %v1240 = vunpack.c.l.b16 %v499
        %v1241 = vunpack.c.h.b16 %v499
        %v1242 = vunpack.c.l.b16 %v500
        %v1243 = vunpack.c.h.b16 %v500
        %v1244 = vunpack.c.l.b16 %v501
        %v1245 = vunpack.c.h.b16 %v501
        %v1246 = vunpack.c.l.b16 %v502
        %v1247 = vunpack.c.h.b16 %v502
        %v1248 = vunpack.c.l.b16 %v503
        %v1249 = vunpack.c.h.b16 %v503
        %v1250 = vunpack.c.l.b16 %v504
        %v1251 = vunpack.c.h.b16 %v504
        %v1252 = vunpack.c.l.b16 %v505
        %v1253 = vunpack.c.h.b16 %v505
        %v1254 = vunpack.c.l.b16 %v506
        %v1255 = vunpack.c.h.b16 %v506
        %v1256 = vunpack.c.l.b16 %v507
        %v1257 = vunpack.c.h.b16 %v507
        %v1258 = vunpack.c.l.b16 %v508
        %v1259 = vunpack.c.h.b16 %v508
        %v1260 = vunpack.c.l.b16 %v509
        %v1261 = vunpack.c.h.b16 %v509
        %v1262 = vunpack.c.l.b16 %v510
        %v1263 = vunpack.c.h.b16 %v510
        %v1264 = vunpack.c.l.b16 %v511
        %v1265 = vunpack.c.h.b16 %v511
        %v1266 = vunpack.c.l.b16 %v512
        %v1267 = vunpack.c.h.b16 %v512
        %v1268 = vunpack.c.l.b16 %v513
        %v1269 = vunpack.c.h.b16 %v513
        %v1270 = vunpack.c.l.b16 %v514
        %v1271 = vunpack.c.h.b16 %v514
        %v1272 = vunpack.c.l.b16 %v515
        %v1273 = vunpack.c.h.b16 %v515
        %v1274 = vunpack.c.l.b16 %v516
        %v1275 = vunpack.c.h.b16 %v516
        %v1276 = vunpack.c.l.b16 %v517
        %v1277 = vunpack.c.h.b16 %v517
        %v1278 = vunpack.c.l.b16 %v518
        %v1279 = vunpack.c.h.b16 %v518
        %v1280 = vunpack.c.l.b16 %v519
        %v1281 = vunpack.c.h.b16 %v519
        %v1282 = vunpack.c.l.b16 %v520
        %v1283 = vunpack.c.h.b16 %v520
        %v1284 = vunpack.c.l.b16 %v521
        %v1285 = vunpack.c.h.b16 %v521
        %v1286 = vunpack.c.l.b16 %v522
        %v1287 = vunpack.c.h.b16 %v522
        %v1288 = vunpack.c.l.b16 %v523
        %v1289 = vunpack.c.h.b16 %v523
        %v1290 = vunpack.c.l.b16 %v524
        %v1291 = vunpack.c.h.b16 %v524
        %v1292 = vunpack.c.l.b16 %v525
        %v1293 = vunpack.c.h.b16 %v525
        %v1294 = vunpack.c.l.b16 %v526
        %v1295 = vunpack.c.h.b16 %v526
        %v1296 = vunpack.c.l.b16 %v527
        %v1297 = vunpack.c.h.b16 %v527
        %v1298 = vunpack.c.l.b16 %v528
        %v1299 = vunpack.c.h.b16 %v528
        %v1300 = vunpack.c.l.b16 %v529
        %v1301 = vunpack.c.h.b16 %v529
        %v1302 = vunpack.c.l.b16 %v530
        %v1303 = vunpack.c.h.b16 %v530
        %v1304 = vunpack.c.l.b16 %v531
        %v1305 = vunpack.c.h.b16 %v531
        %v1306 = vunpack.c.l.b16 %v532
        %v1307 = vunpack.c.h.b16 %v532
        %v1308 = vunpack.c.l.b16 %v533
        %v1309 = vunpack.c.h.b16 %v533
        %v1310 = vunpack.c.l.b16 %v534
        %v1311 = vunpack.c.h.b16 %v534
        %v1312 = vunpack.c.l.b16 %v535
        %v1313 = vunpack.c.h.b16 %v535
        %v1314 = vunpack.c.l.b16 %v536
        %v1315 = vunpack.c.h.b16 %v536
        %v1316 = vunpack.c.l.b16 %v537
        %v1317 = vunpack.c.h.b16 %v537
        %v1318 = vunpack.c.l.b16 %v538
        %v1319 = vunpack.c.h.b16 %v538
        %v1320 = vunpack.c.l.b16 %v539
        %v1321 = vunpack.c.h.b16 %v539
        %v1322 = vunpack.c.l.b16 %v540
        %v1323 = vunpack.c.h.b16 %v540
        %v1324 = vunpack.c.l.b16 %v541
        %v1325 = vunpack.c.h.b16 %v541
        %v1326 = vunpack.c.l.b16 %v542
        %v1327 = vunpack.c.h.b16 %v542
        %v1328 = vunpack.c.l.b16 %v543
        %v1329 = vunpack.c.h.b16 %v543
        %v1330 = vunpack.c.l.b16 %v544
        %v1331 = vunpack.c.h.b16 %v544
        %v1332 = vunpack.c.l.b16 %v545
        %v1333 = vunpack.c.h.b16 %v545
        %v1334 = vunpack.c.l.b16 %v546
        %v1335 = vunpack.c.h.b16 %v546
        %v1336 = vunpack.c.l.b16 %v547
        %v1337 = vunpack.c.h.b16 %v547
        %v1338 = vunpack.c.l.b16 %v548
        %v1339 = vunpack.c.h.b16 %v548
        %v1340 = vunpack.c.l.b16 %v549
        %v1341 = vunpack.c.h.b16 %v549
        %v1342 = vunpack.c.l.b16 %v550
        %v1343 = vunpack.c.h.b16 %v550
        %v1344 = vunpack.c.l.b16 %v551
        %v1345 = vunpack.c.h.b16 %v551
        %v1346 = vunpack.c.l.b16 %v552
        %v1347 = vunpack.c.h.b16 %v552
        %v1348 = vunpack.c.l.b16 %v553
        %v1349 = vunpack.c.h.b16 %v553
        %v1350 = vunpack.c.l.b16 %v554
        %v1351 = vunpack.c.h.b16 %v554
        %v1352 = vunpack.c.l.b16 %v555
        %v1353 = vunpack.c.h.b16 %v555
        %v1354 = vunpack.c.l.b16 %v556
        %v1355 = vunpack.c.h.b16 %v556
        %v1356 = vunpack.c.l.b16 %v557
        %v1357 = vunpack.c.h.b16 %v557
        %v1358 = vunpack.c.l.b16 %v558
        %v1359 = vunpack.c.h.b16 %v558
        %v1360 = vunpack.c.l.b16 %v559
        %v1361 = vunpack.c.h.b16 %v559
        %v1362 = vunpack.c.l.b16 %v560
        %v1363 = vunpack.c.h.b16 %v560
        %v1364 = vunpack.c.l.b16 %v561
        %v1365 = vunpack.c.h.b16 %v561
        %v1366 = vunpack.c.l.b16 %v562
        %v1367 = vunpack.c.h.b16 %v562
        %v1368 = vunpack.c.l.b16 %v563
        %v1369 = vunpack.c.h.b16 %v563
        %v1370 = vunpack.c.l.b16 %v564
        %v1371 = vunpack.c.h.b16 %v564
        %v1372 = vunpack.c.l.b16 %v565
        %v1373 = vunpack.c.h.b16 %v565
        %v1374 = vunpack.c.l.b16 %v566
        %v1375 = vunpack.c.h.b16 %v566
        %v1376 = vunpack.c.l.b16 %v567
        %v1377 = vunpack.c.h.b16 %v567
        %v1378 = vunpack.c.l.b16 %v568
        %v1379 = vunpack.c.h.b16 %v568
        %v1380 = vunpack.c.l.b16 %v569
        %v1381 = vunpack.c.h.b16 %v569
        %v1382 = vunpack.c.l.b16 %v570
        %v1383 = vunpack.c.h.b16 %v570
        %v1384 = vunpack.c.l.b16 %v571
        %v1385 = vunpack.c.h.b16 %v571
        %v1386 = vunpack.c.l.b16 %v572
        %v1387 = vunpack.c.h.b16 %v572
        %v1388 = vunpack.c.l.b16 %v573
        %v1389 = vunpack.c.h.b16 %v573
        %v1390 = vunpack.c.l.b16 %v574
        %v1391 = vunpack.c.h.b16 %v574
        %v1392 = vunpack.c.l.b16 %v575
        %v1393 = vunpack.c.h.b16 %v575
        %v1394 = vunpack.c.l.b16 %v576
        %v1395 = vunpack.c.h.b16 %v576
        %v1396 = vunpack.c.l.b16 %v577
        %v1397 = vunpack.c.h.b16 %v577
        %v1398 = vunpack.c.l.b16 %v578
        %v1399 = vunpack.c.h.b16 %v578
        %v1400 = vunpack.c.l.b16 %v579
        %v1401 = vunpack.c.h.b16 %v579
        %v1402 = vunpack.c.l.b16 %v580
        %v1403 = vunpack.c.h.b16 %v580
        %v1404 = vunpack.c.l.b16 %v581
        %v1405 = vunpack.c.h.b16 %v581
        %v1406 = vunpack.c.l.b16 %v582
        %v1407 = vunpack.c.h.b16 %v582
        %v1408 = vunpack.c.l.b16 %v583
        %v1409 = vunpack.c.h.b16 %v583
        %v1410 = vpack.c.b16 %v902, %v898
        %v1411 = vpack.c.b16 %v903, %v899
        %v1412 = vpack.c.b16 %v904, %v900
        %v1413 = vpack.c.b16 %v905, %v901
        %v1414 = vpack.c.b16 %v910, %v906
        %v1415 = vpack.c.b16 %v911, %v907
        %v1416 = vpack.c.b16 %v912, %v908
        %v1417 = vpack.c.b16 %v913, %v909
        %v1418 = vpack.c.b16 %v918, %v914
        %v1419 = vpack.c.b16 %v919, %v915
        %v1420 = vpack.c.b16 %v920, %v916
        %v1421 = vpack.c.b16 %v921, %v917
        %v1422 = vpack.c.b16 %v926, %v922
        %v1423 = vpack.c.b16 %v927, %v923
        %v1424 = vpack.c.b16 %v928, %v924
        %v1425 = vpack.c.b16 %v929, %v925
        %v1426 = vpack.c.b16 %v934, %v930
        %v1427 = vpack.c.b16 %v935, %v931
        %v1428 = vpack.c.b16 %v936, %v932
        %v1429 = vpack.c.b16 %v937, %v933
        %v1430 = vpack.c.b16 %v942, %v938
        %v1431 = vpack.c.b16 %v943, %v939
        %v1432 = vpack.c.b16 %v944, %v940
        %v1433 = vpack.c.b16 %v945, %v941
        %v1434 = vpack.c.b16 %v950, %v946
        %v1435 = vpack.c.b16 %v951, %v947
        %v1436 = vpack.c.b16 %v952, %v948
        %v1437 = vpack.c.b16 %v953, %v949
        %v1438 = vpack.c.b16 %v958, %v954
        %v1439 = vpack.c.b16 %v959, %v955
        %v1440 = vpack.c.b16 %v960, %v956
        %v1441 = vpack.c.b16 %v961, %v957
        %v1442 = vpack.c.b16 %v966, %v962
        %v1443 = vpack.c.b16 %v967, %v963
        %v1444 = vpack.c.b16 %v968, %v964
        %v1445 = vpack.c.b16 %v969, %v965
        %v1446 = vpack.c.b16 %v974, %v970
        %v1447 = vpack.c.b16 %v975, %v971
        %v1448 = vpack.c.b16 %v976, %v972
        %v1449 = vpack.c.b16 %v977, %v973
        %v1450 = vpack.c.b16 %v982, %v978
        %v1451 = vpack.c.b16 %v983, %v979
        %v1452 = vpack.c.b16 %v984, %v980
        %v1453 = vpack.c.b16 %v985, %v981
        %v1454 = vpack.c.b16 %v990, %v986
        %v1455 = vpack.c.b16 %v991, %v987
        %v1456 = vpack.c.b16 %v992, %v988
        %v1457 = vpack.c.b16 %v993, %v989
        %v1458 = vpack.c.b16 %v998, %v994
        %v1459 = vpack.c.b16 %v999, %v995
        %v1460 = vpack.c.b16 %v1000, %v996
        %v1461 = vpack.c.b16 %v1001, %v997
        %v1462 = vpack.c.b16 %v1006, %v1002
        %v1463 = vpack.c.b16 %v1007, %v1003
        %v1464 = vpack.c.b16 %v1008, %v1004
        %v1465 = vpack.c.b16 %v1009, %v1005
        %v1466 = vpack.c.b16 %v1014, %v1010
        %v1467 = vpack.c.b16 %v1015, %v1011
        %v1468 = vpack.c.b16 %v1016, %v1012
        %v1469 = vpack.c.b16 %v1017, %v1013
        %v1470 = vpack.c.b16 %v1022, %v1018
        %v1471 = vpack.c.b16 %v1023, %v1019
        %v1472 = vpack.c.b16 %v1024, %v1020
        %v1473 = vpack.c.b16 %v1025, %v1021
        %v1474 = vpack.c.b16 %v1030, %v1026
        %v1475 = vpack.c.b16 %v1031, %v1027
        %v1476 = vpack.c.b16 %v1032, %v1028
        %v1477 = vpack.c.b16 %v1033, %v1029
        %v1478 = vpack.c.b16 %v1038, %v1034
        %v1479 = vpack.c.b16 %v1039, %v1035
        %v1480 = vpack.c.b16 %v1040, %v1036
        %v1481 = vpack.c.b16 %v1041, %v1037
        %v1482 = vpack.c.b16 %v1046, %v1042
        %v1483 = vpack.c.b16 %v1047, %v1043
        %v1484 = vpack.c.b16 %v1048, %v1044
        %v1485 = vpack.c.b16 %v1049, %v1045
        %v1486 = vpack.c.b16 %v1054, %v1050
        %v1487 = vpack.c.b16 %v1055, %v1051
        %v1488 = vpack.c.b16 %v1056, %v1052
        %v1489 = vpack.c.b16 %v1057, %v1053
        %v1490 = vpack.c.b16 %v1062, %v1058
        %v1491 = vpack.c.b16 %v1063, %v1059
        %v1492 = vpack.c.b16 %v1064, %v1060
        %v1493 = vpack.c.b16 %v1065, %v1061
        %v1494 = vpack.c.b16 %v1070, %v1066
        %v1495 = vpack.c.b16 %v1071, %v1067
        %v1496 = vpack.c.b16 %v1072, %v1068
        %v1497 = vpack.c.b16 %v1073, %v1069
        %v1498 = vpack.c.b16 %v1078, %v1074
        %v1499 = vpack.c.b16 %v1079, %v1075
        %v1500 = vpack.c.b16 %v1080, %v1076
        %v1501 = vpack.c.b16 %v1081, %v1077
        %v1502 = vpack.c.b16 %v1086, %v1082
        %v1503 = vpack.c.b16 %v1087, %v1083
        %v1504 = vpack.c.b16 %v1088, %v1084
        %v1505 = vpack.c.b16 %v1089, %v1085
        %v1506 = vpack.c.b16 %v1094, %v1090
        %v1507 = vpack.c.b16 %v1095, %v1091
        %v1508 = vpack.c.b16 %v1096, %v1092
        %v1509 = vpack.c.b16 %v1097, %v1093
        %v1510 = vpack.c.b16 %v1102, %v1098
        %v1511 = vpack.c.b16 %v1103, %v1099
        %v1512 = vpack.c.b16 %v1104, %v1100
        %v1513 = vpack.c.b16 %v1105, %v1101
        %v1514 = vpack.c.b16 %v1110, %v1106
        %v1515 = vpack.c.b16 %v1111, %v1107
        %v1516 = vpack.c.b16 %v1112, %v1108
        %v1517 = vpack.c.b16 %v1113, %v1109
        %v1518 = vpack.c.b16 %v1118, %v1114
        %v1519 = vpack.c.b16 %v1119, %v1115
        %v1520 = vpack.c.b16 %v1120, %v1116
        %v1521 = vpack.c.b16 %v1121, %v1117
        %v1522 = vpack.c.b16 %v1126, %v1122
        %v1523 = vpack.c.b16 %v1127, %v1123
        %v1524 = vpack.c.b16 %v1128, %v1124
        %v1525 = vpack.c.b16 %v1129, %v1125
        %v1526 = vpack.c.b16 %v1134, %v1130
        %v1527 = vpack.c.b16 %v1135, %v1131
        %v1528 = vpack.c.b16 %v1136, %v1132
        %v1529 = vpack.c.b16 %v1137, %v1133
        %v1530 = vpack.c.b16 %v1142, %v1138
        %v1531 = vpack.c.b16 %v1143, %v1139
        %v1532 = vpack.c.b16 %v1144, %v1140
        %v1533 = vpack.c.b16 %v1145, %v1141
        %v1534 = vpack.c.b16 %v1150, %v1146
        %v1535 = vpack.c.b16 %v1151, %v1147
        %v1536 = vpack.c.b16 %v1152, %v1148
        %v1537 = vpack.c.b16 %v1153, %v1149
        %v1538 = vpack.c.b16 %v1158, %v1154
        %v1539 = vpack.c.b16 %v1159, %v1155
        %v1540 = vpack.c.b16 %v1160, %v1156
        %v1541 = vpack.c.b16 %v1161, %v1157
        %v1542 = vpack.c.b16 %v1166, %v1162
        %v1543 = vpack.c.b16 %v1167, %v1163
        %v1544 = vpack.c.b16 %v1168, %v1164
        %v1545 = vpack.c.b16 %v1169, %v1165
        %v1546 = vpack.c.b16 %v1174, %v1170
        %v1547 = vpack.c.b16 %v1175, %v1171
        %v1548 = vpack.c.b16 %v1176, %v1172
        %v1549 = vpack.c.b16 %v1177, %v1173
        %v1550 = vpack.c.b16 %v1182, %v1178
        %v1551 = vpack.c.b16 %v1183, %v1179
        %v1552 = vpack.c.b16 %v1184, %v1180
        %v1553 = vpack.c.b16 %v1185, %v1181
        %v1554 = vpack.c.b16 %v1190, %v1186
        %v1555 = vpack.c.b16 %v1191, %v1187
        %v1556 = vpack.c.b16 %v1192, %v1188
        %v1557 = vpack.c.b16 %v1193, %v1189
        %v1558 = vpack.c.b16 %v1198, %v1194
        %v1559 = vpack.c.b16 %v1199, %v1195
        %v1560 = vpack.c.b16 %v1200, %v1196
        %v1561 = vpack.c.b16 %v1201, %v1197
        %v1562 = vpack.c.b16 %v1206, %v1202
        %v1563 = vpack.c.b16 %v1207, %v1203
        %v1564 = vpack.c.b16 %v1208, %v1204
        %v1565 = vpack.c.b16 %v1209, %v1205
        %v1566 = vpack.c.b16 %v1214, %v1210
        %v1567 = vpack.c.b16 %v1215, %v1211
        %v1568 = vpack.c.b16 %v1216, %v1212
        %v1569 = vpack.c.b16 %v1217, %v1213
        %v1570 = vpack.c.b16 %v1222, %v1218
        %v1571 = vpack.c.b16 %v1223, %v1219
        %v1572 = vpack.c.b16 %v1224, %v1220
        %v1573 = vpack.c.b16 %v1225, %v1221
        %v1574 = vpack.c.b16 %v1230, %v1226
        %v1575 = vpack.c.b16 %v1231, %v1227
        %v1576 = vpack.c.b16 %v1232, %v1228
        %v1577 = vpack.c.b16 %v1233, %v1229
        %v1578 = vpack.c.b16 %v1238, %v1234
        %v1579 = vpack.c.b16 %v1239, %v1235
        %v1580 = vpack.c.b16 %v1240, %v1236
        %v1581 = vpack.c.b16 %v1241, %v1237
        %v1582 = vpack.c.b16 %v1246, %v1242
        %v1583 = vpack.c.b16 %v1247, %v1243
        %v1584 = vpack.c.b16 %v1248, %v1244
        %v1585 = vpack.c.b16 %v1249, %v1245
        %v1586 = vpack.c.b16 %v1254, %v1250
        %v1587 = vpack.c.b16 %v1255, %v1251
        %v1588 = vpack.c.b16 %v1256, %v1252
        %v1589 = vpack.c.b16 %v1257, %v1253
        %v1590 = vpack.c.b16 %v1262, %v1258
        %v1591 = vpack.c.b16 %v1263, %v1259
        %v1592 = vpack.c.b16 %v1264, %v1260
        %v1593 = vpack.c.b16 %v1265, %v1261
        %v1594 = vpack.c.b16 %v1270, %v1266
        %v1595 = vpack.c.b16 %v1271, %v1267
        %v1596 = vpack.c.b16 %v1272, %v1268
        %v1597 = vpack.c.b16 %v1273, %v1269
        %v1598 = vpack.c.b16 %v1278, %v1274
        %v1599 = vpack.c.b16 %v1279, %v1275
        %v1600 = vpack.c.b16 %v1280, %v1276
        %v1601 = vpack.c.b16 %v1281, %v1277
        %v1602 = vpack.c.b16 %v1286, %v1282
        %v1603 = vpack.c.b16 %v1287, %v1283
        %v1604 = vpack.c.b16 %v1288, %v1284
        %v1605 = vpack.c.b16 %v1289, %v1285
        %v1606 = vpack.c.b16 %v1294, %v1290
        %v1607 = vpack.c.b16 %v1295, %v1291
        %v1608 = vpack.c.b16 %v1296, %v1292
        %v1609 = vpack.c.b16 %v1297, %v1293
        %v1610 = vpack.c.b16 %v1302, %v1298
        %v1611 = vpack.c.b16 %v1303, %v1299
        %v1612 = vpack.c.b16 %v1304, %v1300
        %v1613 = vpack.c.b16 %v1305, %v1301
        %v1614 = vpack.c.b16 %v1310, %v1306
        %v1615 = vpack.c.b16 %v1311, %v1307
        %v1616 = vpack.c.b16 %v1312, %v1308
        %v1617 = vpack.c.b16 %v1313, %v1309
        %v1618 = vpack.c.b16 %v1318, %v1314
        %v1619 = vpack.c.b16 %v1319, %v1315
        %v1620 = vpack.c.b16 %v1320, %v1316
        %v1621 = vpack.c.b16 %v1321, %v1317
        %v1622 = vpack.c.b16 %v1326, %v1322
        %v1623 = vpack.c.b16 %v1327, %v1323
        %v1624 = vpack.c.b16 %v1328, %v1324
        %v1625 = vpack.c.b16 %v1329, %v1325
        %v1626 = vpack.c.b16 %v1334, %v1330
        %v1627 = vpack.c.b16 %v1335, %v1331
        %v1628 = vpack.c.b16 %v1336, %v1332
        %v1629 = vpack.c.b16 %v1337, %v1333
        %v1630 = vpack.c.b16 %v1342, %v1338
        %v1631 = vpack.c.b16 %v1343, %v1339
        %v1632 = vpack.c.b16 %v1344, %v1340
        %v1633 = vpack.c.b16 %v1345, %v1341
        %v1634 = vpack.c.b16 %v1350, %v1346
        %v1635 = vpack.c.b16 %v1351, %v1347
        %v1636 = vpack.c.b16 %v1352, %v1348
        %v1637 = vpack.c.b16 %v1353, %v1349
        %v1638 = vpack.c.b16 %v1358, %v1354
        %v1639 = vpack.c.b16 %v1359, %v1355
        %v1640 = vpack.c.b16 %v1360, %v1356
        %v1641 = vpack.c.b16 %v1361, %v1357
        %v1642 = vpack.c.b16 %v1366, %v1362
        %v1643 = vpack.c.b16 %v1367, %v1363
        %v1644 = vpack.c.b16 %v1368, %v1364
        %v1645 = vpack.c.b16 %v1369, %v1365
        %v1646 = vpack.c.b16 %v1374, %v1370
        %v1647 = vpack.c.b16 %v1375, %v1371
        %v1648 = vpack.c.b16 %v1376, %v1372
        %v1649 = vpack.c.b16 %v1377, %v1373
        %v1650 = vpack.c.b16 %v1382, %v1378
        %v1651 = vpack.c.b16 %v1383, %v1379
        %v1652 = vpack.c.b16 %v1384, %v1380
        %v1653 = vpack.c.b16 %v1385, %v1381
        %v1654 = vpack.c.b16 %v1390, %v1386
        %v1655 = vpack.c.b16 %v1391, %v1387
        %v1656 = vpack.c.b16 %v1392, %v1388
        %v1657 = vpack.c.b16 %v1393, %v1389
        %v1658 = vpack.c.b16 %v1398, %v1394
        %v1659 = vpack.c.b16 %v1399, %v1395
        %v1660 = vpack.c.b16 %v1400, %v1396
        %v1661 = vpack.c.b16 %v1401, %v1397
        %v1662 = vpack.c.b16 %v1406, %v1402
        %v1663 = vpack.c.b16 %v1407, %v1403
        %v1664 = vpack.c.b16 %v1408, %v1404
        %v1665 = vpack.c.b16 %v1409, %v1405
        %1922 = vmatprep.subr.bf16.mxu0 %v1439
        %1923 = vmatpush1.bf16.msra.mxu0 %v1438
        %1924 = vmatprep.subr.bf16.mxu0 %v1435
        %1925 = vmatpush1.bf16.msra.mxu0 %v1434
        %1926 = vmatprep.subr.bf16.mxu0 %v1431
        %1927 = vmatpush1.bf16.msra.mxu0 %v1430
        %1928 = vmatprep.subr.bf16.mxu0 %v1427
        %1929 = vmatpush1.bf16.msra.mxu0 %v1426
        %1930 = vmatprep.subr.bf16.mxu0 %v1423
        %1931 = vmatpush1.bf16.msra.mxu0 %v1422
        %1932 = vmatprep.subr.bf16.mxu0 %v1419
        %1933 = vmatpush1.bf16.msra.mxu0 %v1418
        %1934 = vmatprep.subr.bf16.mxu0 %v1415
        %1935 = vmatpush1.bf16.msra.mxu0 %v1414
        %1936 = vmatprep.subr.bf16.mxu0 %v1411
        %1937 = vmatpush1.bf16.msra.mxu0 %v1410
        %1938 = vmatprep.subr.bf16.mxu0 %v1471
        %1939 = vmatpush2.bf16.msra.mxu0 %v1470
        %1940 = vmatprep.subr.bf16.mxu0 %v1467
        %1941 = vmatpush2.bf16.msra.mxu0 %v1466
        %1942 = vmatprep.subr.bf16.mxu0 %v1463
        %1943 = vmatpush2.bf16.msra.mxu0 %v1462
        %1944 = vmatprep.subr.bf16.mxu0 %v1459
        %1945 = vmatpush2.bf16.msra.mxu0 %v1458
        %1946 = vmatprep.subr.bf16.mxu0 %v1455
        %1947 = vmatpush2.bf16.msra.mxu0 %v1454
        %1948 = vmatprep.subr.bf16.mxu0 %v1451
        %1949 = vmatpush2.bf16.msra.mxu0 %v1450
        %1950 = vmatprep.subr.bf16.mxu0 %v1447
        %1951 = vmatpush2.bf16.msra.mxu0 %v1446
        %1952 = vmatprep.subr.bf16.mxu0 %v1443
        %1953 = vmatpush2.bf16.msra.mxu0 %v1442
        %1954 = vmatprep.mubr.bf16.mxu0 %v622
        %1955 = vmatmul.mubr.bf16.gmra.mxu0 %v608
        %v1956 = vpop.f32.mrf.mxu0
        %v1957 = vadd.f32 0.0, %v1956
        %v1958 = vpop.f32.mrf.mxu0
        %v1959 = vadd.f32 0.0, %v1958
        %v1960 = vpop.f32.mrf.mxu0
        %v1961 = vpop.f32.mrf.mxu0
        %1962 = vdwg.mxu0
        %1963 = vmatprep.subr.bf16.mxu0 %v1503
        %1964 = vmatpush1.bf16.msra.mxu0 %v1502
        %1965 = vmatprep.subr.bf16.mxu0 %v1499
        %1966 = vmatpush1.bf16.msra.mxu0 %v1498
        %1967 = vmatprep.subr.bf16.mxu0 %v1495
        %1968 = vmatpush1.bf16.msra.mxu0 %v1494
        %1969 = vmatprep.subr.bf16.mxu0 %v1491
        %1970 = vmatpush1.bf16.msra.mxu0 %v1490
        %1971 = vmatprep.subr.bf16.mxu0 %v1487
        %1972 = vmatpush1.bf16.msra.mxu0 %v1486
        %1973 = vmatprep.subr.bf16.mxu0 %v1483
        %1974 = vmatpush1.bf16.msra.mxu0 %v1482
        %1975 = vmatprep.subr.bf16.mxu0 %v1479
        %1976 = vmatpush1.bf16.msra.mxu0 %v1478
        %1977 = vmatprep.subr.bf16.mxu0 %v1475
        %1978 = vmatpush1.bf16.msra.mxu0 %v1474
        %1979 = vmatprep.subr.bf16.mxu0 %v1535
        %1980 = vmatpush2.bf16.msra.mxu0 %v1534
        %1981 = vmatprep.subr.bf16.mxu0 %v1531
        %1982 = vmatpush2.bf16.msra.mxu0 %v1530
        %1983 = vmatprep.subr.bf16.mxu0 %v1527
        %1984 = vmatpush2.bf16.msra.mxu0 %v1526
        %1985 = vmatprep.subr.bf16.mxu0 %v1523
        %1986 = vmatpush2.bf16.msra.mxu0 %v1522
        %1987 = vmatprep.subr.bf16.mxu0 %v1519
        %1988 = vmatpush2.bf16.msra.mxu0 %v1518
        %1989 = vmatprep.subr.bf16.mxu0 %v1515
        %1990 = vmatpush2.bf16.msra.mxu0 %v1514
        %1991 = vmatprep.subr.bf16.mxu0 %v1511
        %1992 = vmatpush2.bf16.msra.mxu0 %v1510
        %1993 = vmatprep.subr.bf16.mxu0 %v1507
        %1994 = vmatpush2.bf16.msra.mxu0 %v1506
        %1995 = vmatprep.mubr.bf16.mxu0 %v632
        %1996 = vmatmul.mubr.bf16.gmra.mxu0 %v630
        %v1997 = vpop.f32.mrf.mxu0
        %v1998 = vadd.f32 %v1957, %v1997
        %v1999 = vpop.f32.mrf.mxu0
        %v2000 = vadd.f32 %v1959, %v1999
        %v2001 = vpop.f32.mrf.mxu0
        %v2002 = vpop.f32.mrf.mxu0
        %2003 = vdwg.mxu0
        %2004 = vmatprep.subr.bf16.mxu0 %v1567
        %2005 = vmatpush1.bf16.msra.mxu0 %v1566
        %2006 = vmatprep.subr.bf16.mxu0 %v1563
        %2007 = vmatpush1.bf16.msra.mxu0 %v1562
        %2008 = vmatprep.subr.bf16.mxu0 %v1559
        %2009 = vmatpush1.bf16.msra.mxu0 %v1558
        %2010 = vmatprep.subr.bf16.mxu0 %v1555
        %2011 = vmatpush1.bf16.msra.mxu0 %v1554
        %2012 = vmatprep.subr.bf16.mxu0 %v1551
        %2013 = vmatpush1.bf16.msra.mxu0 %v1550
        %2014 = vmatprep.subr.bf16.mxu0 %v1547
        %2015 = vmatpush1.bf16.msra.mxu0 %v1546
        %2016 = vmatprep.subr.bf16.mxu0 %v1543
        %2017 = vmatpush1.bf16.msra.mxu0 %v1542
        %2018 = vmatprep.subr.bf16.mxu0 %v1539
        %2019 = vmatpush1.bf16.msra.mxu0 %v1538
        %2020 = vmatprep.subr.bf16.mxu0 %v1599
        %2021 = vmatpush2.bf16.msra.mxu0 %v1598
        %2022 = vmatprep.subr.bf16.mxu0 %v1595
        %2023 = vmatpush2.bf16.msra.mxu0 %v1594
        %2024 = vmatprep.subr.bf16.mxu0 %v1591
        %2025 = vmatpush2.bf16.msra.mxu0 %v1590
        %2026 = vmatprep.subr.bf16.mxu0 %v1587
        %2027 = vmatpush2.bf16.msra.mxu0 %v1586
        %2028 = vmatprep.subr.bf16.mxu0 %v1583
        %2029 = vmatpush2.bf16.msra.mxu0 %v1582
        %2030 = vmatprep.subr.bf16.mxu0 %v1579
        %2031 = vmatpush2.bf16.msra.mxu0 %v1578
        %2032 = vmatprep.subr.bf16.mxu0 %v1575
        %2033 = vmatpush2.bf16.msra.mxu0 %v1574
        %2034 = vmatprep.subr.bf16.mxu0 %v1571
        %2035 = vmatpush2.bf16.msra.mxu0 %v1570
        %2036 = vmatprep.mubr.bf16.mxu0 %v629
        %2037 = vmatmul.mubr.bf16.gmra.mxu0 %v615
        %v2038 = vpop.f32.mrf.mxu0
        %v2039 = vadd.f32 %v1998, %v2038
        %v2040 = vpop.f32.mrf.mxu0
        %v2041 = vadd.f32 %v2000, %v2040
        %v2042 = vpop.f32.mrf.mxu0
        %v2043 = vpop.f32.mrf.mxu0
        %2044 = vdwg.mxu0
        %2045 = vmatprep.subr.bf16.mxu0 %v1631
        %2046 = vmatpush1.bf16.msra.mxu0 %v1630
        %2047 = vmatprep.subr.bf16.mxu0 %v1627
        %2048 = vmatpush1.bf16.msra.mxu0 %v1626
        %2049 = vmatprep.subr.bf16.mxu0 %v1623
        %2050 = vmatpush1.bf16.msra.mxu0 %v1622
        %2051 = vmatprep.subr.bf16.mxu0 %v1619
        %2052 = vmatpush1.bf16.msra.mxu0 %v1618
        %2053 = vmatprep.subr.bf16.mxu0 %v1615
        %2054 = vmatpush1.bf16.msra.mxu0 %v1614
        %2055 = vmatprep.subr.bf16.mxu0 %v1611
        %2056 = vmatpush1.bf16.msra.mxu0 %v1610
        %2057 = vmatprep.subr.bf16.mxu0 %v1607
        %2058 = vmatpush1.bf16.msra.mxu0 %v1606
        %2059 = vmatprep.subr.bf16.mxu0 %v1603
        %2060 = vmatpush1.bf16.msra.mxu0 %v1602
        %2061 = vmatprep.subr.bf16.mxu0 %v1663
        %2062 = vmatpush2.bf16.msra.mxu0 %v1662
        %2063 = vmatprep.subr.bf16.mxu0 %v1659
        %2064 = vmatpush2.bf16.msra.mxu0 %v1658
        %2065 = vmatprep.subr.bf16.mxu0 %v1655
        %2066 = vmatpush2.bf16.msra.mxu0 %v1654
        %2067 = vmatprep.subr.bf16.mxu0 %v1651
        %2068 = vmatpush2.bf16.msra.mxu0 %v1650
        %2069 = vmatprep.subr.bf16.mxu0 %v1647
        %2070 = vmatpush2.bf16.msra.mxu0 %v1646
        %2071 = vmatprep.subr.bf16.mxu0 %v1643
        %2072 = vmatpush2.bf16.msra.mxu0 %v1642
        %2073 = vmatprep.subr.bf16.mxu0 %v1639
        %2074 = vmatpush2.bf16.msra.mxu0 %v1638
        %2075 = vmatprep.subr.bf16.mxu0 %v1635
        %2076 = vmatpush2.bf16.msra.mxu0 %v1634
        %2077 = vmatprep.mubr.bf16.mxu0 %v633
        %2078 = vmatmul.mubr.bf16.gmra.mxu0 %v631
        %v2079 = vpop.f32.mrf.mxu0
        %v2080 = vadd.f32 %v2039, %v2079
        %v2081 = vpop.f32.mrf.mxu0
        %v2082 = vadd.f32 %v2041, %v2081
        %v2083 = vpop.f32.mrf.mxu0
        %v2084 = vpop.f32.mrf.mxu0
        %2085 = vdwg.mxu0
        %2086 = vmatprep.subr.bf16.mxu0 %v1441
        %2087 = vmatpush1.bf16.msra.mxu0 %v1440
        %2088 = vmatprep.subr.bf16.mxu0 %v1437
        %2089 = vmatpush1.bf16.msra.mxu0 %v1436
        %2090 = vmatprep.subr.bf16.mxu0 %v1433
        %2091 = vmatpush1.bf16.msra.mxu0 %v1432
        %2092 = vmatprep.subr.bf16.mxu0 %v1429
        %2093 = vmatpush1.bf16.msra.mxu0 %v1428
        %2094 = vmatprep.subr.bf16.mxu0 %v1425
        %2095 = vmatpush1.bf16.msra.mxu0 %v1424
        %2096 = vmatprep.subr.bf16.mxu0 %v1421
        %2097 = vmatpush1.bf16.msra.mxu0 %v1420
        %2098 = vmatprep.subr.bf16.mxu0 %v1417
        %2099 = vmatpush1.bf16.msra.mxu0 %v1416
        %2100 = vmatprep.subr.bf16.mxu0 %v1413
        %2101 = vmatpush1.bf16.msra.mxu0 %v1412
        %2102 = vmatprep.subr.bf16.mxu0 %v1473
        %2103 = vmatpush2.bf16.msra.mxu0 %v1472
        %2104 = vmatprep.subr.bf16.mxu0 %v1469
        %2105 = vmatpush2.bf16.msra.mxu0 %v1468
        %2106 = vmatprep.subr.bf16.mxu0 %v1465
        %2107 = vmatpush2.bf16.msra.mxu0 %v1464
        %2108 = vmatprep.subr.bf16.mxu0 %v1461
        %2109 = vmatpush2.bf16.msra.mxu0 %v1460
        %2110 = vmatprep.subr.bf16.mxu0 %v1457
        %2111 = vmatpush2.bf16.msra.mxu0 %v1456
        %2112 = vmatprep.subr.bf16.mxu0 %v1453
        %2113 = vmatpush2.bf16.msra.mxu0 %v1452
        %2114 = vmatprep.subr.bf16.mxu0 %v1449
        %2115 = vmatpush2.bf16.msra.mxu0 %v1448
        %2116 = vmatprep.subr.bf16.mxu0 %v1445
        %2117 = vmatpush2.bf16.msra.mxu0 %v1444
        %2118 = vmatprep.mubr.bf16.mxu0 %v622
        %2119 = vmatmul.mubr.bf16.gmra.mxu0 %v608
        %v2120 = vpop.f32.mrf.mxu0
        %v2121 = vadd.f32 0.0, %v2120
        %v2122 = vpop.f32.mrf.mxu0
        %v2123 = vadd.f32 0.0, %v2122
        %v2124 = vpop.f32.mrf.mxu0
        %v2125 = vpop.f32.mrf.mxu0
        %2126 = vdwg.mxu0
        %2127 = vmatprep.subr.bf16.mxu0 %v1505
        %2128 = vmatpush1.bf16.msra.mxu0 %v1504
        %2129 = vmatprep.subr.bf16.mxu0 %v1501
        %2130 = vmatpush1.bf16.msra.mxu0 %v1500
        %2131 = vmatprep.subr.bf16.mxu0 %v1497
        %2132 = vmatpush1.bf16.msra.mxu0 %v1496
        %2133 = vmatprep.subr.bf16.mxu0 %v1493
        %2134 = vmatpush1.bf16.msra.mxu0 %v1492
        %2135 = vmatprep.subr.bf16.mxu0 %v1489
        %2136 = vmatpush1.bf16.msra.mxu0 %v1488
        %2137 = vmatprep.subr.bf16.mxu0 %v1485
        %2138 = vmatpush1.bf16.msra.mxu0 %v1484
        %2139 = vmatprep.subr.bf16.mxu0 %v1481
        %2140 = vmatpush1.bf16.msra.mxu0 %v1480
        %2141 = vmatprep.subr.bf16.mxu0 %v1477
        %2142 = vmatpush1.bf16.msra.mxu0 %v1476
        %2143 = vmatprep.subr.bf16.mxu0 %v1537
        %2144 = vmatpush2.bf16.msra.mxu0 %v1536
        %2145 = vmatprep.subr.bf16.mxu0 %v1533
        %2146 = vmatpush2.bf16.msra.mxu0 %v1532
        %2147 = vmatprep.subr.bf16.mxu0 %v1529
        %2148 = vmatpush2.bf16.msra.mxu0 %v1528
        %2149 = vmatprep.subr.bf16.mxu0 %v1525
        %2150 = vmatpush2.bf16.msra.mxu0 %v1524
        %2151 = vmatprep.subr.bf16.mxu0 %v1521
        %2152 = vmatpush2.bf16.msra.mxu0 %v1520
        %2153 = vmatprep.subr.bf16.mxu0 %v1517
        %2154 = vmatpush2.bf16.msra.mxu0 %v1516
        %2155 = vmatprep.subr.bf16.mxu0 %v1513
        %2156 = vmatpush2.bf16.msra.mxu0 %v1512
        %2157 = vmatprep.subr.bf16.mxu0 %v1509
        %2158 = vmatpush2.bf16.msra.mxu0 %v1508
        %2159 = vmatprep.mubr.bf16.mxu0 %v632
        %2160 = vmatmul.mubr.bf16.gmra.mxu0 %v630
        %v2161 = vpop.f32.mrf.mxu0
        %v2162 = vadd.f32 %v2121, %v2161
        %v2163 = vpop.f32.mrf.mxu0
        %v2164 = vadd.f32 %v2123, %v2163
        %v2165 = vpop.f32.mrf.mxu0
        %v2166 = vpop.f32.mrf.mxu0
        %2167 = vdwg.mxu0
        %2168 = vmatprep.subr.bf16.mxu0 %v1569
        %2169 = vmatpush1.bf16.msra.mxu0 %v1568
        %2170 = vmatprep.subr.bf16.mxu0 %v1565
        %2171 = vmatpush1.bf16.msra.mxu0 %v1564
        %2172 = vmatprep.subr.bf16.mxu0 %v1561
        %2173 = vmatpush1.bf16.msra.mxu0 %v1560
        %2174 = vmatprep.subr.bf16.mxu0 %v1557
        %2175 = vmatpush1.bf16.msra.mxu0 %v1556
        %2176 = vmatprep.subr.bf16.mxu0 %v1553
        %2177 = vmatpush1.bf16.msra.mxu0 %v1552
        %2178 = vmatprep.subr.bf16.mxu0 %v1549
        %2179 = vmatpush1.bf16.msra.mxu0 %v1548
        %2180 = vmatprep.subr.bf16.mxu0 %v1545
        %2181 = vmatpush1.bf16.msra.mxu0 %v1544
        %2182 = vmatprep.subr.bf16.mxu0 %v1541
        %2183 = vmatpush1.bf16.msra.mxu0 %v1540
        %2184 = vmatprep.subr.bf16.mxu0 %v1601
        %2185 = vmatpush2.bf16.msra.mxu0 %v1600
        %2186 = vmatprep.subr.bf16.mxu0 %v1597
        %2187 = vmatpush2.bf16.msra.mxu0 %v1596
        %2188 = vmatprep.subr.bf16.mxu0 %v1593
        %2189 = vmatpush2.bf16.msra.mxu0 %v1592
        %2190 = vmatprep.subr.bf16.mxu0 %v1589
        %2191 = vmatpush2.bf16.msra.mxu0 %v1588
        %2192 = vmatprep.subr.bf16.mxu0 %v1585
        %2193 = vmatpush2.bf16.msra.mxu0 %v1584
        %2194 = vmatprep.subr.bf16.mxu0 %v1581
        %2195 = vmatpush2.bf16.msra.mxu0 %v1580
        %2196 = vmatprep.subr.bf16.mxu0 %v1577
        %2197 = vmatpush2.bf16.msra.mxu0 %v1576
        %2198 = vmatprep.subr.bf16.mxu0 %v1573
        %2199 = vmatpush2.bf16.msra.mxu0 %v1572
        %2200 = vmatprep.mubr.bf16.mxu0 %v629
        %2201 = vmatmul.mubr.bf16.gmra.mxu0 %v615
        %v2202 = vpop.f32.mrf.mxu0
        %v2203 = vadd.f32 %v2162, %v2202
        %v2204 = vpop.f32.mrf.mxu0
        %v2205 = vadd.f32 %v2164, %v2204
        %v2206 = vpop.f32.mrf.mxu0
        %v2207 = vpop.f32.mrf.mxu0
        %2208 = vdwg.mxu0
        %2209 = vmatprep.subr.bf16.mxu0 %v1633
        %2210 = vmatpush1.bf16.msra.mxu0 %v1632
        %2211 = vmatprep.subr.bf16.mxu0 %v1629
        %2212 = vmatpush1.bf16.msra.mxu0 %v1628
        %2213 = vmatprep.subr.bf16.mxu0 %v1625
        %2214 = vmatpush1.bf16.msra.mxu0 %v1624
        %2215 = vmatprep.subr.bf16.mxu0 %v1621
        %2216 = vmatpush1.bf16.msra.mxu0 %v1620
        %2217 = vmatprep.subr.bf16.mxu0 %v1617
        %2218 = vmatpush1.bf16.msra.mxu0 %v1616
        %2219 = vmatprep.subr.bf16.mxu0 %v1613
        %2220 = vmatpush1.bf16.msra.mxu0 %v1612
        %2221 = vmatprep.subr.bf16.mxu0 %v1609
        %2222 = vmatpush1.bf16.msra.mxu0 %v1608
        %2223 = vmatprep.subr.bf16.mxu0 %v1605
        %2224 = vmatpush1.bf16.msra.mxu0 %v1604
        %2225 = vmatprep.subr.bf16.mxu0 %v1665
        %2226 = vmatpush2.bf16.msra.mxu0 %v1664
        %2227 = vmatprep.subr.bf16.mxu0 %v1661
        %2228 = vmatpush2.bf16.msra.mxu0 %v1660
        %2229 = vmatprep.subr.bf16.mxu0 %v1657
        %2230 = vmatpush2.bf16.msra.mxu0 %v1656
        %2231 = vmatprep.subr.bf16.mxu0 %v1653
        %2232 = vmatpush2.bf16.msra.mxu0 %v1652
        %2233 = vmatprep.subr.bf16.mxu0 %v1649
        %2234 = vmatpush2.bf16.msra.mxu0 %v1648
        %2235 = vmatprep.subr.bf16.mxu0 %v1645
        %2236 = vmatpush2.bf16.msra.mxu0 %v1644
        %2237 = vmatprep.subr.bf16.mxu0 %v1641
        %2238 = vmatpush2.bf16.msra.mxu0 %v1640
        %2239 = vmatprep.subr.bf16.mxu0 %v1637
        %2240 = vmatpush2.bf16.msra.mxu0 %v1636
        %2241 = vmatprep.mubr.bf16.mxu0 %v633
        %2242 = vmatmul.mubr.bf16.gmra.mxu0 %v631
        %v2243 = vpop.f32.mrf.mxu0
        %v2244 = vadd.f32 %v2203, %v2243
        %v2245 = vpop.f32.mrf.mxu0
        %v2246 = vadd.f32 %v2205, %v2245
        %v2247 = vpop.f32.mrf.mxu0
        %v2248 = vpop.f32.mrf.mxu0
        %2249 = vdwg.mxu0
        %v2254 = vcombine.low %v2080, %v2082
        %v2255 = vcombine.low %v2244, %v2246
        %v2257 = vunpack.c.l.s4 1983009808
        %v2258 = vunpack.c.0.s8 %v2257
        %v2259 = vlaneseq
        %v2260 = vshrl.u32 %v2259, 7
        %v2261 = vsub.s32 %v2258, %v2260
        %v2262 = vrot.slane %v2254, %v2261
        %v2264 = vunpack.c.l.s4 1983009808
        %v2265 = vunpack.c.0.s8 %v2264
        %v2266 = vlaneseq
        %v2267 = vshrl.u32 %v2266, 7
        %v2268 = vsub.s32 %v2265, %v2267
        %v2269 = vrot.slane %v2255, %v2268
        %v2270 = vcombine.low %v2262, %v2269
        %v2272 = vadd.f32 %v326, %v2270
        %2273 = vst [vmem:[#allocation2] sm:$0xff] %v2272
        %p2274 = scmp.eq.s32.totalorder %s24, 3
        // Predicated region
        $region53: #{forward.13} parent=47 // pred_check
          %p2275 = pneg %p2274
        $region54: #{forward.13} parent=47 // pred_check_branch
          %2277 = sbr.rel (%p2275) target = $region56
        $region55: #{forward.13} parent=47 // pred_region
          %v2278 = vld [vmem:[#allocation2] sm:$0xff]
          %v2279 = vld [vmem:[%s2] sm:$0xf]
          %v2281 = vlaneseq
          %v2282 = vshrl.u32 %v2281, 7
          %v2283 = vsub.s32 0, %v2282
          %v2284 = vrot.slane %v2279, %v2283
          %v2285 = vlaneseq
          %v2286 = vshrl.u32 %v2285, 7
          %v2287 = vsub.s32 1, %v2286
          %v2288 = vrot.slane %v2279, %v2287
          %v2289 = vlaneseq
          %v2290 = vshrl.u32 %v2289, 7
          %v2291 = vsub.s32 2, %v2290
          %v2292 = vrot.slane %v2279, %v2291
          %v2293 = vlaneseq
          %v2294 = vshrl.u32 %v2293, 7
          %v2295 = vsub.s32 3, %v2294
          %v2296 = vrot.slane %v2279, %v2295
          %v2297 = vcombine.low %v2284, %v2288
          %v2298 = vcombine.low %v2292, %v2296
          %v2300 = vunpack.c.l.s4 1983009808
          %v2301 = vunpack.c.0.s8 %v2300
          %v2302 = vlaneseq
          %v2303 = vshrl.u32 %v2302, 7
          %v2304 = vsub.s32 %v2301, %v2303
          %v2305 = vrot.slane %v2297, %v2304
          %v2307 = vunpack.c.l.s4 1983009808
          %v2308 = vunpack.c.0.s8 %v2307
          %v2309 = vlaneseq
          %v2310 = vshrl.u32 %v2309, 7
          %v2311 = vsub.s32 %v2308, %v2310
          %v2312 = vrot.slane %v2298, %v2311
          %v2313 = vcombine.low %v2305, %v2312
          %v2315 = vadd.f32 %v2278, %v2313
          %v2316 = vmax.f32 %v2315, 0.0
          %v2318 = vcombine.high %v2316, %v2316
          %v2320 = vunpack.c.l.s4 1983009808
          %v2321 = vunpack.c.0.s8 %v2320
          %v2322 = vlaneseq
          %v2323 = vshrl.u32 %v2322, 7
          %v2324 = vsub.s32 %v2321, %v2323
          %v2325 = vrot.slane %v2316, %v2324
          %v2327 = vunpack.c.l.s4 1983009808
          %v2328 = vunpack.c.0.s8 %v2327
          %v2329 = vlaneseq
          %v2330 = vshrl.u32 %v2329, 7
          %v2331 = vsub.s32 %v2328, %v2330
          %v2332 = vrot.slane %v2318, %v2331
          %v2333 = vcombine.high %v2325, %v2325
          %v2334 = vcombine.high %v2332, %v2332
          %v2339 = vpack.c.bf16 %v2325, %v2325
          %v2340 = vpack.c.bf16 %v2333, %v2333
          %v2341 = vpack.c.bf16 %v2332, %v2332
          %v2342 = vpack.c.bf16 %v2334, %v2334
          %v2343 = vld [vmem:[%s3] sm:$0xff]
          %v2344 = vld [vmem:[%s3 + $0x8] sm:$0xff]
          %v2345 = vld [vmem:[%s3 + $0x10] sm:$0xff]
          %v2346 = vld [vmem:[%s3 + $0x18] sm:$0xff]
          %v2347 = vld [vmem:[%s3 + $0x20] sm:$0xff]
          %v2348 = vld [vmem:[%s3 + $0x28] sm:$0xff]
          %v2349 = vld [vmem:[%s3 + $0x30] sm:$0xff]
          %v2350 = vld [vmem:[%s3 + $0x38] sm:$0xff]
          %v2351 = vld [vmem:[%s3 + $0x40] sm:$0xff]
          %v2352 = vld [vmem:[%s3 + $0x48] sm:$0xff]
          %v2353 = vld [vmem:[%s3 + $0x50] sm:$0xff]
          %v2354 = vld [vmem:[%s3 + $0x58] sm:$0xff]
          %v2355 = vld [vmem:[%s3 + $0x60] sm:$0xff]
          %v2356 = vld [vmem:[%s3 + $0x68] sm:$0xff]
          %v2357 = vld [vmem:[%s3 + $0x70] sm:$0xff]
          %v2358 = vld [vmem:[%s3 + $0x78] sm:$0xff]
          %v2359 = vld [vmem:[%s3 + $0x80] sm:$0xff]
          %v2360 = vld [vmem:[%s3 + $0x88] sm:$0xff]
          %v2361 = vld [vmem:[%s3 + $0x90] sm:$0xff]
          %v2362 = vld [vmem:[%s3 + $0x98] sm:$0xff]
          %v2363 = vld [vmem:[%s3 + $0xa0] sm:$0xff]
          %v2364 = vld [vmem:[%s3 + $0xa8] sm:$0xff]
          %v2365 = vld [vmem:[%s3 + $0xb0] sm:$0xff]
          %v2366 = vld [vmem:[%s3 + $0xb8] sm:$0xff]
          %v2367 = vld [vmem:[%s3 + $0xc0] sm:$0xff]
          %v2368 = vld [vmem:[%s3 + $0xc8] sm:$0xff]
          %v2369 = vld [vmem:[%s3 + $0xd0] sm:$0xff]
          %v2370 = vld [vmem:[%s3 + $0xd8] sm:$0xff]
          %v2371 = vld [vmem:[%s3 + $0xe0] sm:$0xff]
          %v2372 = vld [vmem:[%s3 + $0xe8] sm:$0xff]
          %v2373 = vld [vmem:[%s3 + $0xf0] sm:$0xff]
          %v2374 = vld [vmem:[%s3 + $0xf8] sm:$0xff]
          %v2375 = vld [vmem:[%s3 + $0x100] sm:$0xff]
          %v2376 = vld [vmem:[%s3 + $0x108] sm:$0xff]
          %v2377 = vld [vmem:[%s3 + $0x110] sm:$0xff]
          %v2378 = vld [vmem:[%s3 + $0x118] sm:$0xff]
          %v2379 = vld [vmem:[%s3 + $0x120] sm:$0xff]
          %v2380 = vld [vmem:[%s3 + $0x128] sm:$0xff]
          %v2381 = vld [vmem:[%s3 + $0x130] sm:$0xff]
          %v2382 = vld [vmem:[%s3 + $0x138] sm:$0xff]
          %v2383 = vld [vmem:[%s3 + $0x140] sm:$0xff]
          %v2384 = vld [vmem:[%s3 + $0x148] sm:$0xff]
          %v2385 = vld [vmem:[%s3 + $0x150] sm:$0xff]
          %v2386 = vld [vmem:[%s3 + $0x158] sm:$0xff]
          %v2387 = vld [vmem:[%s3 + $0x160] sm:$0xff]
          %v2388 = vld [vmem:[%s3 + $0x168] sm:$0xff]
          %v2389 = vld [vmem:[%s3 + $0x170] sm:$0xff]
          %v2390 = vld [vmem:[%s3 + $0x178] sm:$0xff]
          %v2391 = vld [vmem:[%s3 + $0x180] sm:$0xff]
          %v2392 = vld [vmem:[%s3 + $0x188] sm:$0xff]
          %v2393 = vld [vmem:[%s3 + $0x190] sm:$0xff]
          %v2394 = vld [vmem:[%s3 + $0x198] sm:$0xff]
          %v2395 = vld [vmem:[%s3 + $0x1a0] sm:$0xff]
          %v2396 = vld [vmem:[%s3 + $0x1a8] sm:$0xff]
          %v2397 = vld [vmem:[%s3 + $0x1b0] sm:$0xff]
          %v2398 = vld [vmem:[%s3 + $0x1b8] sm:$0xff]
          %v2399 = vld [vmem:[%s3 + $0x1c0] sm:$0xff]
          %v2400 = vld [vmem:[%s3 + $0x1c8] sm:$0xff]
          %v2401 = vld [vmem:[%s3 + $0x1d0] sm:$0xff]
          %v2402 = vld [vmem:[%s3 + $0x1d8] sm:$0xff]
          %v2403 = vld [vmem:[%s3 + $0x1e0] sm:$0xff]
          %v2404 = vld [vmem:[%s3 + $0x1e8] sm:$0xff]
          %v2405 = vld [vmem:[%s3 + $0x1f0] sm:$0xff]
          %v2406 = vld [vmem:[%s3 + $0x1f8] sm:$0xff]
          %v2407 = vld [vmem:[%s4] sm:$0x3]
          %v2409 = vlaneseq
          %v2410 = vshrl.u32 %v2409, 7
          %v2411 = vsub.s32 0, %v2410
          %v2412 = vrot.slane %v2407, %v2411
          %v2413 = vlaneseq
          %v2414 = vshrl.u32 %v2413, 7
          %v2415 = vsub.s32 1, %v2414
          %v2416 = vrot.slane %v2407, %v2415
          %v2483 = vunpack.c.l.b16 %v2343
          %v2484 = vunpack.c.h.b16 %v2343
          %v2485 = vunpack.c.l.b16 %v2344
          %v2486 = vunpack.c.h.b16 %v2344
          %v2487 = vunpack.c.l.b16 %v2345
          %v2488 = vunpack.c.h.b16 %v2345
          %v2489 = vunpack.c.l.b16 %v2346
          %v2490 = vunpack.c.h.b16 %v2346
          %v2491 = vunpack.c.l.b16 %v2347
          %v2492 = vunpack.c.h.b16 %v2347
          %v2493 = vunpack.c.l.b16 %v2348
          %v2494 = vunpack.c.h.b16 %v2348
          %v2495 = vunpack.c.l.b16 %v2349
          %v2496 = vunpack.c.h.b16 %v2349
          %v2497 = vunpack.c.l.b16 %v2350
          %v2498 = vunpack.c.h.b16 %v2350
          %v2499 = vunpack.c.l.b16 %v2351
          %v2500 = vunpack.c.h.b16 %v2351
          %v2501 = vunpack.c.l.b16 %v2352
          %v2502 = vunpack.c.h.b16 %v2352
          %v2503 = vunpack.c.l.b16 %v2353
          %v2504 = vunpack.c.h.b16 %v2353
          %v2505 = vunpack.c.l.b16 %v2354
          %v2506 = vunpack.c.h.b16 %v2354
          %v2507 = vunpack.c.l.b16 %v2355
          %v2508 = vunpack.c.h.b16 %v2355
          %v2509 = vunpack.c.l.b16 %v2356
          %v2510 = vunpack.c.h.b16 %v2356
          %v2511 = vunpack.c.l.b16 %v2357
          %v2512 = vunpack.c.h.b16 %v2357
          %v2513 = vunpack.c.l.b16 %v2358
          %v2514 = vunpack.c.h.b16 %v2358
          %v2515 = vunpack.c.l.b16 %v2359
          %v2516 = vunpack.c.h.b16 %v2359
          %v2517 = vunpack.c.l.b16 %v2360
          %v2518 = vunpack.c.h.b16 %v2360
          %v2519 = vunpack.c.l.b16 %v2361
          %v2520 = vunpack.c.h.b16 %v2361
          %v2521 = vunpack.c.l.b16 %v2362
          %v2522 = vunpack.c.h.b16 %v2362
          %v2523 = vunpack.c.l.b16 %v2363
          %v2524 = vunpack.c.h.b16 %v2363
          %v2525 = vunpack.c.l.b16 %v2364
          %v2526 = vunpack.c.h.b16 %v2364
          %v2527 = vunpack.c.l.b16 %v2365
          %v2528 = vunpack.c.h.b16 %v2365
          %v2529 = vunpack.c.l.b16 %v2366
          %v2530 = vunpack.c.h.b16 %v2366
          %v2531 = vunpack.c.l.b16 %v2367
          %v2532 = vunpack.c.h.b16 %v2367
          %v2533 = vunpack.c.l.b16 %v2368
          %v2534 = vunpack.c.h.b16 %v2368
          %v2535 = vunpack.c.l.b16 %v2369
          %v2536 = vunpack.c.h.b16 %v2369
          %v2537 = vunpack.c.l.b16 %v2370
          %v2538 = vunpack.c.h.b16 %v2370
          %v2539 = vunpack.c.l.b16 %v2371
          %v2540 = vunpack.c.h.b16 %v2371
          %v2541 = vunpack.c.l.b16 %v2372
          %v2542 = vunpack.c.h.b16 %v2372
          %v2543 = vunpack.c.l.b16 %v2373
          %v2544 = vunpack.c.h.b16 %v2373
          %v2545 = vunpack.c.l.b16 %v2374
          %v2546 = vunpack.c.h.b16 %v2374
          %v2547 = vunpack.c.l.b16 %v2375
          %v2548 = vunpack.c.h.b16 %v2375
          %v2549 = vunpack.c.l.b16 %v2376
          %v2550 = vunpack.c.h.b16 %v2376
          %v2551 = vunpack.c.l.b16 %v2377
          %v2552 = vunpack.c.h.b16 %v2377
          %v2553 = vunpack.c.l.b16 %v2378
          %v2554 = vunpack.c.h.b16 %v2378
          %v2555 = vunpack.c.l.b16 %v2379
          %v2556 = vunpack.c.h.b16 %v2379
          %v2557 = vunpack.c.l.b16 %v2380
          %v2558 = vunpack.c.h.b16 %v2380
          %v2559 = vunpack.c.l.b16 %v2381
          %v2560 = vunpack.c.h.b16 %v2381
          %v2561 = vunpack.c.l.b16 %v2382
          %v2562 = vunpack.c.h.b16 %v2382
          %v2563 = vunpack.c.l.b16 %v2383
          %v2564 = vunpack.c.h.b16 %v2383
          %v2565 = vunpack.c.l.b16 %v2384
          %v2566 = vunpack.c.h.b16 %v2384
          %v2567 = vunpack.c.l.b16 %v2385
          %v2568 = vunpack.c.h.b16 %v2385
          %v2569 = vunpack.c.l.b16 %v2386
          %v2570 = vunpack.c.h.b16 %v2386
          %v2571 = vunpack.c.l.b16 %v2387
          %v2572 = vunpack.c.h.b16 %v2387
          %v2573 = vunpack.c.l.b16 %v2388
          %v2574 = vunpack.c.h.b16 %v2388
          %v2575 = vunpack.c.l.b16 %v2389
          %v2576 = vunpack.c.h.b16 %v2389
          %v2577 = vunpack.c.l.b16 %v2390
          %v2578 = vunpack.c.h.b16 %v2390
          %v2579 = vunpack.c.l.b16 %v2391
          %v2580 = vunpack.c.h.b16 %v2391
          %v2581 = vunpack.c.l.b16 %v2392
          %v2582 = vunpack.c.h.b16 %v2392
          %v2583 = vunpack.c.l.b16 %v2393
          %v2584 = vunpack.c.h.b16 %v2393
          %v2585 = vunpack.c.l.b16 %v2394
          %v2586 = vunpack.c.h.b16 %v2394
          %v2587 = vunpack.c.l.b16 %v2395
          %v2588 = vunpack.c.h.b16 %v2395
          %v2589 = vunpack.c.l.b16 %v2396
          %v2590 = vunpack.c.h.b16 %v2396
          %v2591 = vunpack.c.l.b16 %v2397
          %v2592 = vunpack.c.h.b16 %v2397
          %v2593 = vunpack.c.l.b16 %v2398
          %v2594 = vunpack.c.h.b16 %v2398
          %v2595 = vunpack.c.l.b16 %v2399
          %v2596 = vunpack.c.h.b16 %v2399
          %v2597 = vunpack.c.l.b16 %v2400
          %v2598 = vunpack.c.h.b16 %v2400
          %v2599 = vunpack.c.l.b16 %v2401
          %v2600 = vunpack.c.h.b16 %v2401
          %v2601 = vunpack.c.l.b16 %v2402
          %v2602 = vunpack.c.h.b16 %v2402
          %v2603 = vunpack.c.l.b16 %v2403
          %v2604 = vunpack.c.h.b16 %v2403
          %v2605 = vunpack.c.l.b16 %v2404
          %v2606 = vunpack.c.h.b16 %v2404
          %v2607 = vunpack.c.l.b16 %v2405
          %v2608 = vunpack.c.h.b16 %v2405
          %v2609 = vunpack.c.l.b16 %v2406
          %v2610 = vunpack.c.h.b16 %v2406
          %v2611 = vpack.c.b16 %v2485, %v2483
          %v2612 = vpack.c.b16 %v2486, %v2484
          %v2613 = vpack.c.b16 %v2489, %v2487
          %v2614 = vpack.c.b16 %v2490, %v2488
          %v2615 = vpack.c.b16 %v2493, %v2491
          %v2616 = vpack.c.b16 %v2494, %v2492
          %v2617 = vpack.c.b16 %v2497, %v2495
          %v2618 = vpack.c.b16 %v2498, %v2496
          %v2619 = vpack.c.b16 %v2501, %v2499
          %v2620 = vpack.c.b16 %v2502, %v2500
          %v2621 = vpack.c.b16 %v2505, %v2503
          %v2622 = vpack.c.b16 %v2506, %v2504
          %v2623 = vpack.c.b16 %v2509, %v2507
          %v2624 = vpack.c.b16 %v2510, %v2508
          %v2625 = vpack.c.b16 %v2513, %v2511
          %v2626 = vpack.c.b16 %v2514, %v2512
          %v2627 = vpack.c.b16 %v2517, %v2515
          %v2628 = vpack.c.b16 %v2518, %v2516
          %v2629 = vpack.c.b16 %v2521, %v2519
          %v2630 = vpack.c.b16 %v2522, %v2520
          %v2631 = vpack.c.b16 %v2525, %v2523
          %v2632 = vpack.c.b16 %v2526, %v2524
          %v2633 = vpack.c.b16 %v2529, %v2527
          %v2634 = vpack.c.b16 %v2530, %v2528
          %v2635 = vpack.c.b16 %v2533, %v2531
          %v2636 = vpack.c.b16 %v2534, %v2532
          %v2637 = vpack.c.b16 %v2537, %v2535
          %v2638 = vpack.c.b16 %v2538, %v2536
          %v2639 = vpack.c.b16 %v2541, %v2539
          %v2640 = vpack.c.b16 %v2542, %v2540
          %v2641 = vpack.c.b16 %v2545, %v2543
          %v2642 = vpack.c.b16 %v2546, %v2544
          %v2643 = vpack.c.b16 %v2549, %v2547
          %v2644 = vpack.c.b16 %v2550, %v2548
          %v2645 = vpack.c.b16 %v2553, %v2551
          %v2646 = vpack.c.b16 %v2554, %v2552
          %v2647 = vpack.c.b16 %v2557, %v2555
          %v2648 = vpack.c.b16 %v2558, %v2556
          %v2649 = vpack.c.b16 %v2561, %v2559
          %v2650 = vpack.c.b16 %v2562, %v2560
          %v2651 = vpack.c.b16 %v2565, %v2563
          %v2652 = vpack.c.b16 %v2566, %v2564
          %v2653 = vpack.c.b16 %v2569, %v2567
          %v2654 = vpack.c.b16 %v2570, %v2568
          %v2655 = vpack.c.b16 %v2573, %v2571
          %v2656 = vpack.c.b16 %v2574, %v2572
          %v2657 = vpack.c.b16 %v2577, %v2575
          %v2658 = vpack.c.b16 %v2578, %v2576
          %v2659 = vpack.c.b16 %v2581, %v2579
          %v2660 = vpack.c.b16 %v2582, %v2580
          %v2661 = vpack.c.b16 %v2585, %v2583
          %v2662 = vpack.c.b16 %v2586, %v2584
          %v2663 = vpack.c.b16 %v2589, %v2587
          %v2664 = vpack.c.b16 %v2590, %v2588
          %v2665 = vpack.c.b16 %v2593, %v2591
          %v2666 = vpack.c.b16 %v2594, %v2592
          %v2667 = vpack.c.b16 %v2597, %v2595
          %v2668 = vpack.c.b16 %v2598, %v2596
          %v2669 = vpack.c.b16 %v2601, %v2599
          %v2670 = vpack.c.b16 %v2602, %v2600
          %v2671 = vpack.c.b16 %v2605, %v2603
          %v2672 = vpack.c.b16 %v2606, %v2604
          %v2673 = vpack.c.b16 %v2609, %v2607
          %v2674 = vpack.c.b16 %v2610, %v2608
          %2739 = vmatprep.subr.bf16.mxu0 %v2626
          %2740 = vmatpush1.bf16.msra.mxu0 %v2625
          %2741 = vmatprep.subr.bf16.mxu0 %v2624
          %2742 = vmatpush1.bf16.msra.mxu0 %v2623
          %2743 = vmatprep.subr.bf16.mxu0 %v2622
          %2744 = vmatpush1.bf16.msra.mxu0 %v2621
          %2745 = vmatprep.subr.bf16.mxu0 %v2620
          %2746 = vmatpush1.bf16.msra.mxu0 %v2619
          %2747 = vmatprep.subr.bf16.mxu0 %v2618
          %2748 = vmatpush1.bf16.msra.mxu0 %v2617
          %2749 = vmatprep.subr.bf16.mxu0 %v2616
          %2750 = vmatpush1.bf16.msra.mxu0 %v2615
          %2751 = vmatprep.subr.bf16.mxu0 %v2614
          %2752 = vmatpush1.bf16.msra.mxu0 %v2613
          %2753 = vmatprep.subr.bf16.mxu0 %v2612
          %2754 = vmatpush1.bf16.msra.mxu0 %v2611
          %2755 = vmatprep.subr.bf16.mxu0 %v2642
          %2756 = vmatpush2.bf16.msra.mxu0 %v2641
          %2757 = vmatprep.subr.bf16.mxu0 %v2640
          %2758 = vmatpush2.bf16.msra.mxu0 %v2639
          %2759 = vmatprep.subr.bf16.mxu0 %v2638
          %2760 = vmatpush2.bf16.msra.mxu0 %v2637
          %2761 = vmatprep.subr.bf16.mxu0 %v2636
          %2762 = vmatpush2.bf16.msra.mxu0 %v2635
          %2763 = vmatprep.subr.bf16.mxu0 %v2634
          %2764 = vmatpush2.bf16.msra.mxu0 %v2633
          %2765 = vmatprep.subr.bf16.mxu0 %v2632
          %2766 = vmatpush2.bf16.msra.mxu0 %v2631
          %2767 = vmatprep.subr.bf16.mxu0 %v2630
          %2768 = vmatpush2.bf16.msra.mxu0 %v2629
          %2769 = vmatprep.subr.bf16.mxu0 %v2628
          %2770 = vmatpush2.bf16.msra.mxu0 %v2627
          %2771 = vmatprep.mubr.bf16.mxu0 %v2340
          %2772 = vmatmul.mubr.bf16.gmra.mxu0 %v2339
          %v2773 = vpop.f32.mrf.mxu0
          %v2774 = vadd.f32 %v2412, %v2773
          %v2775 = vpop.f32.mrf.mxu0
          %v2776 = vadd.f32 %v2416, %v2775
          %v2777 = vpop.f32.mrf.mxu0
          %v2778 = vpop.f32.mrf.mxu0
          %2779 = vdwg.mxu0
          %2780 = vmatprep.subr.bf16.mxu0 %v2658
          %2781 = vmatpush1.bf16.msra.mxu0 %v2657
          %2782 = vmatprep.subr.bf16.mxu0 %v2656
          %2783 = vmatpush1.bf16.msra.mxu0 %v2655
          %2784 = vmatprep.subr.bf16.mxu0 %v2654
          %2785 = vmatpush1.bf16.msra.mxu0 %v2653
          %2786 = vmatprep.subr.bf16.mxu0 %v2652
          %2787 = vmatpush1.bf16.msra.mxu0 %v2651
          %2788 = vmatprep.subr.bf16.mxu0 %v2650
          %2789 = vmatpush1.bf16.msra.mxu0 %v2649
          %2790 = vmatprep.subr.bf16.mxu0 %v2648
          %2791 = vmatpush1.bf16.msra.mxu0 %v2647
          %2792 = vmatprep.subr.bf16.mxu0 %v2646
          %2793 = vmatpush1.bf16.msra.mxu0 %v2645
          %2794 = vmatprep.subr.bf16.mxu0 %v2644
          %2795 = vmatpush1.bf16.msra.mxu0 %v2643
          %2796 = vmatprep.subr.bf16.mxu0 %v2674
          %2797 = vmatpush2.bf16.msra.mxu0 %v2673
          %2798 = vmatprep.subr.bf16.mxu0 %v2672
          %2799 = vmatpush2.bf16.msra.mxu0 %v2671
          %2800 = vmatprep.subr.bf16.mxu0 %v2670
          %2801 = vmatpush2.bf16.msra.mxu0 %v2669
          %2802 = vmatprep.subr.bf16.mxu0 %v2668
          %2803 = vmatpush2.bf16.msra.mxu0 %v2667
          %2804 = vmatprep.subr.bf16.mxu0 %v2666
          %2805 = vmatpush2.bf16.msra.mxu0 %v2665
          %2806 = vmatprep.subr.bf16.mxu0 %v2664
          %2807 = vmatpush2.bf16.msra.mxu0 %v2663
          %2808 = vmatprep.subr.bf16.mxu0 %v2662
          %2809 = vmatpush2.bf16.msra.mxu0 %v2661
          %2810 = vmatprep.subr.bf16.mxu0 %v2660
          %2811 = vmatpush2.bf16.msra.mxu0 %v2659
          %2812 = vmatprep.mubr.bf16.mxu0 %v2342
          %2813 = vmatmul.mubr.bf16.gmra.mxu0 %v2341
          %v2814 = vpop.f32.mrf.mxu0
          %v2815 = vadd.f32 %v2774, %v2814
          %v2816 = vpop.f32.mrf.mxu0
          %v2817 = vadd.f32 %v2776, %v2816
          %v2818 = vpop.f32.mrf.mxu0
          %v2819 = vpop.f32.mrf.mxu0
          %2820 = vdwg.mxu0
          %v2821 = vmax.f32 %v2815, 0.0
          %v2822 = vmax.f32 %v2817, 0.0
          %v2823 = vpack.c.bf16 %v2821, %v2821
          %v2824 = vpack.c.bf16 %v2822, %v2822
          %v2825 = vld [vmem:[%s5] sm:$0xf]
          %v2826 = vld [vmem:[%s5 + $0x4] sm:$0xf]
          %v2827 = vld [vmem:[%s5 + $0x8] sm:$0xf]
          %v2828 = vld [vmem:[%s5 + $0xc] sm:$0xf]
          %v2829 = vld [vmem:[%s5 + $0x10] sm:$0xf]
          %v2830 = vld [vmem:[%s5 + $0x14] sm:$0xf]
          %v2831 = vld [vmem:[%s5 + $0x18] sm:$0xf]
          %v2832 = vld [vmem:[%s5 + $0x1c] sm:$0xf]
          %v2833 = vld [vmem:[%s5 + $0x20] sm:$0xf]
          %v2834 = vld [vmem:[%s5 + $0x24] sm:$0xf]
          %v2835 = vld [vmem:[%s5 + $0x28] sm:$0xf]
          %v2836 = vld [vmem:[%s5 + $0x2c] sm:$0xf]
          %v2837 = vld [vmem:[%s5 + $0x30] sm:$0xf]
          %v2838 = vld [vmem:[%s5 + $0x34] sm:$0xf]
          %v2839 = vld [vmem:[%s5 + $0x38] sm:$0xf]
          %v2840 = vld [vmem:[%s5 + $0x3c] sm:$0xf]
          %v2841 = vld [vmem:[%s5 + $0x40] sm:$0xf]
          %v2842 = vld [vmem:[%s5 + $0x44] sm:$0xf]
          %v2843 = vld [vmem:[%s5 + $0x48] sm:$0xf]
          %v2844 = vld [vmem:[%s5 + $0x4c] sm:$0xf]
          %v2845 = vld [vmem:[%s5 + $0x50] sm:$0xf]
          %v2846 = vld [vmem:[%s5 + $0x54] sm:$0xf]
          %v2847 = vld [vmem:[%s5 + $0x58] sm:$0xf]
          %v2848 = vld [vmem:[%s5 + $0x5c] sm:$0xf]
          %v2849 = vld [vmem:[%s5 + $0x60] sm:$0xf]
          %v2850 = vld [vmem:[%s5 + $0x64] sm:$0xf]
          %v2851 = vld [vmem:[%s5 + $0x68] sm:$0xf]
          %v2852 = vld [vmem:[%s5 + $0x6c] sm:$0xf]
          %v2853 = vld [vmem:[%s5 + $0x70] sm:$0xf]
          %v2854 = vld [vmem:[%s5 + $0x74] sm:$0xf]
          %v2855 = vld [vmem:[%s5 + $0x78] sm:$0xf]
          %v2856 = vld [vmem:[%s5 + $0x7c] sm:$0xf]
          %v2857 = vld [vmem:[%s6] sm:$0x1]
          %v2859 = vlaneseq
          %v2860 = vshrl.u32 %v2859, 7
          %v2861 = vsub.s32 0, %v2860
          %v2862 = vrot.slane %v2857, %v2861
          %v2896 = vunpack.c.l.b16 %v2825
          %v2897 = vunpack.c.l.b16 %v2826
          %v2898 = vunpack.c.l.b16 %v2827
          %v2899 = vunpack.c.l.b16 %v2828
          %v2900 = vunpack.c.l.b16 %v2829
          %v2901 = vunpack.c.l.b16 %v2830
          %v2902 = vunpack.c.l.b16 %v2831
          %v2903 = vunpack.c.l.b16 %v2832
          %v2904 = vunpack.c.l.b16 %v2833
          %v2905 = vunpack.c.l.b16 %v2834
          %v2906 = vunpack.c.l.b16 %v2835
          %v2907 = vunpack.c.l.b16 %v2836
          %v2908 = vunpack.c.l.b16 %v2837
          %v2909 = vunpack.c.l.b16 %v2838
          %v2910 = vunpack.c.l.b16 %v2839
          %v2911 = vunpack.c.l.b16 %v2840
          %v2912 = vunpack.c.l.b16 %v2841
          %v2913 = vunpack.c.l.b16 %v2842
          %v2914 = vunpack.c.l.b16 %v2843
          %v2915 = vunpack.c.l.b16 %v2844
          %v2916 = vunpack.c.l.b16 %v2845
          %v2917 = vunpack.c.l.b16 %v2846
          %v2918 = vunpack.c.l.b16 %v2847
          %v2919 = vunpack.c.l.b16 %v2848
          %v2920 = vunpack.c.l.b16 %v2849
          %v2921 = vunpack.c.l.b16 %v2850
          %v2922 = vunpack.c.l.b16 %v2851
          %v2923 = vunpack.c.l.b16 %v2852
          %v2924 = vunpack.c.l.b16 %v2853
          %v2925 = vunpack.c.l.b16 %v2854
          %v2926 = vunpack.c.l.b16 %v2855
          %v2927 = vunpack.c.l.b16 %v2856
          %v2928 = vpack.c.b16 %v2897, %v2896
          %v2929 = vpack.c.b16 %v2899, %v2898
          %v2930 = vpack.c.b16 %v2901, %v2900
          %v2931 = vpack.c.b16 %v2903, %v2902
          %v2932 = vpack.c.b16 %v2905, %v2904
          %v2933 = vpack.c.b16 %v2907, %v2906
          %v2934 = vpack.c.b16 %v2909, %v2908
          %v2935 = vpack.c.b16 %v2911, %v2910
          %v2936 = vpack.c.b16 %v2913, %v2912
          %v2937 = vpack.c.b16 %v2915, %v2914
          %v2938 = vpack.c.b16 %v2917, %v2916
          %v2939 = vpack.c.b16 %v2919, %v2918
          %v2940 = vpack.c.b16 %v2921, %v2920
          %v2941 = vpack.c.b16 %v2923, %v2922
          %v2942 = vpack.c.b16 %v2925, %v2924
          %v2943 = vpack.c.b16 %v2927, %v2926
          %2960 = vmatprep.subr.bf16.mxu0 0
          %2961 = vmatpush1.bf16.msra.mxu0 %v2935
          %2962 = vmatprep.subr.bf16.mxu0 0
          %2963 = vmatpush1.bf16.msra.mxu0 %v2934
          %2964 = vmatprep.subr.bf16.mxu0 0
          %2965 = vmatpush1.bf16.msra.mxu0 %v2933
          %2966 = vmatprep.subr.bf16.mxu0 0
          %2967 = vmatpush1.bf16.msra.mxu0 %v2932
          %2968 = vmatprep.subr.bf16.mxu0 0
          %2969 = vmatpush1.bf16.msra.mxu0 %v2931
          %2970 = vmatprep.subr.bf16.mxu0 0
          %2971 = vmatpush1.bf16.msra.mxu0 %v2930
          %2972 = vmatprep.subr.bf16.mxu0 0
          %2973 = vmatpush1.bf16.msra.mxu0 %v2929
          %2974 = vmatprep.subr.bf16.mxu0 0
          %2975 = vmatpush1.bf16.msra.mxu0 %v2928
          %2976 = vmatprep.subr.bf16.mxu0 0
          %2977 = vmatpush2.bf16.msra.mxu0 %v2943
          %2978 = vmatprep.subr.bf16.mxu0 0
          %2979 = vmatpush2.bf16.msra.mxu0 %v2942
          %2980 = vmatprep.subr.bf16.mxu0 0
          %2981 = vmatpush2.bf16.msra.mxu0 %v2941
          %2982 = vmatprep.subr.bf16.mxu0 0
          %2983 = vmatpush2.bf16.msra.mxu0 %v2940
          %2984 = vmatprep.subr.bf16.mxu0 0
          %2985 = vmatpush2.bf16.msra.mxu0 %v2939
          %2986 = vmatprep.subr.bf16.mxu0 0
          %2987 = vmatpush2.bf16.msra.mxu0 %v2938
          %2988 = vmatprep.subr.bf16.mxu0 0
          %2989 = vmatpush2.bf16.msra.mxu0 %v2937
          %2990 = vmatprep.subr.bf16.mxu0 0
          %2991 = vmatpush2.bf16.msra.mxu0 %v2936
          %2992 = vmatprep.mubr.bf16.mxu0 %v2824
          %2993 = vmatmul.mubr.bf16.gmra.mxu0 %v2823
          %v2994 = vpop.f32.mrf.mxu0
          %v2995 = vadd.f32 %v2862, %v2994
          %v2996 = vpop.f32.mrf.mxu0
          %v2997 = vpop.f32.mrf.mxu0
          %v2998 = vpop.f32.mrf.mxu0
          %2999 = vdwg.mxu0
          %3000 = vst [vmem:[#allocation3] sm:$0x3] %v2995
        $region56: #{forward.13} parent=47 // pred_fallthru
          _
        // Predicated region
        $region57: #{forward.13} parent=47 // pred_check
          %p3001 = pneg %p208
        $region58: #{forward.13} parent=47 // pred_check_branch
          %3003 = sbr.rel (%p3001) target = $region60
        $region59: #{forward.13} parent=47 // pred_region
          %s3005 = ssub.s32 32, 32
          %3006 = vsyncadd [#allocation4], %s3005
          %s3007 = smul.addr %s23, 32
          %s3008 = scalar_lea.hbm %s7, %s3007
          %s3010 = sshll.u32 [#allocation3], 4
          %s3011 = int_to_ptr.vmem [resolvable:$true] %s3010
          %3013 = dma.vmem_to_hbm [thread:$0]  %s3011, 32, %s3008, [#allocation4]
        $region60: #{forward.13} parent=47 // pred_fallthru
          _
        // Predicated region
        $region61: #{forward.13} parent=47 // pred_check
          %p3014 = pneg %p208
        $region62: #{forward.13} parent=47 // pred_check_branch
          %3016 = sbr.rel (%p3014) target = $region64
        $region63: #{forward.13} parent=47 // pred_region
          %3017 = dma.done [#allocation4], 32
        $region64: #{forward.13} parent=47 // pred_fallthru
          _
      $region48: #{forward.13} parent=5 // pred_fallthru
        _
      %p3018 = scmp.le.s32.totalorder 2, %s14
      // Predicated region
      $region65: #{forward.13} parent=5 // pred_check
        %p3019 = pneg %p3018
      $region66: #{forward.13} parent=5 // pred_check_branch
        %3021 = sbr.rel (%p3019) target = $region68
      $region67: #{forward.13} parent=5 // pred_region
        %s3022 = ssub.s32 %s14, 2
      $region68: #{forward.13} parent=5 // pred_fallthru
        _
    $region6: #{forward.13} parent=1 // loop_footer
      %s18 = sadd.s32 1, %s14
    $region7: #{forward.13} parent=1 // loop_footer_branch
      %13 = sbr.rel target = $region3
    $region8: #{forward.13} parent=1 // loop_exit
      _
    %3023 = vsyncpa [#allocation4], 1
    %s3024 = scalar_lea.sflag [#allocation4], 1
    %3025 = vsyncpa %s3024, 1

</llo_original>
